<compile_context>
chip_gen: v7x
topology: tpu7x:2x2x1
jax: 0.10.0
libtpu: 0.0.40
codegen_flags: <defaults>
</compile_context>

<pallas_src>
import functools
import math

import jax
import jax.numpy as jnp
from jax.experimental import pallas as pl
from jax.experimental.pallas import tpu as pltpu

EPS = 1e-5          # nn.BatchNorm2d default eps
NEG_SLOPE = 0.2     # nn.LeakyReLU(0.2) in UnetSkipConnectionBlock


def _default_vmem_limit():
    """Generation-aware VMEM budget for the kernels."""
    try:
        cap = int(pltpu.get_tpu_info().vmem_capacity_bytes)
    except Exception:
        cap = 64 << 20                  # assume the smallest (v7x-class) part
    if cap >= (100 << 20):              # v5e / v6e: 128 MiB per core
        return 96 << 20
    return 40 << 20                     # v7x-class: 64 MiB per core


_VMEM_LIMIT = _default_vmem_limit()
_TM_CAP = 1024 if _VMEM_LIMIT > (64 << 20) else 512


def _round_up(x, m):
    return (x + m - 1) // m * m


def _pick_div_tile(total, cap):
    """Largest multiple of 128 that divides `total` (a 128-multiple), <= cap."""
    best, t = 128, 256
    while t <= min(total, cap):
        if total % t == 0:
            best = t
        t += 128
    return best


def _choose_tm(m, cap):
    """M-tile: single tile when m fits, else a divisor-aware 128-multiple."""
    if m <= cap:
        return _round_up(m, 16)
    best = 0
    t = 128
    while t <= cap:
        if m % t == 0:
            best = t
        t += 128
    if best:
        return best
    # no exact divisor: minimize padded rows (ties -> larger tile)
    best_t, best_w = 128, _round_up(m, 128) - m
    t = 256
    while t <= cap:
        waste = _round_up(m, t) - m
        if waste <= best_w:
            best_t, best_w = t, waste
        t += 128
    return best_t


# ----------------------------- Pallas kernels ------------------------------

def _down_mm_kernel(x_ref, scale_ref, shift_ref, w_ref, y_ref, sum_ref,
                    ssq_ref, *, lrelu, valid_rows):
    """Fused (producer BN affine [+ LeakyReLU]) -> bf16 matmul + BN stats.

    x_ref: (tm, kp) bf16 raw im2col patches.  scale/shift: (1, kp) f32.
    Emits y (bf16) and per-tile channel sum / sum-of-squares of the f32 y;
    rows beyond `valid_rows` (M padding) are excluded from the stats.
    """
    x = x_ref[...].astype(jnp.float32) * scale_ref[...] + shift_ref[...]
    if lrelu:
        x = jnp.maximum(x, NEG_SLOPE * x)
    y = jnp.dot(x.astype(jnp.bfloat16), w_ref[...],
                preferred_element_type=jnp.float32)
    y_ref[...] = y.astype(y_ref.dtype)
    if valid_rows is not None:
        tm = y.shape[0]
        row = (pl.program_id(0) * tm
               + jax.lax.broadcasted_iota(jnp.int32, (tm, 1), 0))
        y = jnp.where(row < valid_rows, y, 0.0)
    sum_ref[...] = jnp.sum(y, axis=0, keepdims=True)
    ssq_ref[...] = jnp.sum(y * y, axis=0, keepdims=True)


def _up_mm_kernel(x_ref, scale_ref, shift_ref, w_ref, y_ref):
    """Fused (producer BN affine + ReLU) -> bf16 matmul for ConvTranspose."""
    x = x_ref[...].astype(jnp.float32) * scale_ref[...] + shift_ref[...]
    x = jnp.maximum(x, 0.0)
    y = jnp.dot(x.astype(jnp.bfloat16), w_ref[...],
                preferred_element_type=jnp.float32)
    y_ref[...] = y.astype(y_ref.dtype)


# --------------------------- matmul call wrappers ---------------------------

def _matmul_down(patches, scale_k, shift_k, w_mat, cout, lrelu):
    """lrelu(patches*scale_k + shift_k) @ w_mat  (patches bf16, raw values).

    Returns y (M, cout) bf16 plus f32 per-channel sum / sum-of-squares of the
    f32 accumulator (for training-mode BatchNorm).
    """
    m, k = patches.shape
    kp = _round_up(k, 128)
    coutp = _round_up(cout, 128)
    tm = _choose_tm(m, _TM_CAP)
    mp = _round_up(m, tm)
    g = mp // tm
    # Split the N axis when the M grid is too small to feed both TCs (v7x).
    tn = coutp
    if g == 1 and coutp >= 256:
        tn = _pick_div_tile(coutp, coutp // 2)
    gn = coutp // tn

    x_p = jnp.pad(patches, ((0, mp - m), (0, kp - k)))
    s_p = jnp.pad(scale_k.reshape(1, k).astype(jnp.float32),
                  ((0, 0), (0, kp - k)), constant_values=1.0)
    t_p = jnp.pad(shift_k.reshape(1, k).astype(jnp.float32),
                  ((0, 0), (0, kp - k)))
    w_p = jnp.pad(w_mat, ((0, kp - k), (0, coutp - cout))).astype(jnp.bfloat16)

    kern = functools.partial(_down_mm_kernel, lrelu=lrelu,
                             valid_rows=(m if mp > m else None))
    y, psum, pssq = pl.pallas_call(
        kern,
        grid=(g, gn),
        in_specs=[pl.BlockSpec((tm, kp), lambda i, j: (i, 0)),
                  pl.BlockSpec((1, kp), lambda i, j: (0, 0)),
                  pl.BlockSpec((1, kp), lambda i, j: (0, 0)),
                  pl.BlockSpec((kp, tn), lambda i, j: (0, j))],
        out_specs=[pl.BlockSpec((tm, tn), lambda i, j: (i, j)),
                   pl.BlockSpec((1, tn), lambda i, j: (i, j)),
                   pl.BlockSpec((1, tn), lambda i, j: (i, j))],
        out_shape=[jax.ShapeDtypeStruct((mp, coutp), jnp.bfloat16),
                   jax.ShapeDtypeStruct((g, coutp), jnp.float32),
                   jax.ShapeDtypeStruct((g, coutp), jnp.float32)],
        compiler_params=pltpu.CompilerParams(
            dimension_semantics=("parallel", "parallel"),
            vmem_limit_bytes=_VMEM_LIMIT),
    )(x_p, s_p, t_p, w_p)

    s = jnp.sum(psum, axis=0)[:cout]
    ssq = jnp.sum(pssq, axis=0)[:cout]
    return y[:m, :cout], s, ssq


def _matmul_up(x_mat, scale, shift, w_mat):
    """relu(x_mat*scale + shift) @ w_mat with the affine+ReLU fused in-kernel.

    x_mat arrives bf16 (raw activations); output columns are bf16.
    """
    m, c = x_mat.shape
    nout = w_mat.shape[1]
    kp = _round_up(c, 128)
    noutp = _round_up(nout, 128)
    tm = _choose_tm(m, _TM_CAP)
    mp = _round_up(m, tm)
    gm = mp // tm

    budget = _VMEM_LIMIT - (4 << 20)

    def _vmem_need(tn):
        # double-buffered: x bf16, scale/shift f32, W bf16, out bf16
        return 2 * (tm * kp * 2 + 2 * kp * 4 + kp * tn * 2 + tm * tn * 2)

    tn = noutp
    while tn > 128 and _vmem_need(tn) > budget:
        tn = _pick_div_tile(noutp, tn - 128)
    gn = noutp // tn

    x_p = jnp.pad(x_mat.astype(jnp.bfloat16), ((0, mp - m), (0, kp - c)))
    s_p = jnp.pad(scale.reshape(1, c).astype(jnp.float32),
                  ((0, 0), (0, kp - c)))
    t_p = jnp.pad(shift.reshape(1, c).astype(jnp.float32),
                  ((0, 0), (0, kp - c)))
    w_p = jnp.pad(w_mat, ((0, kp - c), (0, noutp - nout))).astype(jnp.bfloat16)

    if gn == 1:
        # Weight stays VMEM-resident; 1-D parallel grid over M tiles.
        grid = (gm,)
        in_specs = [pl.BlockSpec((tm, kp), lambda i: (i, 0)),
                    pl.BlockSpec((1, kp), lambda i: (0, 0)),
                    pl.BlockSpec((1, kp), lambda i: (0, 0)),
                    pl.BlockSpec((kp, noutp), lambda i: (0, 0))]
        out_specs = pl.BlockSpec((tm, noutp), lambda i: (i, 0))
        sem = ("parallel",)
    else:
        # N tiles outermost so W is streamed exactly once; the (smaller) x
        # tile is the one that gets re-read.
        grid = (gn, gm)
        in_specs = [pl.BlockSpec((tm, kp), lambda j, i: (i, 0)),
                    pl.BlockSpec((1, kp), lambda j, i: (0, 0)),
                    pl.BlockSpec((1, kp), lambda j, i: (0, 0)),
                    pl.BlockSpec((kp, tn), lambda j, i: (0, j))]
        out_specs = pl.BlockSpec((tm, tn), lambda j, i: (i, j))
        sem = ("parallel", "parallel")

    cols = pl.pallas_call(
        _up_mm_kernel,
        grid=grid,
        in_specs=in_specs,
        out_specs=out_specs,
        out_shape=jax.ShapeDtypeStruct((mp, noutp), jnp.bfloat16),
        compiler_params=pltpu.CompilerParams(
            dimension_semantics=sem, vmem_limit_bytes=_VMEM_LIMIT),
    )(x_p, s_p, t_p, w_p)

    return cols[:m, :nout]


# ------------------------------ layer wrappers ------------------------------

def _im2col_s2(x, kh, kw):
    """x: (N,H,W,C) -> (N*OH*OW, KH*KW*C), stride 2, (ky,kx,c) ordering."""
    n, h, w, c = x.shape
    oh = (h - kh) // 2 + 1
    ow = (w - kw) // 2 + 1
    cols = []
    for i in range(kh):
        for j in range(kw):
            cols.append(x[:, i:i + 2 * oh:2, j:j + 2 * ow:2, :])
    patches = jnp.concatenate(cols, axis=-1)
    return patches.reshape(n * oh * ow, kh * kw * c), (n, oh, ow)


def down_level(x_raw, pre_scale, pre_shift, pre_lrelu, w, gamma, beta):
    """[LeakyReLU(producer BN affine)] -> Conv2d(4,4,s2,p1) -> BN stats.

    x_raw is the producer's raw (pre-BN) bf16 output; the affine + LeakyReLU
    are applied inside the Pallas kernel.  Returns the raw bf16 conv output
    plus the per-channel BN scale/shift to be applied by the consumer
    (identity if this conv has no BatchNorm).
    """
    n, h, sw, c = x_raw.shape
    if pre_scale is None:
        pre_scale = jnp.ones((c,), jnp.float32)
        pre_shift = jnp.zeros((c,), jnp.float32)
    # Conv2d padding=1 zero-pads the *activated* tensor; with the affine fused
    # in-kernel we pad the raw tensor with (0 - shift)/scale, which the affine
    # maps back to ~0 (exact up to bf16 rounding of the pad value).
    padv = jnp.where(pre_scale != 0, -pre_shift / pre_scale, 0.0)
    padv = padv.astype(x_raw.dtype)
    row = jnp.broadcast_to(padv, (n, 1, sw, c))
    xp = jnp.concatenate([row, x_raw, row], axis=1)
    col = jnp.broadcast_to(padv, (n, h + 2, 1, c))
    xp = jnp.concatenate([col, xp, col], axis=2)

    cout = w.shape[-1]
    patches, (n, oh, ow) = _im2col_s2(xp, 4, 4)          # bf16, raw values
    w_mat = w.reshape(16 * c, cout)
    scale_k = jnp.tile(pre_scale, 16)                    # (ky,kx,c) ordering
    shift_k = jnp.tile(pre_shift, 16)
    y, s, ssq = _matmul_down(patches, scale_k, shift_k, w_mat, cout, pre_lrelu)
    y = y.reshape(n, oh, ow, cout)

    if gamma is None:
        bn_scale = jnp.ones((cout,), jnp.float32)
        bn_shift = jnp.zeros((cout,), jnp.float32)
    else:
        cnt = n * oh * ow
        mean = s / cnt
        var = jnp.maximum(ssq / cnt - mean * mean, 0.0)  # biased, clamped
        inv = gamma / jnp.sqrt(var + EPS)
        bn_scale = inv
        bn_shift = beta - mean * inv
    return y, bn_scale, bn_shift


def _overlap_add(y):
    """Recombine ConvTranspose2d(k=4, s=2, p=1) per-input-pixel columns.

    y: (n, h, w, 4, 4, cout) bf16 -> (n, 2h, 2w, cout) f32 (taps summed f32).
    """
    n, h, w, _, _, cout = y.shape
    yp = jnp.pad(y, ((0, 0), (1, 1), (1, 1), (0, 0), (0, 0), (0, 0)))
    terms = {0: ((1, 1), (0, 3)), 1: ((1, 2), (2, 0))}   # (offset, kernel tap)
    rows = []
    for a in (0, 1):
        cols_ = []
        for b in (0, 1):
            acc = None
            for offy, ky in terms[a]:
                for offx, kx in terms[b]:
                    t = yp[:, offy:offy + h, offx:offx + w, ky, kx, :]
                    t = t.astype(jnp.float32)
                    acc = t if acc is None else acc + t
            cols_.append(acc)                             # (n, h, w, cout)
        rows.append(jnp.stack(cols_, axis=3))             # (n, h, w, 2, cout)
    out = jnp.stack(rows, axis=2)                         # (n, h, 2, w, 2, cout)
    return out.reshape(n, 2 * h, 2 * w, cout)


def up_level(x_raw, pre_scale, pre_shift, w_mat, gamma=None, beta=None,
             bias=None, final_tanh=False):
    """ReLU(producer BN affine(x_raw)) -> ConvTranspose2d(4,4,s2,p1)."""
    n, h, sw, c = x_raw.shape
    cout = w_mat.shape[1] // 16
    m = n * h * sw
    cols = _matmul_up(x_raw.reshape(m, c), pre_scale, pre_shift, w_mat)
    out = _overlap_add(cols.reshape(n, h, sw, 4, 4, cout))   # f32
    if final_tanh:
        return jnp.tanh(out + bias)
    mean = jnp.mean(out, axis=(0, 1, 2))
    var = jnp.maximum(jnp.mean(out * out, axis=(0, 1, 2)) - mean * mean, 0.0)
    inv = gamma / jnp.sqrt(var + EPS)
    return out.astype(jnp.bfloat16), inv, beta - mean * inv


# ------------------------------ UnetGenerator -------------------------------

def _down_cin(l, input_nc, ngf):
    return (input_nc, ngf, ngf * 2, ngf * 4)[l] if l < 4 else ngf * 8


def _down_cout(l, ngf):
    return (ngf, ngf * 2, ngf * 4)[l] if l < 3 else ngf * 8


def init_params(key, input_nc, output_nc, num_downs, ngf):
    assert num_downs >= 5, "UnetGenerator needs num_downs >= 5"
    D = num_downs
    keys = jax.random.split(key, 2 * D)
    down, up = [], []
    for l in range(D):
        cin, cout = _down_cin(l, input_nc, ngf), _down_cout(l, ngf)
        bound = 1.0 / math.sqrt(cin * 16)
        entry = {"w": jax.random.uniform(keys[l], (4, 4, cin, cout),
                                         jnp.float32, -bound, bound)}
        if 1 <= l <= D - 2:                 # innermost/outermost: no downnorm
            entry["gamma"] = jnp.ones((cout,), jnp.float32)
            entry["beta"] = jnp.zeros((cout,), jnp.float32)
        down.append(entry)
    for l in range(D):
        cin_up = _down_cout(l, ngf) * (1 if l == D - 1 else 2)
        cout_up = output_nc if l == 0 else _down_cin(l, input_nc, ngf)
        bound = 1.0 / math.sqrt(cin_up * 16)
        w = jax.random.uniform(keys[D + l], (cin_up, 4, 4, cout_up),
                               jnp.float32, -bound, bound)
        entry = {"w": w.reshape(cin_up, 16 * cout_up)}
        if l == 0:
            entry["b"] = jnp.zeros((cout_up,), jnp.float32)  # outermost bias
        else:
            entry["gamma"] = jnp.ones((cout_up,), jnp.float32)
            entry["beta"] = jnp.zeros((cout_up,), jnp.float32)
        up.append(entry)
    return {"down": down, "up": up}


def unet_forward(params, x_nchw):
    """UnetGenerator.forward for a fresh (train-mode) module, NCHW in/out."""
    x = jnp.transpose(x_nchw, (0, 2, 3, 1)).astype(jnp.bfloat16)   # -> NHWC
    down_ps, up_ps = params["down"], params["up"]
    D = len(down_ps)

    # ---- down path: keep raw conv outputs + their BN affine ----
    feats = []
    cur, cs, ct = x, None, None
    for l in range(D):
        p = down_ps[l]
        y, s, t = down_level(cur, cs, ct, pre_lrelu=(l > 0),
                             w=p["w"], gamma=p.get("gamma"), beta=p.get("beta"))
        feats.append((y, s, t))
        cur, cs, ct = y, s, t

    # ---- up path with skip concatenation (raw tensors + affines) ----
    up_raw, us, ut = feats[D - 1]
    for l in range(D - 1, 0, -1):
        p = up_ps[l]
        up_raw, us, ut = up_level(up_raw, us, ut, p["w"],
                                  gamma=p["gamma"], beta=p["beta"])
        skip_raw, ss, st = feats[l - 1]
        up_raw = jnp.concatenate([skip_raw, up_raw], axis=-1)
        us = jnp.concatenate([ss, us])
        ut = jnp.concatenate([st, ut])

    p0 = up_ps[0]
    out = up_level(up_raw, us, ut, p0["w"], bias=p0["b"], final_tanh=True)
    return jnp.transpose(out, (0, 3, 1, 2)).astype(jnp.float32)    # -> NCHW


if __name__ == "__main__":
    input_nc, output_nc, num_downs, ngf = 3, 3, 5, 16
    batch, hw = 2, 32                        # 32 / 2**5 = 1 at the bottleneck

    key = jax.random.PRNGKey(0)
    pkey, xkey = jax.random.split(key)
    params = init_params(pkey, input_nc, output_nc, num_downs, ngf)
    x = jax.random.normal(xkey, (batch, input_nc, hw, hw), jnp.float32)

    out = jax.jit(unet_forward)(params, x)
    out = jax.block_until_ready(out)

    assert out.shape == (batch, output_nc, hw, hw), out.shape
    assert bool(jnp.all(jnp.isfinite(out)))
    print("KERNEL_OK")
</pallas_src>

<mosaic_0001>
module attributes {stable_mosaic.version = 11 : i64} {
  func.func @_down_mm_kernel(%arg0: i32, %arg1: i32, %arg2: memref<512x128xbf16, #tpu.memory_space<vmem>>, %arg3: memref<1x128xf32, #tpu.memory_space<vmem>>, %arg4: memref<1x128xf32, #tpu.memory_space<vmem>>, %arg5: memref<128x128xbf16, #tpu.memory_space<vmem>>, %arg6: memref<512x128xbf16, #tpu.memory_space<vmem>>, %arg7: memref<1x128xf32, #tpu.memory_space<vmem>>, %arg8: memref<1x128xf32, #tpu.memory_space<vmem>>) attributes {dimension_semantics = [#tpu.dimension_semantics<parallel>, #tpu.dimension_semantics<parallel>], iteration_bounds = array<i64: 1, 1>, scalar_prefetch = 0 : i64, scratch_operands = 0 : i64, tpu.core_type = #tpu.core_type<tc>, window_params = [{transform_indices = @transform_0, window_bounds = array<i64: 512, 128>}, {pipeline_mode = #tpu.pipeline_mode<synchronous>, transform_indices = @transform_1, window_bounds = array<i64: 1, 128>}, {pipeline_mode = #tpu.pipeline_mode<synchronous>, transform_indices = @transform_2, window_bounds = array<i64: 1, 128>}, {transform_indices = @transform_3, window_bounds = array<i64: 128, 128>}, {transform_indices = @transform_4, window_bounds = array<i64: 512, 128>}, {transform_indices = @transform_5, window_bounds = array<i64: 1, 128>}, {transform_indices = @transform_6, window_bounds = array<i64: 1, 128>}]} {
    %c0 = arith.constant 0 : index
    %c0_0 = arith.constant 0 : index
    %0 = vector.load %arg2[%c0, %c0_0] : memref<512x128xbf16, #tpu.memory_space<vmem>>, vector<512x128xbf16>
    %1 = arith.extf %0 : vector<512x128xbf16> to vector<512x128xf32>
    %c0_1 = arith.constant 0 : index
    %c0_2 = arith.constant 0 : index
    %2 = vector.load %arg3[%c0_1, %c0_2] : memref<1x128xf32, #tpu.memory_space<vmem>>, vector<1x128xf32>
    %3 = vector.broadcast %2 : vector<1x128xf32> to vector<512x128xf32>
    %4 = arith.mulf %1, %3 : vector<512x128xf32>
    %c0_3 = arith.constant 0 : index
    %c0_4 = arith.constant 0 : index
    %5 = vector.load %arg4[%c0_3, %c0_4] : memref<1x128xf32, #tpu.memory_space<vmem>>, vector<1x128xf32>
    %6 = vector.broadcast %5 : vector<1x128xf32> to vector<512x128xf32>
    %7 = arith.addf %4, %6 : vector<512x128xf32>
    %8 = arith.truncf %7 : vector<512x128xf32> to vector<512x128xbf16>
    %c0_5 = arith.constant 0 : index
    %c0_6 = arith.constant 0 : index
    %9 = vector.load %arg5[%c0_5, %c0_6] : memref<128x128xbf16, #tpu.memory_space<vmem>>, vector<128x128xbf16>
    %cst = arith.constant dense<0.000000e+00> : vector<512x128xf32>
    %10 = tpu.matmul %8, %9, %cst {dimension_numbers = #tpu.dot_dimension_numbers<[1], [0], [0], [1], [0, 0, 1, 1], [], []>} : vector<512x128xbf16>, vector<128x128xbf16>, vector<512x128xf32> -> vector<512x128xf32>
    %11 = arith.truncf %10 : vector<512x128xf32> to vector<512x128xbf16>
    %c0_7 = arith.constant 0 : index
    %c0_8 = arith.constant 0 : index
    %12 = vector.load %arg6[%c0_7, %c0_8] : memref<512x128xbf16, #tpu.memory_space<vmem>>, vector<512x128xbf16>
    tpu.vector_store %arg6[%c0_7, %c0_8], %11 {strides = array<i32>} : memref<512x128xbf16, #tpu.memory_space<vmem>>, vector<512x128xbf16>,
    %cst_9 = arith.constant dense<0.000000e+00> : vector<128xf32>
    %13 = vector.multi_reduction <add>, %10, %cst_9 [0] : vector<512x128xf32> to vector<128xf32>
    %14 = vector.shape_cast %13 : vector<128xf32> to vector<1x128xf32>
    %c0_10 = arith.constant 0 : index
    %c0_11 = arith.constant 0 : index
    %15 = vector.load %arg7[%c0_10, %c0_11] : memref<1x128xf32, #tpu.memory_space<vmem>>, vector<1x128xf32>
    tpu.vector_store %arg7[%c0_10, %c0_11], %14 {strides = array<i32>} : memref<1x128xf32, #tpu.memory_space<vmem>>, vector<1x128xf32>,
    %16 = arith.mulf %10, %10 : vector<512x128xf32>
    %cst_12 = arith.constant dense<0.000000e+00> : vector<128xf32>
    %17 = vector.multi_reduction <add>, %16, %cst_12 [0] : vector<512x128xf32> to vector<128xf32>
    %18 = vector.shape_cast %17 : vector<128xf32> to vector<1x128xf32>
    %c0_13 = arith.constant 0 : index
    %c0_14 = arith.constant 0 : index
    %19 = vector.load %arg8[%c0_13, %c0_14] : memref<1x128xf32, #tpu.memory_space<vmem>>, vector<1x128xf32>
    tpu.vector_store %arg8[%c0_13, %c0_14], %18 {strides = array<i32>} : memref<1x128xf32, #tpu.memory_space<vmem>>, vector<1x128xf32>,
    return
  }
  func.func @transform_0(%arg0: i32, %arg1: i32) -> (i32, i32) {
    %c0_i32 = arith.constant 0 : i32
    %c0_i32_0 = arith.constant 0 : i32
    return %arg0, %c0_i32 : i32, i32
  }
  func.func @transform_1(%arg0: i32, %arg1: i32) -> (i32, i32) {
    %c0_i32 = arith.constant 0 : i32
    %c0_i32_0 = arith.constant 0 : i32
    %c0_i32_1 = arith.constant 0 : i32
    return %c0_i32, %c0_i32_0 : i32, i32
  }
  func.func @transform_2(%arg0: i32, %arg1: i32) -> (i32, i32) {
    %c0_i32 = arith.constant 0 : i32
    %c0_i32_0 = arith.constant 0 : i32
    %c0_i32_1 = arith.constant 0 : i32
    return %c0_i32, %c0_i32_0 : i32, i32
  }
  func.func @transform_3(%arg0: i32, %arg1: i32) -> (i32, i32) {
    %c0_i32 = arith.constant 0 : i32
    %c0_i32_0 = arith.constant 0 : i32
    return %c0_i32, %arg1 : i32, i32
  }
  func.func @transform_4(%arg0: i32, %arg1: i32) -> (i32, i32) {
    %c0_i32 = arith.constant 0 : i32
    return %arg0, %arg1 : i32, i32
  }
  func.func @transform_5(%arg0: i32, %arg1: i32) -> (i32, i32) {
    %c0_i32 = arith.constant 0 : i32
    return %arg0, %arg1 : i32, i32
  }
  func.func @transform_6(%arg0: i32, %arg1: i32) -> (i32, i32) {
    %c0_i32 = arith.constant 0 : i32
    return %arg0, %arg1 : i32, i32
  }
}

module attributes {stable_mosaic.version = 11 : i64} {
  func.func @_down_mm_kernel(%arg0: i32, %arg1: i32, %arg2: memref<128x256xbf16, #tpu.memory_space<vmem>>, %arg3: memref<1x256xf32, #tpu.memory_space<vmem>>, %arg4: memref<1x256xf32, #tpu.memory_space<vmem>>, %arg5: memref<256x128xbf16, #tpu.memory_space<vmem>>, %arg6: memref<128x128xbf16, #tpu.memory_space<vmem>>, %arg7: memref<1x128xf32, #tpu.memory_space<vmem>>, %arg8: memref<1x128xf32, #tpu.memory_space<vmem>>) attributes {dimension_semantics = [#tpu.dimension_semantics<parallel>, #tpu.dimension_semantics<parallel>], iteration_bounds = array<i64: 1, 1>, scalar_prefetch = 0 : i64, scratch_operands = 0 : i64, tpu.core_type = #tpu.core_type<tc>, window_params = [{transform_indices = @transform_0, window_bounds = array<i64: 128, 256>}, {pipeline_mode = #tpu.pipeline_mode<synchronous>, transform_indices = @transform_1, window_bounds = array<i64: 1, 256>}, {pipeline_mode = #tpu.pipeline_mode<synchronous>, transform_indices = @transform_2, window_bounds = array<i64: 1, 256>}, {transform_indices = @transform_3, window_bounds = array<i64: 256, 128>}, {transform_indices = @transform_4, window_bounds = array<i64: 128, 128>}, {transform_indices = @transform_5, window_bounds = array<i64: 1, 128>}, {transform_indices = @transform_6, window_bounds = array<i64: 1, 128>}]} {
    %c0 = arith.constant 0 : index
    %c0_0 = arith.constant 0 : index
    %0 = vector.load %arg2[%c0, %c0_0] : memref<128x256xbf16, #tpu.memory_space<vmem>>, vector<128x256xbf16>
    %1 = arith.extf %0 : vector<128x256xbf16> to vector<128x256xf32>
    %c0_1 = arith.constant 0 : index
    %c0_2 = arith.constant 0 : index
    %2 = vector.load %arg3[%c0_1, %c0_2] : memref<1x256xf32, #tpu.memory_space<vmem>>, vector<1x256xf32>
    %3 = vector.broadcast %2 : vector<1x256xf32> to vector<128x256xf32>
    %4 = arith.mulf %1, %3 : vector<128x256xf32>
    %c0_3 = arith.constant 0 : index
    %c0_4 = arith.constant 0 : index
    %5 = vector.load %arg4[%c0_3, %c0_4] : memref<1x256xf32, #tpu.memory_space<vmem>>, vector<1x256xf32>
    %6 = vector.broadcast %5 : vector<1x256xf32> to vector<128x256xf32>
    %7 = arith.addf %4, %6 : vector<128x256xf32>
    %cst = arith.constant 2.000000e-01 : f32
    %8 = vector.broadcast %cst : f32 to vector<128x256xf32>
    %9 = arith.mulf %8, %7 : vector<128x256xf32>
    %10 = arith.maximumf %7, %9 : vector<128x256xf32>
    %11 = arith.truncf %10 : vector<128x256xf32> to vector<128x256xbf16>
    %c0_5 = arith.constant 0 : index
    %c0_6 = arith.constant 0 : index
    %12 = vector.load %arg5[%c0_5, %c0_6] : memref<256x128xbf16, #tpu.memory_space<vmem>>, vector<256x128xbf16>
    %cst_7 = arith.constant dense<0.000000e+00> : vector<128x128xf32>
    %13 = tpu.matmul %11, %12, %cst_7 {dimension_numbers = #tpu.dot_dimension_numbers<[1], [0], [0], [1], [0, 0, 1, 1], [], []>} : vector<128x256xbf16>, vector<256x128xbf16>, vector<128x128xf32> -> vector<128x128xf32>
    %14 = arith.truncf %13 : vector<128x128xf32> to vector<128x128xbf16>
    %c0_8 = arith.constant 0 : index
    %c0_9 = arith.constant 0 : index
    %15 = vector.load %arg6[%c0_8, %c0_9] : memref<128x128xbf16, #tpu.memory_space<vmem>>, vector<128x128xbf16>
    tpu.vector_store %arg6[%c0_8, %c0_9], %14 {strides = array<i32>} : memref<128x128xbf16, #tpu.memory_space<vmem>>, vector<128x128xbf16>,
    %cst_10 = arith.constant dense<0.000000e+00> : vector<128xf32>
    %16 = vector.multi_reduction <add>, %13, %cst_10 [0] : vector<128x128xf32> to vector<128xf32>
    %17 = vector.shape_cast %16 : vector<128xf32> to vector<1x128xf32>
    %c0_11 = arith.constant 0 : index
    %c0_12 = arith.constant 0 : index
    %18 = vector.load %arg7[%c0_11, %c0_12] : memref<1x128xf32, #tpu.memory_space<vmem>>, vector<1x128xf32>
    tpu.vector_store %arg7[%c0_11, %c0_12], %17 {strides = array<i32>} : memref<1x128xf32, #tpu.memory_space<vmem>>, vector<1x128xf32>,
    %19 = arith.mulf %13, %13 : vector<128x128xf32>
    %cst_13 = arith.constant dense<0.000000e+00> : vector<128xf32>
    %20 = vector.multi_reduction <add>, %19, %cst_13 [0] : vector<128x128xf32> to vector<128xf32>
    %21 = vector.shape_cast %20 : vector<128xf32> to vector<1x128xf32>
    %c0_14 = arith.constant 0 : index
    %c0_15 = arith.constant 0 : index
    %22 = vector.load %arg8[%c0_14, %c0_15] : memref<1x128xf32, #tpu.memory_space<vmem>>, vector<1x128xf32>
    tpu.vector_store %arg8[%c0_14, %c0_15], %21 {strides = array<i32>} : memref<1x128xf32, #tpu.memory_space<vmem>>, vector<1x128xf32>,
    return
  }
  func.func @transform_0(%arg0: i32, %arg1: i32) -> (i32, i32) {
    %c0_i32 = arith.constant 0 : i32
    %c0_i32_0 = arith.constant 0 : i32
    return %arg0, %c0_i32 : i32, i32
  }
  func.func @transform_1(%arg0: i32, %arg1: i32) -> (i32, i32) {
    %c0_i32 = arith.constant 0 : i32
    %c0_i32_0 = arith.constant 0 : i32
    %c0_i32_1 = arith.constant 0 : i32
    return %c0_i32, %c0_i32_0 : i32, i32
  }
  func.func @transform_2(%arg0: i32, %arg1: i32) -> (i32, i32) {
    %c0_i32 = arith.constant 0 : i32
    %c0_i32_0 = arith.constant 0 : i32
    %c0_i32_1 = arith.constant 0 : i32
    return %c0_i32, %c0_i32_0 : i32, i32
  }
  func.func @transform_3(%arg0: i32, %arg1: i32) -> (i32, i32) {
    %c0_i32 = arith.constant 0 : i32
    %c0_i32_0 = arith.constant 0 : i32
    return %c0_i32, %arg1 : i32, i32
  }
  func.func @transform_4(%arg0: i32, %arg1: i32) -> (i32, i32) {
    %c0_i32 = arith.constant 0 : i32
    return %arg0, %arg1 : i32, i32
  }
  func.func @transform_5(%arg0: i32, %arg1: i32) -> (i32, i32) {
    %c0_i32 = arith.constant 0 : i32
    return %arg0, %arg1 : i32, i32
  }
  func.func @transform_6(%arg0: i32, %arg1: i32) -> (i32, i32) {
    %c0_i32 = arith.constant 0 : i32
    return %arg0, %arg1 : i32, i32
  }
}

module attributes {stable_mosaic.version = 11 : i64} {
  func.func @_down_mm_kernel(%arg0: i32, %arg1: i32, %arg2: memref<32x512xbf16, #tpu.memory_space<vmem>>, %arg3: memref<1x512xf32, #tpu.memory_space<vmem>>, %arg4: memref<1x512xf32, #tpu.memory_space<vmem>>, %arg5: memref<512x128xbf16, #tpu.memory_space<vmem>>, %arg6: memref<32x128xbf16, #tpu.memory_space<vmem>>, %arg7: memref<1x128xf32, #tpu.memory_space<vmem>>, %arg8: memref<1x128xf32, #tpu.memory_space<vmem>>) attributes {dimension_semantics = [#tpu.dimension_semantics<parallel>, #tpu.dimension_semantics<parallel>], iteration_bounds = array<i64: 1, 1>, scalar_prefetch = 0 : i64, scratch_operands = 0 : i64, tpu.core_type = #tpu.core_type<tc>, window_params = [{transform_indices = @transform_0, window_bounds = array<i64: 32, 512>}, {pipeline_mode = #tpu.pipeline_mode<synchronous>, transform_indices = @transform_1, window_bounds = array<i64: 1, 512>}, {pipeline_mode = #tpu.pipeline_mode<synchronous>, transform_indices = @transform_2, window_bounds = array<i64: 1, 512>}, {transform_indices = @transform_3, window_bounds = array<i64: 512, 128>}, {transform_indices = @transform_4, window_bounds = array<i64: 32, 128>}, {transform_indices = @transform_5, window_bounds = array<i64: 1, 128>}, {transform_indices = @transform_6, window_bounds = array<i64: 1, 128>}]} {
    %c0 = arith.constant 0 : index
    %c0_0 = arith.constant 0 : index
    %0 = vector.load %arg2[%c0, %c0_0] : memref<32x512xbf16, #tpu.memory_space<vmem>>, vector<32x512xbf16>
    %1 = arith.extf %0 : vector<32x512xbf16> to vector<32x512xf32>
    %c0_1 = arith.constant 0 : index
    %c0_2 = arith.constant 0 : index
    %2 = vector.load %arg3[%c0_1, %c0_2] : memref<1x512xf32, #tpu.memory_space<vmem>>, vector<1x512xf32>
    %3 = vector.broadcast %2 : vector<1x512xf32> to vector<32x512xf32>
    %4 = arith.mulf %1, %3 : vector<32x512xf32>
    %c0_3 = arith.constant 0 : index
    %c0_4 = arith.constant 0 : index
    %5 = vector.load %arg4[%c0_3, %c0_4] : memref<1x512xf32, #tpu.memory_space<vmem>>, vector<1x512xf32>
    %6 = vector.broadcast %5 : vector<1x512xf32> to vector<32x512xf32>
    %7 = arith.addf %4, %6 : vector<32x512xf32>
    %cst = arith.constant 2.000000e-01 : f32
    %8 = vector.broadcast %cst : f32 to vector<32x512xf32>
    %9 = arith.mulf %8, %7 : vector<32x512xf32>
    %10 = arith.maximumf %7, %9 : vector<32x512xf32>
    %11 = arith.truncf %10 : vector<32x512xf32> to vector<32x512xbf16>
    %c0_5 = arith.constant 0 : index
    %c0_6 = arith.constant 0 : index
    %12 = vector.load %arg5[%c0_5, %c0_6] : memref<512x128xbf16, #tpu.memory_space<vmem>>, vector<512x128xbf16>
    %cst_7 = arith.constant dense<0.000000e+00> : vector<32x128xf32>
    %13 = tpu.matmul %11, %12, %cst_7 {dimension_numbers = #tpu.dot_dimension_numbers<[1], [0], [0], [1], [0, 0, 1, 1], [], []>} : vector<32x512xbf16>, vector<512x128xbf16>, vector<32x128xf32> -> vector<32x128xf32>
    %14 = arith.truncf %13 : vector<32x128xf32> to vector<32x128xbf16>
    %c0_8 = arith.constant 0 : index
    %c0_9 = arith.constant 0 : index
    %15 = vector.load %arg6[%c0_8, %c0_9] : memref<32x128xbf16, #tpu.memory_space<vmem>>, vector<32x128xbf16>
    tpu.vector_store %arg6[%c0_8, %c0_9], %14 {strides = array<i32>} : memref<32x128xbf16, #tpu.memory_space<vmem>>, vector<32x128xbf16>,
    %cst_10 = arith.constant dense<0.000000e+00> : vector<128xf32>
    %16 = vector.multi_reduction <add>, %13, %cst_10 [0] : vector<32x128xf32> to vector<128xf32>
    %17 = vector.shape_cast %16 : vector<128xf32> to vector<1x128xf32>
    %c0_11 = arith.constant 0 : index
    %c0_12 = arith.constant 0 : index
    %18 = vector.load %arg7[%c0_11, %c0_12] : memref<1x128xf32, #tpu.memory_space<vmem>>, vector<1x128xf32>
    tpu.vector_store %arg7[%c0_11, %c0_12], %17 {strides = array<i32>} : memref<1x128xf32, #tpu.memory_space<vmem>>, vector<1x128xf32>,
    %19 = arith.mulf %13, %13 : vector<32x128xf32>
    %cst_13 = arith.constant dense<0.000000e+00> : vector<128xf32>
    %20 = vector.multi_reduction <add>, %19, %cst_13 [0] : vector<32x128xf32> to vector<128xf32>
    %21 = vector.shape_cast %20 : vector<128xf32> to vector<1x128xf32>
    %c0_14 = arith.constant 0 : index
    %c0_15 = arith.constant 0 : index
    %22 = vector.load %arg8[%c0_14, %c0_15] : memref<1x128xf32, #tpu.memory_space<vmem>>, vector<1x128xf32>
    tpu.vector_store %arg8[%c0_14, %c0_15], %21 {strides = array<i32>} : memref<1x128xf32, #tpu.memory_space<vmem>>, vector<1x128xf32>,
    return
  }
  func.func @transform_0(%arg0: i32, %arg1: i32) -> (i32, i32) {
    %c0_i32 = arith.constant 0 : i32
    %c0_i32_0 = arith.constant 0 : i32
    return %arg0, %c0_i32 : i32, i32
  }
  func.func @transform_1(%arg0: i32, %arg1: i32) -> (i32, i32) {
    %c0_i32 = arith.constant 0 : i32
    %c0_i32_0 = arith.constant 0 : i32
    %c0_i32_1 = arith.constant 0 : i32
    return %c0_i32, %c0_i32_0 : i32, i32
  }
  func.func @transform_2(%arg0: i32, %arg1: i32) -> (i32, i32) {
    %c0_i32 = arith.constant 0 : i32
    %c0_i32_0 = arith.constant 0 : i32
    %c0_i32_1 = arith.constant 0 : i32
    return %c0_i32, %c0_i32_0 : i32, i32
  }
  func.func @transform_3(%arg0: i32, %arg1: i32) -> (i32, i32) {
    %c0_i32 = arith.constant 0 : i32
    %c0_i32_0 = arith.constant 0 : i32
    return %c0_i32, %arg1 : i32, i32
  }
  func.func @transform_4(%arg0: i32, %arg1: i32) -> (i32, i32) {
    %c0_i32 = arith.constant 0 : i32
    return %arg0, %arg1 : i32, i32
  }
  func.func @transform_5(%arg0: i32, %arg1: i32) -> (i32, i32) {
    %c0_i32 = arith.constant 0 : i32
    return %arg0, %arg1 : i32, i32
  }
  func.func @transform_6(%arg0: i32, %arg1: i32) -> (i32, i32) {
    %c0_i32 = arith.constant 0 : i32
    return %arg0, %arg1 : i32, i32
  }
}

module attributes {stable_mosaic.version = 11 : i64} {
  func.func @_down_mm_kernel(%arg0: i32, %arg1: i32, %arg2: memref<16x1024xbf16, #tpu.memory_space<vmem>>, %arg3: memref<1x1024xf32, #tpu.memory_space<vmem>>, %arg4: memref<1x1024xf32, #tpu.memory_space<vmem>>, %arg5: memref<1024x128xbf16, #tpu.memory_space<vmem>>, %arg6: memref<16x128xbf16, #tpu.memory_space<vmem>>, %arg7: memref<1x128xf32, #tpu.memory_space<vmem>>, %arg8: memref<1x128xf32, #tpu.memory_space<vmem>>) attributes {dimension_semantics = [#tpu.dimension_semantics<parallel>, #tpu.dimension_semantics<parallel>], iteration_bounds = array<i64: 1, 1>, scalar_prefetch = 0 : i64, scratch_operands = 0 : i64, tpu.core_type = #tpu.core_type<tc>, window_params = [{transform_indices = @transform_0, window_bounds = array<i64: 16, 1024>}, {pipeline_mode = #tpu.pipeline_mode<synchronous>, transform_indices = @transform_1, window_bounds = array<i64: 1, 1024>}, {pipeline_mode = #tpu.pipeline_mode<synchronous>, transform_indices = @transform_2, window_bounds = array<i64: 1, 1024>}, {transform_indices = @transform_3, window_bounds = array<i64: 1024, 128>}, {transform_indices = @transform_4, window_bounds = array<i64: 16, 128>}, {transform_indices = @transform_5, window_bounds = array<i64: 1, 128>}, {transform_indices = @transform_6, window_bounds = array<i64: 1, 128>}]} {
    %c0 = arith.constant 0 : index
    %c0_0 = arith.constant 0 : index
    %0 = vector.load %arg2[%c0, %c0_0] : memref<16x1024xbf16, #tpu.memory_space<vmem>>, vector<16x1024xbf16>
    %1 = arith.extf %0 : vector<16x1024xbf16> to vector<16x1024xf32>
    %c0_1 = arith.constant 0 : index
    %c0_2 = arith.constant 0 : index
    %2 = vector.load %arg3[%c0_1, %c0_2] : memref<1x1024xf32, #tpu.memory_space<vmem>>, vector<1x1024xf32>
    %3 = vector.broadcast %2 : vector<1x1024xf32> to vector<16x1024xf32>
    %4 = arith.mulf %1, %3 : vector<16x1024xf32>
    %c0_3 = arith.constant 0 : index
    %c0_4 = arith.constant 0 : index
    %5 = vector.load %arg4[%c0_3, %c0_4] : memref<1x1024xf32, #tpu.memory_space<vmem>>, vector<1x1024xf32>
    %6 = vector.broadcast %5 : vector<1x1024xf32> to vector<16x1024xf32>
    %7 = arith.addf %4, %6 : vector<16x1024xf32>
    %cst = arith.constant 2.000000e-01 : f32
    %8 = vector.broadcast %cst : f32 to vector<16x1024xf32>
    %9 = arith.mulf %8, %7 : vector<16x1024xf32>
    %10 = arith.maximumf %7, %9 : vector<16x1024xf32>
    %11 = arith.truncf %10 : vector<16x1024xf32> to vector<16x1024xbf16>
    %c0_5 = arith.constant 0 : index
    %c0_6 = arith.constant 0 : index
    %12 = vector.load %arg5[%c0_5, %c0_6] : memref<1024x128xbf16, #tpu.memory_space<vmem>>, vector<1024x128xbf16>
    %cst_7 = arith.constant dense<0.000000e+00> : vector<16x128xf32>
    %13 = tpu.matmul %11, %12, %cst_7 {dimension_numbers = #tpu.dot_dimension_numbers<[1], [0], [0], [1], [0, 0, 1, 1], [], []>} : vector<16x1024xbf16>, vector<1024x128xbf16>, vector<16x128xf32> -> vector<16x128xf32>
    %14 = arith.truncf %13 : vector<16x128xf32> to vector<16x128xbf16>
    %c0_8 = arith.constant 0 : index
    %c0_9 = arith.constant 0 : index
    %15 = vector.load %arg6[%c0_8, %c0_9] : memref<16x128xbf16, #tpu.memory_space<vmem>>, vector<16x128xbf16>
    tpu.vector_store %arg6[%c0_8, %c0_9], %14 {strides = array<i32>} : memref<16x128xbf16, #tpu.memory_space<vmem>>, vector<16x128xbf16>,
    %c16_i32 = arith.constant 16 : i32
    %16 = arith.muli %arg0, %c16_i32 : i32
    %17 = tpu.iota {dimensions = array<i32: 0>} : vector<16x1xi32>
    %18 = vector.broadcast %16 : i32 to vector<16x1xi32>
    %19 = arith.addi %18, %17 : vector<16x1xi32>
    %c8_i32 = arith.constant 8 : i32
    %20 = vector.broadcast %c8_i32 : i32 to vector<16x1xi32>
    %21 = arith.cmpi slt, %19, %20 : vector<16x1xi32>
    %cst_10 = arith.constant 0.000000e+00 : f32
    %22 = vector.shape_cast %21 : vector<16x1xi1> to vector<16x1xi1>
    %23 = vector.broadcast %22 : vector<16x1xi1> to vector<16x128xi1>
    %24 = vector.broadcast %cst_10 : f32 to vector<16x128xf32>
    %25 = arith.select %23, %13, %24 : vector<16x128xi1>, vector<16x128xf32>
    %cst_11 = arith.constant dense<0.000000e+00> : vector<128xf32>
    %26 = vector.multi_reduction <add>, %25, %cst_11 [0] : vector<16x128xf32> to vector<128xf32>
    %27 = vector.shape_cast %26 : vector<128xf32> to vector<1x128xf32>
    %c0_12 = arith.constant 0 : index
    %c0_13 = arith.constant 0 : index
    %28 = vector.load %arg7[%c0_12, %c0_13] : memref<1x128xf32, #tpu.memory_space<vmem>>, vector<1x128xf32>
    tpu.vector_store %arg7[%c0_12, %c0_13], %27 {strides = array<i32>} : memref<1x128xf32, #tpu.memory_space<vmem>>, vector<1x128xf32>,
    %29 = arith.mulf %25, %25 : vector<16x128xf32>
    %cst_14 = arith.constant dense<0.000000e+00> : vector<128xf32>
    %30 = vector.multi_reduction <add>, %29, %cst_14 [0] : vector<16x128xf32> to vector<128xf32>
    %31 = vector.shape_cast %30 : vector<128xf32> to vector<1x128xf32>
    %c0_15 = arith.constant 0 : index
    %c0_16 = arith.constant 0 : index
    %32 = vector.load %arg8[%c0_15, %c0_16] : memref<1x128xf32, #tpu.memory_space<vmem>>, vector<1x128xf32>
    tpu.vector_store %arg8[%c0_15, %c0_16], %31 {strides = array<i32>} : memref<1x128xf32, #tpu.memory_space<vmem>>, vector<1x128xf32>,
    return
  }
  func.func @transform_0(%arg0: i32, %arg1: i32) -> (i32, i32) {
    %c0_i32 = arith.constant 0 : i32
    %c0_i32_0 = arith.constant 0 : i32
    return %arg0, %c0_i32 : i32, i32
  }
  func.func @transform_1(%arg0: i32, %arg1: i32) -> (i32, i32) {
    %c0_i32 = arith.constant 0 : i32
    %c0_i32_0 = arith.constant 0 : i32
    %c0_i32_1 = arith.constant 0 : i32
    return %c0_i32, %c0_i32_0 : i32, i32
  }
  func.func @transform_2(%arg0: i32, %arg1: i32) -> (i32, i32) {
    %c0_i32 = arith.constant 0 : i32
    %c0_i32_0 = arith.constant 0 : i32
    %c0_i32_1 = arith.constant 0 : i32
    return %c0_i32, %c0_i32_0 : i32, i32
  }
  func.func @transform_3(%arg0: i32, %arg1: i32) -> (i32, i32) {
    %c0_i32 = arith.constant 0 : i32
    %c0_i32_0 = arith.constant 0 : i32
    return %c0_i32, %arg1 : i32, i32
  }
  func.func @transform_4(%arg0: i32, %arg1: i32) -> (i32, i32) {
    %c0_i32 = arith.constant 0 : i32
    return %arg0, %arg1 : i32, i32
  }
  func.func @transform_5(%arg0: i32, %arg1: i32) -> (i32, i32) {
    %c0_i32 = arith.constant 0 : i32
    return %arg0, %arg1 : i32, i32
  }
  func.func @transform_6(%arg0: i32, %arg1: i32) -> (i32, i32) {
    %c0_i32 = arith.constant 0 : i32
    return %arg0, %arg1 : i32, i32
  }
}

module attributes {stable_mosaic.version = 11 : i64} {
  func.func @_down_mm_kernel(%arg0: i32, %arg1: i32, %arg2: memref<16x2048xbf16, #tpu.memory_space<vmem>>, %arg3: memref<1x2048xf32, #tpu.memory_space<vmem>>, %arg4: memref<1x2048xf32, #tpu.memory_space<vmem>>, %arg5: memref<2048x128xbf16, #tpu.memory_space<vmem>>, %arg6: memref<16x128xbf16, #tpu.memory_space<vmem>>, %arg7: memref<1x128xf32, #tpu.memory_space<vmem>>, %arg8: memref<1x128xf32, #tpu.memory_space<vmem>>) attributes {dimension_semantics = [#tpu.dimension_semantics<parallel>, #tpu.dimension_semantics<parallel>], iteration_bounds = array<i64: 1, 1>, scalar_prefetch = 0 : i64, scratch_operands = 0 : i64, tpu.core_type = #tpu.core_type<tc>, window_params = [{transform_indices = @transform_0, window_bounds = array<i64: 16, 2048>}, {pipeline_mode = #tpu.pipeline_mode<synchronous>, transform_indices = @transform_1, window_bounds = array<i64: 1, 2048>}, {pipeline_mode = #tpu.pipeline_mode<synchronous>, transform_indices = @transform_2, window_bounds = array<i64: 1, 2048>}, {transform_indices = @transform_3, window_bounds = array<i64: 2048, 128>}, {transform_indices = @transform_4, window_bounds = array<i64: 16, 128>}, {transform_indices = @transform_5, window_bounds = array<i64: 1, 128>}, {transform_indices = @transform_6, window_bounds = array<i64: 1, 128>}]} {
    %c0 = arith.constant 0 : index
    %c0_0 = arith.constant 0 : index
    %0 = vector.load %arg2[%c0, %c0_0] : memref<16x2048xbf16, #tpu.memory_space<vmem>>, vector<16x2048xbf16>
    %1 = arith.extf %0 : vector<16x2048xbf16> to vector<16x2048xf32>
    %c0_1 = arith.constant 0 : index
    %c0_2 = arith.constant 0 : index
    %2 = vector.load %arg3[%c0_1, %c0_2] : memref<1x2048xf32, #tpu.memory_space<vmem>>, vector<1x2048xf32>
    %3 = vector.broadcast %2 : vector<1x2048xf32> to vector<16x2048xf32>
    %4 = arith.mulf %1, %3 : vector<16x2048xf32>
    %c0_3 = arith.constant 0 : index
    %c0_4 = arith.constant 0 : index
    %5 = vector.load %arg4[%c0_3, %c0_4] : memref<1x2048xf32, #tpu.memory_space<vmem>>, vector<1x2048xf32>
    %6 = vector.broadcast %5 : vector<1x2048xf32> to vector<16x2048xf32>
    %7 = arith.addf %4, %6 : vector<16x2048xf32>
    %cst = arith.constant 2.000000e-01 : f32
    %8 = vector.broadcast %cst : f32 to vector<16x2048xf32>
    %9 = arith.mulf %8, %7 : vector<16x2048xf32>
    %10 = arith.maximumf %7, %9 : vector<16x2048xf32>
    %11 = arith.truncf %10 : vector<16x2048xf32> to vector<16x2048xbf16>
    %c0_5 = arith.constant 0 : index
    %c0_6 = arith.constant 0 : index
    %12 = vector.load %arg5[%c0_5, %c0_6] : memref<2048x128xbf16, #tpu.memory_space<vmem>>, vector<2048x128xbf16>
    %cst_7 = arith.constant dense<0.000000e+00> : vector<16x128xf32>
    %13 = tpu.matmul %11, %12, %cst_7 {dimension_numbers = #tpu.dot_dimension_numbers<[1], [0], [0], [1], [0, 0, 1, 1], [], []>} : vector<16x2048xbf16>, vector<2048x128xbf16>, vector<16x128xf32> -> vector<16x128xf32>
    %14 = arith.truncf %13 : vector<16x128xf32> to vector<16x128xbf16>
    %c0_8 = arith.constant 0 : index
    %c0_9 = arith.constant 0 : index
    %15 = vector.load %arg6[%c0_8, %c0_9] : memref<16x128xbf16, #tpu.memory_space<vmem>>, vector<16x128xbf16>
    tpu.vector_store %arg6[%c0_8, %c0_9], %14 {strides = array<i32>} : memref<16x128xbf16, #tpu.memory_space<vmem>>, vector<16x128xbf16>,
    %c16_i32 = arith.constant 16 : i32
    %16 = arith.muli %arg0, %c16_i32 : i32
    %17 = tpu.iota {dimensions = array<i32: 0>} : vector<16x1xi32>
    %18 = vector.broadcast %16 : i32 to vector<16x1xi32>
    %19 = arith.addi %18, %17 : vector<16x1xi32>
    %c2_i32 = arith.constant 2 : i32
    %20 = vector.broadcast %c2_i32 : i32 to vector<16x1xi32>
    %21 = arith.cmpi slt, %19, %20 : vector<16x1xi32>
    %cst_10 = arith.constant 0.000000e+00 : f32
    %22 = vector.shape_cast %21 : vector<16x1xi1> to vector<16x1xi1>
    %23 = vector.broadcast %22 : vector<16x1xi1> to vector<16x128xi1>
    %24 = vector.broadcast %cst_10 : f32 to vector<16x128xf32>
    %25 = arith.select %23, %13, %24 : vector<16x128xi1>, vector<16x128xf32>
    %cst_11 = arith.constant dense<0.000000e+00> : vector<128xf32>
    %26 = vector.multi_reduction <add>, %25, %cst_11 [0] : vector<16x128xf32> to vector<128xf32>
    %27 = vector.shape_cast %26 : vector<128xf32> to vector<1x128xf32>
    %c0_12 = arith.constant 0 : index
    %c0_13 = arith.constant 0 : index
    %28 = vector.load %arg7[%c0_12, %c0_13] : memref<1x128xf32, #tpu.memory_space<vmem>>, vector<1x128xf32>
    tpu.vector_store %arg7[%c0_12, %c0_13], %27 {strides = array<i32>} : memref<1x128xf32, #tpu.memory_space<vmem>>, vector<1x128xf32>,
    %29 = arith.mulf %25, %25 : vector<16x128xf32>
    %cst_14 = arith.constant dense<0.000000e+00> : vector<128xf32>
    %30 = vector.multi_reduction <add>, %29, %cst_14 [0] : vector<16x128xf32> to vector<128xf32>
    %31 = vector.shape_cast %30 : vector<128xf32> to vector<1x128xf32>
    %c0_15 = arith.constant 0 : index
    %c0_16 = arith.constant 0 : index
    %32 = vector.load %arg8[%c0_15, %c0_16] : memref<1x128xf32, #tpu.memory_space<vmem>>, vector<1x128xf32>
    tpu.vector_store %arg8[%c0_15, %c0_16], %31 {strides = array<i32>} : memref<1x128xf32, #tpu.memory_space<vmem>>, vector<1x128xf32>,
    return
  }
  func.func @transform_0(%arg0: i32, %arg1: i32) -> (i32, i32) {
    %c0_i32 = arith.constant 0 : i32
    %c0_i32_0 = arith.constant 0 : i32
    return %arg0, %c0_i32 : i32, i32
  }
  func.func @transform_1(%arg0: i32, %arg1: i32) -> (i32, i32) {
    %c0_i32 = arith.constant 0 : i32
    %c0_i32_0 = arith.constant 0 : i32
    %c0_i32_1 = arith.constant 0 : i32
    return %c0_i32, %c0_i32_0 : i32, i32
  }
  func.func @transform_2(%arg0: i32, %arg1: i32) -> (i32, i32) {
    %c0_i32 = arith.constant 0 : i32
    %c0_i32_0 = arith.constant 0 : i32
    %c0_i32_1 = arith.constant 0 : i32
    return %c0_i32, %c0_i32_0 : i32, i32
  }
  func.func @transform_3(%arg0: i32, %arg1: i32) -> (i32, i32) {
    %c0_i32 = arith.constant 0 : i32
    %c0_i32_0 = arith.constant 0 : i32
    return %c0_i32, %arg1 : i32, i32
  }
  func.func @transform_4(%arg0: i32, %arg1: i32) -> (i32, i32) {
    %c0_i32 = arith.constant 0 : i32
    return %arg0, %arg1 : i32, i32
  }
  func.func @transform_5(%arg0: i32, %arg1: i32) -> (i32, i32) {
    %c0_i32 = arith.constant 0 : i32
    return %arg0, %arg1 : i32, i32
  }
  func.func @transform_6(%arg0: i32, %arg1: i32) -> (i32, i32) {
    %c0_i32 = arith.constant 0 : i32
    return %arg0, %arg1 : i32, i32
  }
}

module attributes {stable_mosaic.version = 11 : i64} {
  func.func @_up_mm_kernel(%arg0: i32, %arg1: memref<16x128xbf16, #tpu.memory_space<vmem>>, %arg2: memref<1x128xf32, #tpu.memory_space<vmem>>, %arg3: memref<1x128xf32, #tpu.memory_space<vmem>>, %arg4: memref<128x2048xbf16, #tpu.memory_space<vmem>>, %arg5: memref<16x2048xbf16, #tpu.memory_space<vmem>>) attributes {dimension_semantics = [#tpu.dimension_semantics<parallel>], iteration_bounds = array<i64: 1>, scalar_prefetch = 0 : i64, scratch_operands = 0 : i64, tpu.core_type = #tpu.core_type<tc>, window_params = [{transform_indices = @transform_0, window_bounds = array<i64: 16, 128>}, {pipeline_mode = #tpu.pipeline_mode<synchronous>, transform_indices = @transform_1, window_bounds = array<i64: 1, 128>}, {pipeline_mode = #tpu.pipeline_mode<synchronous>, transform_indices = @transform_2, window_bounds = array<i64: 1, 128>}, {pipeline_mode = #tpu.pipeline_mode<synchronous>, transform_indices = @transform_3, window_bounds = array<i64: 128, 2048>}, {transform_indices = @transform_4, window_bounds = array<i64: 16, 2048>}]} {
    %c0 = arith.constant 0 : index
    %c0_0 = arith.constant 0 : index
    %0 = vector.load %arg1[%c0, %c0_0] : memref<16x128xbf16, #tpu.memory_space<vmem>>, vector<16x128xbf16>
    %1 = arith.extf %0 : vector<16x128xbf16> to vector<16x128xf32>
    %c0_1 = arith.constant 0 : index
    %c0_2 = arith.constant 0 : index
    %2 = vector.load %arg2[%c0_1, %c0_2] : memref<1x128xf32, #tpu.memory_space<vmem>>, vector<1x128xf32>
    %3 = vector.broadcast %2 : vector<1x128xf32> to vector<16x128xf32>
    %4 = arith.mulf %1, %3 : vector<16x128xf32>
    %c0_3 = arith.constant 0 : index
    %c0_4 = arith.constant 0 : index
    %5 = vector.load %arg3[%c0_3, %c0_4] : memref<1x128xf32, #tpu.memory_space<vmem>>, vector<1x128xf32>
    %6 = vector.broadcast %5 : vector<1x128xf32> to vector<16x128xf32>
    %7 = arith.addf %4, %6 : vector<16x128xf32>
    %cst = arith.constant 0.000000e+00 : f32
    %8 = vector.broadcast %cst : f32 to vector<16x128xf32>
    %9 = arith.maximumf %7, %8 : vector<16x128xf32>
    %10 = arith.truncf %9 : vector<16x128xf32> to vector<16x128xbf16>
    %c0_5 = arith.constant 0 : index
    %c0_6 = arith.constant 0 : index
    %11 = vector.load %arg4[%c0_5, %c0_6] : memref<128x2048xbf16, #tpu.memory_space<vmem>>, vector<128x2048xbf16>
    %cst_7 = arith.constant dense<0.000000e+00> : vector<16x2048xf32>
    %12 = tpu.matmul %10, %11, %cst_7 {dimension_numbers = #tpu.dot_dimension_numbers<[1], [0], [0], [1], [0, 0, 1, 1], [], []>} : vector<16x128xbf16>, vector<128x2048xbf16>, vector<16x2048xf32> -> vector<16x2048xf32>
    %13 = arith.truncf %12 : vector<16x2048xf32> to vector<16x2048xbf16>
    %c0_8 = arith.constant 0 : index
    %c0_9 = arith.constant 0 : index
    %14 = vector.load %arg5[%c0_8, %c0_9] : memref<16x2048xbf16, #tpu.memory_space<vmem>>, vector<16x2048xbf16>
    tpu.vector_store %arg5[%c0_8, %c0_9], %13 {strides = array<i32>} : memref<16x2048xbf16, #tpu.memory_space<vmem>>, vector<16x2048xbf16>,
    return
  }
  func.func @transform_0(%arg0: i32) -> (i32, i32) {
    %c0_i32 = arith.constant 0 : i32
    %c0_i32_0 = arith.constant 0 : i32
    return %arg0, %c0_i32 : i32, i32
  }
  func.func @transform_1(%arg0: i32) -> (i32, i32) {
    %c0_i32 = arith.constant 0 : i32
    %c0_i32_0 = arith.constant 0 : i32
    %c0_i32_1 = arith.constant 0 : i32
    return %c0_i32, %c0_i32_0 : i32, i32
  }
  func.func @transform_2(%arg0: i32) -> (i32, i32) {
    %c0_i32 = arith.constant 0 : i32
    %c0_i32_0 = arith.constant 0 : i32
    %c0_i32_1 = arith.constant 0 : i32
    return %c0_i32, %c0_i32_0 : i32, i32
  }
  func.func @transform_3(%arg0: i32) -> (i32, i32) {
    %c0_i32 = arith.constant 0 : i32
    %c0_i32_0 = arith.constant 0 : i32
    %c0_i32_1 = arith.constant 0 : i32
    return %c0_i32, %c0_i32_0 : i32, i32
  }
  func.func @transform_4(%arg0: i32) -> (i32, i32) {
    %c0_i32 = arith.constant 0 : i32
    %c0_i32_0 = arith.constant 0 : i32
    return %arg0, %c0_i32 : i32, i32
  }
}

module attributes {stable_mosaic.version = 11 : i64} {
  func.func @_up_mm_kernel(%arg0: i32, %arg1: memref<16x256xbf16, #tpu.memory_space<vmem>>, %arg2: memref<1x256xf32, #tpu.memory_space<vmem>>, %arg3: memref<1x256xf32, #tpu.memory_space<vmem>>, %arg4: memref<256x1024xbf16, #tpu.memory_space<vmem>>, %arg5: memref<16x1024xbf16, #tpu.memory_space<vmem>>) attributes {dimension_semantics = [#tpu.dimension_semantics<parallel>], iteration_bounds = array<i64: 1>, scalar_prefetch = 0 : i64, scratch_operands = 0 : i64, tpu.core_type = #tpu.core_type<tc>, window_params = [{transform_indices = @transform_0, window_bounds = array<i64: 16, 256>}, {pipeline_mode = #tpu.pipeline_mode<synchronous>, transform_indices = @transform_1, window_bounds = array<i64: 1, 256>}, {pipeline_mode = #tpu.pipeline_mode<synchronous>, transform_indices = @transform_2, window_bounds = array<i64: 1, 256>}, {pipeline_mode = #tpu.pipeline_mode<synchronous>, transform_indices = @transform_3, window_bounds = array<i64: 256, 1024>}, {transform_indices = @transform_4, window_bounds = array<i64: 16, 1024>}]} {
    %c0 = arith.constant 0 : index
    %c0_0 = arith.constant 0 : index
    %0 = vector.load %arg1[%c0, %c0_0] : memref<16x256xbf16, #tpu.memory_space<vmem>>, vector<16x256xbf16>
    %1 = arith.extf %0 : vector<16x256xbf16> to vector<16x256xf32>
    %c0_1 = arith.constant 0 : index
    %c0_2 = arith.constant 0 : index
    %2 = vector.load %arg2[%c0_1, %c0_2] : memref<1x256xf32, #tpu.memory_space<vmem>>, vector<1x256xf32>
    %3 = vector.broadcast %2 : vector<1x256xf32> to vector<16x256xf32>
    %4 = arith.mulf %1, %3 : vector<16x256xf32>
    %c0_3 = arith.constant 0 : index
    %c0_4 = arith.constant 0 : index
    %5 = vector.load %arg3[%c0_3, %c0_4] : memref<1x256xf32, #tpu.memory_space<vmem>>, vector<1x256xf32>
    %6 = vector.broadcast %5 : vector<1x256xf32> to vector<16x256xf32>
    %7 = arith.addf %4, %6 : vector<16x256xf32>
    %cst = arith.constant 0.000000e+00 : f32
    %8 = vector.broadcast %cst : f32 to vector<16x256xf32>
    %9 = arith.maximumf %7, %8 : vector<16x256xf32>
    %10 = arith.truncf %9 : vector<16x256xf32> to vector<16x256xbf16>
    %c0_5 = arith.constant 0 : index
    %c0_6 = arith.constant 0 : index
    %11 = vector.load %arg4[%c0_5, %c0_6] : memref<256x1024xbf16, #tpu.memory_space<vmem>>, vector<256x1024xbf16>
    %cst_7 = arith.constant dense<0.000000e+00> : vector<16x1024xf32>
    %12 = tpu.matmul %10, %11, %cst_7 {dimension_numbers = #tpu.dot_dimension_numbers<[1], [0], [0], [1], [0, 0, 1, 1], [], []>} : vector<16x256xbf16>, vector<256x1024xbf16>, vector<16x1024xf32> -> vector<16x1024xf32>
    %13 = arith.truncf %12 : vector<16x1024xf32> to vector<16x1024xbf16>
    %c0_8 = arith.constant 0 : index
    %c0_9 = arith.constant 0 : index
    %14 = vector.load %arg5[%c0_8, %c0_9] : memref<16x1024xbf16, #tpu.memory_space<vmem>>, vector<16x1024xbf16>
    tpu.vector_store %arg5[%c0_8, %c0_9], %13 {strides = array<i32>} : memref<16x1024xbf16, #tpu.memory_space<vmem>>, vector<16x1024xbf16>,
    return
  }
  func.func @transform_0(%arg0: i32) -> (i32, i32) {
    %c0_i32 = arith.constant 0 : i32
    %c0_i32_0 = arith.constant 0 : i32
    return %arg0, %c0_i32 : i32, i32
  }
  func.func @transform_1(%arg0: i32) -> (i32, i32) {
    %c0_i32 = arith.constant 0 : i32
    %c0_i32_0 = arith.constant 0 : i32
    %c0_i32_1 = arith.constant 0 : i32
    return %c0_i32, %c0_i32_0 : i32, i32
  }
  func.func @transform_2(%arg0: i32) -> (i32, i32) {
    %c0_i32 = arith.constant 0 : i32
    %c0_i32_0 = arith.constant 0 : i32
    %c0_i32_1 = arith.constant 0 : i32
    return %c0_i32, %c0_i32_0 : i32, i32
  }
  func.func @transform_3(%arg0: i32) -> (i32, i32) {
    %c0_i32 = arith.constant 0 : i32
    %c0_i32_0 = arith.constant 0 : i32
    %c0_i32_1 = arith.constant 0 : i32
    return %c0_i32, %c0_i32_0 : i32, i32
  }
  func.func @transform_4(%arg0: i32) -> (i32, i32) {
    %c0_i32 = arith.constant 0 : i32
    %c0_i32_0 = arith.constant 0 : i32
    return %arg0, %c0_i32 : i32, i32
  }
}

module attributes {stable_mosaic.version = 11 : i64} {
  func.func @_up_mm_kernel(%arg0: i32, %arg1: memref<32x128xbf16, #tpu.memory_space<vmem>>, %arg2: memref<1x128xf32, #tpu.memory_space<vmem>>, %arg3: memref<1x128xf32, #tpu.memory_space<vmem>>, %arg4: memref<128x512xbf16, #tpu.memory_space<vmem>>, %arg5: memref<32x512xbf16, #tpu.memory_space<vmem>>) attributes {dimension_semantics = [#tpu.dimension_semantics<parallel>], iteration_bounds = array<i64: 1>, scalar_prefetch = 0 : i64, scratch_operands = 0 : i64, tpu.core_type = #tpu.core_type<tc>, window_params = [{transform_indices = @transform_0, window_bounds = array<i64: 32, 128>}, {pipeline_mode = #tpu.pipeline_mode<synchronous>, transform_indices = @transform_1, window_bounds = array<i64: 1, 128>}, {pipeline_mode = #tpu.pipeline_mode<synchronous>, transform_indices = @transform_2, window_bounds = array<i64: 1, 128>}, {pipeline_mode = #tpu.pipeline_mode<synchronous>, transform_indices = @transform_3, window_bounds = array<i64: 128, 512>}, {transform_indices = @transform_4, window_bounds = array<i64: 32, 512>}]} {
    %c0 = arith.constant 0 : index
    %c0_0 = arith.constant 0 : index
    %0 = vector.load %arg1[%c0, %c0_0] : memref<32x128xbf16, #tpu.memory_space<vmem>>, vector<32x128xbf16>
    %1 = arith.extf %0 : vector<32x128xbf16> to vector<32x128xf32>
    %c0_1 = arith.constant 0 : index
    %c0_2 = arith.constant 0 : index
    %2 = vector.load %arg2[%c0_1, %c0_2] : memref<1x128xf32, #tpu.memory_space<vmem>>, vector<1x128xf32>
    %3 = vector.broadcast %2 : vector<1x128xf32> to vector<32x128xf32>
    %4 = arith.mulf %1, %3 : vector<32x128xf32>
    %c0_3 = arith.constant 0 : index
    %c0_4 = arith.constant 0 : index
    %5 = vector.load %arg3[%c0_3, %c0_4] : memref<1x128xf32, #tpu.memory_space<vmem>>, vector<1x128xf32>
    %6 = vector.broadcast %5 : vector<1x128xf32> to vector<32x128xf32>
    %7 = arith.addf %4, %6 : vector<32x128xf32>
    %cst = arith.constant 0.000000e+00 : f32
    %8 = vector.broadcast %cst : f32 to vector<32x128xf32>
    %9 = arith.maximumf %7, %8 : vector<32x128xf32>
    %10 = arith.truncf %9 : vector<32x128xf32> to vector<32x128xbf16>
    %c0_5 = arith.constant 0 : index
    %c0_6 = arith.constant 0 : index
    %11 = vector.load %arg4[%c0_5, %c0_6] : memref<128x512xbf16, #tpu.memory_space<vmem>>, vector<128x512xbf16>
    %cst_7 = arith.constant dense<0.000000e+00> : vector<32x512xf32>
    %12 = tpu.matmul %10, %11, %cst_7 {dimension_numbers = #tpu.dot_dimension_numbers<[1], [0], [0], [1], [0, 0, 1, 1], [], []>} : vector<32x128xbf16>, vector<128x512xbf16>, vector<32x512xf32> -> vector<32x512xf32>
    %13 = arith.truncf %12 : vector<32x512xf32> to vector<32x512xbf16>
    %c0_8 = arith.constant 0 : index
    %c0_9 = arith.constant 0 : index
    %14 = vector.load %arg5[%c0_8, %c0_9] : memref<32x512xbf16, #tpu.memory_space<vmem>>, vector<32x512xbf16>
    tpu.vector_store %arg5[%c0_8, %c0_9], %13 {strides = array<i32>} : memref<32x512xbf16, #tpu.memory_space<vmem>>, vector<32x512xbf16>,
    return
  }
  func.func @transform_0(%arg0: i32) -> (i32, i32) {
    %c0_i32 = arith.constant 0 : i32
    %c0_i32_0 = arith.constant 0 : i32
    return %arg0, %c0_i32 : i32, i32
  }
  func.func @transform_1(%arg0: i32) -> (i32, i32) {
    %c0_i32 = arith.constant 0 : i32
    %c0_i32_0 = arith.constant 0 : i32
    %c0_i32_1 = arith.constant 0 : i32
    return %c0_i32, %c0_i32_0 : i32, i32
  }
  func.func @transform_2(%arg0: i32) -> (i32, i32) {
    %c0_i32 = arith.constant 0 : i32
    %c0_i32_0 = arith.constant 0 : i32
    %c0_i32_1 = arith.constant 0 : i32
    return %c0_i32, %c0_i32_0 : i32, i32
  }
  func.func @transform_3(%arg0: i32) -> (i32, i32) {
    %c0_i32 = arith.constant 0 : i32
    %c0_i32_0 = arith.constant 0 : i32
    %c0_i32_1 = arith.constant 0 : i32
    return %c0_i32, %c0_i32_0 : i32, i32
  }
  func.func @transform_4(%arg0: i32) -> (i32, i32) {
    %c0_i32 = arith.constant 0 : i32
    %c0_i32_0 = arith.constant 0 : i32
    return %arg0, %c0_i32 : i32, i32
  }
}

module attributes {stable_mosaic.version = 11 : i64} {
  func.func @_up_mm_kernel(%arg0: i32, %arg1: memref<128x128xbf16, #tpu.memory_space<vmem>>, %arg2: memref<1x128xf32, #tpu.memory_space<vmem>>, %arg3: memref<1x128xf32, #tpu.memory_space<vmem>>, %arg4: memref<128x256xbf16, #tpu.memory_space<vmem>>, %arg5: memref<128x256xbf16, #tpu.memory_space<vmem>>) attributes {dimension_semantics = [#tpu.dimension_semantics<parallel>], iteration_bounds = array<i64: 1>, scalar_prefetch = 0 : i64, scratch_operands = 0 : i64, tpu.core_type = #tpu.core_type<tc>, window_params = [{transform_indices = @transform_0, window_bounds = array<i64: 128, 128>}, {pipeline_mode = #tpu.pipeline_mode<synchronous>, transform_indices = @transform_1, window_bounds = array<i64: 1, 128>}, {pipeline_mode = #tpu.pipeline_mode<synchronous>, transform_indices = @transform_2, window_bounds = array<i64: 1, 128>}, {pipeline_mode = #tpu.pipeline_mode<synchronous>, transform_indices = @transform_3, window_bounds = array<i64: 128, 256>}, {transform_indices = @transform_4, window_bounds = array<i64: 128, 256>}]} {
    %c0 = arith.constant 0 : index
    %c0_0 = arith.constant 0 : index
    %0 = vector.load %arg1[%c0, %c0_0] : memref<128x128xbf16, #tpu.memory_space<vmem>>, vector<128x128xbf16>
    %1 = arith.extf %0 : vector<128x128xbf16> to vector<128x128xf32>
    %c0_1 = arith.constant 0 : index
    %c0_2 = arith.constant 0 : index
    %2 = vector.load %arg2[%c0_1, %c0_2] : memref<1x128xf32, #tpu.memory_space<vmem>>, vector<1x128xf32>
    %3 = vector.broadcast %2 : vector<1x128xf32> to vector<128x128xf32>
    %4 = arith.mulf %1, %3 : vector<128x128xf32>
    %c0_3 = arith.constant 0 : index
    %c0_4 = arith.constant 0 : index
    %5 = vector.load %arg3[%c0_3, %c0_4] : memref<1x128xf32, #tpu.memory_space<vmem>>, vector<1x128xf32>
    %6 = vector.broadcast %5 : vector<1x128xf32> to vector<128x128xf32>
    %7 = arith.addf %4, %6 : vector<128x128xf32>
    %cst = arith.constant 0.000000e+00 : f32
    %8 = vector.broadcast %cst : f32 to vector<128x128xf32>
    %9 = arith.maximumf %7, %8 : vector<128x128xf32>
    %10 = arith.truncf %9 : vector<128x128xf32> to vector<128x128xbf16>
    %c0_5 = arith.constant 0 : index
    %c0_6 = arith.constant 0 : index
    %11 = vector.load %arg4[%c0_5, %c0_6] : memref<128x256xbf16, #tpu.memory_space<vmem>>, vector<128x256xbf16>
    %cst_7 = arith.constant dense<0.000000e+00> : vector<128x256xf32>
    %12 = tpu.matmul %10, %11, %cst_7 {dimension_numbers = #tpu.dot_dimension_numbers<[1], [0], [0], [1], [0, 0, 1, 1], [], []>} : vector<128x128xbf16>, vector<128x256xbf16>, vector<128x256xf32> -> vector<128x256xf32>
    %13 = arith.truncf %12 : vector<128x256xf32> to vector<128x256xbf16>
    %c0_8 = arith.constant 0 : index
    %c0_9 = arith.constant 0 : index
    %14 = vector.load %arg5[%c0_8, %c0_9] : memref<128x256xbf16, #tpu.memory_space<vmem>>, vector<128x256xbf16>
    tpu.vector_store %arg5[%c0_8, %c0_9], %13 {strides = array<i32>} : memref<128x256xbf16, #tpu.memory_space<vmem>>, vector<128x256xbf16>,
    return
  }
  func.func @transform_0(%arg0: i32) -> (i32, i32) {
    %c0_i32 = arith.constant 0 : i32
    %c0_i32_0 = arith.constant 0 : i32
    return %arg0, %c0_i32 : i32, i32
  }
  func.func @transform_1(%arg0: i32) -> (i32, i32) {
    %c0_i32 = arith.constant 0 : i32
    %c0_i32_0 = arith.constant 0 : i32
    %c0_i32_1 = arith.constant 0 : i32
    return %c0_i32, %c0_i32_0 : i32, i32
  }
  func.func @transform_2(%arg0: i32) -> (i32, i32) {
    %c0_i32 = arith.constant 0 : i32
    %c0_i32_0 = arith.constant 0 : i32
    %c0_i32_1 = arith.constant 0 : i32
    return %c0_i32, %c0_i32_0 : i32, i32
  }
  func.func @transform_3(%arg0: i32) -> (i32, i32) {
    %c0_i32 = arith.constant 0 : i32
    %c0_i32_0 = arith.constant 0 : i32
    %c0_i32_1 = arith.constant 0 : i32
    return %c0_i32, %c0_i32_0 : i32, i32
  }
  func.func @transform_4(%arg0: i32) -> (i32, i32) {
    %c0_i32 = arith.constant 0 : i32
    %c0_i32_0 = arith.constant 0 : i32
    return %arg0, %c0_i32 : i32, i32
  }
}

module attributes {stable_mosaic.version = 11 : i64} {
  func.func @_up_mm_kernel(%arg0: i32, %arg1: memref<512x128xbf16, #tpu.memory_space<vmem>>, %arg2: memref<1x128xf32, #tpu.memory_space<vmem>>, %arg3: memref<1x128xf32, #tpu.memory_space<vmem>>, %arg4: memref<128x128xbf16, #tpu.memory_space<vmem>>, %arg5: memref<512x128xbf16, #tpu.memory_space<vmem>>) attributes {dimension_semantics = [#tpu.dimension_semantics<parallel>], iteration_bounds = array<i64: 1>, scalar_prefetch = 0 : i64, scratch_operands = 0 : i64, tpu.core_type = #tpu.core_type<tc>, window_params = [{transform_indices = @transform_0, window_bounds = array<i64: 512, 128>}, {pipeline_mode = #tpu.pipeline_mode<synchronous>, transform_indices = @transform_1, window_bounds = array<i64: 1, 128>}, {pipeline_mode = #tpu.pipeline_mode<synchronous>, transform_indices = @transform_2, window_bounds = array<i64: 1, 128>}, {pipeline_mode = #tpu.pipeline_mode<synchronous>, transform_indices = @transform_3, window_bounds = array<i64: 128, 128>}, {transform_indices = @transform_4, window_bounds = array<i64: 512, 128>}]} {
    %c0 = arith.constant 0 : index
    %c0_0 = arith.constant 0 : index
    %0 = vector.load %arg1[%c0, %c0_0] : memref<512x128xbf16, #tpu.memory_space<vmem>>, vector<512x128xbf16>
    %1 = arith.extf %0 : vector<512x128xbf16> to vector<512x128xf32>
    %c0_1 = arith.constant 0 : index
    %c0_2 = arith.constant 0 : index
    %2 = vector.load %arg2[%c0_1, %c0_2] : memref<1x128xf32, #tpu.memory_space<vmem>>, vector<1x128xf32>
    %3 = vector.broadcast %2 : vector<1x128xf32> to vector<512x128xf32>
    %4 = arith.mulf %1, %3 : vector<512x128xf32>
    %c0_3 = arith.constant 0 : index
    %c0_4 = arith.constant 0 : index
    %5 = vector.load %arg3[%c0_3, %c0_4] : memref<1x128xf32, #tpu.memory_space<vmem>>, vector<1x128xf32>
    %6 = vector.broadcast %5 : vector<1x128xf32> to vector<512x128xf32>
    %7 = arith.addf %4, %6 : vector<512x128xf32>
    %cst = arith.constant 0.000000e+00 : f32
    %8 = vector.broadcast %cst : f32 to vector<512x128xf32>
    %9 = arith.maximumf %7, %8 : vector<512x128xf32>
    %10 = arith.truncf %9 : vector<512x128xf32> to vector<512x128xbf16>
    %c0_5 = arith.constant 0 : index
    %c0_6 = arith.constant 0 : index
    %11 = vector.load %arg4[%c0_5, %c0_6] : memref<128x128xbf16, #tpu.memory_space<vmem>>, vector<128x128xbf16>
    %cst_7 = arith.constant dense<0.000000e+00> : vector<512x128xf32>
    %12 = tpu.matmul %10, %11, %cst_7 {dimension_numbers = #tpu.dot_dimension_numbers<[1], [0], [0], [1], [0, 0, 1, 1], [], []>} : vector<512x128xbf16>, vector<128x128xbf16>, vector<512x128xf32> -> vector<512x128xf32>
    %13 = arith.truncf %12 : vector<512x128xf32> to vector<512x128xbf16>
    %c0_8 = arith.constant 0 : index
    %c0_9 = arith.constant 0 : index
    %14 = vector.load %arg5[%c0_8, %c0_9] : memref<512x128xbf16, #tpu.memory_space<vmem>>, vector<512x128xbf16>
    tpu.vector_store %arg5[%c0_8, %c0_9], %13 {strides = array<i32>} : memref<512x128xbf16, #tpu.memory_space<vmem>>, vector<512x128xbf16>,
    return
  }
  func.func @transform_0(%arg0: i32) -> (i32, i32) {
    %c0_i32 = arith.constant 0 : i32
    %c0_i32_0 = arith.constant 0 : i32
    return %arg0, %c0_i32 : i32, i32
  }
  func.func @transform_1(%arg0: i32) -> (i32, i32) {
    %c0_i32 = arith.constant 0 : i32
    %c0_i32_0 = arith.constant 0 : i32
    %c0_i32_1 = arith.constant 0 : i32
    return %c0_i32, %c0_i32_0 : i32, i32
  }
  func.func @transform_2(%arg0: i32) -> (i32, i32) {
    %c0_i32 = arith.constant 0 : i32
    %c0_i32_0 = arith.constant 0 : i32
    %c0_i32_1 = arith.constant 0 : i32
    return %c0_i32, %c0_i32_0 : i32, i32
  }
  func.func @transform_3(%arg0: i32) -> (i32, i32) {
    %c0_i32 = arith.constant 0 : i32
    %c0_i32_0 = arith.constant 0 : i32
    %c0_i32_1 = arith.constant 0 : i32
    return %c0_i32, %c0_i32_0 : i32, i32
  }
  func.func @transform_4(%arg0: i32) -> (i32, i32) {
    %c0_i32 = arith.constant 0 : i32
    %c0_i32_0 = arith.constant 0 : i32
    return %arg0, %c0_i32 : i32, i32
  }
}

</mosaic_0001>

<llo_original>
// kernel: tile.36
$region0: #{tile.36}
  #allocation0 [shape = 's32[1]{0}', space=sflag, size = 0x4, scoped, tag = 'scoped memory for tile.36']
  %s0 = inlined_call_operand.<no memory space> [shape: f32[], index: 0, kind: input, shape index: {}]
  %s1 = inlined_call_operand.vmem [shape: f32[48], index: 1, kind: output, shape index: {}]
  %v2 = vstv %s0
  %3 = vst [vmem:[%s1] sm:$0x1] %v2

// kernel: unet_forward.10
$region0: #{unet_forward.10}
  #allocation0 [shape = 'u32[]', space=smem, size = 0x4, offset = 0x4, fixed_abs, tag = 'smem constant byte address 0x4 - core index']
  #allocation1 [shape = 'u32[144,128]{1,0:T(1,128)}', space=vmem, size = 0x12000, scoped, tag = 'internal scratch']
  %s0 = inlined_call_operand.vmem [shape: bf16[512,128], index: 0, kind: input, shape index: {}]
  %s1 = inlined_call_operand.vmem [shape: f32[1,128], index: 1, kind: input, shape index: {}]
  %s2 = inlined_call_operand.vmem [shape: f32[1,128], index: 2, kind: input, shape index: {}]
  %s3 = inlined_call_operand.vmem [shape: bf16[128,128], index: 3, kind: input, shape index: {}]
  %s4 = inlined_call_operand.vmem [shape: bf16[512,128], index: 4, kind: output, shape index: {0}]
  %s5 = inlined_call_operand.hbm [shape: f32[1,128], index: 5, kind: output, shape index: {1}]
  %s6 = inlined_call_operand.hbm [shape: f32[1,128], index: 6, kind: output, shape index: {2}]
  %7 = xla_tuple %s4, %s5, %s6
  %s8 = sld [smem:[#allocation0]]
  $region42: #{unet_forward.10} parent=0
    _
  %s10 = ssub.s32 1, %s8
  %s11 = scalar_select 0, %s10, %s8
  $region1: #{unet_forward.10} parent=0
    #allocation2 [shape = 'u8[512]{0}', space=vmem, size = 0x400, scoped, tag = 'output window, operand 1, single buffered']
    #allocation3 [shape = 's32[1]{0}', space=sflag, size = 0x4, scoped, tag = 'scoped memory for unet_forward.10']
    #allocation4 [shape = 'u8[512]{0}', space=vmem, size = 0x400, scoped, tag = 'output window, operand 2, single buffered']
    #allocation5 [shape = 's32[1]{0}', space=sflag, size = 0x4, scoped, tag = 'scoped memory for unet_forward.10']
    %12 = vsyncpa [#allocation3], 0
    %13 = vsyncpa [#allocation5], 0
    // Predicated region
    $region2: #{unet_forward.10} parent=1 // pred_check
      _
    $region3: #{unet_forward.10} parent=1 // pred_check_branch
      %15 = sbr.rel (0) target = $region5
    $region4: #{unet_forward.10} parent=1 // pred_region
      _
    $region5: #{unet_forward.10} parent=1 // pred_fallthru
      _
    // Predicated region
    $region6: #{unet_forward.10} parent=1 // pred_check
      _
    $region7: #{unet_forward.10} parent=1 // pred_check_branch
      %17 = sbr.rel (0) target = $region9
    $region8: #{unet_forward.10} parent=1 // pred_region
      _
    $region9: #{unet_forward.10} parent=1 // pred_fallthru
      _
    // Predicated region
    $region10: #{unet_forward.10} parent=1 // pred_check
      _
    $region11: #{unet_forward.10} parent=1 // pred_check_branch
      %19 = sbr.rel (0) target = $region13
    $region12: #{unet_forward.10} parent=1 // pred_region
      _
    $region13: #{unet_forward.10} parent=1 // pred_fallthru
      _
    // Predicated region
    $region14: #{unet_forward.10} parent=1 // pred_check
      _
    $region15: #{unet_forward.10} parent=1 // pred_check_branch
      %21 = sbr.rel (0) target = $region17
    $region16: #{unet_forward.10} parent=1 // pred_region
      _
    $region17: #{unet_forward.10} parent=1 // pred_fallthru
      _
    %v23 = vld [vmem:[%s0] sm:$0xf]
    %v24 = vld [vmem:[%s0 + $0x4] sm:$0xf]
    %v25 = vld [vmem:[%s0 + $0x8] sm:$0xf]
    %v26 = vld [vmem:[%s0 + $0xc] sm:$0xf]
    %v27 = vld [vmem:[%s0 + $0x10] sm:$0xf]
    %v28 = vld [vmem:[%s0 + $0x14] sm:$0xf]
    %v29 = vld [vmem:[%s0 + $0x18] sm:$0xf]
    %v30 = vld [vmem:[%s0 + $0x1c] sm:$0xf]
    %v31 = vld [vmem:[%s0 + $0x20] sm:$0xf]
    %v32 = vld [vmem:[%s0 + $0x24] sm:$0xf]
    %v33 = vld [vmem:[%s0 + $0x28] sm:$0xf]
    %v34 = vld [vmem:[%s0 + $0x2c] sm:$0xf]
    %v35 = vld [vmem:[%s0 + $0x30] sm:$0xf]
    %v36 = vld [vmem:[%s0 + $0x34] sm:$0xf]
    %v37 = vld [vmem:[%s0 + $0x38] sm:$0xf]
    %v38 = vld [vmem:[%s0 + $0x3c] sm:$0xf]
    %v39 = vld [vmem:[%s0 + $0x40] sm:$0xf]
    %v40 = vld [vmem:[%s0 + $0x44] sm:$0xf]
    %v41 = vld [vmem:[%s0 + $0x48] sm:$0xf]
    %v42 = vld [vmem:[%s0 + $0x4c] sm:$0xf]
    %v43 = vld [vmem:[%s0 + $0x50] sm:$0xf]
    %v44 = vld [vmem:[%s0 + $0x54] sm:$0xf]
    %v45 = vld [vmem:[%s0 + $0x58] sm:$0xf]
    %v46 = vld [vmem:[%s0 + $0x5c] sm:$0xf]
    %v47 = vld [vmem:[%s0 + $0x60] sm:$0xf]
    %v48 = vld [vmem:[%s0 + $0x64] sm:$0xf]
    %v49 = vld [vmem:[%s0 + $0x68] sm:$0xf]
    %v50 = vld [vmem:[%s0 + $0x6c] sm:$0xf]
    %v51 = vld [vmem:[%s0 + $0x70] sm:$0xf]
    %v52 = vld [vmem:[%s0 + $0x74] sm:$0xf]
    %v53 = vld [vmem:[%s0 + $0x78] sm:$0xf]
    %v54 = vld [vmem:[%s0 + $0x7c] sm:$0xf]
    %v55 = vld [vmem:[%s0 + $0x80] sm:$0xf]
    %v56 = vld [vmem:[%s0 + $0x84] sm:$0xf]
    %v57 = vld [vmem:[%s0 + $0x88] sm:$0xf]
    %v58 = vld [vmem:[%s0 + $0x8c] sm:$0xf]
    %v59 = vld [vmem:[%s0 + $0x90] sm:$0xf]
    %v60 = vld [vmem:[%s0 + $0x94] sm:$0xf]
    %v61 = vld [vmem:[%s0 + $0x98] sm:$0xf]
    %v62 = vld [vmem:[%s0 + $0x9c] sm:$0xf]
    %v63 = vld [vmem:[%s0 + $0xa0] sm:$0xf]
    %v64 = vld [vmem:[%s0 + $0xa4] sm:$0xf]
    %v65 = vld [vmem:[%s0 + $0xa8] sm:$0xf]
    %v66 = vld [vmem:[%s0 + $0xac] sm:$0xf]
    %v67 = vld [vmem:[%s0 + $0xb0] sm:$0xf]
    %v68 = vld [vmem:[%s0 + $0xb4] sm:$0xf]
    %v69 = vld [vmem:[%s0 + $0xb8] sm:$0xf]
    %v70 = vld [vmem:[%s0 + $0xbc] sm:$0xf]
    %v71 = vld [vmem:[%s0 + $0xc0] sm:$0xf]
    %v72 = vld [vmem:[%s0 + $0xc4] sm:$0xf]
    %v73 = vld [vmem:[%s0 + $0xc8] sm:$0xf]
    %v74 = vld [vmem:[%s0 + $0xcc] sm:$0xf]
    %v75 = vld [vmem:[%s0 + $0xd0] sm:$0xf]
    %v76 = vld [vmem:[%s0 + $0xd4] sm:$0xf]
    %v77 = vld [vmem:[%s0 + $0xd8] sm:$0xf]
    %v78 = vld [vmem:[%s0 + $0xdc] sm:$0xf]
    %v79 = vld [vmem:[%s0 + $0xe0] sm:$0xf]
    %v80 = vld [vmem:[%s0 + $0xe4] sm:$0xf]
    %v81 = vld [vmem:[%s0 + $0xe8] sm:$0xf]
    %v82 = vld [vmem:[%s0 + $0xec] sm:$0xf]
    %v83 = vld [vmem:[%s0 + $0xf0] sm:$0xf]
    %v84 = vld [vmem:[%s0 + $0xf4] sm:$0xf]
    %v85 = vld [vmem:[%s0 + $0xf8] sm:$0xf]
    %v86 = vld [vmem:[%s0 + $0xfc] sm:$0xf]
    %v87 = vunpack.c.l.bf16 %v23
    %v88 = vunpack.c.l.bf16 %v24
    %v89 = vunpack.c.l.bf16 %v25
    %v90 = vunpack.c.l.bf16 %v26
    %v91 = vunpack.c.l.bf16 %v27
    %v92 = vunpack.c.l.bf16 %v28
    %v93 = vunpack.c.l.bf16 %v29
    %v94 = vunpack.c.l.bf16 %v30
    %v95 = vunpack.c.l.bf16 %v31
    %v96 = vunpack.c.l.bf16 %v32
    %v97 = vunpack.c.l.bf16 %v33
    %v98 = vunpack.c.l.bf16 %v34
    %v99 = vunpack.c.l.bf16 %v35
    %v100 = vunpack.c.l.bf16 %v36
    %v101 = vunpack.c.l.bf16 %v37
    %v102 = vunpack.c.l.bf16 %v38
    %v103 = vunpack.c.l.bf16 %v39
    %v104 = vunpack.c.l.bf16 %v40
    %v105 = vunpack.c.l.bf16 %v41
    %v106 = vunpack.c.l.bf16 %v42
    %v107 = vunpack.c.l.bf16 %v43
    %v108 = vunpack.c.l.bf16 %v44
    %v109 = vunpack.c.l.bf16 %v45
    %v110 = vunpack.c.l.bf16 %v46
    %v111 = vunpack.c.l.bf16 %v47
    %v112 = vunpack.c.l.bf16 %v48
    %v113 = vunpack.c.l.bf16 %v49
    %v114 = vunpack.c.l.bf16 %v50
    %v115 = vunpack.c.l.bf16 %v51
    %v116 = vunpack.c.l.bf16 %v52
    %v117 = vunpack.c.l.bf16 %v53
    %v118 = vunpack.c.l.bf16 %v54
    %v119 = vunpack.c.l.bf16 %v55
    %v120 = vunpack.c.l.bf16 %v56
    %v121 = vunpack.c.l.bf16 %v57
    %v122 = vunpack.c.l.bf16 %v58
    %v123 = vunpack.c.l.bf16 %v59
    %v124 = vunpack.c.l.bf16 %v60
    %v125 = vunpack.c.l.bf16 %v61
    %v126 = vunpack.c.l.bf16 %v62
    %v127 = vunpack.c.l.bf16 %v63
    %v128 = vunpack.c.l.bf16 %v64
    %v129 = vunpack.c.l.bf16 %v65
    %v130 = vunpack.c.l.bf16 %v66
    %v131 = vunpack.c.l.bf16 %v67
    %v132 = vunpack.c.l.bf16 %v68
    %v133 = vunpack.c.l.bf16 %v69
    %v134 = vunpack.c.l.bf16 %v70
    %v135 = vunpack.c.l.bf16 %v71
    %v136 = vunpack.c.l.bf16 %v72
    %v137 = vunpack.c.l.bf16 %v73
    %v138 = vunpack.c.l.bf16 %v74
    %v139 = vunpack.c.l.bf16 %v75
    %v140 = vunpack.c.l.bf16 %v76
    %v141 = vunpack.c.l.bf16 %v77
    %v142 = vunpack.c.l.bf16 %v78
    %v143 = vunpack.c.l.bf16 %v79
    %v144 = vunpack.c.l.bf16 %v80
    %v145 = vunpack.c.l.bf16 %v81
    %v146 = vunpack.c.l.bf16 %v82
    %v147 = vunpack.c.l.bf16 %v83
    %v148 = vunpack.c.l.bf16 %v84
    %v149 = vunpack.c.l.bf16 %v85
    %v150 = vunpack.c.l.bf16 %v86
    %v151 = vld [vmem:[%s1] sm:$0x1]
    %v153 = vlaneseq
    %v154 = vshrl.u32 %v153, 7
    %v155 = vsub.s32 0, %v154
    %v156 = vrot.slane %v151, %v155
    %v158 = vmul.f32 %v87, %v156
    %v159 = vmul.f32 %v88, %v156
    %v160 = vmul.f32 %v89, %v156
    %v161 = vmul.f32 %v90, %v156
    %v162 = vmul.f32 %v91, %v156
    %v163 = vmul.f32 %v92, %v156
    %v164 = vmul.f32 %v93, %v156
    %v165 = vmul.f32 %v94, %v156
    %v166 = vmul.f32 %v95, %v156
    %v167 = vmul.f32 %v96, %v156
    %v168 = vmul.f32 %v97, %v156
    %v169 = vmul.f32 %v98, %v156
    %v170 = vmul.f32 %v99, %v156
    %v171 = vmul.f32 %v100, %v156
    %v172 = vmul.f32 %v101, %v156
    %v173 = vmul.f32 %v102, %v156
    %v174 = vmul.f32 %v103, %v156
    %v175 = vmul.f32 %v104, %v156
    %v176 = vmul.f32 %v105, %v156
    %v177 = vmul.f32 %v106, %v156
    %v178 = vmul.f32 %v107, %v156
    %v179 = vmul.f32 %v108, %v156
    %v180 = vmul.f32 %v109, %v156
    %v181 = vmul.f32 %v110, %v156
    %v182 = vmul.f32 %v111, %v156
    %v183 = vmul.f32 %v112, %v156
    %v184 = vmul.f32 %v113, %v156
    %v185 = vmul.f32 %v114, %v156
    %v186 = vmul.f32 %v115, %v156
    %v187 = vmul.f32 %v116, %v156
    %v188 = vmul.f32 %v117, %v156
    %v189 = vmul.f32 %v118, %v156
    %v190 = vmul.f32 %v119, %v156
    %v191 = vmul.f32 %v120, %v156
    %v192 = vmul.f32 %v121, %v156
    %v193 = vmul.f32 %v122, %v156
    %v194 = vmul.f32 %v123, %v156
    %v195 = vmul.f32 %v124, %v156
    %v196 = vmul.f32 %v125, %v156
    %v197 = vmul.f32 %v126, %v156
    %v198 = vmul.f32 %v127, %v156
    %v199 = vmul.f32 %v128, %v156
    %v200 = vmul.f32 %v129, %v156
    %v201 = vmul.f32 %v130, %v156
    %v202 = vmul.f32 %v131, %v156
    %v203 = vmul.f32 %v132, %v156
    %v204 = vmul.f32 %v133, %v156
    %v205 = vmul.f32 %v134, %v156
    %v206 = vmul.f32 %v135, %v156
    %v207 = vmul.f32 %v136, %v156
    %v208 = vmul.f32 %v137, %v156
    %v209 = vmul.f32 %v138, %v156
    %v210 = vmul.f32 %v139, %v156
    %v211 = vmul.f32 %v140, %v156
    %v212 = vmul.f32 %v141, %v156
    %v213 = vmul.f32 %v142, %v156
    %v214 = vmul.f32 %v143, %v156
    %v215 = vmul.f32 %v144, %v156
    %v216 = vmul.f32 %v145, %v156
    %v217 = vmul.f32 %v146, %v156
    %v218 = vmul.f32 %v147, %v156
    %v219 = vmul.f32 %v148, %v156
    %v220 = vmul.f32 %v149, %v156
    %v221 = vmul.f32 %v150, %v156
    %v222 = vld [vmem:[%s2] sm:$0x1]
    %v224 = vlaneseq
    %v225 = vshrl.u32 %v224, 7
    %v226 = vsub.s32 0, %v225
    %v227 = vrot.slane %v222, %v226
    %v229 = vadd.f32 %v158, %v227
    %v230 = vadd.f32 %v159, %v227
    %v231 = vadd.f32 %v160, %v227
    %v232 = vadd.f32 %v161, %v227
    %v233 = vadd.f32 %v162, %v227
    %v234 = vadd.f32 %v163, %v227
    %v235 = vadd.f32 %v164, %v227
    %v236 = vadd.f32 %v165, %v227
    %v237 = vadd.f32 %v166, %v227
    %v238 = vadd.f32 %v167, %v227
    %v239 = vadd.f32 %v168, %v227
    %v240 = vadd.f32 %v169, %v227
    %v241 = vadd.f32 %v170, %v227
    %v242 = vadd.f32 %v171, %v227
    %v243 = vadd.f32 %v172, %v227
    %v244 = vadd.f32 %v173, %v227
    %v245 = vadd.f32 %v174, %v227
    %v246 = vadd.f32 %v175, %v227
    %v247 = vadd.f32 %v176, %v227
    %v248 = vadd.f32 %v177, %v227
    %v249 = vadd.f32 %v178, %v227
    %v250 = vadd.f32 %v179, %v227
    %v251 = vadd.f32 %v180, %v227
    %v252 = vadd.f32 %v181, %v227
    %v253 = vadd.f32 %v182, %v227
    %v254 = vadd.f32 %v183, %v227
    %v255 = vadd.f32 %v184, %v227
    %v256 = vadd.f32 %v185, %v227
    %v257 = vadd.f32 %v186, %v227
    %v258 = vadd.f32 %v187, %v227
    %v259 = vadd.f32 %v188, %v227
    %v260 = vadd.f32 %v189, %v227
    %v261 = vadd.f32 %v190, %v227
    %v262 = vadd.f32 %v191, %v227
    %v263 = vadd.f32 %v192, %v227
    %v264 = vadd.f32 %v193, %v227
    %v265 = vadd.f32 %v194, %v227
    %v266 = vadd.f32 %v195, %v227
    %v267 = vadd.f32 %v196, %v227
    %v268 = vadd.f32 %v197, %v227
    %v269 = vadd.f32 %v198, %v227
    %v270 = vadd.f32 %v199, %v227
    %v271 = vadd.f32 %v200, %v227
    %v272 = vadd.f32 %v201, %v227
    %v273 = vadd.f32 %v202, %v227
    %v274 = vadd.f32 %v203, %v227
    %v275 = vadd.f32 %v204, %v227
    %v276 = vadd.f32 %v205, %v227
    %v277 = vadd.f32 %v206, %v227
    %v278 = vadd.f32 %v207, %v227
    %v279 = vadd.f32 %v208, %v227
    %v280 = vadd.f32 %v209, %v227
    %v281 = vadd.f32 %v210, %v227
    %v282 = vadd.f32 %v211, %v227
    %v283 = vadd.f32 %v212, %v227
    %v284 = vadd.f32 %v213, %v227
    %v285 = vadd.f32 %v214, %v227
    %v286 = vadd.f32 %v215, %v227
    %v287 = vadd.f32 %v216, %v227
    %v288 = vadd.f32 %v217, %v227
    %v289 = vadd.f32 %v218, %v227
    %v290 = vadd.f32 %v219, %v227
    %v291 = vadd.f32 %v220, %v227
    %v292 = vadd.f32 %v221, %v227
    %v293 = vpack.c.bf16 %v230, %v229
    %v294 = vpack.c.bf16 %v232, %v231
    %v295 = vpack.c.bf16 %v234, %v233
    %v296 = vpack.c.bf16 %v236, %v235
    %v297 = vpack.c.bf16 %v238, %v237
    %v298 = vpack.c.bf16 %v240, %v239
    %v299 = vpack.c.bf16 %v242, %v241
    %v300 = vpack.c.bf16 %v244, %v243
    %v301 = vpack.c.bf16 %v246, %v245
    %v302 = vpack.c.bf16 %v248, %v247
    %v303 = vpack.c.bf16 %v250, %v249
    %v304 = vpack.c.bf16 %v252, %v251
    %v305 = vpack.c.bf16 %v254, %v253
    %v306 = vpack.c.bf16 %v256, %v255
    %v307 = vpack.c.bf16 %v258, %v257
    %v308 = vpack.c.bf16 %v260, %v259
    %v309 = vpack.c.bf16 %v262, %v261
    %v310 = vpack.c.bf16 %v264, %v263
    %v311 = vpack.c.bf16 %v266, %v265
    %v312 = vpack.c.bf16 %v268, %v267
    %v313 = vpack.c.bf16 %v270, %v269
    %v314 = vpack.c.bf16 %v272, %v271
    %v315 = vpack.c.bf16 %v274, %v273
    %v316 = vpack.c.bf16 %v276, %v275
    %v317 = vpack.c.bf16 %v278, %v277
    %v318 = vpack.c.bf16 %v280, %v279
    %v319 = vpack.c.bf16 %v282, %v281
    %v320 = vpack.c.bf16 %v284, %v283
    %v321 = vpack.c.bf16 %v286, %v285
    %v322 = vpack.c.bf16 %v288, %v287
    %v323 = vpack.c.bf16 %v290, %v289
    %v324 = vpack.c.bf16 %v292, %v291
    %v325 = vld [vmem:[%s3] sm:$0xf]
    %v326 = vld [vmem:[%s3 + $0x4] sm:$0xf]
    %v327 = vld [vmem:[%s3 + $0x8] sm:$0xf]
    %v328 = vld [vmem:[%s3 + $0xc] sm:$0xf]
    %v329 = vld [vmem:[%s3 + $0x10] sm:$0xf]
    %v330 = vld [vmem:[%s3 + $0x14] sm:$0xf]
    %v331 = vld [vmem:[%s3 + $0x18] sm:$0xf]
    %v332 = vld [vmem:[%s3 + $0x1c] sm:$0xf]
    %v333 = vld [vmem:[%s3 + $0x20] sm:$0xf]
    %v334 = vld [vmem:[%s3 + $0x24] sm:$0xf]
    %v335 = vld [vmem:[%s3 + $0x28] sm:$0xf]
    %v336 = vld [vmem:[%s3 + $0x2c] sm:$0xf]
    %v337 = vld [vmem:[%s3 + $0x30] sm:$0xf]
    %v338 = vld [vmem:[%s3 + $0x34] sm:$0xf]
    %v339 = vld [vmem:[%s3 + $0x38] sm:$0xf]
    %v340 = vld [vmem:[%s3 + $0x3c] sm:$0xf]
    %v357 = vunpack.c.l.b16 %v325
    %v358 = vunpack.c.l.b16 %v326
    %v359 = vunpack.c.l.b16 %v327
    %v360 = vunpack.c.l.b16 %v328
    %v361 = vunpack.c.l.b16 %v329
    %v362 = vunpack.c.l.b16 %v330
    %v363 = vunpack.c.l.b16 %v331
    %v364 = vunpack.c.l.b16 %v332
    %v365 = vunpack.c.l.b16 %v333
    %v366 = vunpack.c.l.b16 %v334
    %v367 = vunpack.c.l.b16 %v335
    %v368 = vunpack.c.l.b16 %v336
    %v369 = vunpack.c.l.b16 %v337
    %v370 = vunpack.c.l.b16 %v338
    %v371 = vunpack.c.l.b16 %v339
    %v372 = vunpack.c.l.b16 %v340
    %v373 = vpack.c.b16 %v358, %v357
    %v374 = vpack.c.b16 %v360, %v359
    %v375 = vpack.c.b16 %v362, %v361
    %v376 = vpack.c.b16 %v364, %v363
    %v377 = vpack.c.b16 %v366, %v365
    %v378 = vpack.c.b16 %v368, %v367
    %v379 = vpack.c.b16 %v370, %v369
    %v380 = vpack.c.b16 %v372, %v371
    %389 = vmatprep.subr.bf16.mxu0 0
    %390 = vmatpush1.bf16.msra.mxu0 %v373
    %391 = vmatprep.subr.bf16.mxu0 0
    %392 = vmatpush1.bf16.msra.mxu0 %v374
    %393 = vmatprep.subr.bf16.mxu0 0
    %394 = vmatpush1.bf16.msra.mxu0 %v375
    %395 = vmatprep.subr.bf16.mxu0 0
    %396 = vmatpush1.bf16.msra.mxu0 %v376
    %397 = vmatprep.subr.bf16.mxu0 0
    %398 = vmatpush1.bf16.msra.mxu0 %v377
    %399 = vmatprep.subr.bf16.mxu0 0
    %400 = vmatpush1.bf16.msra.mxu0 %v378
    %401 = vmatprep.subr.bf16.mxu0 0
    %402 = vmatpush1.bf16.msra.mxu0 %v379
    %403 = vmatprep.subr.bf16.mxu0 0
    %404 = vmatpush1.bf16.msra.mxu0 %v380
    %405 = vmatprep.subr.bf16.mxu0 0
    %406 = vmatpush1.bf16.msra.mxu0 0
    %407 = vmatprep.subr.bf16.mxu0 0
    %408 = vmatpush1.bf16.msra.mxu0 0
    %409 = vmatprep.subr.bf16.mxu0 0
    %410 = vmatpush1.bf16.msra.mxu0 0
    %411 = vmatprep.subr.bf16.mxu0 0
    %412 = vmatpush1.bf16.msra.mxu0 0
    %413 = vmatprep.subr.bf16.mxu0 0
    %414 = vmatpush1.bf16.msra.mxu0 0
    %415 = vmatprep.subr.bf16.mxu0 0
    %416 = vmatpush1.bf16.msra.mxu0 0
    %417 = vmatprep.subr.bf16.mxu0 0
    %418 = vmatpush1.bf16.msra.mxu0 0
    %419 = vmatprep.subr.bf16.mxu0 0
    %420 = vmatpush1.bf16.msra.mxu0 0
    %421 = vmatprep.mubr.bf16.mxu0 0
    %422 = vmatmul.mubr.bf16.gmra.mrb[0].mxu0 %v293
    %v423 = vpop.f32.mrb[0].mxu0
    %v424 = vadd.f32 0.0, %v423
    %v425 = vpop.f32.mrb[0].mxu0
    %v426 = vpop.f32.mrb[0].mxu0
    %v427 = vadd.f32 0.0, %v426
    %v428 = vpop.f32.mrb[0].mxu0
    %429 = vmatprep.mubr.bf16.mxu0 0
    %430 = vmatmul.mubr.bf16.gmra.mrb[0].mxu0 %v294
    %v431 = vpop.f32.mrb[0].mxu0
    %v432 = vadd.f32 0.0, %v431
    %v433 = vpop.f32.mrb[0].mxu0
    %v434 = vpop.f32.mrb[0].mxu0
    %v435 = vadd.f32 0.0, %v434
    %v436 = vpop.f32.mrb[0].mxu0
    %437 = vmatprep.mubr.bf16.mxu0 0
    %438 = vmatmul.mubr.bf16.gmra.mrb[0].mxu0 %v295
    %v439 = vpop.f32.mrb[0].mxu0
    %v440 = vadd.f32 0.0, %v439
    %v441 = vpop.f32.mrb[0].mxu0
    %v442 = vpop.f32.mrb[0].mxu0
    %v443 = vadd.f32 0.0, %v442
    %v444 = vpop.f32.mrb[0].mxu0
    %445 = vmatprep.mubr.bf16.mxu0 0
    %446 = vmatmul.mubr.bf16.gmra.mrb[0].mxu0 %v296
    %v447 = vpop.f32.mrb[0].mxu0
    %v448 = vadd.f32 0.0, %v447
    %v449 = vpop.f32.mrb[0].mxu0
    %v450 = vpop.f32.mrb[0].mxu0
    %v451 = vadd.f32 0.0, %v450
    %v452 = vpop.f32.mrb[0].mxu0
    %453 = vmatprep.mubr.bf16.mxu0 0
    %454 = vmatmul.mubr.bf16.gmra.mrb[0].mxu0 %v297
    %v455 = vpop.f32.mrb[0].mxu0
    %v456 = vadd.f32 0.0, %v455
    %v457 = vpop.f32.mrb[0].mxu0
    %v458 = vpop.f32.mrb[0].mxu0
    %v459 = vadd.f32 0.0, %v458
    %v460 = vpop.f32.mrb[0].mxu0
    %461 = vmatprep.mubr.bf16.mxu0 0
    %462 = vmatmul.mubr.bf16.gmra.mrb[0].mxu0 %v298
    %v463 = vpop.f32.mrb[0].mxu0
    %v464 = vadd.f32 0.0, %v463
    %v465 = vpop.f32.mrb[0].mxu0
    %v466 = vpop.f32.mrb[0].mxu0
    %v467 = vadd.f32 0.0, %v466
    %v468 = vpop.f32.mrb[0].mxu0
    %469 = vmatprep.mubr.bf16.mxu0 0
    %470 = vmatmul.mubr.bf16.gmra.mrb[0].mxu0 %v299
    %v471 = vpop.f32.mrb[0].mxu0
    %v472 = vadd.f32 0.0, %v471
    %v473 = vpop.f32.mrb[0].mxu0
    %v474 = vpop.f32.mrb[0].mxu0
    %v475 = vadd.f32 0.0, %v474
    %v476 = vpop.f32.mrb[0].mxu0
    %477 = vmatprep.mubr.bf16.mxu0 0
    %478 = vmatmul.mubr.bf16.gmra.mrb[0].mxu0 %v300
    %v479 = vpop.f32.mrb[0].mxu0
    %v480 = vadd.f32 0.0, %v479
    %v481 = vpop.f32.mrb[0].mxu0
    %v482 = vpop.f32.mrb[0].mxu0
    %v483 = vadd.f32 0.0, %v482
    %v484 = vpop.f32.mrb[0].mxu0
    %485 = vmatprep.mubr.bf16.mxu0 0
    %486 = vmatmul.mubr.bf16.gmra.mrb[0].mxu0 %v301
    %v487 = vpop.f32.mrb[0].mxu0
    %v488 = vadd.f32 0.0, %v487
    %v489 = vpop.f32.mrb[0].mxu0
    %v490 = vpop.f32.mrb[0].mxu0
    %v491 = vadd.f32 0.0, %v490
    %v492 = vpop.f32.mrb[0].mxu0
    %493 = vmatprep.mubr.bf16.mxu0 0
    %494 = vmatmul.mubr.bf16.gmra.mrb[0].mxu0 %v302
    %v495 = vpop.f32.mrb[0].mxu0
    %v496 = vadd.f32 0.0, %v495
    %v497 = vpop.f32.mrb[0].mxu0
    %v498 = vpop.f32.mrb[0].mxu0
    %v499 = vadd.f32 0.0, %v498
    %v500 = vpop.f32.mrb[0].mxu0
    %501 = vmatprep.mubr.bf16.mxu0 0
    %502 = vmatmul.mubr.bf16.gmra.mrb[0].mxu0 %v303
    %v503 = vpop.f32.mrb[0].mxu0
    %v504 = vadd.f32 0.0, %v503
    %v505 = vpop.f32.mrb[0].mxu0
    %v506 = vpop.f32.mrb[0].mxu0
    %v507 = vadd.f32 0.0, %v506
    %v508 = vpop.f32.mrb[0].mxu0
    %509 = vmatprep.mubr.bf16.mxu0 0
    %510 = vmatmul.mubr.bf16.gmra.mrb[0].mxu0 %v304
    %v511 = vpop.f32.mrb[0].mxu0
    %v512 = vadd.f32 0.0, %v511
    %v513 = vpop.f32.mrb[0].mxu0
    %v514 = vpop.f32.mrb[0].mxu0
    %v515 = vadd.f32 0.0, %v514
    %v516 = vpop.f32.mrb[0].mxu0
    %517 = vmatprep.mubr.bf16.mxu0 0
    %518 = vmatmul.mubr.bf16.gmra.mrb[0].mxu0 %v305
    %v519 = vpop.f32.mrb[0].mxu0
    %v520 = vadd.f32 0.0, %v519
    %v521 = vpop.f32.mrb[0].mxu0
    %v522 = vpop.f32.mrb[0].mxu0
    %v523 = vadd.f32 0.0, %v522
    %v524 = vpop.f32.mrb[0].mxu0
    %525 = vmatprep.mubr.bf16.mxu0 0
    %526 = vmatmul.mubr.bf16.gmra.mrb[0].mxu0 %v306
    %v527 = vpop.f32.mrb[0].mxu0
    %v528 = vadd.f32 0.0, %v527
    %v529 = vpop.f32.mrb[0].mxu0
    %v530 = vpop.f32.mrb[0].mxu0
    %v531 = vadd.f32 0.0, %v530
    %v532 = vpop.f32.mrb[0].mxu0
    %533 = vmatprep.mubr.bf16.mxu0 0
    %534 = vmatmul.mubr.bf16.gmra.mrb[0].mxu0 %v307
    %v535 = vpop.f32.mrb[0].mxu0
    %v536 = vadd.f32 0.0, %v535
    %v537 = vpop.f32.mrb[0].mxu0
    %v538 = vpop.f32.mrb[0].mxu0
    %v539 = vadd.f32 0.0, %v538
    %v540 = vpop.f32.mrb[0].mxu0
    %541 = vmatprep.mubr.bf16.mxu0 0
    %542 = vmatmul.mubr.bf16.gmra.mrb[0].mxu0 %v308
    %v543 = vpop.f32.mrb[0].mxu0
    %v544 = vadd.f32 0.0, %v543
    %v545 = vpop.f32.mrb[0].mxu0
    %v546 = vpop.f32.mrb[0].mxu0
    %v547 = vadd.f32 0.0, %v546
    %v548 = vpop.f32.mrb[0].mxu0
    %549 = vmatprep.mubr.bf16.mxu0 0
    %550 = vmatmul.mubr.bf16.gmra.mrb[0].mxu0 %v309
    %v551 = vpop.f32.mrb[0].mxu0
    %v552 = vadd.f32 0.0, %v551
    %v553 = vpop.f32.mrb[0].mxu0
    %v554 = vpop.f32.mrb[0].mxu0
    %v555 = vadd.f32 0.0, %v554
    %v556 = vpop.f32.mrb[0].mxu0
    %557 = vmatprep.mubr.bf16.mxu0 0
    %558 = vmatmul.mubr.bf16.gmra.mrb[0].mxu0 %v310
    %v559 = vpop.f32.mrb[0].mxu0
    %v560 = vadd.f32 0.0, %v559
    %v561 = vpop.f32.mrb[0].mxu0
    %v562 = vpop.f32.mrb[0].mxu0
    %v563 = vadd.f32 0.0, %v562
    %v564 = vpop.f32.mrb[0].mxu0
    %565 = vmatprep.mubr.bf16.mxu0 0
    %566 = vmatmul.mubr.bf16.gmra.mrb[0].mxu0 %v311
    %v567 = vpop.f32.mrb[0].mxu0
    %v568 = vadd.f32 0.0, %v567
    %v569 = vpop.f32.mrb[0].mxu0
    %v570 = vpop.f32.mrb[0].mxu0
    %v571 = vadd.f32 0.0, %v570
    %v572 = vpop.f32.mrb[0].mxu0
    %573 = vmatprep.mubr.bf16.mxu0 0
    %574 = vmatmul.mubr.bf16.gmra.mrb[0].mxu0 %v312
    %v575 = vpop.f32.mrb[0].mxu0
    %v576 = vadd.f32 0.0, %v575
    %v577 = vpop.f32.mrb[0].mxu0
    %v578 = vpop.f32.mrb[0].mxu0
    %v579 = vadd.f32 0.0, %v578
    %v580 = vpop.f32.mrb[0].mxu0
    %581 = vmatprep.mubr.bf16.mxu0 0
    %582 = vmatmul.mubr.bf16.gmra.mrb[0].mxu0 %v313
    %v583 = vpop.f32.mrb[0].mxu0
    %v584 = vadd.f32 0.0, %v583
    %v585 = vpop.f32.mrb[0].mxu0
    %v586 = vpop.f32.mrb[0].mxu0
    %v587 = vadd.f32 0.0, %v586
    %v588 = vpop.f32.mrb[0].mxu0
    %589 = vmatprep.mubr.bf16.mxu0 0
    %590 = vmatmul.mubr.bf16.gmra.mrb[0].mxu0 %v314
    %v591 = vpop.f32.mrb[0].mxu0
    %v592 = vadd.f32 0.0, %v591
    %v593 = vpop.f32.mrb[0].mxu0
    %v594 = vpop.f32.mrb[0].mxu0
    %v595 = vadd.f32 0.0, %v594
    %v596 = vpop.f32.mrb[0].mxu0
    %597 = vmatprep.mubr.bf16.mxu0 0
    %598 = vmatmul.mubr.bf16.gmra.mrb[0].mxu0 %v315
    %v599 = vpop.f32.mrb[0].mxu0
    %v600 = vadd.f32 0.0, %v599
    %v601 = vpop.f32.mrb[0].mxu0
    %v602 = vpop.f32.mrb[0].mxu0
    %v603 = vadd.f32 0.0, %v602
    %v604 = vpop.f32.mrb[0].mxu0
    %605 = vmatprep.mubr.bf16.mxu0 0
    %606 = vmatmul.mubr.bf16.gmra.mrb[0].mxu0 %v316
    %v607 = vpop.f32.mrb[0].mxu0
    %v608 = vadd.f32 0.0, %v607
    %v609 = vpop.f32.mrb[0].mxu0
    %v610 = vpop.f32.mrb[0].mxu0
    %v611 = vadd.f32 0.0, %v610
    %v612 = vpop.f32.mrb[0].mxu0
    %613 = vmatprep.mubr.bf16.mxu0 0
    %614 = vmatmul.mubr.bf16.gmra.mrb[0].mxu0 %v317
    %v615 = vpop.f32.mrb[0].mxu0
    %v616 = vadd.f32 0.0, %v615
    %v617 = vpop.f32.mrb[0].mxu0
    %v618 = vpop.f32.mrb[0].mxu0
    %v619 = vadd.f32 0.0, %v618
    %v620 = vpop.f32.mrb[0].mxu0
    %621 = vmatprep.mubr.bf16.mxu0 0
    %622 = vmatmul.mubr.bf16.gmra.mrb[0].mxu0 %v318
    %v623 = vpop.f32.mrb[0].mxu0
    %v624 = vadd.f32 0.0, %v623
    %v625 = vpop.f32.mrb[0].mxu0
    %v626 = vpop.f32.mrb[0].mxu0
    %v627 = vadd.f32 0.0, %v626
    %v628 = vpop.f32.mrb[0].mxu0
    %629 = vmatprep.mubr.bf16.mxu0 0
    %630 = vmatmul.mubr.bf16.gmra.mrb[0].mxu0 %v319
    %v631 = vpop.f32.mrb[0].mxu0
    %v632 = vadd.f32 0.0, %v631
    %v633 = vpop.f32.mrb[0].mxu0
    %v634 = vpop.f32.mrb[0].mxu0
    %v635 = vadd.f32 0.0, %v634
    %v636 = vpop.f32.mrb[0].mxu0
    %637 = vmatprep.mubr.bf16.mxu0 0
    %638 = vmatmul.mubr.bf16.gmra.mrb[0].mxu0 %v320
    %v639 = vpop.f32.mrb[0].mxu0
    %v640 = vadd.f32 0.0, %v639
    %v641 = vpop.f32.mrb[0].mxu0
    %v642 = vpop.f32.mrb[0].mxu0
    %v643 = vadd.f32 0.0, %v642
    %v644 = vpop.f32.mrb[0].mxu0
    %645 = vmatprep.mubr.bf16.mxu0 0
    %646 = vmatmul.mubr.bf16.gmra.mrb[0].mxu0 %v321
    %v647 = vpop.f32.mrb[0].mxu0
    %v648 = vadd.f32 0.0, %v647
    %v649 = vpop.f32.mrb[0].mxu0
    %v650 = vpop.f32.mrb[0].mxu0
    %v651 = vadd.f32 0.0, %v650
    %v652 = vpop.f32.mrb[0].mxu0
    %653 = vmatprep.mubr.bf16.mxu0 0
    %654 = vmatmul.mubr.bf16.gmra.mrb[0].mxu0 %v322
    %v655 = vpop.f32.mrb[0].mxu0
    %v656 = vadd.f32 0.0, %v655
    %v657 = vpop.f32.mrb[0].mxu0
    %v658 = vpop.f32.mrb[0].mxu0
    %v659 = vadd.f32 0.0, %v658
    %v660 = vpop.f32.mrb[0].mxu0
    %661 = vmatprep.mubr.bf16.mxu0 0
    %662 = vmatmul.mubr.bf16.gmra.mrb[0].mxu0 %v323
    %v663 = vpop.f32.mrb[0].mxu0
    %v664 = vadd.f32 0.0, %v663
    %v665 = vpop.f32.mrb[0].mxu0
    %v666 = vpop.f32.mrb[0].mxu0
    %v667 = vadd.f32 0.0, %v666
    %v668 = vpop.f32.mrb[0].mxu0
    %669 = vmatprep.mubr.bf16.mxu0 0
    %670 = vmatmul.mubr.bf16.gmra.mrb[0].mxu0 %v324
    %v671 = vpop.f32.mrb[0].mxu0
    %v672 = vadd.f32 0.0, %v671
    %v673 = vpop.f32.mrb[0].mxu0
    %v674 = vpop.f32.mrb[0].mxu0
    %v675 = vadd.f32 0.0, %v674
    %v676 = vpop.f32.mrb[0].mxu0
    %677 = vdwg.mxu0
    %v678 = vpack.c.bf16 %v427, %v424
    %v679 = vpack.c.bf16 %v435, %v432
    %v680 = vpack.c.bf16 %v443, %v440
    %v681 = vpack.c.bf16 %v451, %v448
    %v682 = vpack.c.bf16 %v459, %v456
    %v683 = vpack.c.bf16 %v467, %v464
    %v684 = vpack.c.bf16 %v475, %v472
    %v685 = vpack.c.bf16 %v483, %v480
    %v686 = vpack.c.bf16 %v491, %v488
    %v687 = vpack.c.bf16 %v499, %v496
    %v688 = vpack.c.bf16 %v507, %v504
    %v689 = vpack.c.bf16 %v515, %v512
    %v690 = vpack.c.bf16 %v523, %v520
    %v691 = vpack.c.bf16 %v531, %v528
    %v692 = vpack.c.bf16 %v539, %v536
    %v693 = vpack.c.bf16 %v547, %v544
    %v694 = vpack.c.bf16 %v555, %v552
    %v695 = vpack.c.bf16 %v563, %v560
    %v696 = vpack.c.bf16 %v571, %v568
    %v697 = vpack.c.bf16 %v579, %v576
    %v698 = vpack.c.bf16 %v587, %v584
    %v699 = vpack.c.bf16 %v595, %v592
    %v700 = vpack.c.bf16 %v603, %v600
    %v701 = vpack.c.bf16 %v611, %v608
    %v702 = vpack.c.bf16 %v619, %v616
    %v703 = vpack.c.bf16 %v627, %v624
    %v704 = vpack.c.bf16 %v635, %v632
    %v705 = vpack.c.bf16 %v643, %v640
    %v706 = vpack.c.bf16 %v651, %v648
    %v707 = vpack.c.bf16 %v659, %v656
    %v708 = vpack.c.bf16 %v667, %v664
    %v709 = vpack.c.bf16 %v675, %v672
    %v742 = vunpack.c.l.b16 %v678
    %v743 = vunpack.c.h.b16 %v678
    %v744 = vunpack.c.l.b16 %v679
    %v745 = vunpack.c.h.b16 %v679
    %v746 = vunpack.c.l.b16 %v680
    %v747 = vunpack.c.h.b16 %v680
    %v748 = vunpack.c.l.b16 %v681
    %v749 = vunpack.c.h.b16 %v681
    %v750 = vunpack.c.l.b16 %v682
    %v751 = vunpack.c.h.b16 %v682
    %v752 = vunpack.c.l.b16 %v683
    %v753 = vunpack.c.h.b16 %v683
    %v754 = vunpack.c.l.b16 %v684
    %v755 = vunpack.c.h.b16 %v684
    %v756 = vunpack.c.l.b16 %v685
    %v757 = vunpack.c.h.b16 %v685
    %v758 = vunpack.c.l.b16 %v686
    %v759 = vunpack.c.h.b16 %v686
    %v760 = vunpack.c.l.b16 %v687
    %v761 = vunpack.c.h.b16 %v687
    %v762 = vunpack.c.l.b16 %v688
    %v763 = vunpack.c.h.b16 %v688
    %v764 = vunpack.c.l.b16 %v689
    %v765 = vunpack.c.h.b16 %v689
    %v766 = vunpack.c.l.b16 %v690
    %v767 = vunpack.c.h.b16 %v690
    %v768 = vunpack.c.l.b16 %v691
    %v769 = vunpack.c.h.b16 %v691
    %v770 = vunpack.c.l.b16 %v692
    %v771 = vunpack.c.h.b16 %v692
    %v772 = vunpack.c.l.b16 %v693
    %v773 = vunpack.c.h.b16 %v693
    %v774 = vunpack.c.l.b16 %v694
    %v775 = vunpack.c.h.b16 %v694
    %v776 = vunpack.c.l.b16 %v695
    %v777 = vunpack.c.h.b16 %v695
    %v778 = vunpack.c.l.b16 %v696
    %v779 = vunpack.c.h.b16 %v696
    %v780 = vunpack.c.l.b16 %v697
    %v781 = vunpack.c.h.b16 %v697
    %v782 = vunpack.c.l.b16 %v698
    %v783 = vunpack.c.h.b16 %v698
    %v784 = vunpack.c.l.b16 %v699
    %v785 = vunpack.c.h.b16 %v699
    %v786 = vunpack.c.l.b16 %v700
    %v787 = vunpack.c.h.b16 %v700
    %v788 = vunpack.c.l.b16 %v701
    %v789 = vunpack.c.h.b16 %v701
    %v790 = vunpack.c.l.b16 %v702
    %v791 = vunpack.c.h.b16 %v702
    %v792 = vunpack.c.l.b16 %v703
    %v793 = vunpack.c.h.b16 %v703
    %v794 = vunpack.c.l.b16 %v704
    %v795 = vunpack.c.h.b16 %v704
    %v796 = vunpack.c.l.b16 %v705
    %v797 = vunpack.c.h.b16 %v705
    %v798 = vunpack.c.l.b16 %v706
    %v799 = vunpack.c.h.b16 %v706
    %v800 = vunpack.c.l.b16 %v707
    %v801 = vunpack.c.h.b16 %v707
    %v802 = vunpack.c.l.b16 %v708
    %v803 = vunpack.c.h.b16 %v708
    %v804 = vunpack.c.l.b16 %v709
    %v805 = vunpack.c.h.b16 %v709
    %v806 = vpack.c.b16 %v742, %v742
    %v807 = vpack.c.b16 %v743, %v743
    %v808 = vpack.c.b16 %v744, %v744
    %v809 = vpack.c.b16 %v745, %v745
    %v810 = vpack.c.b16 %v746, %v746
    %v811 = vpack.c.b16 %v747, %v747
    %v812 = vpack.c.b16 %v748, %v748
    %v813 = vpack.c.b16 %v749, %v749
    %v814 = vpack.c.b16 %v750, %v750
    %v815 = vpack.c.b16 %v751, %v751
    %v816 = vpack.c.b16 %v752, %v752
    %v817 = vpack.c.b16 %v753, %v753
    %v818 = vpack.c.b16 %v754, %v754
    %v819 = vpack.c.b16 %v755, %v755
    %v820 = vpack.c.b16 %v756, %v756
    %v821 = vpack.c.b16 %v757, %v757
    %v822 = vpack.c.b16 %v758, %v758
    %v823 = vpack.c.b16 %v759, %v759
    %v824 = vpack.c.b16 %v760, %v760
    %v825 = vpack.c.b16 %v761, %v761
    %v826 = vpack.c.b16 %v762, %v762
    %v827 = vpack.c.b16 %v763, %v763
    %v828 = vpack.c.b16 %v764, %v764
    %v829 = vpack.c.b16 %v765, %v765
    %v830 = vpack.c.b16 %v766, %v766
    %v831 = vpack.c.b16 %v767, %v767
    %v832 = vpack.c.b16 %v768, %v768
    %v833 = vpack.c.b16 %v769, %v769
    %v834 = vpack.c.b16 %v770, %v770
    %v835 = vpack.c.b16 %v771, %v771
    %v836 = vpack.c.b16 %v772, %v772
    %v837 = vpack.c.b16 %v773, %v773
    %v838 = vpack.c.b16 %v774, %v774
    %v839 = vpack.c.b16 %v775, %v775
    %v840 = vpack.c.b16 %v776, %v776
    %v841 = vpack.c.b16 %v777, %v777
    %v842 = vpack.c.b16 %v778, %v778
    %v843 = vpack.c.b16 %v779, %v779
    %v844 = vpack.c.b16 %v780, %v780
    %v845 = vpack.c.b16 %v781, %v781
    %v846 = vpack.c.b16 %v782, %v782
    %v847 = vpack.c.b16 %v783, %v783
    %v848 = vpack.c.b16 %v784, %v784
    %v849 = vpack.c.b16 %v785, %v785
    %v850 = vpack.c.b16 %v786, %v786
    %v851 = vpack.c.b16 %v787, %v787
    %v852 = vpack.c.b16 %v788, %v788
    %v853 = vpack.c.b16 %v789, %v789
    %v854 = vpack.c.b16 %v790, %v790
    %v855 = vpack.c.b16 %v791, %v791
    %v856 = vpack.c.b16 %v792, %v792
    %v857 = vpack.c.b16 %v793, %v793
    %v858 = vpack.c.b16 %v794, %v794
    %v859 = vpack.c.b16 %v795, %v795
    %v860 = vpack.c.b16 %v796, %v796
    %v861 = vpack.c.b16 %v797, %v797
    %v862 = vpack.c.b16 %v798, %v798
    %v863 = vpack.c.b16 %v799, %v799
    %v864 = vpack.c.b16 %v800, %v800
    %v865 = vpack.c.b16 %v801, %v801
    %v866 = vpack.c.b16 %v802, %v802
    %v867 = vpack.c.b16 %v803, %v803
    %v868 = vpack.c.b16 %v804, %v804
    %v869 = vpack.c.b16 %v805, %v805
    %934 = vst [vmem:[%s4] sm:$0xf] %v806
    %935 = vst [vmem:[%s4 + $0x4] sm:$0xf] %v807
    %936 = vst [vmem:[%s4 + $0x8] sm:$0xf] %v808
    %937 = vst [vmem:[%s4 + $0xc] sm:$0xf] %v809
    %938 = vst [vmem:[%s4 + $0x10] sm:$0xf] %v810
    %939 = vst [vmem:[%s4 + $0x14] sm:$0xf] %v811
    %940 = vst [vmem:[%s4 + $0x18] sm:$0xf] %v812
    %941 = vst [vmem:[%s4 + $0x1c] sm:$0xf] %v813
    %942 = vst [vmem:[%s4 + $0x20] sm:$0xf] %v814
    %943 = vst [vmem:[%s4 + $0x24] sm:$0xf] %v815
    %944 = vst [vmem:[%s4 + $0x28] sm:$0xf] %v816
    %945 = vst [vmem:[%s4 + $0x2c] sm:$0xf] %v817
    %946 = vst [vmem:[%s4 + $0x30] sm:$0xf] %v818
    %947 = vst [vmem:[%s4 + $0x34] sm:$0xf] %v819
    %948 = vst [vmem:[%s4 + $0x38] sm:$0xf] %v820
    %949 = vst [vmem:[%s4 + $0x3c] sm:$0xf] %v821
    %950 = vst [vmem:[%s4 + $0x40] sm:$0xf] %v822
    %951 = vst [vmem:[%s4 + $0x44] sm:$0xf] %v823
    %952 = vst [vmem:[%s4 + $0x48] sm:$0xf] %v824
    %953 = vst [vmem:[%s4 + $0x4c] sm:$0xf] %v825
    %954 = vst [vmem:[%s4 + $0x50] sm:$0xf] %v826
    %955 = vst [vmem:[%s4 + $0x54] sm:$0xf] %v827
    %956 = vst [vmem:[%s4 + $0x58] sm:$0xf] %v828
    %957 = vst [vmem:[%s4 + $0x5c] sm:$0xf] %v829
    %958 = vst [vmem:[%s4 + $0x60] sm:$0xf] %v830
    %959 = vst [vmem:[%s4 + $0x64] sm:$0xf] %v831
    %960 = vst [vmem:[%s4 + $0x68] sm:$0xf] %v832
    %961 = vst [vmem:[%s4 + $0x6c] sm:$0xf] %v833
    %962 = vst [vmem:[%s4 + $0x70] sm:$0xf] %v834
    %963 = vst [vmem:[%s4 + $0x74] sm:$0xf] %v835
    %964 = vst [vmem:[%s4 + $0x78] sm:$0xf] %v836
    %965 = vst [vmem:[%s4 + $0x7c] sm:$0xf] %v837
    %966 = vst [vmem:[%s4 + $0x80] sm:$0xf] %v838
    %967 = vst [vmem:[%s4 + $0x84] sm:$0xf] %v839
    %968 = vst [vmem:[%s4 + $0x88] sm:$0xf] %v840
    %969 = vst [vmem:[%s4 + $0x8c] sm:$0xf] %v841
    %970 = vst [vmem:[%s4 + $0x90] sm:$0xf] %v842
    %971 = vst [vmem:[%s4 + $0x94] sm:$0xf] %v843
    %972 = vst [vmem:[%s4 + $0x98] sm:$0xf] %v844
    %973 = vst [vmem:[%s4 + $0x9c] sm:$0xf] %v845
    %974 = vst [vmem:[%s4 + $0xa0] sm:$0xf] %v846
    %975 = vst [vmem:[%s4 + $0xa4] sm:$0xf] %v847
    %976 = vst [vmem:[%s4 + $0xa8] sm:$0xf] %v848
    %977 = vst [vmem:[%s4 + $0xac] sm:$0xf] %v849
    %978 = vst [vmem:[%s4 + $0xb0] sm:$0xf] %v850
    %979 = vst [vmem:[%s4 + $0xb4] sm:$0xf] %v851
    %980 = vst [vmem:[%s4 + $0xb8] sm:$0xf] %v852
    %981 = vst [vmem:[%s4 + $0xbc] sm:$0xf] %v853
    %982 = vst [vmem:[%s4 + $0xc0] sm:$0xf] %v854
    %983 = vst [vmem:[%s4 + $0xc4] sm:$0xf] %v855
    %984 = vst [vmem:[%s4 + $0xc8] sm:$0xf] %v856
    %985 = vst [vmem:[%s4 + $0xcc] sm:$0xf] %v857
    %986 = vst [vmem:[%s4 + $0xd0] sm:$0xf] %v858
    %987 = vst [vmem:[%s4 + $0xd4] sm:$0xf] %v859
    %988 = vst [vmem:[%s4 + $0xd8] sm:$0xf] %v860
    %989 = vst [vmem:[%s4 + $0xdc] sm:$0xf] %v861
    %990 = vst [vmem:[%s4 + $0xe0] sm:$0xf] %v862
    %991 = vst [vmem:[%s4 + $0xe4] sm:$0xf] %v863
    %992 = vst [vmem:[%s4 + $0xe8] sm:$0xf] %v864
    %993 = vst [vmem:[%s4 + $0xec] sm:$0xf] %v865
    %994 = vst [vmem:[%s4 + $0xf0] sm:$0xf] %v866
    %995 = vst [vmem:[%s4 + $0xf4] sm:$0xf] %v867
    %996 = vst [vmem:[%s4 + $0xf8] sm:$0xf] %v868
    %997 = vst [vmem:[%s4 + $0xfc] sm:$0xf] %v869
    %v998 = vadd.f32 %v424, %v427
    %v999 = vadd.f32 %v998, %v432
    %v1000 = vadd.f32 %v999, %v435
    %v1001 = vadd.f32 %v1000, %v440
    %v1002 = vadd.f32 %v1001, %v443
    %v1003 = vadd.f32 %v1002, %v448
    %v1004 = vadd.f32 %v1003, %v451
    %v1005 = vadd.f32 %v1004, %v456
    %v1006 = vadd.f32 %v1005, %v459
    %v1007 = vadd.f32 %v1006, %v464
    %v1008 = vadd.f32 %v1007, %v467
    %v1009 = vadd.f32 %v1008, %v472
    %v1010 = vadd.f32 %v1009, %v475
    %v1011 = vadd.f32 %v1010, %v480
    %v1012 = vadd.f32 %v1011, %v483
    %v1013 = vadd.f32 %v1012, %v488
    %v1014 = vadd.f32 %v1013, %v491
    %v1015 = vadd.f32 %v1014, %v496
    %v1016 = vadd.f32 %v1015, %v499
    %v1017 = vadd.f32 %v1016, %v504
    %v1018 = vadd.f32 %v1017, %v507
    %v1019 = vadd.f32 %v1018, %v512
    %v1020 = vadd.f32 %v1019, %v515
    %v1021 = vadd.f32 %v1020, %v520
    %v1022 = vadd.f32 %v1021, %v523
    %v1023 = vadd.f32 %v1022, %v528
    %v1024 = vadd.f32 %v1023, %v531
    %v1025 = vadd.f32 %v1024, %v536
    %v1026 = vadd.f32 %v1025, %v539
    %v1027 = vadd.f32 %v1026, %v544
    %v1028 = vadd.f32 %v1027, %v547
    %v1029 = vadd.f32 %v1028, %v552
    %v1030 = vadd.f32 %v1029, %v555
    %v1031 = vadd.f32 %v1030, %v560
    %v1032 = vadd.f32 %v1031, %v563
    %v1033 = vadd.f32 %v1032, %v568
    %v1034 = vadd.f32 %v1033, %v571
    %v1035 = vadd.f32 %v1034, %v576
    %v1036 = vadd.f32 %v1035, %v579
    %v1037 = vadd.f32 %v1036, %v584
    %v1038 = vadd.f32 %v1037, %v587
    %v1039 = vadd.f32 %v1038, %v592
    %v1040 = vadd.f32 %v1039, %v595
    %v1041 = vadd.f32 %v1040, %v600
    %v1042 = vadd.f32 %v1041, %v603
    %v1043 = vadd.f32 %v1042, %v608
    %v1044 = vadd.f32 %v1043, %v611
    %v1045 = vadd.f32 %v1044, %v616
    %v1046 = vadd.f32 %v1045, %v619
    %v1047 = vadd.f32 %v1046, %v624
    %v1048 = vadd.f32 %v1047, %v627
    %v1049 = vadd.f32 %v1048, %v632
    %v1050 = vadd.f32 %v1049, %v635
    %v1051 = vadd.f32 %v1050, %v640
    %v1052 = vadd.f32 %v1051, %v643
    %v1053 = vadd.f32 %v1052, %v648
    %v1054 = vadd.f32 %v1053, %v651
    %v1055 = vadd.f32 %v1054, %v656
    %v1056 = vadd.f32 %v1055, %v659
    %v1057 = vadd.f32 %v1056, %v664
    %v1058 = vadd.f32 %v1057, %v667
    %v1059 = vadd.f32 %v1058, %v672
    %v1060 = vadd.f32 %v1059, %v675
    %v1061 = vrot.slane %v1060, 4
    %v1062 = vadd.f32 %v1060, %v1061
    %v1063 = vrot.slane %v1062, 2
    %v1064 = vadd.f32 %v1062, %v1063
    %v1065 = vrot.slane %v1064, 1
    %v1066 = vadd.f32 %v1064, %v1065
    %1067 = vst [vmem:[#allocation2] sm:$0x1] %v1066
    %v1068 = vmul.f32 %v424, %v424
    %v1069 = vmul.f32 %v427, %v427
    %v1070 = vmul.f32 %v432, %v432
    %v1071 = vmul.f32 %v435, %v435
    %v1072 = vmul.f32 %v440, %v440
    %v1073 = vmul.f32 %v443, %v443
    %v1074 = vmul.f32 %v448, %v448
    %v1075 = vmul.f32 %v451, %v451
    %v1076 = vmul.f32 %v456, %v456
    %v1077 = vmul.f32 %v459, %v459
    %v1078 = vmul.f32 %v464, %v464
    %v1079 = vmul.f32 %v467, %v467
    %v1080 = vmul.f32 %v472, %v472
    %v1081 = vmul.f32 %v475, %v475
    %v1082 = vmul.f32 %v480, %v480
    %v1083 = vmul.f32 %v483, %v483
    %v1084 = vmul.f32 %v488, %v488
    %v1085 = vmul.f32 %v491, %v491
    %v1086 = vmul.f32 %v496, %v496
    %v1087 = vmul.f32 %v499, %v499
    %v1088 = vmul.f32 %v504, %v504
    %v1089 = vmul.f32 %v507, %v507
    %v1090 = vmul.f32 %v512, %v512
    %v1091 = vmul.f32 %v515, %v515
    %v1092 = vmul.f32 %v520, %v520
    %v1093 = vmul.f32 %v523, %v523
    %v1094 = vmul.f32 %v528, %v528
    %v1095 = vmul.f32 %v531, %v531
    %v1096 = vmul.f32 %v536, %v536
    %v1097 = vmul.f32 %v539, %v539
    %v1098 = vmul.f32 %v544, %v544
    %v1099 = vmul.f32 %v547, %v547
    %v1100 = vmul.f32 %v552, %v552
    %v1101 = vmul.f32 %v555, %v555
    %v1102 = vmul.f32 %v560, %v560
    %v1103 = vmul.f32 %v563, %v563
    %v1104 = vmul.f32 %v568, %v568
    %v1105 = vmul.f32 %v571, %v571
    %v1106 = vmul.f32 %v576, %v576
    %v1107 = vmul.f32 %v579, %v579
    %v1108 = vmul.f32 %v584, %v584
    %v1109 = vmul.f32 %v587, %v587
    %v1110 = vmul.f32 %v592, %v592
    %v1111 = vmul.f32 %v595, %v595
    %v1112 = vmul.f32 %v600, %v600
    %v1113 = vmul.f32 %v603, %v603
    %v1114 = vmul.f32 %v608, %v608
    %v1115 = vmul.f32 %v611, %v611
    %v1116 = vmul.f32 %v616, %v616
    %v1117 = vmul.f32 %v619, %v619
    %v1118 = vmul.f32 %v624, %v624
    %v1119 = vmul.f32 %v627, %v627
    %v1120 = vmul.f32 %v632, %v632
    %v1121 = vmul.f32 %v635, %v635
    %v1122 = vmul.f32 %v640, %v640
    %v1123 = vmul.f32 %v643, %v643
    %v1124 = vmul.f32 %v648, %v648
    %v1125 = vmul.f32 %v651, %v651
    %v1126 = vmul.f32 %v656, %v656
    %v1127 = vmul.f32 %v659, %v659
    %v1128 = vmul.f32 %v664, %v664
    %v1129 = vmul.f32 %v667, %v667
    %v1130 = vmul.f32 %v672, %v672
    %v1131 = vmul.f32 %v675, %v675
    %v1132 = vadd.f32 %v1068, %v1069
    %v1133 = vadd.f32 %v1132, %v1070
    %v1134 = vadd.f32 %v1133, %v1071
    %v1135 = vadd.f32 %v1134, %v1072
    %v1136 = vadd.f32 %v1135, %v1073
    %v1137 = vadd.f32 %v1136, %v1074
    %v1138 = vadd.f32 %v1137, %v1075
    %v1139 = vadd.f32 %v1138, %v1076
    %v1140 = vadd.f32 %v1139, %v1077
    %v1141 = vadd.f32 %v1140, %v1078
    %v1142 = vadd.f32 %v1141, %v1079
    %v1143 = vadd.f32 %v1142, %v1080
    %v1144 = vadd.f32 %v1143, %v1081
    %v1145 = vadd.f32 %v1144, %v1082
    %v1146 = vadd.f32 %v1145, %v1083
    %v1147 = vadd.f32 %v1146, %v1084
    %v1148 = vadd.f32 %v1147, %v1085
    %v1149 = vadd.f32 %v1148, %v1086
    %v1150 = vadd.f32 %v1149, %v1087
    %v1151 = vadd.f32 %v1150, %v1088
    %v1152 = vadd.f32 %v1151, %v1089
    %v1153 = vadd.f32 %v1152, %v1090
    %v1154 = vadd.f32 %v1153, %v1091
    %v1155 = vadd.f32 %v1154, %v1092
    %v1156 = vadd.f32 %v1155, %v1093
    %v1157 = vadd.f32 %v1156, %v1094
    %v1158 = vadd.f32 %v1157, %v1095
    %v1159 = vadd.f32 %v1158, %v1096
    %v1160 = vadd.f32 %v1159, %v1097
    %v1161 = vadd.f32 %v1160, %v1098
    %v1162 = vadd.f32 %v1161, %v1099
    %v1163 = vadd.f32 %v1162, %v1100
    %v1164 = vadd.f32 %v1163, %v1101
    %v1165 = vadd.f32 %v1164, %v1102
    %v1166 = vadd.f32 %v1165, %v1103
    %v1167 = vadd.f32 %v1166, %v1104
    %v1168 = vadd.f32 %v1167, %v1105
    %v1169 = vadd.f32 %v1168, %v1106
    %v1170 = vadd.f32 %v1169, %v1107
    %v1171 = vadd.f32 %v1170, %v1108
    %v1172 = vadd.f32 %v1171, %v1109
    %v1173 = vadd.f32 %v1172, %v1110
    %v1174 = vadd.f32 %v1173, %v1111
    %v1175 = vadd.f32 %v1174, %v1112
    %v1176 = vadd.f32 %v1175, %v1113
    %v1177 = vadd.f32 %v1176, %v1114
    %v1178 = vadd.f32 %v1177, %v1115
    %v1179 = vadd.f32 %v1178, %v1116
    %v1180 = vadd.f32 %v1179, %v1117
    %v1181 = vadd.f32 %v1180, %v1118
    %v1182 = vadd.f32 %v1181, %v1119
    %v1183 = vadd.f32 %v1182, %v1120
    %v1184 = vadd.f32 %v1183, %v1121
    %v1185 = vadd.f32 %v1184, %v1122
    %v1186 = vadd.f32 %v1185, %v1123
    %v1187 = vadd.f32 %v1186, %v1124
    %v1188 = vadd.f32 %v1187, %v1125
    %v1189 = vadd.f32 %v1188, %v1126
    %v1190 = vadd.f32 %v1189, %v1127
    %v1191 = vadd.f32 %v1190, %v1128
    %v1192 = vadd.f32 %v1191, %v1129
    %v1193 = vadd.f32 %v1192, %v1130
    %v1194 = vadd.f32 %v1193, %v1131
    %v1195 = vrot.slane %v1194, 4
    %v1196 = vadd.f32 %v1194, %v1195
    %v1197 = vrot.slane %v1196, 2
    %v1198 = vadd.f32 %v1196, %v1197
    %v1199 = vrot.slane %v1198, 1
    %v1200 = vadd.f32 %v1198, %v1199
    %1201 = vst [vmem:[#allocation4] sm:$0x1] %v1200
    // Predicated region
    $region18: #{unet_forward.10} parent=1 // pred_check
      _
    $region19: #{unet_forward.10} parent=1 // pred_check_branch
      %1203 = sbr.rel (0) target = $region21
    $region20: #{unet_forward.10} parent=1 // pred_region
      _
    $region21: #{unet_forward.10} parent=1 // pred_fallthru
      _
    // Predicated region
    $region22: #{unet_forward.10} parent=1 // pred_check
      _
    $region23: #{unet_forward.10} parent=1 // pred_check_branch
      %1205 = sbr.rel (0) target = $region25
    $region24: #{unet_forward.10} parent=1 // pred_region
      %s1207 = ssub.s32 16, 16
      %1208 = vsyncadd [#allocation3], %s1207
      %s1210 = sshll.u32 [#allocation2], 4
      %s1211 = int_to_ptr.vmem [resolvable:$true] %s1210
      %1213 = dma.vmem_to_hbm [thread:$0]  %s1211, 16, %s5, [#allocation3]
    $region25: #{unet_forward.10} parent=1 // pred_fallthru
      _
    // Predicated region
    $region26: #{unet_forward.10} parent=1 // pred_check
      _
    $region27: #{unet_forward.10} parent=1 // pred_check_branch
      %1215 = sbr.rel (0) target = $region29
    $region28: #{unet_forward.10} parent=1 // pred_region
      %s1217 = ssub.s32 16, 16
      %1218 = vsyncadd [#allocation5], %s1217
      %s1220 = sshll.u32 [#allocation4], 4
      %s1221 = int_to_ptr.vmem [resolvable:$true] %s1220
      %1223 = dma.vmem_to_hbm [thread:$0]  %s1221, 16, %s6, [#allocation5]
    $region29: #{unet_forward.10} parent=1 // pred_fallthru
      _
    // Predicated region
    $region30: #{unet_forward.10} parent=1 // pred_check
      _
    $region31: #{unet_forward.10} parent=1 // pred_check_branch
      %1225 = sbr.rel (0) target = $region33
    $region32: #{unet_forward.10} parent=1 // pred_region
      _
    $region33: #{unet_forward.10} parent=1 // pred_fallthru
      _
    // Predicated region
    $region34: #{unet_forward.10} parent=1 // pred_check
      _
    $region35: #{unet_forward.10} parent=1 // pred_check_branch
      %1227 = sbr.rel (0) target = $region37
    $region36: #{unet_forward.10} parent=1 // pred_region
      %1228 = dma.done [#allocation3], 16
    $region37: #{unet_forward.10} parent=1 // pred_fallthru
      _
    // Predicated region
    $region38: #{unet_forward.10} parent=1 // pred_check
      _
    $region39: #{unet_forward.10} parent=1 // pred_check_branch
      %1230 = sbr.rel (0) target = $region41
    $region40: #{unet_forward.10} parent=1 // pred_region
      %1231 = dma.done [#allocation5], 16
    $region41: #{unet_forward.10} parent=1 // pred_fallthru
      _
    %1232 = vsyncpa [#allocation3], 1
    %1233 = vsyncpa [#allocation5], 1

// kernel: tile.34
$region0: #{tile.34}
  #allocation0 [shape = 's32[1]{0}', space=sflag, size = 0x4, scoped, tag = 'scoped memory for tile.34']
  %s0 = inlined_call_operand.<no memory space> [shape: f32[], index: 0, kind: input, shape index: {}]
  %s1 = inlined_call_operand.vmem [shape: f32[1,256], index: 1, kind: output, shape index: {}]
  %v2 = vstv %s0
  %3 = vst [vmem:[%s1] sm:$0x1] %v2
  %s4 = scalar_lea.vmem %s1, 1
  %5 = vst [vmem:[%s4] sm:$0x1] %v2

// kernel: unet_forward.11
$region0: #{unet_forward.11}
  #allocation0 [shape = 'u32[]', space=smem, size = 0x4, offset = 0x4, fixed_abs, tag = 'smem constant byte address 0x4 - core index']
  #allocation1 [shape = 'u32[144,128]{1,0:T(1,128)}', space=vmem, size = 0x12000, scoped, tag = 'internal scratch']
  %s0 = inlined_call_operand.vmem [shape: bf16[128,256], index: 0, kind: input, shape index: {}]
  %s1 = inlined_call_operand.vmem [shape: f32[1,256], index: 1, kind: input, shape index: {}]
  %s2 = inlined_call_operand.vmem [shape: f32[1,256], index: 2, kind: input, shape index: {}]
  %s3 = inlined_call_operand.vmem [shape: bf16[256,128], index: 3, kind: input, shape index: {}]
  %s4 = inlined_call_operand.vmem [shape: bf16[128,128], index: 4, kind: output, shape index: {0}]
  %s5 = inlined_call_operand.vmem [shape: f32[1,128], index: 5, kind: output, shape index: {1}]
  %s6 = inlined_call_operand.vmem [shape: f32[1,128], index: 6, kind: output, shape index: {2}]
  %7 = xla_tuple %s4, %s5, %s6
  %s8 = sld [smem:[#allocation0]]
  $region42: #{unet_forward.11} parent=0
    _
  %s10 = ssub.s32 1, %s8
  %s11 = scalar_select 0, %s10, %s8
  // Predicated region
  $region2: #{unet_forward.11} parent=0 // pred_check
    _
  $region3: #{unet_forward.11} parent=0 // pred_check_branch
    %13 = sbr.rel (0) target = $region5
  $region4: #{unet_forward.11} parent=0 // pred_region
    _
  $region5: #{unet_forward.11} parent=0 // pred_fallthru
    _
  // Predicated region
  $region6: #{unet_forward.11} parent=0 // pred_check
    _
  $region7: #{unet_forward.11} parent=0 // pred_check_branch
    %15 = sbr.rel (0) target = $region9
  $region8: #{unet_forward.11} parent=0 // pred_region
    _
  $region9: #{unet_forward.11} parent=0 // pred_fallthru
    _
  // Predicated region
  $region10: #{unet_forward.11} parent=0 // pred_check
    _
  $region11: #{unet_forward.11} parent=0 // pred_check_branch
    %17 = sbr.rel (0) target = $region13
  $region12: #{unet_forward.11} parent=0 // pred_region
    _
  $region13: #{unet_forward.11} parent=0 // pred_fallthru
    _
  // Predicated region
  $region14: #{unet_forward.11} parent=0 // pred_check
    _
  $region15: #{unet_forward.11} parent=0 // pred_check_branch
    %19 = sbr.rel (0) target = $region17
  $region16: #{unet_forward.11} parent=0 // pred_region
    _
  $region17: #{unet_forward.11} parent=0 // pred_fallthru
    _
  %v21 = vld [vmem:[%s0] sm:$0xff]
  %v22 = vld [vmem:[%s0 + $0x8] sm:$0xff]
  %v23 = vld [vmem:[%s0 + $0x10] sm:$0xff]
  %v24 = vld [vmem:[%s0 + $0x18] sm:$0xff]
  %v25 = vld [vmem:[%s0 + $0x20] sm:$0xff]
  %v26 = vld [vmem:[%s0 + $0x28] sm:$0xff]
  %v27 = vld [vmem:[%s0 + $0x30] sm:$0xff]
  %v28 = vld [vmem:[%s0 + $0x38] sm:$0xff]
  %v29 = vld [vmem:[%s0 + $0x40] sm:$0xff]
  %v30 = vld [vmem:[%s0 + $0x48] sm:$0xff]
  %v31 = vld [vmem:[%s0 + $0x50] sm:$0xff]
  %v32 = vld [vmem:[%s0 + $0x58] sm:$0xff]
  %v33 = vld [vmem:[%s0 + $0x60] sm:$0xff]
  %v34 = vld [vmem:[%s0 + $0x68] sm:$0xff]
  %v35 = vld [vmem:[%s0 + $0x70] sm:$0xff]
  %v36 = vld [vmem:[%s0 + $0x78] sm:$0xff]
  %v37 = vunpack.c.l.bf16 %v21
  %v38 = vunpack.c.h.bf16 %v21
  %v39 = vunpack.c.l.bf16 %v22
  %v40 = vunpack.c.h.bf16 %v22
  %v41 = vunpack.c.l.bf16 %v23
  %v42 = vunpack.c.h.bf16 %v23
  %v43 = vunpack.c.l.bf16 %v24
  %v44 = vunpack.c.h.bf16 %v24
  %v45 = vunpack.c.l.bf16 %v25
  %v46 = vunpack.c.h.bf16 %v25
  %v47 = vunpack.c.l.bf16 %v26
  %v48 = vunpack.c.h.bf16 %v26
  %v49 = vunpack.c.l.bf16 %v27
  %v50 = vunpack.c.h.bf16 %v27
  %v51 = vunpack.c.l.bf16 %v28
  %v52 = vunpack.c.h.bf16 %v28
  %v53 = vunpack.c.l.bf16 %v29
  %v54 = vunpack.c.h.bf16 %v29
  %v55 = vunpack.c.l.bf16 %v30
  %v56 = vunpack.c.h.bf16 %v30
  %v57 = vunpack.c.l.bf16 %v31
  %v58 = vunpack.c.h.bf16 %v31
  %v59 = vunpack.c.l.bf16 %v32
  %v60 = vunpack.c.h.bf16 %v32
  %v61 = vunpack.c.l.bf16 %v33
  %v62 = vunpack.c.h.bf16 %v33
  %v63 = vunpack.c.l.bf16 %v34
  %v64 = vunpack.c.h.bf16 %v34
  %v65 = vunpack.c.l.bf16 %v35
  %v66 = vunpack.c.h.bf16 %v35
  %v67 = vunpack.c.l.bf16 %v36
  %v68 = vunpack.c.h.bf16 %v36
  %v69 = vld [vmem:[%s1] sm:$0x3]
  %v71 = vlaneseq
  %v72 = vshrl.u32 %v71, 7
  %v73 = vsub.s32 0, %v72
  %v74 = vrot.slane %v69, %v73
  %v75 = vlaneseq
  %v76 = vshrl.u32 %v75, 7
  %v77 = vsub.s32 1, %v76
  %v78 = vrot.slane %v69, %v77
  %v81 = vmul.f32 %v37, %v74
  %v82 = vmul.f32 %v38, %v78
  %v83 = vmul.f32 %v39, %v74
  %v84 = vmul.f32 %v40, %v78
  %v85 = vmul.f32 %v41, %v74
  %v86 = vmul.f32 %v42, %v78
  %v87 = vmul.f32 %v43, %v74
  %v88 = vmul.f32 %v44, %v78
  %v89 = vmul.f32 %v45, %v74
  %v90 = vmul.f32 %v46, %v78
  %v91 = vmul.f32 %v47, %v74
  %v92 = vmul.f32 %v48, %v78
  %v93 = vmul.f32 %v49, %v74
  %v94 = vmul.f32 %v50, %v78
  %v95 = vmul.f32 %v51, %v74
  %v96 = vmul.f32 %v52, %v78
  %v97 = vmul.f32 %v53, %v74
  %v98 = vmul.f32 %v54, %v78
  %v99 = vmul.f32 %v55, %v74
  %v100 = vmul.f32 %v56, %v78
  %v101 = vmul.f32 %v57, %v74
  %v102 = vmul.f32 %v58, %v78
  %v103 = vmul.f32 %v59, %v74
  %v104 = vmul.f32 %v60, %v78
  %v105 = vmul.f32 %v61, %v74
  %v106 = vmul.f32 %v62, %v78
  %v107 = vmul.f32 %v63, %v74
  %v108 = vmul.f32 %v64, %v78
  %v109 = vmul.f32 %v65, %v74
  %v110 = vmul.f32 %v66, %v78
  %v111 = vmul.f32 %v67, %v74
  %v112 = vmul.f32 %v68, %v78
  %v113 = vld [vmem:[%s2] sm:$0x3]
  %v115 = vlaneseq
  %v116 = vshrl.u32 %v115, 7
  %v117 = vsub.s32 0, %v116
  %v118 = vrot.slane %v113, %v117
  %v119 = vlaneseq
  %v120 = vshrl.u32 %v119, 7
  %v121 = vsub.s32 1, %v120
  %v122 = vrot.slane %v113, %v121
  %v125 = vadd.f32 %v81, %v118
  %v126 = vadd.f32 %v82, %v122
  %v127 = vadd.f32 %v83, %v118
  %v128 = vadd.f32 %v84, %v122
  %v129 = vadd.f32 %v85, %v118
  %v130 = vadd.f32 %v86, %v122
  %v131 = vadd.f32 %v87, %v118
  %v132 = vadd.f32 %v88, %v122
  %v133 = vadd.f32 %v89, %v118
  %v134 = vadd.f32 %v90, %v122
  %v135 = vadd.f32 %v91, %v118
  %v136 = vadd.f32 %v92, %v122
  %v137 = vadd.f32 %v93, %v118
  %v138 = vadd.f32 %v94, %v122
  %v139 = vadd.f32 %v95, %v118
  %v140 = vadd.f32 %v96, %v122
  %v141 = vadd.f32 %v97, %v118
  %v142 = vadd.f32 %v98, %v122
  %v143 = vadd.f32 %v99, %v118
  %v144 = vadd.f32 %v100, %v122
  %v145 = vadd.f32 %v101, %v118
  %v146 = vadd.f32 %v102, %v122
  %v147 = vadd.f32 %v103, %v118
  %v148 = vadd.f32 %v104, %v122
  %v149 = vadd.f32 %v105, %v118
  %v150 = vadd.f32 %v106, %v122
  %v151 = vadd.f32 %v107, %v118
  %v152 = vadd.f32 %v108, %v122
  %v153 = vadd.f32 %v109, %v118
  %v154 = vadd.f32 %v110, %v122
  %v155 = vadd.f32 %v111, %v118
  %v156 = vadd.f32 %v112, %v122
  %v157 = vmul.f32 %v125, 0.2
  %v158 = vmul.f32 %v126, 0.2
  %v159 = vmul.f32 %v127, 0.2
  %v160 = vmul.f32 %v128, 0.2
  %v161 = vmul.f32 %v129, 0.2
  %v162 = vmul.f32 %v130, 0.2
  %v163 = vmul.f32 %v131, 0.2
  %v164 = vmul.f32 %v132, 0.2
  %v165 = vmul.f32 %v133, 0.2
  %v166 = vmul.f32 %v134, 0.2
  %v167 = vmul.f32 %v135, 0.2
  %v168 = vmul.f32 %v136, 0.2
  %v169 = vmul.f32 %v137, 0.2
  %v170 = vmul.f32 %v138, 0.2
  %v171 = vmul.f32 %v139, 0.2
  %v172 = vmul.f32 %v140, 0.2
  %v173 = vmul.f32 %v141, 0.2
  %v174 = vmul.f32 %v142, 0.2
  %v175 = vmul.f32 %v143, 0.2
  %v176 = vmul.f32 %v144, 0.2
  %v177 = vmul.f32 %v145, 0.2
  %v178 = vmul.f32 %v146, 0.2
  %v179 = vmul.f32 %v147, 0.2
  %v180 = vmul.f32 %v148, 0.2
  %v181 = vmul.f32 %v149, 0.2
  %v182 = vmul.f32 %v150, 0.2
  %v183 = vmul.f32 %v151, 0.2
  %v184 = vmul.f32 %v152, 0.2
  %v185 = vmul.f32 %v153, 0.2
  %v186 = vmul.f32 %v154, 0.2
  %v187 = vmul.f32 %v155, 0.2
  %v188 = vmul.f32 %v156, 0.2
  %v189 = vmax.f32 %v125, %v157
  %v190 = vmax.f32 %v126, %v158
  %v191 = vmax.f32 %v127, %v159
  %v192 = vmax.f32 %v128, %v160
  %v193 = vmax.f32 %v129, %v161
  %v194 = vmax.f32 %v130, %v162
  %v195 = vmax.f32 %v131, %v163
  %v196 = vmax.f32 %v132, %v164
  %v197 = vmax.f32 %v133, %v165
  %v198 = vmax.f32 %v134, %v166
  %v199 = vmax.f32 %v135, %v167
  %v200 = vmax.f32 %v136, %v168
  %v201 = vmax.f32 %v137, %v169
  %v202 = vmax.f32 %v138, %v170
  %v203 = vmax.f32 %v139, %v171
  %v204 = vmax.f32 %v140, %v172
  %v205 = vmax.f32 %v141, %v173
  %v206 = vmax.f32 %v142, %v174
  %v207 = vmax.f32 %v143, %v175
  %v208 = vmax.f32 %v144, %v176
  %v209 = vmax.f32 %v145, %v177
  %v210 = vmax.f32 %v146, %v178
  %v211 = vmax.f32 %v147, %v179
  %v212 = vmax.f32 %v148, %v180
  %v213 = vmax.f32 %v149, %v181
  %v214 = vmax.f32 %v150, %v182
  %v215 = vmax.f32 %v151, %v183
  %v216 = vmax.f32 %v152, %v184
  %v217 = vmax.f32 %v153, %v185
  %v218 = vmax.f32 %v154, %v186
  %v219 = vmax.f32 %v155, %v187
  %v220 = vmax.f32 %v156, %v188
  %v221 = vpack.c.bf16 %v191, %v189
  %v222 = vpack.c.bf16 %v192, %v190
  %v223 = vpack.c.bf16 %v195, %v193
  %v224 = vpack.c.bf16 %v196, %v194
  %v225 = vpack.c.bf16 %v199, %v197
  %v226 = vpack.c.bf16 %v200, %v198
  %v227 = vpack.c.bf16 %v203, %v201
  %v228 = vpack.c.bf16 %v204, %v202
  %v229 = vpack.c.bf16 %v207, %v205
  %v230 = vpack.c.bf16 %v208, %v206
  %v231 = vpack.c.bf16 %v211, %v209
  %v232 = vpack.c.bf16 %v212, %v210
  %v233 = vpack.c.bf16 %v215, %v213
  %v234 = vpack.c.bf16 %v216, %v214
  %v235 = vpack.c.bf16 %v219, %v217
  %v236 = vpack.c.bf16 %v220, %v218
  %v237 = vld [vmem:[%s3] sm:$0xf]
  %v238 = vld [vmem:[%s3 + $0x4] sm:$0xf]
  %v239 = vld [vmem:[%s3 + $0x8] sm:$0xf]
  %v240 = vld [vmem:[%s3 + $0xc] sm:$0xf]
  %v241 = vld [vmem:[%s3 + $0x10] sm:$0xf]
  %v242 = vld [vmem:[%s3 + $0x14] sm:$0xf]
  %v243 = vld [vmem:[%s3 + $0x18] sm:$0xf]
  %v244 = vld [vmem:[%s3 + $0x1c] sm:$0xf]
  %v245 = vld [vmem:[%s3 + $0x20] sm:$0xf]
  %v246 = vld [vmem:[%s3 + $0x24] sm:$0xf]
  %v247 = vld [vmem:[%s3 + $0x28] sm:$0xf]
  %v248 = vld [vmem:[%s3 + $0x2c] sm:$0xf]
  %v249 = vld [vmem:[%s3 + $0x30] sm:$0xf]
  %v250 = vld [vmem:[%s3 + $0x34] sm:$0xf]
  %v251 = vld [vmem:[%s3 + $0x38] sm:$0xf]
  %v252 = vld [vmem:[%s3 + $0x3c] sm:$0xf]
  %v253 = vld [vmem:[%s3 + $0x40] sm:$0xf]
  %v254 = vld [vmem:[%s3 + $0x44] sm:$0xf]
  %v255 = vld [vmem:[%s3 + $0x48] sm:$0xf]
  %v256 = vld [vmem:[%s3 + $0x4c] sm:$0xf]
  %v257 = vld [vmem:[%s3 + $0x50] sm:$0xf]
  %v258 = vld [vmem:[%s3 + $0x54] sm:$0xf]
  %v259 = vld [vmem:[%s3 + $0x58] sm:$0xf]
  %v260 = vld [vmem:[%s3 + $0x5c] sm:$0xf]
  %v261 = vld [vmem:[%s3 + $0x60] sm:$0xf]
  %v262 = vld [vmem:[%s3 + $0x64] sm:$0xf]
  %v263 = vld [vmem:[%s3 + $0x68] sm:$0xf]
  %v264 = vld [vmem:[%s3 + $0x6c] sm:$0xf]
  %v265 = vld [vmem:[%s3 + $0x70] sm:$0xf]
  %v266 = vld [vmem:[%s3 + $0x74] sm:$0xf]
  %v267 = vld [vmem:[%s3 + $0x78] sm:$0xf]
  %v268 = vld [vmem:[%s3 + $0x7c] sm:$0xf]
  %v301 = vunpack.c.l.b16 %v237
  %v302 = vunpack.c.l.b16 %v238
  %v303 = vunpack.c.l.b16 %v239
  %v304 = vunpack.c.l.b16 %v240
  %v305 = vunpack.c.l.b16 %v241
  %v306 = vunpack.c.l.b16 %v242
  %v307 = vunpack.c.l.b16 %v243
  %v308 = vunpack.c.l.b16 %v244
  %v309 = vunpack.c.l.b16 %v245
  %v310 = vunpack.c.l.b16 %v246
  %v311 = vunpack.c.l.b16 %v247
  %v312 = vunpack.c.l.b16 %v248
  %v313 = vunpack.c.l.b16 %v249
  %v314 = vunpack.c.l.b16 %v250
  %v315 = vunpack.c.l.b16 %v251
  %v316 = vunpack.c.l.b16 %v252
  %v317 = vunpack.c.l.b16 %v253
  %v318 = vunpack.c.l.b16 %v254
  %v319 = vunpack.c.l.b16 %v255
  %v320 = vunpack.c.l.b16 %v256
  %v321 = vunpack.c.l.b16 %v257
  %v322 = vunpack.c.l.b16 %v258
  %v323 = vunpack.c.l.b16 %v259
  %v324 = vunpack.c.l.b16 %v260
  %v325 = vunpack.c.l.b16 %v261
  %v326 = vunpack.c.l.b16 %v262
  %v327 = vunpack.c.l.b16 %v263
  %v328 = vunpack.c.l.b16 %v264
  %v329 = vunpack.c.l.b16 %v265
  %v330 = vunpack.c.l.b16 %v266
  %v331 = vunpack.c.l.b16 %v267
  %v332 = vunpack.c.l.b16 %v268
  %v333 = vpack.c.b16 %v302, %v301
  %v334 = vpack.c.b16 %v304, %v303
  %v335 = vpack.c.b16 %v306, %v305
  %v336 = vpack.c.b16 %v308, %v307
  %v337 = vpack.c.b16 %v310, %v309
  %v338 = vpack.c.b16 %v312, %v311
  %v339 = vpack.c.b16 %v314, %v313
  %v340 = vpack.c.b16 %v316, %v315
  %v341 = vpack.c.b16 %v318, %v317
  %v342 = vpack.c.b16 %v320, %v319
  %v343 = vpack.c.b16 %v322, %v321
  %v344 = vpack.c.b16 %v324, %v323
  %v345 = vpack.c.b16 %v326, %v325
  %v346 = vpack.c.b16 %v328, %v327
  %v347 = vpack.c.b16 %v330, %v329
  %v348 = vpack.c.b16 %v332, %v331
  %365 = vmatprep.subr.bf16.mxu0 0
  %366 = vmatpush1.bf16.msra.mxu0 %v333
  %367 = vmatprep.subr.bf16.mxu0 0
  %368 = vmatpush1.bf16.msra.mxu0 %v334
  %369 = vmatprep.subr.bf16.mxu0 0
  %370 = vmatpush1.bf16.msra.mxu0 %v335
  %371 = vmatprep.subr.bf16.mxu0 0
  %372 = vmatpush1.bf16.msra.mxu0 %v336
  %373 = vmatprep.subr.bf16.mxu0 0
  %374 = vmatpush1.bf16.msra.mxu0 %v337
  %375 = vmatprep.subr.bf16.mxu0 0
  %376 = vmatpush1.bf16.msra.mxu0 %v338
  %377 = vmatprep.subr.bf16.mxu0 0
  %378 = vmatpush1.bf16.msra.mxu0 %v339
  %379 = vmatprep.subr.bf16.mxu0 0
  %380 = vmatpush1.bf16.msra.mxu0 %v340
  %381 = vmatprep.subr.bf16.mxu0 0
  %382 = vmatpush1.bf16.msra.mxu0 %v341
  %383 = vmatprep.subr.bf16.mxu0 0
  %384 = vmatpush1.bf16.msra.mxu0 %v342
  %385 = vmatprep.subr.bf16.mxu0 0
  %386 = vmatpush1.bf16.msra.mxu0 %v343
  %387 = vmatprep.subr.bf16.mxu0 0
  %388 = vmatpush1.bf16.msra.mxu0 %v344
  %389 = vmatprep.subr.bf16.mxu0 0
  %390 = vmatpush1.bf16.msra.mxu0 %v345
  %391 = vmatprep.subr.bf16.mxu0 0
  %392 = vmatpush1.bf16.msra.mxu0 %v346
  %393 = vmatprep.subr.bf16.mxu0 0
  %394 = vmatpush1.bf16.msra.mxu0 %v347
  %395 = vmatprep.subr.bf16.mxu0 0
  %396 = vmatpush1.bf16.msra.mxu0 %v348
  %397 = vmatprep.mubr.bf16.mxu0 %v222
  %398 = vmatmul.mubr.bf16.gmra.mrb[0].mxu0 %v221
  %v399 = vpop.f32.mrb[0].mxu0
  %v400 = vadd.f32 0.0, %v399
  %v401 = vpop.f32.mrb[0].mxu0
  %v402 = vpop.f32.mrb[0].mxu0
  %v403 = vadd.f32 0.0, %v402
  %v404 = vpop.f32.mrb[0].mxu0
  %405 = vmatprep.mubr.bf16.mxu0 %v224
  %406 = vmatmul.mubr.bf16.gmra.mrb[0].mxu0 %v223
  %v407 = vpop.f32.mrb[0].mxu0
  %v408 = vadd.f32 0.0, %v407
  %v409 = vpop.f32.mrb[0].mxu0
  %v410 = vpop.f32.mrb[0].mxu0
  %v411 = vadd.f32 0.0, %v410
  %v412 = vpop.f32.mrb[0].mxu0
  %413 = vmatprep.mubr.bf16.mxu0 %v226
  %414 = vmatmul.mubr.bf16.gmra.mrb[0].mxu0 %v225
  %v415 = vpop.f32.mrb[0].mxu0
  %v416 = vadd.f32 0.0, %v415
  %v417 = vpop.f32.mrb[0].mxu0
  %v418 = vpop.f32.mrb[0].mxu0
  %v419 = vadd.f32 0.0, %v418
  %v420 = vpop.f32.mrb[0].mxu0
  %421 = vmatprep.mubr.bf16.mxu0 %v228
  %422 = vmatmul.mubr.bf16.gmra.mrb[0].mxu0 %v227
  %v423 = vpop.f32.mrb[0].mxu0
  %v424 = vadd.f32 0.0, %v423
  %v425 = vpop.f32.mrb[0].mxu0
  %v426 = vpop.f32.mrb[0].mxu0
  %v427 = vadd.f32 0.0, %v426
  %v428 = vpop.f32.mrb[0].mxu0
  %429 = vmatprep.mubr.bf16.mxu0 %v230
  %430 = vmatmul.mubr.bf16.gmra.mrb[0].mxu0 %v229
  %v431 = vpop.f32.mrb[0].mxu0
  %v432 = vadd.f32 0.0, %v431
  %v433 = vpop.f32.mrb[0].mxu0
  %v434 = vpop.f32.mrb[0].mxu0
  %v435 = vadd.f32 0.0, %v434
  %v436 = vpop.f32.mrb[0].mxu0
  %437 = vmatprep.mubr.bf16.mxu0 %v232
  %438 = vmatmul.mubr.bf16.gmra.mrb[0].mxu0 %v231
  %v439 = vpop.f32.mrb[0].mxu0
  %v440 = vadd.f32 0.0, %v439
  %v441 = vpop.f32.mrb[0].mxu0
  %v442 = vpop.f32.mrb[0].mxu0
  %v443 = vadd.f32 0.0, %v442
  %v444 = vpop.f32.mrb[0].mxu0
  %445 = vmatprep.mubr.bf16.mxu0 %v234
  %446 = vmatmul.mubr.bf16.gmra.mrb[0].mxu0 %v233
  %v447 = vpop.f32.mrb[0].mxu0
  %v448 = vadd.f32 0.0, %v447
  %v449 = vpop.f32.mrb[0].mxu0
  %v450 = vpop.f32.mrb[0].mxu0
  %v451 = vadd.f32 0.0, %v450
  %v452 = vpop.f32.mrb[0].mxu0
  %453 = vmatprep.mubr.bf16.mxu0 %v236
  %454 = vmatmul.mubr.bf16.gmra.mrb[0].mxu0 %v235
  %v455 = vpop.f32.mrb[0].mxu0
  %v456 = vadd.f32 0.0, %v455
  %v457 = vpop.f32.mrb[0].mxu0
  %v458 = vpop.f32.mrb[0].mxu0
  %v459 = vadd.f32 0.0, %v458
  %v460 = vpop.f32.mrb[0].mxu0
  %461 = vdwg.mxu0
  %v462 = vpack.c.bf16 %v403, %v400
  %v463 = vpack.c.bf16 %v411, %v408
  %v464 = vpack.c.bf16 %v419, %v416
  %v465 = vpack.c.bf16 %v427, %v424
  %v466 = vpack.c.bf16 %v435, %v432
  %v467 = vpack.c.bf16 %v443, %v440
  %v468 = vpack.c.bf16 %v451, %v448
  %v469 = vpack.c.bf16 %v459, %v456
  %v478 = vunpack.c.l.b16 %v462
  %v479 = vunpack.c.h.b16 %v462
  %v480 = vunpack.c.l.b16 %v463
  %v481 = vunpack.c.h.b16 %v463
  %v482 = vunpack.c.l.b16 %v464
  %v483 = vunpack.c.h.b16 %v464
  %v484 = vunpack.c.l.b16 %v465
  %v485 = vunpack.c.h.b16 %v465
  %v486 = vunpack.c.l.b16 %v466
  %v487 = vunpack.c.h.b16 %v466
  %v488 = vunpack.c.l.b16 %v467
  %v489 = vunpack.c.h.b16 %v467
  %v490 = vunpack.c.l.b16 %v468
  %v491 = vunpack.c.h.b16 %v468
  %v492 = vunpack.c.l.b16 %v469
  %v493 = vunpack.c.h.b16 %v469
  %v494 = vpack.c.b16 %v478, %v478
  %v495 = vpack.c.b16 %v479, %v479
  %v496 = vpack.c.b16 %v480, %v480
  %v497 = vpack.c.b16 %v481, %v481
  %v498 = vpack.c.b16 %v482, %v482
  %v499 = vpack.c.b16 %v483, %v483
  %v500 = vpack.c.b16 %v484, %v484
  %v501 = vpack.c.b16 %v485, %v485
  %v502 = vpack.c.b16 %v486, %v486
  %v503 = vpack.c.b16 %v487, %v487
  %v504 = vpack.c.b16 %v488, %v488
  %v505 = vpack.c.b16 %v489, %v489
  %v506 = vpack.c.b16 %v490, %v490
  %v507 = vpack.c.b16 %v491, %v491
  %v508 = vpack.c.b16 %v492, %v492
  %v509 = vpack.c.b16 %v493, %v493
  %526 = vst [vmem:[%s4] sm:$0xf] %v494
  %527 = vst [vmem:[%s4 + $0x4] sm:$0xf] %v495
  %528 = vst [vmem:[%s4 + $0x8] sm:$0xf] %v496
  %529 = vst [vmem:[%s4 + $0xc] sm:$0xf] %v497
  %530 = vst [vmem:[%s4 + $0x10] sm:$0xf] %v498
  %531 = vst [vmem:[%s4 + $0x14] sm:$0xf] %v499
  %532 = vst [vmem:[%s4 + $0x18] sm:$0xf] %v500
  %533 = vst [vmem:[%s4 + $0x1c] sm:$0xf] %v501
  %534 = vst [vmem:[%s4 + $0x20] sm:$0xf] %v502
  %535 = vst [vmem:[%s4 + $0x24] sm:$0xf] %v503
  %536 = vst [vmem:[%s4 + $0x28] sm:$0xf] %v504
  %537 = vst [vmem:[%s4 + $0x2c] sm:$0xf] %v505
  %538 = vst [vmem:[%s4 + $0x30] sm:$0xf] %v506
  %539 = vst [vmem:[%s4 + $0x34] sm:$0xf] %v507
  %540 = vst [vmem:[%s4 + $0x38] sm:$0xf] %v508
  %541 = vst [vmem:[%s4 + $0x3c] sm:$0xf] %v509
  %v542 = vadd.f32 %v400, %v403
  %v543 = vadd.f32 %v542, %v408
  %v544 = vadd.f32 %v543, %v411
  %v545 = vadd.f32 %v544, %v416
  %v546 = vadd.f32 %v545, %v419
  %v547 = vadd.f32 %v546, %v424
  %v548 = vadd.f32 %v547, %v427
  %v549 = vadd.f32 %v548, %v432
  %v550 = vadd.f32 %v549, %v435
  %v551 = vadd.f32 %v550, %v440
  %v552 = vadd.f32 %v551, %v443
  %v553 = vadd.f32 %v552, %v448
  %v554 = vadd.f32 %v553, %v451
  %v555 = vadd.f32 %v554, %v456
  %v556 = vadd.f32 %v555, %v459
  %v557 = vrot.slane %v556, 4
  %v558 = vadd.f32 %v556, %v557
  %v559 = vrot.slane %v558, 2
  %v560 = vadd.f32 %v558, %v559
  %v561 = vrot.slane %v560, 1
  %v562 = vadd.f32 %v560, %v561
  %563 = vst [vmem:[%s5] sm:$0x1] %v562
  %v564 = vmul.f32 %v400, %v400
  %v565 = vmul.f32 %v403, %v403
  %v566 = vmul.f32 %v408, %v408
  %v567 = vmul.f32 %v411, %v411
  %v568 = vmul.f32 %v416, %v416
  %v569 = vmul.f32 %v419, %v419
  %v570 = vmul.f32 %v424, %v424
  %v571 = vmul.f32 %v427, %v427
  %v572 = vmul.f32 %v432, %v432
  %v573 = vmul.f32 %v435, %v435
  %v574 = vmul.f32 %v440, %v440
  %v575 = vmul.f32 %v443, %v443
  %v576 = vmul.f32 %v448, %v448
  %v577 = vmul.f32 %v451, %v451
  %v578 = vmul.f32 %v456, %v456
  %v579 = vmul.f32 %v459, %v459
  %v580 = vadd.f32 %v564, %v565
  %v581 = vadd.f32 %v580, %v566
  %v582 = vadd.f32 %v581, %v567
  %v583 = vadd.f32 %v582, %v568
  %v584 = vadd.f32 %v583, %v569
  %v585 = vadd.f32 %v584, %v570
  %v586 = vadd.f32 %v585, %v571
  %v587 = vadd.f32 %v586, %v572
  %v588 = vadd.f32 %v587, %v573
  %v589 = vadd.f32 %v588, %v574
  %v590 = vadd.f32 %v589, %v575
  %v591 = vadd.f32 %v590, %v576
  %v592 = vadd.f32 %v591, %v577
  %v593 = vadd.f32 %v592, %v578
  %v594 = vadd.f32 %v593, %v579
  %v595 = vrot.slane %v594, 4
  %v596 = vadd.f32 %v594, %v595
  %v597 = vrot.slane %v596, 2
  %v598 = vadd.f32 %v596, %v597
  %v599 = vrot.slane %v598, 1
  %v600 = vadd.f32 %v598, %v599
  %601 = vst [vmem:[%s6] sm:$0x1] %v600
  // Predicated region
  $region18: #{unet_forward.11} parent=0 // pred_check
    _
  $region19: #{unet_forward.11} parent=0 // pred_check_branch
    %603 = sbr.rel (0) target = $region21
  $region20: #{unet_forward.11} parent=0 // pred_region
    _
  $region21: #{unet_forward.11} parent=0 // pred_fallthru
    _
  // Predicated region
  $region22: #{unet_forward.11} parent=0 // pred_check
    _
  $region23: #{unet_forward.11} parent=0 // pred_check_branch
    %605 = sbr.rel (0) target = $region25
  $region24: #{unet_forward.11} parent=0 // pred_region
    _
  $region25: #{unet_forward.11} parent=0 // pred_fallthru
    _
  // Predicated region
  $region26: #{unet_forward.11} parent=0 // pred_check
    _
  $region27: #{unet_forward.11} parent=0 // pred_check_branch
    %607 = sbr.rel (0) target = $region29
  $region28: #{unet_forward.11} parent=0 // pred_region
    _
  $region29: #{unet_forward.11} parent=0 // pred_fallthru
    _
  // Predicated region
  $region30: #{unet_forward.11} parent=0 // pred_check
    _
  $region31: #{unet_forward.11} parent=0 // pred_check_branch
    %609 = sbr.rel (0) target = $region33
  $region32: #{unet_forward.11} parent=0 // pred_region
    _
  $region33: #{unet_forward.11} parent=0 // pred_fallthru
    _
  // Predicated region
  $region34: #{unet_forward.11} parent=0 // pred_check
    _
  $region35: #{unet_forward.11} parent=0 // pred_check_branch
    %611 = sbr.rel (0) target = $region37
  $region36: #{unet_forward.11} parent=0 // pred_region
    _
  $region37: #{unet_forward.11} parent=0 // pred_fallthru
    _
  // Predicated region
  $region38: #{unet_forward.11} parent=0 // pred_check
    _
  $region39: #{unet_forward.11} parent=0 // pred_check_branch
    %613 = sbr.rel (0) target = $region41
  $region40: #{unet_forward.11} parent=0 // pred_region
    _
  $region41: #{unet_forward.11} parent=0 // pred_fallthru
    _

// kernel: tile.41
$region0: #{tile.41}
  #allocation0 [shape = 's32[1]{0}', space=sflag, size = 0x4, scoped, tag = 'scoped memory for tile.41']
  %s0 = inlined_call_operand.vmem [shape: f32[32], index: 0, kind: input, shape index: {}]
  %s1 = inlined_call_operand.vmem [shape: f32[16,32], index: 1, kind: output, shape index: {}]
  // Predicated region
  $region2: #{tile.41} parent=0 // pred_check
    _
  $region3: #{tile.41} parent=0 // pred_check_branch
    %3 = sbr.rel (0) target = $region5
  $region4: #{tile.41} parent=0 // pred_region
    _
  $region5: #{tile.41} parent=0 // pred_fallthru
    _
  %v4 = vld [vmem:[%s0] ss:$0 sm:$0xff]
  %5 = vst [vmem:[%s1] sm:$0xff] %v4
  %s6 = scalar_lea.vmem %s1, 8
  %7 = vst [vmem:[%s6] sm:$0xff] %v4

// kernel: tile.46
$region0: #{tile.46}
  %s0 = inlined_call_operand.vmem [shape: f32[16,32], index: 0, kind: input, shape index: {}]
  %s1 = inlined_call_operand.vmem [shape: f32[1,512], index: 1, kind: output, shape index: {}]
  $region1: #{tile.46} parent=0
    #allocation0 [shape = 'u8[16384]{0}', space=vmem, size = 0x4000, scoped, tag = 'scoped mem for output reshape']
    %v2 = vld [vmem:[%s0] ss:$4 sm:$0xf]
    %vm3 = vcmask 261120
    %4 = vst.msk [vmem:[#allocation0] ss:$8 sm:$0xf] %vm3, %v2
    %s5 = scalar_lea.vmem %s0, 3
    %v6 = vld [vmem:[%s5] ss:$4 sm:$0xf]
    %7 = vrot.lane.b32.xlu0 %v6, 96
    %v8 = vpop.permute.xlu0 %7
    %vm9 = vcmask 1048320
    %10 = vst.msk [vmem:[#allocation0] ss:$8 sm:$0xf] %vm9, %v8
    %s11 = scalar_lea.vmem %s0, 2
    %v12 = vld [vmem:[%s11] ss:$4 sm:$0xf]
    %13 = vrot.lane.b32.xlu0 %v12, 64
    %v14 = vpop.permute.xlu0 %13
    %vm15 = vcmask 785920
    %16 = vst.msk [vmem:[#allocation0] ss:$8 sm:$0xf] %vm15, %v14
    %s17 = scalar_lea.vmem %s0, 1
    %v18 = vld [vmem:[%s17] ss:$4 sm:$0xf]
    %19 = vrot.lane.b32.xlu0 %v18, 32
    %v20 = vpop.permute.xlu0 %19
    %vm21 = vcmask 523520
    %22 = vst.msk [vmem:[#allocation0] ss:$8 sm:$0xf] %vm21, %v20
    %s24 = sshllo.u32 0, 1
    %v26 = vld [vmem:[#allocation0] sm:%s24]
    %s27 = sshllo.u32 0, 1
    %28 = vst [vmem:[%s1] sm:%s27] %v26
    %s29 = scalar_lea.vmem [#allocation0], 8
    %v30 = vld [vmem:[%s29] sm:%s24]
    %s31 = sshllo.u32 0, 1
    %s32 = scalar_lea.vmem %s1, 1
    %33 = vst [vmem:[%s32] sm:%s31] %v30
    %s34 = scalar_lea.vmem [#allocation0], 16
    %v35 = vld [vmem:[%s34] sm:%s24]
    %s36 = sshllo.u32 0, 1
    %s37 = smul.addr 1, 2
    %s38 = scalar_lea.vmem %s1, %s37
    %39 = vst [vmem:[%s38] sm:%s36] %v35
    %s40 = scalar_lea.vmem [#allocation0], 24
    %v41 = vld [vmem:[%s40] sm:%s24]
    %s42 = sshllo.u32 0, 1
    %s43 = smul.addr 1, 3
    %s44 = scalar_lea.vmem %s1, %s43
    %45 = vst [vmem:[%s44] sm:%s42] %v41

// kernel: unet_forward.12
$region0: #{unet_forward.12}
  #allocation0 [shape = 'u32[]', space=smem, size = 0x4, offset = 0x4, fixed_abs, tag = 'smem constant byte address 0x4 - core index']
  #allocation1 [shape = 'u32[144,128]{1,0:T(1,128)}', space=vmem, size = 0x12000, scoped, tag = 'internal scratch']
  %s0 = inlined_call_operand.vmem [shape: bf16[32,512], index: 0, kind: input, shape index: {}]
  %s1 = inlined_call_operand.vmem [shape: f32[1,512], index: 1, kind: input, shape index: {}]
  %s2 = inlined_call_operand.vmem [shape: f32[1,512], index: 2, kind: input, shape index: {}]
  %s3 = inlined_call_operand.vmem [shape: bf16[512,128], index: 3, kind: input, shape index: {}]
  %s4 = inlined_call_operand.vmem [shape: bf16[32,128], index: 4, kind: output, shape index: {0}]
  %s5 = inlined_call_operand.vmem [shape: f32[1,128], index: 5, kind: output, shape index: {1}]
  %s6 = inlined_call_operand.vmem [shape: f32[1,128], index: 6, kind: output, shape index: {2}]
  %7 = xla_tuple %s4, %s5, %s6
  %s8 = sld [smem:[#allocation0]]
  $region42: #{unet_forward.12} parent=0
    _
  %s10 = ssub.s32 1, %s8
  %s11 = scalar_select 0, %s10, %s8
  // Predicated region
  $region2: #{unet_forward.12} parent=0 // pred_check
    _
  $region3: #{unet_forward.12} parent=0 // pred_check_branch
    %13 = sbr.rel (0) target = $region5
  $region4: #{unet_forward.12} parent=0 // pred_region
    _
  $region5: #{unet_forward.12} parent=0 // pred_fallthru
    _
  // Predicated region
  $region6: #{unet_forward.12} parent=0 // pred_check
    _
  $region7: #{unet_forward.12} parent=0 // pred_check_branch
    %15 = sbr.rel (0) target = $region9
  $region8: #{unet_forward.12} parent=0 // pred_region
    _
  $region9: #{unet_forward.12} parent=0 // pred_fallthru
    _
  // Predicated region
  $region10: #{unet_forward.12} parent=0 // pred_check
    _
  $region11: #{unet_forward.12} parent=0 // pred_check_branch
    %17 = sbr.rel (0) target = $region13
  $region12: #{unet_forward.12} parent=0 // pred_region
    _
  $region13: #{unet_forward.12} parent=0 // pred_fallthru
    _
  // Predicated region
  $region14: #{unet_forward.12} parent=0 // pred_check
    _
  $region15: #{unet_forward.12} parent=0 // pred_check_branch
    %19 = sbr.rel (0) target = $region17
  $region16: #{unet_forward.12} parent=0 // pred_region
    _
  $region17: #{unet_forward.12} parent=0 // pred_fallthru
    _
  %v21 = vld [vmem:[%s0] sm:$0xff]
  %v22 = vld [vmem:[%s0 + $0x8] sm:$0xff]
  %v23 = vld [vmem:[%s0 + $0x10] sm:$0xff]
  %v24 = vld [vmem:[%s0 + $0x18] sm:$0xff]
  %v25 = vld [vmem:[%s0 + $0x20] sm:$0xff]
  %v26 = vld [vmem:[%s0 + $0x28] sm:$0xff]
  %v27 = vld [vmem:[%s0 + $0x30] sm:$0xff]
  %v28 = vld [vmem:[%s0 + $0x38] sm:$0xff]
  %v29 = vunpack.c.l.bf16 %v21
  %v30 = vunpack.c.h.bf16 %v21
  %v31 = vunpack.c.l.bf16 %v22
  %v32 = vunpack.c.h.bf16 %v22
  %v33 = vunpack.c.l.bf16 %v23
  %v34 = vunpack.c.h.bf16 %v23
  %v35 = vunpack.c.l.bf16 %v24
  %v36 = vunpack.c.h.bf16 %v24
  %v37 = vunpack.c.l.bf16 %v25
  %v38 = vunpack.c.h.bf16 %v25
  %v39 = vunpack.c.l.bf16 %v26
  %v40 = vunpack.c.h.bf16 %v26
  %v41 = vunpack.c.l.bf16 %v27
  %v42 = vunpack.c.h.bf16 %v27
  %v43 = vunpack.c.l.bf16 %v28
  %v44 = vunpack.c.h.bf16 %v28
  %v45 = vld [vmem:[%s1] sm:$0xf]
  %v47 = vlaneseq
  %v48 = vshrl.u32 %v47, 7
  %v49 = vsub.s32 0, %v48
  %v50 = vrot.slane %v45, %v49
  %v51 = vlaneseq
  %v52 = vshrl.u32 %v51, 7
  %v53 = vsub.s32 1, %v52
  %v54 = vrot.slane %v45, %v53
  %v55 = vlaneseq
  %v56 = vshrl.u32 %v55, 7
  %v57 = vsub.s32 2, %v56
  %v58 = vrot.slane %v45, %v57
  %v59 = vlaneseq
  %v60 = vshrl.u32 %v59, 7
  %v61 = vsub.s32 3, %v60
  %v62 = vrot.slane %v45, %v61
  %v67 = vmul.f32 %v29, %v50
  %v68 = vmul.f32 %v30, %v54
  %v69 = vmul.f32 %v31, %v58
  %v70 = vmul.f32 %v32, %v62
  %v71 = vmul.f32 %v33, %v50
  %v72 = vmul.f32 %v34, %v54
  %v73 = vmul.f32 %v35, %v58
  %v74 = vmul.f32 %v36, %v62
  %v75 = vmul.f32 %v37, %v50
  %v76 = vmul.f32 %v38, %v54
  %v77 = vmul.f32 %v39, %v58
  %v78 = vmul.f32 %v40, %v62
  %v79 = vmul.f32 %v41, %v50
  %v80 = vmul.f32 %v42, %v54
  %v81 = vmul.f32 %v43, %v58
  %v82 = vmul.f32 %v44, %v62
  %v83 = vld [vmem:[%s2] sm:$0xf]
  %v85 = vlaneseq
  %v86 = vshrl.u32 %v85, 7
  %v87 = vsub.s32 0, %v86
  %v88 = vrot.slane %v83, %v87
  %v89 = vlaneseq
  %v90 = vshrl.u32 %v89, 7
  %v91 = vsub.s32 1, %v90
  %v92 = vrot.slane %v83, %v91
  %v93 = vlaneseq
  %v94 = vshrl.u32 %v93, 7
  %v95 = vsub.s32 2, %v94
  %v96 = vrot.slane %v83, %v95
  %v97 = vlaneseq
  %v98 = vshrl.u32 %v97, 7
  %v99 = vsub.s32 3, %v98
  %v100 = vrot.slane %v83, %v99
  %v105 = vadd.f32 %v67, %v88
  %v106 = vadd.f32 %v68, %v92
  %v107 = vadd.f32 %v69, %v96
  %v108 = vadd.f32 %v70, %v100
  %v109 = vadd.f32 %v71, %v88
  %v110 = vadd.f32 %v72, %v92
  %v111 = vadd.f32 %v73, %v96
  %v112 = vadd.f32 %v74, %v100
  %v113 = vadd.f32 %v75, %v88
  %v114 = vadd.f32 %v76, %v92
  %v115 = vadd.f32 %v77, %v96
  %v116 = vadd.f32 %v78, %v100
  %v117 = vadd.f32 %v79, %v88
  %v118 = vadd.f32 %v80, %v92
  %v119 = vadd.f32 %v81, %v96
  %v120 = vadd.f32 %v82, %v100
  %v121 = vmul.f32 %v105, 0.2
  %v122 = vmul.f32 %v106, 0.2
  %v123 = vmul.f32 %v107, 0.2
  %v124 = vmul.f32 %v108, 0.2
  %v125 = vmul.f32 %v109, 0.2
  %v126 = vmul.f32 %v110, 0.2
  %v127 = vmul.f32 %v111, 0.2
  %v128 = vmul.f32 %v112, 0.2
  %v129 = vmul.f32 %v113, 0.2
  %v130 = vmul.f32 %v114, 0.2
  %v131 = vmul.f32 %v115, 0.2
  %v132 = vmul.f32 %v116, 0.2
  %v133 = vmul.f32 %v117, 0.2
  %v134 = vmul.f32 %v118, 0.2
  %v135 = vmul.f32 %v119, 0.2
  %v136 = vmul.f32 %v120, 0.2
  %v137 = vmax.f32 %v105, %v121
  %v138 = vmax.f32 %v106, %v122
  %v139 = vmax.f32 %v107, %v123
  %v140 = vmax.f32 %v108, %v124
  %v141 = vmax.f32 %v109, %v125
  %v142 = vmax.f32 %v110, %v126
  %v143 = vmax.f32 %v111, %v127
  %v144 = vmax.f32 %v112, %v128
  %v145 = vmax.f32 %v113, %v129
  %v146 = vmax.f32 %v114, %v130
  %v147 = vmax.f32 %v115, %v131
  %v148 = vmax.f32 %v116, %v132
  %v149 = vmax.f32 %v117, %v133
  %v150 = vmax.f32 %v118, %v134
  %v151 = vmax.f32 %v119, %v135
  %v152 = vmax.f32 %v120, %v136
  %v153 = vpack.c.bf16 %v141, %v137
  %v154 = vpack.c.bf16 %v142, %v138
  %v155 = vpack.c.bf16 %v143, %v139
  %v156 = vpack.c.bf16 %v144, %v140
  %v157 = vpack.c.bf16 %v149, %v145
  %v158 = vpack.c.bf16 %v150, %v146
  %v159 = vpack.c.bf16 %v151, %v147
  %v160 = vpack.c.bf16 %v152, %v148
  %v161 = vld [vmem:[%s3] sm:$0xf]
  %v162 = vld [vmem:[%s3 + $0x4] sm:$0xf]
  %v163 = vld [vmem:[%s3 + $0x8] sm:$0xf]
  %v164 = vld [vmem:[%s3 + $0xc] sm:$0xf]
  %v165 = vld [vmem:[%s3 + $0x10] sm:$0xf]
  %v166 = vld [vmem:[%s3 + $0x14] sm:$0xf]
  %v167 = vld [vmem:[%s3 + $0x18] sm:$0xf]
  %v168 = vld [vmem:[%s3 + $0x1c] sm:$0xf]
  %v169 = vld [vmem:[%s3 + $0x20] sm:$0xf]
  %v170 = vld [vmem:[%s3 + $0x24] sm:$0xf]
  %v171 = vld [vmem:[%s3 + $0x28] sm:$0xf]
  %v172 = vld [vmem:[%s3 + $0x2c] sm:$0xf]
  %v173 = vld [vmem:[%s3 + $0x30] sm:$0xf]
  %v174 = vld [vmem:[%s3 + $0x34] sm:$0xf]
  %v175 = vld [vmem:[%s3 + $0x38] sm:$0xf]
  %v176 = vld [vmem:[%s3 + $0x3c] sm:$0xf]
  %v177 = vld [vmem:[%s3 + $0x40] sm:$0xf]
  %v178 = vld [vmem:[%s3 + $0x44] sm:$0xf]
  %v179 = vld [vmem:[%s3 + $0x48] sm:$0xf]
  %v180 = vld [vmem:[%s3 + $0x4c] sm:$0xf]
  %v181 = vld [vmem:[%s3 + $0x50] sm:$0xf]
  %v182 = vld [vmem:[%s3 + $0x54] sm:$0xf]
  %v183 = vld [vmem:[%s3 + $0x58] sm:$0xf]
  %v184 = vld [vmem:[%s3 + $0x5c] sm:$0xf]
  %v185 = vld [vmem:[%s3 + $0x60] sm:$0xf]
  %v186 = vld [vmem:[%s3 + $0x64] sm:$0xf]
  %v187 = vld [vmem:[%s3 + $0x68] sm:$0xf]
  %v188 = vld [vmem:[%s3 + $0x6c] sm:$0xf]
  %v189 = vld [vmem:[%s3 + $0x70] sm:$0xf]
  %v190 = vld [vmem:[%s3 + $0x74] sm:$0xf]
  %v191 = vld [vmem:[%s3 + $0x78] sm:$0xf]
  %v192 = vld [vmem:[%s3 + $0x7c] sm:$0xf]
  %v193 = vld [vmem:[%s3 + $0x80] sm:$0xf]
  %v194 = vld [vmem:[%s3 + $0x84] sm:$0xf]
  %v195 = vld [vmem:[%s3 + $0x88] sm:$0xf]
  %v196 = vld [vmem:[%s3 + $0x8c] sm:$0xf]
  %v197 = vld [vmem:[%s3 + $0x90] sm:$0xf]
  %v198 = vld [vmem:[%s3 + $0x94] sm:$0xf]
  %v199 = vld [vmem:[%s3 + $0x98] sm:$0xf]
  %v200 = vld [vmem:[%s3 + $0x9c] sm:$0xf]
  %v201 = vld [vmem:[%s3 + $0xa0] sm:$0xf]
  %v202 = vld [vmem:[%s3 + $0xa4] sm:$0xf]
  %v203 = vld [vmem:[%s3 + $0xa8] sm:$0xf]
  %v204 = vld [vmem:[%s3 + $0xac] sm:$0xf]
  %v205 = vld [vmem:[%s3 + $0xb0] sm:$0xf]
  %v206 = vld [vmem:[%s3 + $0xb4] sm:$0xf]
  %v207 = vld [vmem:[%s3 + $0xb8] sm:$0xf]
  %v208 = vld [vmem:[%s3 + $0xbc] sm:$0xf]
  %v209 = vld [vmem:[%s3 + $0xc0] sm:$0xf]
  %v210 = vld [vmem:[%s3 + $0xc4] sm:$0xf]
  %v211 = vld [vmem:[%s3 + $0xc8] sm:$0xf]
  %v212 = vld [vmem:[%s3 + $0xcc] sm:$0xf]
  %v213 = vld [vmem:[%s3 + $0xd0] sm:$0xf]
  %v214 = vld [vmem:[%s3 + $0xd4] sm:$0xf]
  %v215 = vld [vmem:[%s3 + $0xd8] sm:$0xf]
  %v216 = vld [vmem:[%s3 + $0xdc] sm:$0xf]
  %v217 = vld [vmem:[%s3 + $0xe0] sm:$0xf]
  %v218 = vld [vmem:[%s3 + $0xe4] sm:$0xf]
  %v219 = vld [vmem:[%s3 + $0xe8] sm:$0xf]
  %v220 = vld [vmem:[%s3 + $0xec] sm:$0xf]
  %v221 = vld [vmem:[%s3 + $0xf0] sm:$0xf]
  %v222 = vld [vmem:[%s3 + $0xf4] sm:$0xf]
  %v223 = vld [vmem:[%s3 + $0xf8] sm:$0xf]
  %v224 = vld [vmem:[%s3 + $0xfc] sm:$0xf]
  %v289 = vunpack.c.l.b16 %v161
  %v290 = vunpack.c.l.b16 %v162
  %v291 = vunpack.c.l.b16 %v163
  %v292 = vunpack.c.l.b16 %v164
  %v293 = vunpack.c.l.b16 %v165
  %v294 = vunpack.c.l.b16 %v166
  %v295 = vunpack.c.l.b16 %v167
  %v296 = vunpack.c.l.b16 %v168
  %v297 = vunpack.c.l.b16 %v169
  %v298 = vunpack.c.l.b16 %v170
  %v299 = vunpack.c.l.b16 %v171
  %v300 = vunpack.c.l.b16 %v172
  %v301 = vunpack.c.l.b16 %v173
  %v302 = vunpack.c.l.b16 %v174
  %v303 = vunpack.c.l.b16 %v175
  %v304 = vunpack.c.l.b16 %v176
  %v305 = vunpack.c.l.b16 %v177
  %v306 = vunpack.c.l.b16 %v178
  %v307 = vunpack.c.l.b16 %v179
  %v308 = vunpack.c.l.b16 %v180
  %v309 = vunpack.c.l.b16 %v181
  %v310 = vunpack.c.l.b16 %v182
  %v311 = vunpack.c.l.b16 %v183
  %v312 = vunpack.c.l.b16 %v184
  %v313 = vunpack.c.l.b16 %v185
  %v314 = vunpack.c.l.b16 %v186
  %v315 = vunpack.c.l.b16 %v187
  %v316 = vunpack.c.l.b16 %v188
  %v317 = vunpack.c.l.b16 %v189
  %v318 = vunpack.c.l.b16 %v190
  %v319 = vunpack.c.l.b16 %v191
  %v320 = vunpack.c.l.b16 %v192
  %v321 = vunpack.c.l.b16 %v193
  %v322 = vunpack.c.l.b16 %v194
  %v323 = vunpack.c.l.b16 %v195
  %v324 = vunpack.c.l.b16 %v196
  %v325 = vunpack.c.l.b16 %v197
  %v326 = vunpack.c.l.b16 %v198
  %v327 = vunpack.c.l.b16 %v199
  %v328 = vunpack.c.l.b16 %v200
  %v329 = vunpack.c.l.b16 %v201
  %v330 = vunpack.c.l.b16 %v202
  %v331 = vunpack.c.l.b16 %v203
  %v332 = vunpack.c.l.b16 %v204
  %v333 = vunpack.c.l.b16 %v205
  %v334 = vunpack.c.l.b16 %v206
  %v335 = vunpack.c.l.b16 %v207
  %v336 = vunpack.c.l.b16 %v208
  %v337 = vunpack.c.l.b16 %v209
  %v338 = vunpack.c.l.b16 %v210
  %v339 = vunpack.c.l.b16 %v211
  %v340 = vunpack.c.l.b16 %v212
  %v341 = vunpack.c.l.b16 %v213
  %v342 = vunpack.c.l.b16 %v214
  %v343 = vunpack.c.l.b16 %v215
  %v344 = vunpack.c.l.b16 %v216
  %v345 = vunpack.c.l.b16 %v217
  %v346 = vunpack.c.l.b16 %v218
  %v347 = vunpack.c.l.b16 %v219
  %v348 = vunpack.c.l.b16 %v220
  %v349 = vunpack.c.l.b16 %v221
  %v350 = vunpack.c.l.b16 %v222
  %v351 = vunpack.c.l.b16 %v223
  %v352 = vunpack.c.l.b16 %v224
  %v353 = vpack.c.b16 %v290, %v289
  %v354 = vpack.c.b16 %v292, %v291
  %v355 = vpack.c.b16 %v294, %v293
  %v356 = vpack.c.b16 %v296, %v295
  %v357 = vpack.c.b16 %v298, %v297
  %v358 = vpack.c.b16 %v300, %v299
  %v359 = vpack.c.b16 %v302, %v301
  %v360 = vpack.c.b16 %v304, %v303
  %v361 = vpack.c.b16 %v306, %v305
  %v362 = vpack.c.b16 %v308, %v307
  %v363 = vpack.c.b16 %v310, %v309
  %v364 = vpack.c.b16 %v312, %v311
  %v365 = vpack.c.b16 %v314, %v313
  %v366 = vpack.c.b16 %v316, %v315
  %v367 = vpack.c.b16 %v318, %v317
  %v368 = vpack.c.b16 %v320, %v319
  %v369 = vpack.c.b16 %v322, %v321
  %v370 = vpack.c.b16 %v324, %v323
  %v371 = vpack.c.b16 %v326, %v325
  %v372 = vpack.c.b16 %v328, %v327
  %v373 = vpack.c.b16 %v330, %v329
  %v374 = vpack.c.b16 %v332, %v331
  %v375 = vpack.c.b16 %v334, %v333
  %v376 = vpack.c.b16 %v336, %v335
  %v377 = vpack.c.b16 %v338, %v337
  %v378 = vpack.c.b16 %v340, %v339
  %v379 = vpack.c.b16 %v342, %v341
  %v380 = vpack.c.b16 %v344, %v343
  %v381 = vpack.c.b16 %v346, %v345
  %v382 = vpack.c.b16 %v348, %v347
  %v383 = vpack.c.b16 %v350, %v349
  %v384 = vpack.c.b16 %v352, %v351
  %417 = vmatprep.subr.bf16.mxu0 0
  %418 = vmatpush1.bf16.msra.mxu0 %v353
  %419 = vmatprep.subr.bf16.mxu0 0
  %420 = vmatpush1.bf16.msra.mxu0 %v354
  %421 = vmatprep.subr.bf16.mxu0 0
  %422 = vmatpush1.bf16.msra.mxu0 %v355
  %423 = vmatprep.subr.bf16.mxu0 0
  %424 = vmatpush1.bf16.msra.mxu0 %v356
  %425 = vmatprep.subr.bf16.mxu0 0
  %426 = vmatpush1.bf16.msra.mxu0 %v357
  %427 = vmatprep.subr.bf16.mxu0 0
  %428 = vmatpush1.bf16.msra.mxu0 %v358
  %429 = vmatprep.subr.bf16.mxu0 0
  %430 = vmatpush1.bf16.msra.mxu0 %v359
  %431 = vmatprep.subr.bf16.mxu0 0
  %432 = vmatpush1.bf16.msra.mxu0 %v360
  %433 = vmatprep.subr.bf16.mxu0 0
  %434 = vmatpush1.bf16.msra.mxu0 %v361
  %435 = vmatprep.subr.bf16.mxu0 0
  %436 = vmatpush1.bf16.msra.mxu0 %v362
  %437 = vmatprep.subr.bf16.mxu0 0
  %438 = vmatpush1.bf16.msra.mxu0 %v363
  %439 = vmatprep.subr.bf16.mxu0 0
  %440 = vmatpush1.bf16.msra.mxu0 %v364
  %441 = vmatprep.subr.bf16.mxu0 0
  %442 = vmatpush1.bf16.msra.mxu0 %v365
  %443 = vmatprep.subr.bf16.mxu0 0
  %444 = vmatpush1.bf16.msra.mxu0 %v366
  %445 = vmatprep.subr.bf16.mxu0 0
  %446 = vmatpush1.bf16.msra.mxu0 %v367
  %447 = vmatprep.subr.bf16.mxu0 0
  %448 = vmatpush1.bf16.msra.mxu0 %v368
  %449 = vmatprep.mubr.bf16.mxu0 %v154
  %450 = vmatmul.mubr.bf16.gmra.mrb[0].mxu0 %v153
  %v451 = vpop.f32.mrb[0].mxu0
  %v452 = vadd.f32 0.0, %v451
  %v453 = vpop.f32.mrb[0].mxu0
  %v454 = vpop.f32.mrb[0].mxu0
  %v455 = vadd.f32 0.0, %v454
  %v456 = vpop.f32.mrb[0].mxu0
  %457 = vmatprep.mubr.bf16.mxu0 %v158
  %458 = vmatmul.mubr.bf16.gmra.mrb[0].mxu0 %v157
  %v459 = vpop.f32.mrb[0].mxu0
  %v460 = vadd.f32 0.0, %v459
  %v461 = vpop.f32.mrb[0].mxu0
  %v462 = vpop.f32.mrb[0].mxu0
  %v463 = vadd.f32 0.0, %v462
  %v464 = vpop.f32.mrb[0].mxu0
  %465 = vdwg.mxu0
  %466 = vmatprep.subr.bf16.mxu0 0
  %467 = vmatpush1.bf16.msra.mxu0 %v369
  %468 = vmatprep.subr.bf16.mxu0 0
  %469 = vmatpush1.bf16.msra.mxu0 %v370
  %470 = vmatprep.subr.bf16.mxu0 0
  %471 = vmatpush1.bf16.msra.mxu0 %v371
  %472 = vmatprep.subr.bf16.mxu0 0
  %473 = vmatpush1.bf16.msra.mxu0 %v372
  %474 = vmatprep.subr.bf16.mxu0 0
  %475 = vmatpush1.bf16.msra.mxu0 %v373
  %476 = vmatprep.subr.bf16.mxu0 0
  %477 = vmatpush1.bf16.msra.mxu0 %v374
  %478 = vmatprep.subr.bf16.mxu0 0
  %479 = vmatpush1.bf16.msra.mxu0 %v375
  %480 = vmatprep.subr.bf16.mxu0 0
  %481 = vmatpush1.bf16.msra.mxu0 %v376
  %482 = vmatprep.subr.bf16.mxu0 0
  %483 = vmatpush1.bf16.msra.mxu0 %v377
  %484 = vmatprep.subr.bf16.mxu0 0
  %485 = vmatpush1.bf16.msra.mxu0 %v378
  %486 = vmatprep.subr.bf16.mxu0 0
  %487 = vmatpush1.bf16.msra.mxu0 %v379
  %488 = vmatprep.subr.bf16.mxu0 0
  %489 = vmatpush1.bf16.msra.mxu0 %v380
  %490 = vmatprep.subr.bf16.mxu0 0
  %491 = vmatpush1.bf16.msra.mxu0 %v381
  %492 = vmatprep.subr.bf16.mxu0 0
  %493 = vmatpush1.bf16.msra.mxu0 %v382
  %494 = vmatprep.subr.bf16.mxu0 0
  %495 = vmatpush1.bf16.msra.mxu0 %v383
  %496 = vmatprep.subr.bf16.mxu0 0
  %497 = vmatpush1.bf16.msra.mxu0 %v384
  %498 = vmatprep.mubr.bf16.mxu0 %v156
  %499 = vmatmul.mubr.bf16.gmra.mrb[0].mxu0 %v155
  %v500 = vpop.f32.mrb[0].mxu0
  %v501 = vadd.f32 %v452, %v500
  %v502 = vpop.f32.mrb[0].mxu0
  %v503 = vpop.f32.mrb[0].mxu0
  %v504 = vadd.f32 %v455, %v503
  %v505 = vpop.f32.mrb[0].mxu0
  %506 = vmatprep.mubr.bf16.mxu0 %v160
  %507 = vmatmul.mubr.bf16.gmra.mrb[0].mxu0 %v159
  %v508 = vpop.f32.mrb[0].mxu0
  %v509 = vadd.f32 %v460, %v508
  %v510 = vpop.f32.mrb[0].mxu0
  %v511 = vpop.f32.mrb[0].mxu0
  %v512 = vadd.f32 %v463, %v511
  %v513 = vpop.f32.mrb[0].mxu0
  %514 = vdwg.mxu0
  %v515 = vpack.c.bf16 %v504, %v501
  %v516 = vpack.c.bf16 %v512, %v509
  %v519 = vunpack.c.l.b16 %v515
  %v520 = vunpack.c.h.b16 %v515
  %v521 = vunpack.c.l.b16 %v516
  %v522 = vunpack.c.h.b16 %v516
  %v523 = vpack.c.b16 %v519, %v519
  %v524 = vpack.c.b16 %v520, %v520
  %v525 = vpack.c.b16 %v521, %v521
  %v526 = vpack.c.b16 %v522, %v522
  %531 = vst [vmem:[%s4] sm:$0xf] %v523
  %532 = vst [vmem:[%s4 + $0x4] sm:$0xf] %v524
  %533 = vst [vmem:[%s4 + $0x8] sm:$0xf] %v525
  %534 = vst [vmem:[%s4 + $0xc] sm:$0xf] %v526
  %v535 = vadd.f32 %v501, %v504
  %v536 = vadd.f32 %v535, %v509
  %v537 = vadd.f32 %v536, %v512
  %v538 = vrot.slane %v537, 4
  %v539 = vadd.f32 %v537, %v538
  %v540 = vrot.slane %v539, 2
  %v541 = vadd.f32 %v539, %v540
  %v542 = vrot.slane %v541, 1
  %v543 = vadd.f32 %v541, %v542
  %544 = vst [vmem:[%s5] sm:$0x1] %v543
  %v545 = vmul.f32 %v501, %v501
  %v546 = vmul.f32 %v504, %v504
  %v547 = vmul.f32 %v509, %v509
  %v548 = vmul.f32 %v512, %v512
  %v549 = vadd.f32 %v545, %v546
  %v550 = vadd.f32 %v549, %v547
  %v551 = vadd.f32 %v550, %v548
  %v552 = vrot.slane %v551, 4
  %v553 = vadd.f32 %v551, %v552
  %v554 = vrot.slane %v553, 2
  %v555 = vadd.f32 %v553, %v554
  %v556 = vrot.slane %v555, 1
  %v557 = vadd.f32 %v555, %v556
  %558 = vst [vmem:[%s6] sm:$0x1] %v557
  // Predicated region
  $region18: #{unet_forward.12} parent=0 // pred_check
    _
  $region19: #{unet_forward.12} parent=0 // pred_check_branch
    %560 = sbr.rel (0) target = $region21
  $region20: #{unet_forward.12} parent=0 // pred_region
    _
  $region21: #{unet_forward.12} parent=0 // pred_fallthru
    _
  // Predicated region
  $region22: #{unet_forward.12} parent=0 // pred_check
    _
  $region23: #{unet_forward.12} parent=0 // pred_check_branch
    %562 = sbr.rel (0) target = $region25
  $region24: #{unet_forward.12} parent=0 // pred_region
    _
  $region25: #{unet_forward.12} parent=0 // pred_fallthru
    _
  // Predicated region
  $region26: #{unet_forward.12} parent=0 // pred_check
    _
  $region27: #{unet_forward.12} parent=0 // pred_check_branch
    %564 = sbr.rel (0) target = $region29
  $region28: #{unet_forward.12} parent=0 // pred_region
    _
  $region29: #{unet_forward.12} parent=0 // pred_fallthru
    _
  // Predicated region
  $region30: #{unet_forward.12} parent=0 // pred_check
    _
  $region31: #{unet_forward.12} parent=0 // pred_check_branch
    %566 = sbr.rel (0) target = $region33
  $region32: #{unet_forward.12} parent=0 // pred_region
    _
  $region33: #{unet_forward.12} parent=0 // pred_fallthru
    _
  // Predicated region
  $region34: #{unet_forward.12} parent=0 // pred_check
    _
  $region35: #{unet_forward.12} parent=0 // pred_check_branch
    %568 = sbr.rel (0) target = $region37
  $region36: #{unet_forward.12} parent=0 // pred_region
    _
  $region37: #{unet_forward.12} parent=0 // pred_fallthru
    _
  // Predicated region
  $region38: #{unet_forward.12} parent=0 // pred_check
    _
  $region39: #{unet_forward.12} parent=0 // pred_check_branch
    %570 = sbr.rel (0) target = $region41
  $region40: #{unet_forward.12} parent=0 // pred_region
    _
  $region41: #{unet_forward.12} parent=0 // pred_fallthru
    _

// kernel: tile.51
$region0: #{tile.51}
  #allocation0 [shape = 's32[1]{0}', space=sflag, size = 0x4, scoped, tag = 'scoped memory for tile.51']
  %s0 = inlined_call_operand.vmem [shape: f32[64], index: 0, kind: input, shape index: {}]
  %s1 = inlined_call_operand.vmem [shape: f32[16,64], index: 1, kind: output, shape index: {}]
  // Predicated region
  $region2: #{tile.51} parent=0 // pred_check
    _
  $region3: #{tile.51} parent=0 // pred_check_branch
    %3 = sbr.rel (0) target = $region5
  $region4: #{tile.51} parent=0 // pred_region
    _
  $region5: #{tile.51} parent=0 // pred_fallthru
    _
  %v4 = vld [vmem:[%s0] ss:$0 sm:$0xff]
  %5 = vst [vmem:[%s1] sm:$0xff] %v4
  %s6 = scalar_lea.vmem %s1, 8
  %7 = vst [vmem:[%s6] sm:$0xff] %v4

// kernel: tile.56
$region0: #{tile.56}
  %s0 = inlined_call_operand.vmem [shape: f32[16,64], index: 0, kind: input, shape index: {}]
  %s1 = inlined_call_operand.vmem [shape: f32[1,1024], index: 1, kind: output, shape index: {}]
  $region1: #{tile.56} parent=0
    #allocation0 [shape = 'u8[32768]{0}', space=vmem, size = 0x8000, scoped, tag = 'scoped mem for output reshape']
    %v2 = vld [vmem:[%s0] ss:$2 sm:$0xff]
    %vm3 = vcmask 523264
    %4 = vst.msk [vmem:[#allocation0] ss:$8 sm:$0xf] %vm3, %v2
    %5 = vst.msk [vmem:[#allocation0] ss:$8 sm:$0xf0] %vm3, %v2
    %s6 = scalar_lea.vmem %s0, 1
    %v7 = vld [vmem:[%s6] ss:$2 sm:$0xff]
    %8 = vrot.lane.b32.xlu0 %v7, 64
    %v9 = vpop.permute.xlu0 %8
    %vm10 = vcmask 1048064
    %11 = vst.msk [vmem:[#allocation0] ss:$8 sm:$0xf] %vm10, %v9
    %12 = vst.msk [vmem:[#allocation0] ss:$8 sm:$0xf0] %vm10, %v9
    %s14 = sshllo.u32 0, 1
    %v16 = vld [vmem:[#allocation0] sm:%s14]
    %s17 = sshllo.u32 0, 1
    %18 = vst [vmem:[%s1] sm:%s17] %v16
    %s19 = scalar_lea.vmem [#allocation0], 8
    %v20 = vld [vmem:[%s19] sm:%s14]
    %s21 = sshllo.u32 0, 1
    %s22 = scalar_lea.vmem %s1, 1
    %23 = vst [vmem:[%s22] sm:%s21] %v20
    %s24 = scalar_lea.vmem [#allocation0], 16
    %v25 = vld [vmem:[%s24] sm:%s14]
    %s26 = sshllo.u32 0, 1
    %s27 = smul.addr 1, 2
    %s28 = scalar_lea.vmem %s1, %s27
    %29 = vst [vmem:[%s28] sm:%s26] %v25
    %s30 = scalar_lea.vmem [#allocation0], 24
    %v31 = vld [vmem:[%s30] sm:%s14]
    %s32 = sshllo.u32 0, 1
    %s33 = smul.addr 1, 3
    %s34 = scalar_lea.vmem %s1, %s33
    %35 = vst [vmem:[%s34] sm:%s32] %v31
    %s36 = scalar_lea.vmem [#allocation0], 32
    %v37 = vld [vmem:[%s36] sm:%s14]
    %s38 = sshllo.u32 0, 1
    %s39 = smul.addr 1, 4
    %s40 = scalar_lea.vmem %s1, %s39
    %41 = vst [vmem:[%s40] sm:%s38] %v37
    %s42 = scalar_lea.vmem [#allocation0], 40
    %v43 = vld [vmem:[%s42] sm:%s14]
    %s44 = sshllo.u32 0, 1
    %s45 = smul.addr 1, 5
    %s46 = scalar_lea.vmem %s1, %s45
    %47 = vst [vmem:[%s46] sm:%s44] %v43
    %s48 = scalar_lea.vmem [#allocation0], 48
    %v49 = vld [vmem:[%s48] sm:%s14]
    %s50 = sshllo.u32 0, 1
    %s51 = smul.addr 1, 6
    %s52 = scalar_lea.vmem %s1, %s51
    %53 = vst [vmem:[%s52] sm:%s50] %v49
    %s54 = scalar_lea.vmem [#allocation0], 56
    %v55 = vld [vmem:[%s54] sm:%s14]
    %s56 = sshllo.u32 0, 1
    %s57 = smul.addr 1, 7
    %s58 = scalar_lea.vmem %s1, %s57
    %59 = vst [vmem:[%s58] sm:%s56] %v55

// kernel: tile.61
$region0: #{tile.61}
  #allocation0 [shape = 's32[1]{0}', space=sflag, size = 0x4, scoped, tag = 'scoped memory for tile.61']
  %s0 = inlined_call_operand.vmem [shape: f32[128], index: 0, kind: input, shape index: {}]
  %s1 = inlined_call_operand.vmem [shape: f32[16,128], index: 1, kind: output, shape index: {}]
  // Predicated region
  $region2: #{tile.61} parent=0 // pred_check
    _
  $region3: #{tile.61} parent=0 // pred_check_branch
    %3 = sbr.rel (0) target = $region5
  $region4: #{tile.61} parent=0 // pred_region
    _
  $region5: #{tile.61} parent=0 // pred_fallthru
    _
  %v4 = vld [vmem:[%s0] ss:$0 sm:$0xff]
  %5 = vst [vmem:[%s1] sm:$0xff] %v4
  %s6 = scalar_lea.vmem %s1, 8
  %7 = vst [vmem:[%s6] sm:$0xff] %v4

// kernel: unet_forward.13
$region0: #{unet_forward.13}
  #allocation0 [shape = 'u32[]', space=smem, size = 0x4, offset = 0x4, fixed_abs, tag = 'smem constant byte address 0x4 - core index']
  #allocation1 [shape = 'u32[144,128]{1,0:T(1,128)}', space=vmem, size = 0x12000, scoped, tag = 'internal scratch']
  %s0 = inlined_call_operand.vmem [shape: bf16[16,1024], index: 0, kind: input, shape index: {}]
  %s1 = inlined_call_operand.vmem [shape: f32[1,1024], index: 1, kind: input, shape index: {}]
  %s2 = inlined_call_operand.vmem [shape: f32[1,1024], index: 2, kind: input, shape index: {}]
  %s3 = inlined_call_operand.vmem [shape: bf16[1024,128], index: 3, kind: input, shape index: {}]
  %s4 = inlined_call_operand.vmem [shape: bf16[16,128], index: 4, kind: output, shape index: {0}]
  %s5 = inlined_call_operand.vmem [shape: f32[1,128], index: 5, kind: output, shape index: {1}]
  %s6 = inlined_call_operand.vmem [shape: f32[1,128], index: 6, kind: output, shape index: {2}]
  %7 = xla_tuple %s4, %s5, %s6
  %s8 = sld [smem:[#allocation0]]
  $region42: #{unet_forward.13} parent=0
    _
  %s10 = ssub.s32 1, %s8
  %s11 = scalar_select 0, %s10, %s8
  // Predicated region
  $region2: #{unet_forward.13} parent=0 // pred_check
    _
  $region3: #{unet_forward.13} parent=0 // pred_check_branch
    %13 = sbr.rel (0) target = $region5
  $region4: #{unet_forward.13} parent=0 // pred_region
    _
  $region5: #{unet_forward.13} parent=0 // pred_fallthru
    _
  // Predicated region
  $region6: #{unet_forward.13} parent=0 // pred_check
    _
  $region7: #{unet_forward.13} parent=0 // pred_check_branch
    %15 = sbr.rel (0) target = $region9
  $region8: #{unet_forward.13} parent=0 // pred_region
    _
  $region9: #{unet_forward.13} parent=0 // pred_fallthru
    _
  // Predicated region
  $region10: #{unet_forward.13} parent=0 // pred_check
    _
  $region11: #{unet_forward.13} parent=0 // pred_check_branch
    %17 = sbr.rel (0) target = $region13
  $region12: #{unet_forward.13} parent=0 // pred_region
    _
  $region13: #{unet_forward.13} parent=0 // pred_fallthru
    _
  // Predicated region
  $region14: #{unet_forward.13} parent=0 // pred_check
    _
  $region15: #{unet_forward.13} parent=0 // pred_check_branch
    %19 = sbr.rel (0) target = $region17
  $region16: #{unet_forward.13} parent=0 // pred_region
    _
  $region17: #{unet_forward.13} parent=0 // pred_fallthru
    _
  %v21 = vld [vmem:[%s0] sm:$0xff]
  %v22 = vld [vmem:[%s0 + $0x8] sm:$0xff]
  %v23 = vld [vmem:[%s0 + $0x10] sm:$0xff]
  %v24 = vld [vmem:[%s0 + $0x18] sm:$0xff]
  %v25 = vld [vmem:[%s0 + $0x20] sm:$0xff]
  %v26 = vld [vmem:[%s0 + $0x28] sm:$0xff]
  %v27 = vld [vmem:[%s0 + $0x30] sm:$0xff]
  %v28 = vld [vmem:[%s0 + $0x38] sm:$0xff]
  %v29 = vunpack.c.l.bf16 %v21
  %v30 = vunpack.c.h.bf16 %v21
  %v31 = vunpack.c.l.bf16 %v22
  %v32 = vunpack.c.h.bf16 %v22
  %v33 = vunpack.c.l.bf16 %v23
  %v34 = vunpack.c.h.bf16 %v23
  %v35 = vunpack.c.l.bf16 %v24
  %v36 = vunpack.c.h.bf16 %v24
  %v37 = vunpack.c.l.bf16 %v25
  %v38 = vunpack.c.h.bf16 %v25
  %v39 = vunpack.c.l.bf16 %v26
  %v40 = vunpack.c.h.bf16 %v26
  %v41 = vunpack.c.l.bf16 %v27
  %v42 = vunpack.c.h.bf16 %v27
  %v43 = vunpack.c.l.bf16 %v28
  %v44 = vunpack.c.h.bf16 %v28
  %v45 = vld [vmem:[%s1] sm:$0xff]
  %v47 = vlaneseq
  %v48 = vshrl.u32 %v47, 7
  %v49 = vsub.s32 0, %v48
  %v50 = vrot.slane %v45, %v49
  %v51 = vlaneseq
  %v52 = vshrl.u32 %v51, 7
  %v53 = vsub.s32 1, %v52
  %v54 = vrot.slane %v45, %v53
  %v55 = vlaneseq
  %v56 = vshrl.u32 %v55, 7
  %v57 = vsub.s32 2, %v56
  %v58 = vrot.slane %v45, %v57
  %v59 = vlaneseq
  %v60 = vshrl.u32 %v59, 7
  %v61 = vsub.s32 3, %v60
  %v62 = vrot.slane %v45, %v61
  %v63 = vlaneseq
  %v64 = vshrl.u32 %v63, 7
  %v65 = vsub.s32 4, %v64
  %v66 = vrot.slane %v45, %v65
  %v67 = vlaneseq
  %v68 = vshrl.u32 %v67, 7
  %v69 = vsub.s32 5, %v68
  %v70 = vrot.slane %v45, %v69
  %v71 = vlaneseq
  %v72 = vshrl.u32 %v71, 7
  %v73 = vsub.s32 6, %v72
  %v74 = vrot.slane %v45, %v73
  %v75 = vlaneseq
  %v76 = vshrl.u32 %v75, 7
  %v77 = vsub.s32 7, %v76
  %v78 = vrot.slane %v45, %v77
  %v87 = vmul.f32 %v29, %v50
  %v88 = vmul.f32 %v30, %v54
  %v89 = vmul.f32 %v31, %v58
  %v90 = vmul.f32 %v32, %v62
  %v91 = vmul.f32 %v33, %v66
  %v92 = vmul.f32 %v34, %v70
  %v93 = vmul.f32 %v35, %v74
  %v94 = vmul.f32 %v36, %v78
  %v95 = vmul.f32 %v37, %v50
  %v96 = vmul.f32 %v38, %v54
  %v97 = vmul.f32 %v39, %v58
  %v98 = vmul.f32 %v40, %v62
  %v99 = vmul.f32 %v41, %v66
  %v100 = vmul.f32 %v42, %v70
  %v101 = vmul.f32 %v43, %v74
  %v102 = vmul.f32 %v44, %v78
  %v103 = vld [vmem:[%s2] sm:$0xff]
  %v105 = vlaneseq
  %v106 = vshrl.u32 %v105, 7
  %v107 = vsub.s32 0, %v106
  %v108 = vrot.slane %v103, %v107
  %v109 = vlaneseq
  %v110 = vshrl.u32 %v109, 7
  %v111 = vsub.s32 1, %v110
  %v112 = vrot.slane %v103, %v111
  %v113 = vlaneseq
  %v114 = vshrl.u32 %v113, 7
  %v115 = vsub.s32 2, %v114
  %v116 = vrot.slane %v103, %v115
  %v117 = vlaneseq
  %v118 = vshrl.u32 %v117, 7
  %v119 = vsub.s32 3, %v118
  %v120 = vrot.slane %v103, %v119
  %v121 = vlaneseq
  %v122 = vshrl.u32 %v121, 7
  %v123 = vsub.s32 4, %v122
  %v124 = vrot.slane %v103, %v123
  %v125 = vlaneseq
  %v126 = vshrl.u32 %v125, 7
  %v127 = vsub.s32 5, %v126
  %v128 = vrot.slane %v103, %v127
  %v129 = vlaneseq
  %v130 = vshrl.u32 %v129, 7
  %v131 = vsub.s32 6, %v130
  %v132 = vrot.slane %v103, %v131
  %v133 = vlaneseq
  %v134 = vshrl.u32 %v133, 7
  %v135 = vsub.s32 7, %v134
  %v136 = vrot.slane %v103, %v135
  %v145 = vadd.f32 %v87, %v108
  %v146 = vadd.f32 %v88, %v112
  %v147 = vadd.f32 %v89, %v116
  %v148 = vadd.f32 %v90, %v120
  %v149 = vadd.f32 %v91, %v124
  %v150 = vadd.f32 %v92, %v128
  %v151 = vadd.f32 %v93, %v132
  %v152 = vadd.f32 %v94, %v136
  %v153 = vadd.f32 %v95, %v108
  %v154 = vadd.f32 %v96, %v112
  %v155 = vadd.f32 %v97, %v116
  %v156 = vadd.f32 %v98, %v120
  %v157 = vadd.f32 %v99, %v124
  %v158 = vadd.f32 %v100, %v128
  %v159 = vadd.f32 %v101, %v132
  %v160 = vadd.f32 %v102, %v136
  %v161 = vmul.f32 %v145, 0.2
  %v162 = vmul.f32 %v146, 0.2
  %v163 = vmul.f32 %v147, 0.2
  %v164 = vmul.f32 %v148, 0.2
  %v165 = vmul.f32 %v149, 0.2
  %v166 = vmul.f32 %v150, 0.2
  %v167 = vmul.f32 %v151, 0.2
  %v168 = vmul.f32 %v152, 0.2
  %v169 = vmul.f32 %v153, 0.2
  %v170 = vmul.f32 %v154, 0.2
  %v171 = vmul.f32 %v155, 0.2
  %v172 = vmul.f32 %v156, 0.2
  %v173 = vmul.f32 %v157, 0.2
  %v174 = vmul.f32 %v158, 0.2
  %v175 = vmul.f32 %v159, 0.2
  %v176 = vmul.f32 %v160, 0.2
  %v177 = vmax.f32 %v145, %v161
  %v178 = vmax.f32 %v146, %v162
  %v179 = vmax.f32 %v147, %v163
  %v180 = vmax.f32 %v148, %v164
  %v181 = vmax.f32 %v149, %v165
  %v182 = vmax.f32 %v150, %v166
  %v183 = vmax.f32 %v151, %v167
  %v184 = vmax.f32 %v152, %v168
  %v185 = vmax.f32 %v153, %v169
  %v186 = vmax.f32 %v154, %v170
  %v187 = vmax.f32 %v155, %v171
  %v188 = vmax.f32 %v156, %v172
  %v189 = vmax.f32 %v157, %v173
  %v190 = vmax.f32 %v158, %v174
  %v191 = vmax.f32 %v159, %v175
  %v192 = vmax.f32 %v160, %v176
  %v193 = vpack.c.bf16 %v185, %v177
  %v194 = vpack.c.bf16 %v186, %v178
  %v195 = vpack.c.bf16 %v187, %v179
  %v196 = vpack.c.bf16 %v188, %v180
  %v197 = vpack.c.bf16 %v189, %v181
  %v198 = vpack.c.bf16 %v190, %v182
  %v199 = vpack.c.bf16 %v191, %v183
  %v200 = vpack.c.bf16 %v192, %v184
  %v201 = vld [vmem:[%s3] sm:$0xf]
  %v202 = vld [vmem:[%s3 + $0x4] sm:$0xf]
  %v203 = vld [vmem:[%s3 + $0x8] sm:$0xf]
  %v204 = vld [vmem:[%s3 + $0xc] sm:$0xf]
  %v205 = vld [vmem:[%s3 + $0x10] sm:$0xf]
  %v206 = vld [vmem:[%s3 + $0x14] sm:$0xf]
  %v207 = vld [vmem:[%s3 + $0x18] sm:$0xf]
  %v208 = vld [vmem:[%s3 + $0x1c] sm:$0xf]
  %v209 = vld [vmem:[%s3 + $0x20] sm:$0xf]
  %v210 = vld [vmem:[%s3 + $0x24] sm:$0xf]
  %v211 = vld [vmem:[%s3 + $0x28] sm:$0xf]
  %v212 = vld [vmem:[%s3 + $0x2c] sm:$0xf]
  %v213 = vld [vmem:[%s3 + $0x30] sm:$0xf]
  %v214 = vld [vmem:[%s3 + $0x34] sm:$0xf]
  %v215 = vld [vmem:[%s3 + $0x38] sm:$0xf]
  %v216 = vld [vmem:[%s3 + $0x3c] sm:$0xf]
  %v217 = vld [vmem:[%s3 + $0x40] sm:$0xf]
  %v218 = vld [vmem:[%s3 + $0x44] sm:$0xf]
  %v219 = vld [vmem:[%s3 + $0x48] sm:$0xf]
  %v220 = vld [vmem:[%s3 + $0x4c] sm:$0xf]
  %v221 = vld [vmem:[%s3 + $0x50] sm:$0xf]
  %v222 = vld [vmem:[%s3 + $0x54] sm:$0xf]
  %v223 = vld [vmem:[%s3 + $0x58] sm:$0xf]
  %v224 = vld [vmem:[%s3 + $0x5c] sm:$0xf]
  %v225 = vld [vmem:[%s3 + $0x60] sm:$0xf]
  %v226 = vld [vmem:[%s3 + $0x64] sm:$0xf]
  %v227 = vld [vmem:[%s3 + $0x68] sm:$0xf]
  %v228 = vld [vmem:[%s3 + $0x6c] sm:$0xf]
  %v229 = vld [vmem:[%s3 + $0x70] sm:$0xf]
  %v230 = vld [vmem:[%s3 + $0x74] sm:$0xf]
  %v231 = vld [vmem:[%s3 + $0x78] sm:$0xf]
  %v232 = vld [vmem:[%s3 + $0x7c] sm:$0xf]
  %v233 = vld [vmem:[%s3 + $0x80] sm:$0xf]
  %v234 = vld [vmem:[%s3 + $0x84] sm:$0xf]
  %v235 = vld [vmem:[%s3 + $0x88] sm:$0xf]
  %v236 = vld [vmem:[%s3 + $0x8c] sm:$0xf]
  %v237 = vld [vmem:[%s3 + $0x90] sm:$0xf]
  %v238 = vld [vmem:[%s3 + $0x94] sm:$0xf]
  %v239 = vld [vmem:[%s3 + $0x98] sm:$0xf]
  %v240 = vld [vmem:[%s3 + $0x9c] sm:$0xf]
  %v241 = vld [vmem:[%s3 + $0xa0] sm:$0xf]
  %v242 = vld [vmem:[%s3 + $0xa4] sm:$0xf]
  %v243 = vld [vmem:[%s3 + $0xa8] sm:$0xf]
  %v244 = vld [vmem:[%s3 + $0xac] sm:$0xf]
  %v245 = vld [vmem:[%s3 + $0xb0] sm:$0xf]
  %v246 = vld [vmem:[%s3 + $0xb4] sm:$0xf]
  %v247 = vld [vmem:[%s3 + $0xb8] sm:$0xf]
  %v248 = vld [vmem:[%s3 + $0xbc] sm:$0xf]
  %v249 = vld [vmem:[%s3 + $0xc0] sm:$0xf]
  %v250 = vld [vmem:[%s3 + $0xc4] sm:$0xf]
  %v251 = vld [vmem:[%s3 + $0xc8] sm:$0xf]
  %v252 = vld [vmem:[%s3 + $0xcc] sm:$0xf]
  %v253 = vld [vmem:[%s3 + $0xd0] sm:$0xf]
  %v254 = vld [vmem:[%s3 + $0xd4] sm:$0xf]
  %v255 = vld [vmem:[%s3 + $0xd8] sm:$0xf]
  %v256 = vld [vmem:[%s3 + $0xdc] sm:$0xf]
  %v257 = vld [vmem:[%s3 + $0xe0] sm:$0xf]
  %v258 = vld [vmem:[%s3 + $0xe4] sm:$0xf]
  %v259 = vld [vmem:[%s3 + $0xe8] sm:$0xf]
  %v260 = vld [vmem:[%s3 + $0xec] sm:$0xf]
  %v261 = vld [vmem:[%s3 + $0xf0] sm:$0xf]
  %v262 = vld [vmem:[%s3 + $0xf4] sm:$0xf]
  %v263 = vld [vmem:[%s3 + $0xf8] sm:$0xf]
  %v264 = vld [vmem:[%s3 + $0xfc] sm:$0xf]
  %v265 = vld [vmem:[%s3 + $0x100] sm:$0xf]
  %v266 = vld [vmem:[%s3 + $0x104] sm:$0xf]
  %v267 = vld [vmem:[%s3 + $0x108] sm:$0xf]
  %v268 = vld [vmem:[%s3 + $0x10c] sm:$0xf]
  %v269 = vld [vmem:[%s3 + $0x110] sm:$0xf]
  %v270 = vld [vmem:[%s3 + $0x114] sm:$0xf]
  %v271 = vld [vmem:[%s3 + $0x118] sm:$0xf]
  %v272 = vld [vmem:[%s3 + $0x11c] sm:$0xf]
  %v273 = vld [vmem:[%s3 + $0x120] sm:$0xf]
  %v274 = vld [vmem:[%s3 + $0x124] sm:$0xf]
  %v275 = vld [vmem:[%s3 + $0x128] sm:$0xf]
  %v276 = vld [vmem:[%s3 + $0x12c] sm:$0xf]
  %v277 = vld [vmem:[%s3 + $0x130] sm:$0xf]
  %v278 = vld [vmem:[%s3 + $0x134] sm:$0xf]
  %v279 = vld [vmem:[%s3 + $0x138] sm:$0xf]
  %v280 = vld [vmem:[%s3 + $0x13c] sm:$0xf]
  %v281 = vld [vmem:[%s3 + $0x140] sm:$0xf]
  %v282 = vld [vmem:[%s3 + $0x144] sm:$0xf]
  %v283 = vld [vmem:[%s3 + $0x148] sm:$0xf]
  %v284 = vld [vmem:[%s3 + $0x14c] sm:$0xf]
  %v285 = vld [vmem:[%s3 + $0x150] sm:$0xf]
  %v286 = vld [vmem:[%s3 + $0x154] sm:$0xf]
  %v287 = vld [vmem:[%s3 + $0x158] sm:$0xf]
  %v288 = vld [vmem:[%s3 + $0x15c] sm:$0xf]
  %v289 = vld [vmem:[%s3 + $0x160] sm:$0xf]
  %v290 = vld [vmem:[%s3 + $0x164] sm:$0xf]
  %v291 = vld [vmem:[%s3 + $0x168] sm:$0xf]
  %v292 = vld [vmem:[%s3 + $0x16c] sm:$0xf]
  %v293 = vld [vmem:[%s3 + $0x170] sm:$0xf]
  %v294 = vld [vmem:[%s3 + $0x174] sm:$0xf]
  %v295 = vld [vmem:[%s3 + $0x178] sm:$0xf]
  %v296 = vld [vmem:[%s3 + $0x17c] sm:$0xf]
  %v297 = vld [vmem:[%s3 + $0x180] sm:$0xf]
  %v298 = vld [vmem:[%s3 + $0x184] sm:$0xf]
  %v299 = vld [vmem:[%s3 + $0x188] sm:$0xf]
  %v300 = vld [vmem:[%s3 + $0x18c] sm:$0xf]
  %v301 = vld [vmem:[%s3 + $0x190] sm:$0xf]
  %v302 = vld [vmem:[%s3 + $0x194] sm:$0xf]
  %v303 = vld [vmem:[%s3 + $0x198] sm:$0xf]
  %v304 = vld [vmem:[%s3 + $0x19c] sm:$0xf]
  %v305 = vld [vmem:[%s3 + $0x1a0] sm:$0xf]
  %v306 = vld [vmem:[%s3 + $0x1a4] sm:$0xf]
  %v307 = vld [vmem:[%s3 + $0x1a8] sm:$0xf]
  %v308 = vld [vmem:[%s3 + $0x1ac] sm:$0xf]
  %v309 = vld [vmem:[%s3 + $0x1b0] sm:$0xf]
  %v310 = vld [vmem:[%s3 + $0x1b4] sm:$0xf]
  %v311 = vld [vmem:[%s3 + $0x1b8] sm:$0xf]
  %v312 = vld [vmem:[%s3 + $0x1bc] sm:$0xf]
  %v313 = vld [vmem:[%s3 + $0x1c0] sm:$0xf]
  %v314 = vld [vmem:[%s3 + $0x1c4] sm:$0xf]
  %v315 = vld [vmem:[%s3 + $0x1c8] sm:$0xf]
  %v316 = vld [vmem:[%s3 + $0x1cc] sm:$0xf]
  %v317 = vld [vmem:[%s3 + $0x1d0] sm:$0xf]
  %v318 = vld [vmem:[%s3 + $0x1d4] sm:$0xf]
  %v319 = vld [vmem:[%s3 + $0x1d8] sm:$0xf]
  %v320 = vld [vmem:[%s3 + $0x1dc] sm:$0xf]
  %v321 = vld [vmem:[%s3 + $0x1e0] sm:$0xf]
  %v322 = vld [vmem:[%s3 + $0x1e4] sm:$0xf]
  %v323 = vld [vmem:[%s3 + $0x1e8] sm:$0xf]
  %v324 = vld [vmem:[%s3 + $0x1ec] sm:$0xf]
  %v325 = vld [vmem:[%s3 + $0x1f0] sm:$0xf]
  %v326 = vld [vmem:[%s3 + $0x1f4] sm:$0xf]
  %v327 = vld [vmem:[%s3 + $0x1f8] sm:$0xf]
  %v328 = vld [vmem:[%s3 + $0x1fc] sm:$0xf]
  %v457 = vunpack.c.l.b16 %v201
  %v458 = vunpack.c.l.b16 %v202
  %v459 = vunpack.c.l.b16 %v203
  %v460 = vunpack.c.l.b16 %v204
  %v461 = vunpack.c.l.b16 %v205
  %v462 = vunpack.c.l.b16 %v206
  %v463 = vunpack.c.l.b16 %v207
  %v464 = vunpack.c.l.b16 %v208
  %v465 = vunpack.c.l.b16 %v209
  %v466 = vunpack.c.l.b16 %v210
  %v467 = vunpack.c.l.b16 %v211
  %v468 = vunpack.c.l.b16 %v212
  %v469 = vunpack.c.l.b16 %v213
  %v470 = vunpack.c.l.b16 %v214
  %v471 = vunpack.c.l.b16 %v215
  %v472 = vunpack.c.l.b16 %v216
  %v473 = vunpack.c.l.b16 %v217
  %v474 = vunpack.c.l.b16 %v218
  %v475 = vunpack.c.l.b16 %v219
  %v476 = vunpack.c.l.b16 %v220
  %v477 = vunpack.c.l.b16 %v221
  %v478 = vunpack.c.l.b16 %v222
  %v479 = vunpack.c.l.b16 %v223
  %v480 = vunpack.c.l.b16 %v224
  %v481 = vunpack.c.l.b16 %v225
  %v482 = vunpack.c.l.b16 %v226
  %v483 = vunpack.c.l.b16 %v227
  %v484 = vunpack.c.l.b16 %v228
  %v485 = vunpack.c.l.b16 %v229
  %v486 = vunpack.c.l.b16 %v230
  %v487 = vunpack.c.l.b16 %v231
  %v488 = vunpack.c.l.b16 %v232
  %v489 = vunpack.c.l.b16 %v233
  %v490 = vunpack.c.l.b16 %v234
  %v491 = vunpack.c.l.b16 %v235
  %v492 = vunpack.c.l.b16 %v236
  %v493 = vunpack.c.l.b16 %v237
  %v494 = vunpack.c.l.b16 %v238
  %v495 = vunpack.c.l.b16 %v239
  %v496 = vunpack.c.l.b16 %v240
  %v497 = vunpack.c.l.b16 %v241
  %v498 = vunpack.c.l.b16 %v242
  %v499 = vunpack.c.l.b16 %v243
  %v500 = vunpack.c.l.b16 %v244
  %v501 = vunpack.c.l.b16 %v245
  %v502 = vunpack.c.l.b16 %v246
  %v503 = vunpack.c.l.b16 %v247
  %v504 = vunpack.c.l.b16 %v248
  %v505 = vunpack.c.l.b16 %v249
  %v506 = vunpack.c.l.b16 %v250
  %v507 = vunpack.c.l.b16 %v251
  %v508 = vunpack.c.l.b16 %v252
  %v509 = vunpack.c.l.b16 %v253
  %v510 = vunpack.c.l.b16 %v254
  %v511 = vunpack.c.l.b16 %v255
  %v512 = vunpack.c.l.b16 %v256
  %v513 = vunpack.c.l.b16 %v257
  %v514 = vunpack.c.l.b16 %v258
  %v515 = vunpack.c.l.b16 %v259
  %v516 = vunpack.c.l.b16 %v260
  %v517 = vunpack.c.l.b16 %v261
  %v518 = vunpack.c.l.b16 %v262
  %v519 = vunpack.c.l.b16 %v263
  %v520 = vunpack.c.l.b16 %v264
  %v521 = vunpack.c.l.b16 %v265
  %v522 = vunpack.c.l.b16 %v266
  %v523 = vunpack.c.l.b16 %v267
  %v524 = vunpack.c.l.b16 %v268
  %v525 = vunpack.c.l.b16 %v269
  %v526 = vunpack.c.l.b16 %v270
  %v527 = vunpack.c.l.b16 %v271
  %v528 = vunpack.c.l.b16 %v272
  %v529 = vunpack.c.l.b16 %v273
  %v530 = vunpack.c.l.b16 %v274
  %v531 = vunpack.c.l.b16 %v275
  %v532 = vunpack.c.l.b16 %v276
  %v533 = vunpack.c.l.b16 %v277
  %v534 = vunpack.c.l.b16 %v278
  %v535 = vunpack.c.l.b16 %v279
  %v536 = vunpack.c.l.b16 %v280
  %v537 = vunpack.c.l.b16 %v281
  %v538 = vunpack.c.l.b16 %v282
  %v539 = vunpack.c.l.b16 %v283
  %v540 = vunpack.c.l.b16 %v284
  %v541 = vunpack.c.l.b16 %v285
  %v542 = vunpack.c.l.b16 %v286
  %v543 = vunpack.c.l.b16 %v287
  %v544 = vunpack.c.l.b16 %v288
  %v545 = vunpack.c.l.b16 %v289
  %v546 = vunpack.c.l.b16 %v290
  %v547 = vunpack.c.l.b16 %v291
  %v548 = vunpack.c.l.b16 %v292
  %v549 = vunpack.c.l.b16 %v293
  %v550 = vunpack.c.l.b16 %v294
  %v551 = vunpack.c.l.b16 %v295
  %v552 = vunpack.c.l.b16 %v296
  %v553 = vunpack.c.l.b16 %v297
  %v554 = vunpack.c.l.b16 %v298
  %v555 = vunpack.c.l.b16 %v299
  %v556 = vunpack.c.l.b16 %v300
  %v557 = vunpack.c.l.b16 %v301
  %v558 = vunpack.c.l.b16 %v302
  %v559 = vunpack.c.l.b16 %v303
  %v560 = vunpack.c.l.b16 %v304
  %v561 = vunpack.c.l.b16 %v305
  %v562 = vunpack.c.l.b16 %v306
  %v563 = vunpack.c.l.b16 %v307
  %v564 = vunpack.c.l.b16 %v308
  %v565 = vunpack.c.l.b16 %v309
  %v566 = vunpack.c.l.b16 %v310
  %v567 = vunpack.c.l.b16 %v311
  %v568 = vunpack.c.l.b16 %v312
  %v569 = vunpack.c.l.b16 %v313
  %v570 = vunpack.c.l.b16 %v314
  %v571 = vunpack.c.l.b16 %v315
  %v572 = vunpack.c.l.b16 %v316
  %v573 = vunpack.c.l.b16 %v317
  %v574 = vunpack.c.l.b16 %v318
  %v575 = vunpack.c.l.b16 %v319
  %v576 = vunpack.c.l.b16 %v320
  %v577 = vunpack.c.l.b16 %v321
  %v578 = vunpack.c.l.b16 %v322
  %v579 = vunpack.c.l.b16 %v323
  %v580 = vunpack.c.l.b16 %v324
  %v581 = vunpack.c.l.b16 %v325
  %v582 = vunpack.c.l.b16 %v326
  %v583 = vunpack.c.l.b16 %v327
  %v584 = vunpack.c.l.b16 %v328
  %v585 = vpack.c.b16 %v458, %v457
  %v586 = vpack.c.b16 %v460, %v459
  %v587 = vpack.c.b16 %v462, %v461
  %v588 = vpack.c.b16 %v464, %v463
  %v589 = vpack.c.b16 %v466, %v465
  %v590 = vpack.c.b16 %v468, %v467
  %v591 = vpack.c.b16 %v470, %v469
  %v592 = vpack.c.b16 %v472, %v471
  %v593 = vpack.c.b16 %v474, %v473
  %v594 = vpack.c.b16 %v476, %v475
  %v595 = vpack.c.b16 %v478, %v477
  %v596 = vpack.c.b16 %v480, %v479
  %v597 = vpack.c.b16 %v482, %v481
  %v598 = vpack.c.b16 %v484, %v483
  %v599 = vpack.c.b16 %v486, %v485
  %v600 = vpack.c.b16 %v488, %v487
  %v601 = vpack.c.b16 %v490, %v489
  %v602 = vpack.c.b16 %v492, %v491
  %v603 = vpack.c.b16 %v494, %v493
  %v604 = vpack.c.b16 %v496, %v495
  %v605 = vpack.c.b16 %v498, %v497
  %v606 = vpack.c.b16 %v500, %v499
  %v607 = vpack.c.b16 %v502, %v501
  %v608 = vpack.c.b16 %v504, %v503
  %v609 = vpack.c.b16 %v506, %v505
  %v610 = vpack.c.b16 %v508, %v507
  %v611 = vpack.c.b16 %v510, %v509
  %v612 = vpack.c.b16 %v512, %v511
  %v613 = vpack.c.b16 %v514, %v513
  %v614 = vpack.c.b16 %v516, %v515
  %v615 = vpack.c.b16 %v518, %v517
  %v616 = vpack.c.b16 %v520, %v519
  %v617 = vpack.c.b16 %v522, %v521
  %v618 = vpack.c.b16 %v524, %v523
  %v619 = vpack.c.b16 %v526, %v525
  %v620 = vpack.c.b16 %v528, %v527
  %v621 = vpack.c.b16 %v530, %v529
  %v622 = vpack.c.b16 %v532, %v531
  %v623 = vpack.c.b16 %v534, %v533
  %v624 = vpack.c.b16 %v536, %v535
  %v625 = vpack.c.b16 %v538, %v537
  %v626 = vpack.c.b16 %v540, %v539
  %v627 = vpack.c.b16 %v542, %v541
  %v628 = vpack.c.b16 %v544, %v543
  %v629 = vpack.c.b16 %v546, %v545
  %v630 = vpack.c.b16 %v548, %v547
  %v631 = vpack.c.b16 %v550, %v549
  %v632 = vpack.c.b16 %v552, %v551
  %v633 = vpack.c.b16 %v554, %v553
  %v634 = vpack.c.b16 %v556, %v555
  %v635 = vpack.c.b16 %v558, %v557
  %v636 = vpack.c.b16 %v560, %v559
  %v637 = vpack.c.b16 %v562, %v561
  %v638 = vpack.c.b16 %v564, %v563
  %v639 = vpack.c.b16 %v566, %v565
  %v640 = vpack.c.b16 %v568, %v567
  %v641 = vpack.c.b16 %v570, %v569
  %v642 = vpack.c.b16 %v572, %v571
  %v643 = vpack.c.b16 %v574, %v573
  %v644 = vpack.c.b16 %v576, %v575
  %v645 = vpack.c.b16 %v578, %v577
  %v646 = vpack.c.b16 %v580, %v579
  %v647 = vpack.c.b16 %v582, %v581
  %v648 = vpack.c.b16 %v584, %v583
  %713 = vmatprep.subr.bf16.mxu0 0
  %714 = vmatpush1.bf16.msra.mxu0 %v585
  %715 = vmatprep.subr.bf16.mxu0 0
  %716 = vmatpush1.bf16.msra.mxu0 %v586
  %717 = vmatprep.subr.bf16.mxu0 0
  %718 = vmatpush1.bf16.msra.mxu0 %v587
  %719 = vmatprep.subr.bf16.mxu0 0
  %720 = vmatpush1.bf16.msra.mxu0 %v588
  %721 = vmatprep.subr.bf16.mxu0 0
  %722 = vmatpush1.bf16.msra.mxu0 %v589
  %723 = vmatprep.subr.bf16.mxu0 0
  %724 = vmatpush1.bf16.msra.mxu0 %v590
  %725 = vmatprep.subr.bf16.mxu0 0
  %726 = vmatpush1.bf16.msra.mxu0 %v591
  %727 = vmatprep.subr.bf16.mxu0 0
  %728 = vmatpush1.bf16.msra.mxu0 %v592
  %729 = vmatprep.subr.bf16.mxu0 0
  %730 = vmatpush1.bf16.msra.mxu0 %v593
  %731 = vmatprep.subr.bf16.mxu0 0
  %732 = vmatpush1.bf16.msra.mxu0 %v594
  %733 = vmatprep.subr.bf16.mxu0 0
  %734 = vmatpush1.bf16.msra.mxu0 %v595
  %735 = vmatprep.subr.bf16.mxu0 0
  %736 = vmatpush1.bf16.msra.mxu0 %v596
  %737 = vmatprep.subr.bf16.mxu0 0
  %738 = vmatpush1.bf16.msra.mxu0 %v597
  %739 = vmatprep.subr.bf16.mxu0 0
  %740 = vmatpush1.bf16.msra.mxu0 %v598
  %741 = vmatprep.subr.bf16.mxu0 0
  %742 = vmatpush1.bf16.msra.mxu0 %v599
  %743 = vmatprep.subr.bf16.mxu0 0
  %744 = vmatpush1.bf16.msra.mxu0 %v600
  %745 = vmatprep.mubr.bf16.mxu0 %v194
  %746 = vmatmul.mubr.bf16.gmra.mrb[0].mxu0 %v193
  %v747 = vpop.f32.mrb[0].mxu0
  %v748 = vadd.f32 0.0, %v747
  %v749 = vpop.f32.mrb[0].mxu0
  %v750 = vpop.f32.mrb[0].mxu0
  %v751 = vadd.f32 0.0, %v750
  %v752 = vpop.f32.mrb[0].mxu0
  %753 = vdwg.mxu0
  %754 = vmatprep.subr.bf16.mxu0 0
  %755 = vmatpush1.bf16.msra.mxu0 %v601
  %756 = vmatprep.subr.bf16.mxu0 0
  %757 = vmatpush1.bf16.msra.mxu0 %v602
  %758 = vmatprep.subr.bf16.mxu0 0
  %759 = vmatpush1.bf16.msra.mxu0 %v603
  %760 = vmatprep.subr.bf16.mxu0 0
  %761 = vmatpush1.bf16.msra.mxu0 %v604
  %762 = vmatprep.subr.bf16.mxu0 0
  %763 = vmatpush1.bf16.msra.mxu0 %v605
  %764 = vmatprep.subr.bf16.mxu0 0
  %765 = vmatpush1.bf16.msra.mxu0 %v606
  %766 = vmatprep.subr.bf16.mxu0 0
  %767 = vmatpush1.bf16.msra.mxu0 %v607
  %768 = vmatprep.subr.bf16.mxu0 0
  %769 = vmatpush1.bf16.msra.mxu0 %v608
  %770 = vmatprep.subr.bf16.mxu0 0
  %771 = vmatpush1.bf16.msra.mxu0 %v609
  %772 = vmatprep.subr.bf16.mxu0 0
  %773 = vmatpush1.bf16.msra.mxu0 %v610
  %774 = vmatprep.subr.bf16.mxu0 0
  %775 = vmatpush1.bf16.msra.mxu0 %v611
  %776 = vmatprep.subr.bf16.mxu0 0
  %777 = vmatpush1.bf16.msra.mxu0 %v612
  %778 = vmatprep.subr.bf16.mxu0 0
  %779 = vmatpush1.bf16.msra.mxu0 %v613
  %780 = vmatprep.subr.bf16.mxu0 0
  %781 = vmatpush1.bf16.msra.mxu0 %v614
  %782 = vmatprep.subr.bf16.mxu0 0
  %783 = vmatpush1.bf16.msra.mxu0 %v615
  %784 = vmatprep.subr.bf16.mxu0 0
  %785 = vmatpush1.bf16.msra.mxu0 %v616
  %786 = vmatprep.mubr.bf16.mxu0 %v196
  %787 = vmatmul.mubr.bf16.gmra.mrb[0].mxu0 %v195
  %v788 = vpop.f32.mrb[0].mxu0
  %v789 = vadd.f32 %v748, %v788
  %v790 = vpop.f32.mrb[0].mxu0
  %v791 = vpop.f32.mrb[0].mxu0
  %v792 = vadd.f32 %v751, %v791
  %v793 = vpop.f32.mrb[0].mxu0
  %794 = vdwg.mxu0
  %795 = vmatprep.subr.bf16.mxu0 0
  %796 = vmatpush1.bf16.msra.mxu0 %v617
  %797 = vmatprep.subr.bf16.mxu0 0
  %798 = vmatpush1.bf16.msra.mxu0 %v618
  %799 = vmatprep.subr.bf16.mxu0 0
  %800 = vmatpush1.bf16.msra.mxu0 %v619
  %801 = vmatprep.subr.bf16.mxu0 0
  %802 = vmatpush1.bf16.msra.mxu0 %v620
  %803 = vmatprep.subr.bf16.mxu0 0
  %804 = vmatpush1.bf16.msra.mxu0 %v621
  %805 = vmatprep.subr.bf16.mxu0 0
  %806 = vmatpush1.bf16.msra.mxu0 %v622
  %807 = vmatprep.subr.bf16.mxu0 0
  %808 = vmatpush1.bf16.msra.mxu0 %v623
  %809 = vmatprep.subr.bf16.mxu0 0
  %810 = vmatpush1.bf16.msra.mxu0 %v624
  %811 = vmatprep.subr.bf16.mxu0 0
  %812 = vmatpush1.bf16.msra.mxu0 %v625
  %813 = vmatprep.subr.bf16.mxu0 0
  %814 = vmatpush1.bf16.msra.mxu0 %v626
  %815 = vmatprep.subr.bf16.mxu0 0
  %816 = vmatpush1.bf16.msra.mxu0 %v627
  %817 = vmatprep.subr.bf16.mxu0 0
  %818 = vmatpush1.bf16.msra.mxu0 %v628
  %819 = vmatprep.subr.bf16.mxu0 0
  %820 = vmatpush1.bf16.msra.mxu0 %v629
  %821 = vmatprep.subr.bf16.mxu0 0
  %822 = vmatpush1.bf16.msra.mxu0 %v630
  %823 = vmatprep.subr.bf16.mxu0 0
  %824 = vmatpush1.bf16.msra.mxu0 %v631
  %825 = vmatprep.subr.bf16.mxu0 0
  %826 = vmatpush1.bf16.msra.mxu0 %v632
  %827 = vmatprep.mubr.bf16.mxu0 %v198
  %828 = vmatmul.mubr.bf16.gmra.mrb[0].mxu0 %v197
  %v829 = vpop.f32.mrb[0].mxu0
  %v830 = vadd.f32 %v789, %v829
  %v831 = vpop.f32.mrb[0].mxu0
  %v832 = vpop.f32.mrb[0].mxu0
  %v833 = vadd.f32 %v792, %v832
  %v834 = vpop.f32.mrb[0].mxu0
  %835 = vdwg.mxu0
  %836 = vmatprep.subr.bf16.mxu0 0
  %837 = vmatpush1.bf16.msra.mxu0 %v633
  %838 = vmatprep.subr.bf16.mxu0 0
  %839 = vmatpush1.bf16.msra.mxu0 %v634
  %840 = vmatprep.subr.bf16.mxu0 0
  %841 = vmatpush1.bf16.msra.mxu0 %v635
  %842 = vmatprep.subr.bf16.mxu0 0
  %843 = vmatpush1.bf16.msra.mxu0 %v636
  %844 = vmatprep.subr.bf16.mxu0 0
  %845 = vmatpush1.bf16.msra.mxu0 %v637
  %846 = vmatprep.subr.bf16.mxu0 0
  %847 = vmatpush1.bf16.msra.mxu0 %v638
  %848 = vmatprep.subr.bf16.mxu0 0
  %849 = vmatpush1.bf16.msra.mxu0 %v639
  %850 = vmatprep.subr.bf16.mxu0 0
  %851 = vmatpush1.bf16.msra.mxu0 %v640
  %852 = vmatprep.subr.bf16.mxu0 0
  %853 = vmatpush1.bf16.msra.mxu0 %v641
  %854 = vmatprep.subr.bf16.mxu0 0
  %855 = vmatpush1.bf16.msra.mxu0 %v642
  %856 = vmatprep.subr.bf16.mxu0 0
  %857 = vmatpush1.bf16.msra.mxu0 %v643
  %858 = vmatprep.subr.bf16.mxu0 0
  %859 = vmatpush1.bf16.msra.mxu0 %v644
  %860 = vmatprep.subr.bf16.mxu0 0
  %861 = vmatpush1.bf16.msra.mxu0 %v645
  %862 = vmatprep.subr.bf16.mxu0 0
  %863 = vmatpush1.bf16.msra.mxu0 %v646
  %864 = vmatprep.subr.bf16.mxu0 0
  %865 = vmatpush1.bf16.msra.mxu0 %v647
  %866 = vmatprep.subr.bf16.mxu0 0
  %867 = vmatpush1.bf16.msra.mxu0 %v648
  %868 = vmatprep.mubr.bf16.mxu0 %v200
  %869 = vmatmul.mubr.bf16.gmra.mrb[0].mxu0 %v199
  %v870 = vpop.f32.mrb[0].mxu0
  %v871 = vadd.f32 %v830, %v870
  %v872 = vpop.f32.mrb[0].mxu0
  %v873 = vpop.f32.mrb[0].mxu0
  %v874 = vadd.f32 %v833, %v873
  %v875 = vpop.f32.mrb[0].mxu0
  %876 = vdwg.mxu0
  %v877 = vpack.c.bf16 %v874, %v871
  %v879 = vunpack.c.l.b16 %v877
  %v880 = vunpack.c.h.b16 %v877
  %v881 = vpack.c.b16 %v879, %v879
  %v882 = vpack.c.b16 %v880, %v880
  %885 = vst [vmem:[%s4] sm:$0xf] %v881
  %886 = vst [vmem:[%s4 + $0x4] sm:$0xf] %v882
  %s887 = smul.u32 0, 16
  %v888 = vlaneseq
  %v889 = vshrl.u32 %v888, 7
  %v890 = vadd.s32 %v889, 8
  %v891 = vstv %s887
  %v892 = vadd.s32 %v891, %v889
  %v893 = vadd.s32 %v891, %v890
  %vm894 = vcmp.lt.s32.totalorder %v892, 8
  %vm895 = vcmp.lt.s32.totalorder %v893, 8
  %v896 = vsel %vm894, 1, 0
  %v897 = vsel %vm895, 1, 0
  %vm898 = vcmp.eq.s32.totalorder %v896, 1
  %vm899 = vcmp.eq.s32.totalorder %v897, 1
  %v900 = vsel %vm898, %v871, 0.0
  %v901 = vsel %vm899, %v874, 0.0
  %v902 = vadd.f32 %v900, %v901
  %v903 = vrot.slane %v902, 4
  %v904 = vadd.f32 %v902, %v903
  %v905 = vrot.slane %v904, 2
  %v906 = vadd.f32 %v904, %v905
  %v907 = vrot.slane %v906, 1
  %v908 = vadd.f32 %v906, %v907
  %909 = vst [vmem:[%s5] sm:$0x1] %v908
  %v910 = vmul.f32 %v900, %v900
  %v911 = vmul.f32 %v901, %v901
  %v912 = vadd.f32 %v910, %v911
  %v913 = vrot.slane %v912, 4
  %v914 = vadd.f32 %v912, %v913
  %v915 = vrot.slane %v914, 2
  %v916 = vadd.f32 %v914, %v915
  %v917 = vrot.slane %v916, 1
  %v918 = vadd.f32 %v916, %v917
  %919 = vst [vmem:[%s6] sm:$0x1] %v918
  // Predicated region
  $region18: #{unet_forward.13} parent=0 // pred_check
    _
  $region19: #{unet_forward.13} parent=0 // pred_check_branch
    %921 = sbr.rel (0) target = $region21
  $region20: #{unet_forward.13} parent=0 // pred_region
    _
  $region21: #{unet_forward.13} parent=0 // pred_fallthru
    _
  // Predicated region
  $region22: #{unet_forward.13} parent=0 // pred_check
    _
  $region23: #{unet_forward.13} parent=0 // pred_check_branch
    %923 = sbr.rel (0) target = $region25
  $region24: #{unet_forward.13} parent=0 // pred_region
    _
  $region25: #{unet_forward.13} parent=0 // pred_fallthru
    _
  // Predicated region
  $region26: #{unet_forward.13} parent=0 // pred_check
    _
  $region27: #{unet_forward.13} parent=0 // pred_check_branch
    %925 = sbr.rel (0) target = $region29
  $region28: #{unet_forward.13} parent=0 // pred_region
    _
  $region29: #{unet_forward.13} parent=0 // pred_fallthru
    _
  // Predicated region
  $region30: #{unet_forward.13} parent=0 // pred_check
    _
  $region31: #{unet_forward.13} parent=0 // pred_check_branch
    %927 = sbr.rel (0) target = $region33
  $region32: #{unet_forward.13} parent=0 // pred_region
    _
  $region33: #{unet_forward.13} parent=0 // pred_fallthru
    _
  // Predicated region
  $region34: #{unet_forward.13} parent=0 // pred_check
    _
  $region35: #{unet_forward.13} parent=0 // pred_check_branch
    %929 = sbr.rel (0) target = $region37
  $region36: #{unet_forward.13} parent=0 // pred_region
    _
  $region37: #{unet_forward.13} parent=0 // pred_fallthru
    _
  // Predicated region
  $region38: #{unet_forward.13} parent=0 // pred_check
    _
  $region39: #{unet_forward.13} parent=0 // pred_check_branch
    %931 = sbr.rel (0) target = $region41
  $region40: #{unet_forward.13} parent=0 // pred_region
    _
  $region41: #{unet_forward.13} parent=0 // pred_fallthru
    _

// kernel: unet_forward.15
$region0: #{unet_forward.15}
  #allocation0 [shape = 'u32[]', space=smem, size = 0x4, offset = 0x4, fixed_abs, tag = 'smem constant byte address 0x4 - core index']
  #allocation1 [shape = 'u32[144,128]{1,0:T(1,128)}', space=vmem, size = 0x12000, scoped, tag = 'internal scratch']
  %s0 = inlined_call_operand.vmem [shape: bf16[16,128], index: 0, kind: input, shape index: {}]
  %s1 = inlined_call_operand.vmem [shape: f32[1,128], index: 1, kind: input, shape index: {}]
  %s2 = inlined_call_operand.vmem [shape: f32[1,128], index: 2, kind: input, shape index: {}]
  %s3 = inlined_call_operand.vmem [shape: bf16[128,2048], index: 3, kind: input, shape index: {}]
  %s4 = inlined_call_operand.vmem [shape: bf16[16,2048], index: 4, kind: output, shape index: {}]
  %s5 = sld [smem:[#allocation0]]
  $region26: #{unet_forward.15} parent=0
    _
  %s7 = ssub.s32 1, %s5
  %s8 = scalar_select 0, %s7, %s5
  // Predicated region
  $region2: #{unet_forward.15} parent=0 // pred_check
    _
  $region3: #{unet_forward.15} parent=0 // pred_check_branch
    %10 = sbr.rel (0) target = $region5
  $region4: #{unet_forward.15} parent=0 // pred_region
    _
  $region5: #{unet_forward.15} parent=0 // pred_fallthru
    _
  // Predicated region
  $region6: #{unet_forward.15} parent=0 // pred_check
    _
  $region7: #{unet_forward.15} parent=0 // pred_check_branch
    %12 = sbr.rel (0) target = $region9
  $region8: #{unet_forward.15} parent=0 // pred_region
    _
  $region9: #{unet_forward.15} parent=0 // pred_fallthru
    _
  // Predicated region
  $region10: #{unet_forward.15} parent=0 // pred_check
    _
  $region11: #{unet_forward.15} parent=0 // pred_check_branch
    %14 = sbr.rel (0) target = $region13
  $region12: #{unet_forward.15} parent=0 // pred_region
    _
  $region13: #{unet_forward.15} parent=0 // pred_fallthru
    _
  // Predicated region
  $region14: #{unet_forward.15} parent=0 // pred_check
    _
  $region15: #{unet_forward.15} parent=0 // pred_check_branch
    %16 = sbr.rel (0) target = $region17
  $region16: #{unet_forward.15} parent=0 // pred_region
    _
  $region17: #{unet_forward.15} parent=0 // pred_fallthru
    _
  %v18 = vld [vmem:[%s0] sm:$0xf]
  %v19 = vld [vmem:[%s0 + $0x4] sm:$0xf]
  %v20 = vunpack.c.l.bf16 %v18
  %v21 = vunpack.c.l.bf16 %v19
  %v22 = vld [vmem:[%s1] sm:$0x1]
  %v24 = vlaneseq
  %v25 = vshrl.u32 %v24, 7
  %v26 = vsub.s32 0, %v25
  %v27 = vrot.slane %v22, %v26
  %v29 = vmul.f32 %v20, %v27
  %v30 = vmul.f32 %v21, %v27
  %v31 = vld [vmem:[%s2] sm:$0x1]
  %v33 = vlaneseq
  %v34 = vshrl.u32 %v33, 7
  %v35 = vsub.s32 0, %v34
  %v36 = vrot.slane %v31, %v35
  %v38 = vadd.f32 %v29, %v36
  %v39 = vadd.f32 %v30, %v36
  %v40 = vmax.f32 %v38, 0.0
  %v41 = vmax.f32 %v39, 0.0
  %v42 = vpack.c.bf16 %v41, %v40
  %v43 = vld [vmem:[%s3] sm:$0xff]
  %v44 = vld [vmem:[%s3 + $0x8] sm:$0xff]
  %v45 = vld [vmem:[%s3 + $0x10] sm:$0xff]
  %v46 = vld [vmem:[%s3 + $0x18] sm:$0xff]
  %v47 = vld [vmem:[%s3 + $0x20] sm:$0xff]
  %v48 = vld [vmem:[%s3 + $0x28] sm:$0xff]
  %v49 = vld [vmem:[%s3 + $0x30] sm:$0xff]
  %v50 = vld [vmem:[%s3 + $0x38] sm:$0xff]
  %v51 = vld [vmem:[%s3 + $0x40] sm:$0xff]
  %v52 = vld [vmem:[%s3 + $0x48] sm:$0xff]
  %v53 = vld [vmem:[%s3 + $0x50] sm:$0xff]
  %v54 = vld [vmem:[%s3 + $0x58] sm:$0xff]
  %v55 = vld [vmem:[%s3 + $0x60] sm:$0xff]
  %v56 = vld [vmem:[%s3 + $0x68] sm:$0xff]
  %v57 = vld [vmem:[%s3 + $0x70] sm:$0xff]
  %v58 = vld [vmem:[%s3 + $0x78] sm:$0xff]
  %v59 = vld [vmem:[%s3 + $0x80] sm:$0xff]
  %v60 = vld [vmem:[%s3 + $0x88] sm:$0xff]
  %v61 = vld [vmem:[%s3 + $0x90] sm:$0xff]
  %v62 = vld [vmem:[%s3 + $0x98] sm:$0xff]
  %v63 = vld [vmem:[%s3 + $0xa0] sm:$0xff]
  %v64 = vld [vmem:[%s3 + $0xa8] sm:$0xff]
  %v65 = vld [vmem:[%s3 + $0xb0] sm:$0xff]
  %v66 = vld [vmem:[%s3 + $0xb8] sm:$0xff]
  %v67 = vld [vmem:[%s3 + $0xc0] sm:$0xff]
  %v68 = vld [vmem:[%s3 + $0xc8] sm:$0xff]
  %v69 = vld [vmem:[%s3 + $0xd0] sm:$0xff]
  %v70 = vld [vmem:[%s3 + $0xd8] sm:$0xff]
  %v71 = vld [vmem:[%s3 + $0xe0] sm:$0xff]
  %v72 = vld [vmem:[%s3 + $0xe8] sm:$0xff]
  %v73 = vld [vmem:[%s3 + $0xf0] sm:$0xff]
  %v74 = vld [vmem:[%s3 + $0xf8] sm:$0xff]
  %v75 = vld [vmem:[%s3 + $0x100] sm:$0xff]
  %v76 = vld [vmem:[%s3 + $0x108] sm:$0xff]
  %v77 = vld [vmem:[%s3 + $0x110] sm:$0xff]
  %v78 = vld [vmem:[%s3 + $0x118] sm:$0xff]
  %v79 = vld [vmem:[%s3 + $0x120] sm:$0xff]
  %v80 = vld [vmem:[%s3 + $0x128] sm:$0xff]
  %v81 = vld [vmem:[%s3 + $0x130] sm:$0xff]
  %v82 = vld [vmem:[%s3 + $0x138] sm:$0xff]
  %v83 = vld [vmem:[%s3 + $0x140] sm:$0xff]
  %v84 = vld [vmem:[%s3 + $0x148] sm:$0xff]
  %v85 = vld [vmem:[%s3 + $0x150] sm:$0xff]
  %v86 = vld [vmem:[%s3 + $0x158] sm:$0xff]
  %v87 = vld [vmem:[%s3 + $0x160] sm:$0xff]
  %v88 = vld [vmem:[%s3 + $0x168] sm:$0xff]
  %v89 = vld [vmem:[%s3 + $0x170] sm:$0xff]
  %v90 = vld [vmem:[%s3 + $0x178] sm:$0xff]
  %v91 = vld [vmem:[%s3 + $0x180] sm:$0xff]
  %v92 = vld [vmem:[%s3 + $0x188] sm:$0xff]
  %v93 = vld [vmem:[%s3 + $0x190] sm:$0xff]
  %v94 = vld [vmem:[%s3 + $0x198] sm:$0xff]
  %v95 = vld [vmem:[%s3 + $0x1a0] sm:$0xff]
  %v96 = vld [vmem:[%s3 + $0x1a8] sm:$0xff]
  %v97 = vld [vmem:[%s3 + $0x1b0] sm:$0xff]
  %v98 = vld [vmem:[%s3 + $0x1b8] sm:$0xff]
  %v99 = vld [vmem:[%s3 + $0x1c0] sm:$0xff]
  %v100 = vld [vmem:[%s3 + $0x1c8] sm:$0xff]
  %v101 = vld [vmem:[%s3 + $0x1d0] sm:$0xff]
  %v102 = vld [vmem:[%s3 + $0x1d8] sm:$0xff]
  %v103 = vld [vmem:[%s3 + $0x1e0] sm:$0xff]
  %v104 = vld [vmem:[%s3 + $0x1e8] sm:$0xff]
  %v105 = vld [vmem:[%s3 + $0x1f0] sm:$0xff]
  %v106 = vld [vmem:[%s3 + $0x1f8] sm:$0xff]
  %v107 = vld [vmem:[%s3 + $0x200] sm:$0xff]
  %v108 = vld [vmem:[%s3 + $0x208] sm:$0xff]
  %v109 = vld [vmem:[%s3 + $0x210] sm:$0xff]
  %v110 = vld [vmem:[%s3 + $0x218] sm:$0xff]
  %v111 = vld [vmem:[%s3 + $0x220] sm:$0xff]
  %v112 = vld [vmem:[%s3 + $0x228] sm:$0xff]
  %v113 = vld [vmem:[%s3 + $0x230] sm:$0xff]
  %v114 = vld [vmem:[%s3 + $0x238] sm:$0xff]
  %v115 = vld [vmem:[%s3 + $0x240] sm:$0xff]
  %v116 = vld [vmem:[%s3 + $0x248] sm:$0xff]
  %v117 = vld [vmem:[%s3 + $0x250] sm:$0xff]
  %v118 = vld [vmem:[%s3 + $0x258] sm:$0xff]
  %v119 = vld [vmem:[%s3 + $0x260] sm:$0xff]
  %v120 = vld [vmem:[%s3 + $0x268] sm:$0xff]
  %v121 = vld [vmem:[%s3 + $0x270] sm:$0xff]
  %v122 = vld [vmem:[%s3 + $0x278] sm:$0xff]
  %v123 = vld [vmem:[%s3 + $0x280] sm:$0xff]
  %v124 = vld [vmem:[%s3 + $0x288] sm:$0xff]
  %v125 = vld [vmem:[%s3 + $0x290] sm:$0xff]
  %v126 = vld [vmem:[%s3 + $0x298] sm:$0xff]
  %v127 = vld [vmem:[%s3 + $0x2a0] sm:$0xff]
  %v128 = vld [vmem:[%s3 + $0x2a8] sm:$0xff]
  %v129 = vld [vmem:[%s3 + $0x2b0] sm:$0xff]
  %v130 = vld [vmem:[%s3 + $0x2b8] sm:$0xff]
  %v131 = vld [vmem:[%s3 + $0x2c0] sm:$0xff]
  %v132 = vld [vmem:[%s3 + $0x2c8] sm:$0xff]
  %v133 = vld [vmem:[%s3 + $0x2d0] sm:$0xff]
  %v134 = vld [vmem:[%s3 + $0x2d8] sm:$0xff]
  %v135 = vld [vmem:[%s3 + $0x2e0] sm:$0xff]
  %v136 = vld [vmem:[%s3 + $0x2e8] sm:$0xff]
  %v137 = vld [vmem:[%s3 + $0x2f0] sm:$0xff]
  %v138 = vld [vmem:[%s3 + $0x2f8] sm:$0xff]
  %v139 = vld [vmem:[%s3 + $0x300] sm:$0xff]
  %v140 = vld [vmem:[%s3 + $0x308] sm:$0xff]
  %v141 = vld [vmem:[%s3 + $0x310] sm:$0xff]
  %v142 = vld [vmem:[%s3 + $0x318] sm:$0xff]
  %v143 = vld [vmem:[%s3 + $0x320] sm:$0xff]
  %v144 = vld [vmem:[%s3 + $0x328] sm:$0xff]
  %v145 = vld [vmem:[%s3 + $0x330] sm:$0xff]
  %v146 = vld [vmem:[%s3 + $0x338] sm:$0xff]
  %v147 = vld [vmem:[%s3 + $0x340] sm:$0xff]
  %v148 = vld [vmem:[%s3 + $0x348] sm:$0xff]
  %v149 = vld [vmem:[%s3 + $0x350] sm:$0xff]
  %v150 = vld [vmem:[%s3 + $0x358] sm:$0xff]
  %v151 = vld [vmem:[%s3 + $0x360] sm:$0xff]
  %v152 = vld [vmem:[%s3 + $0x368] sm:$0xff]
  %v153 = vld [vmem:[%s3 + $0x370] sm:$0xff]
  %v154 = vld [vmem:[%s3 + $0x378] sm:$0xff]
  %v155 = vld [vmem:[%s3 + $0x380] sm:$0xff]
  %v156 = vld [vmem:[%s3 + $0x388] sm:$0xff]
  %v157 = vld [vmem:[%s3 + $0x390] sm:$0xff]
  %v158 = vld [vmem:[%s3 + $0x398] sm:$0xff]
  %v159 = vld [vmem:[%s3 + $0x3a0] sm:$0xff]
  %v160 = vld [vmem:[%s3 + $0x3a8] sm:$0xff]
  %v161 = vld [vmem:[%s3 + $0x3b0] sm:$0xff]
  %v162 = vld [vmem:[%s3 + $0x3b8] sm:$0xff]
  %v163 = vld [vmem:[%s3 + $0x3c0] sm:$0xff]
  %v164 = vld [vmem:[%s3 + $0x3c8] sm:$0xff]
  %v165 = vld [vmem:[%s3 + $0x3d0] sm:$0xff]
  %v166 = vld [vmem:[%s3 + $0x3d8] sm:$0xff]
  %v167 = vld [vmem:[%s3 + $0x3e0] sm:$0xff]
  %v168 = vld [vmem:[%s3 + $0x3e8] sm:$0xff]
  %v169 = vld [vmem:[%s3 + $0x3f0] sm:$0xff]
  %v170 = vld [vmem:[%s3 + $0x3f8] sm:$0xff]
  %v299 = vunpack.c.l.b16 %v43
  %v300 = vunpack.c.h.b16 %v43
  %v301 = vunpack.c.l.b16 %v44
  %v302 = vunpack.c.h.b16 %v44
  %v303 = vunpack.c.l.b16 %v45
  %v304 = vunpack.c.h.b16 %v45
  %v305 = vunpack.c.l.b16 %v46
  %v306 = vunpack.c.h.b16 %v46
  %v307 = vunpack.c.l.b16 %v47
  %v308 = vunpack.c.h.b16 %v47
  %v309 = vunpack.c.l.b16 %v48
  %v310 = vunpack.c.h.b16 %v48
  %v311 = vunpack.c.l.b16 %v49
  %v312 = vunpack.c.h.b16 %v49
  %v313 = vunpack.c.l.b16 %v50
  %v314 = vunpack.c.h.b16 %v50
  %v315 = vunpack.c.l.b16 %v51
  %v316 = vunpack.c.h.b16 %v51
  %v317 = vunpack.c.l.b16 %v52
  %v318 = vunpack.c.h.b16 %v52
  %v319 = vunpack.c.l.b16 %v53
  %v320 = vunpack.c.h.b16 %v53
  %v321 = vunpack.c.l.b16 %v54
  %v322 = vunpack.c.h.b16 %v54
  %v323 = vunpack.c.l.b16 %v55
  %v324 = vunpack.c.h.b16 %v55
  %v325 = vunpack.c.l.b16 %v56
  %v326 = vunpack.c.h.b16 %v56
  %v327 = vunpack.c.l.b16 %v57
  %v328 = vunpack.c.h.b16 %v57
  %v329 = vunpack.c.l.b16 %v58
  %v330 = vunpack.c.h.b16 %v58
  %v331 = vunpack.c.l.b16 %v59
  %v332 = vunpack.c.h.b16 %v59
  %v333 = vunpack.c.l.b16 %v60
  %v334 = vunpack.c.h.b16 %v60
  %v335 = vunpack.c.l.b16 %v61
  %v336 = vunpack.c.h.b16 %v61
  %v337 = vunpack.c.l.b16 %v62
  %v338 = vunpack.c.h.b16 %v62
  %v339 = vunpack.c.l.b16 %v63
  %v340 = vunpack.c.h.b16 %v63
  %v341 = vunpack.c.l.b16 %v64
  %v342 = vunpack.c.h.b16 %v64
  %v343 = vunpack.c.l.b16 %v65
  %v344 = vunpack.c.h.b16 %v65
  %v345 = vunpack.c.l.b16 %v66
  %v346 = vunpack.c.h.b16 %v66
  %v347 = vunpack.c.l.b16 %v67
  %v348 = vunpack.c.h.b16 %v67
  %v349 = vunpack.c.l.b16 %v68
  %v350 = vunpack.c.h.b16 %v68
  %v351 = vunpack.c.l.b16 %v69
  %v352 = vunpack.c.h.b16 %v69
  %v353 = vunpack.c.l.b16 %v70
  %v354 = vunpack.c.h.b16 %v70
  %v355 = vunpack.c.l.b16 %v71
  %v356 = vunpack.c.h.b16 %v71
  %v357 = vunpack.c.l.b16 %v72
  %v358 = vunpack.c.h.b16 %v72
  %v359 = vunpack.c.l.b16 %v73
  %v360 = vunpack.c.h.b16 %v73
  %v361 = vunpack.c.l.b16 %v74
  %v362 = vunpack.c.h.b16 %v74
  %v363 = vunpack.c.l.b16 %v75
  %v364 = vunpack.c.h.b16 %v75
  %v365 = vunpack.c.l.b16 %v76
  %v366 = vunpack.c.h.b16 %v76
  %v367 = vunpack.c.l.b16 %v77
  %v368 = vunpack.c.h.b16 %v77
  %v369 = vunpack.c.l.b16 %v78
  %v370 = vunpack.c.h.b16 %v78
  %v371 = vunpack.c.l.b16 %v79
  %v372 = vunpack.c.h.b16 %v79
  %v373 = vunpack.c.l.b16 %v80
  %v374 = vunpack.c.h.b16 %v80
  %v375 = vunpack.c.l.b16 %v81
  %v376 = vunpack.c.h.b16 %v81
  %v377 = vunpack.c.l.b16 %v82
  %v378 = vunpack.c.h.b16 %v82
  %v379 = vunpack.c.l.b16 %v83
  %v380 = vunpack.c.h.b16 %v83
  %v381 = vunpack.c.l.b16 %v84
  %v382 = vunpack.c.h.b16 %v84
  %v383 = vunpack.c.l.b16 %v85
  %v384 = vunpack.c.h.b16 %v85
  %v385 = vunpack.c.l.b16 %v86
  %v386 = vunpack.c.h.b16 %v86
  %v387 = vunpack.c.l.b16 %v87
  %v388 = vunpack.c.h.b16 %v87
  %v389 = vunpack.c.l.b16 %v88
  %v390 = vunpack.c.h.b16 %v88
  %v391 = vunpack.c.l.b16 %v89
  %v392 = vunpack.c.h.b16 %v89
  %v393 = vunpack.c.l.b16 %v90
  %v394 = vunpack.c.h.b16 %v90
  %v395 = vunpack.c.l.b16 %v91
  %v396 = vunpack.c.h.b16 %v91
  %v397 = vunpack.c.l.b16 %v92
  %v398 = vunpack.c.h.b16 %v92
  %v399 = vunpack.c.l.b16 %v93
  %v400 = vunpack.c.h.b16 %v93
  %v401 = vunpack.c.l.b16 %v94
  %v402 = vunpack.c.h.b16 %v94
  %v403 = vunpack.c.l.b16 %v95
  %v404 = vunpack.c.h.b16 %v95
  %v405 = vunpack.c.l.b16 %v96
  %v406 = vunpack.c.h.b16 %v96
  %v407 = vunpack.c.l.b16 %v97
  %v408 = vunpack.c.h.b16 %v97
  %v409 = vunpack.c.l.b16 %v98
  %v410 = vunpack.c.h.b16 %v98
  %v411 = vunpack.c.l.b16 %v99
  %v412 = vunpack.c.h.b16 %v99
  %v413 = vunpack.c.l.b16 %v100
  %v414 = vunpack.c.h.b16 %v100
  %v415 = vunpack.c.l.b16 %v101
  %v416 = vunpack.c.h.b16 %v101
  %v417 = vunpack.c.l.b16 %v102
  %v418 = vunpack.c.h.b16 %v102
  %v419 = vunpack.c.l.b16 %v103
  %v420 = vunpack.c.h.b16 %v103
  %v421 = vunpack.c.l.b16 %v104
  %v422 = vunpack.c.h.b16 %v104
  %v423 = vunpack.c.l.b16 %v105
  %v424 = vunpack.c.h.b16 %v105
  %v425 = vunpack.c.l.b16 %v106
  %v426 = vunpack.c.h.b16 %v106
  %v427 = vunpack.c.l.b16 %v107
  %v428 = vunpack.c.h.b16 %v107
  %v429 = vunpack.c.l.b16 %v108
  %v430 = vunpack.c.h.b16 %v108
  %v431 = vunpack.c.l.b16 %v109
  %v432 = vunpack.c.h.b16 %v109
  %v433 = vunpack.c.l.b16 %v110
  %v434 = vunpack.c.h.b16 %v110
  %v435 = vunpack.c.l.b16 %v111
  %v436 = vunpack.c.h.b16 %v111
  %v437 = vunpack.c.l.b16 %v112
  %v438 = vunpack.c.h.b16 %v112
  %v439 = vunpack.c.l.b16 %v113
  %v440 = vunpack.c.h.b16 %v113
  %v441 = vunpack.c.l.b16 %v114
  %v442 = vunpack.c.h.b16 %v114
  %v443 = vunpack.c.l.b16 %v115
  %v444 = vunpack.c.h.b16 %v115
  %v445 = vunpack.c.l.b16 %v116
  %v446 = vunpack.c.h.b16 %v116
  %v447 = vunpack.c.l.b16 %v117
  %v448 = vunpack.c.h.b16 %v117
  %v449 = vunpack.c.l.b16 %v118
  %v450 = vunpack.c.h.b16 %v118
  %v451 = vunpack.c.l.b16 %v119
  %v452 = vunpack.c.h.b16 %v119
  %v453 = vunpack.c.l.b16 %v120
  %v454 = vunpack.c.h.b16 %v120
  %v455 = vunpack.c.l.b16 %v121
  %v456 = vunpack.c.h.b16 %v121
  %v457 = vunpack.c.l.b16 %v122
  %v458 = vunpack.c.h.b16 %v122
  %v459 = vunpack.c.l.b16 %v123
  %v460 = vunpack.c.h.b16 %v123
  %v461 = vunpack.c.l.b16 %v124
  %v462 = vunpack.c.h.b16 %v124
  %v463 = vunpack.c.l.b16 %v125
  %v464 = vunpack.c.h.b16 %v125
  %v465 = vunpack.c.l.b16 %v126
  %v466 = vunpack.c.h.b16 %v126
  %v467 = vunpack.c.l.b16 %v127
  %v468 = vunpack.c.h.b16 %v127
  %v469 = vunpack.c.l.b16 %v128
  %v470 = vunpack.c.h.b16 %v128
  %v471 = vunpack.c.l.b16 %v129
  %v472 = vunpack.c.h.b16 %v129
  %v473 = vunpack.c.l.b16 %v130
  %v474 = vunpack.c.h.b16 %v130
  %v475 = vunpack.c.l.b16 %v131
  %v476 = vunpack.c.h.b16 %v131
  %v477 = vunpack.c.l.b16 %v132
  %v478 = vunpack.c.h.b16 %v132
  %v479 = vunpack.c.l.b16 %v133
  %v480 = vunpack.c.h.b16 %v133
  %v481 = vunpack.c.l.b16 %v134
  %v482 = vunpack.c.h.b16 %v134
  %v483 = vunpack.c.l.b16 %v135
  %v484 = vunpack.c.h.b16 %v135
  %v485 = vunpack.c.l.b16 %v136
  %v486 = vunpack.c.h.b16 %v136
  %v487 = vunpack.c.l.b16 %v137
  %v488 = vunpack.c.h.b16 %v137
  %v489 = vunpack.c.l.b16 %v138
  %v490 = vunpack.c.h.b16 %v138
  %v491 = vunpack.c.l.b16 %v139
  %v492 = vunpack.c.h.b16 %v139
  %v493 = vunpack.c.l.b16 %v140
  %v494 = vunpack.c.h.b16 %v140
  %v495 = vunpack.c.l.b16 %v141
  %v496 = vunpack.c.h.b16 %v141
  %v497 = vunpack.c.l.b16 %v142
  %v498 = vunpack.c.h.b16 %v142
  %v499 = vunpack.c.l.b16 %v143
  %v500 = vunpack.c.h.b16 %v143
  %v501 = vunpack.c.l.b16 %v144
  %v502 = vunpack.c.h.b16 %v144
  %v503 = vunpack.c.l.b16 %v145
  %v504 = vunpack.c.h.b16 %v145
  %v505 = vunpack.c.l.b16 %v146
  %v506 = vunpack.c.h.b16 %v146
  %v507 = vunpack.c.l.b16 %v147
  %v508 = vunpack.c.h.b16 %v147
  %v509 = vunpack.c.l.b16 %v148
  %v510 = vunpack.c.h.b16 %v148
  %v511 = vunpack.c.l.b16 %v149
  %v512 = vunpack.c.h.b16 %v149
  %v513 = vunpack.c.l.b16 %v150
  %v514 = vunpack.c.h.b16 %v150
  %v515 = vunpack.c.l.b16 %v151
  %v516 = vunpack.c.h.b16 %v151
  %v517 = vunpack.c.l.b16 %v152
  %v518 = vunpack.c.h.b16 %v152
  %v519 = vunpack.c.l.b16 %v153
  %v520 = vunpack.c.h.b16 %v153
  %v521 = vunpack.c.l.b16 %v154
  %v522 = vunpack.c.h.b16 %v154
  %v523 = vunpack.c.l.b16 %v155
  %v524 = vunpack.c.h.b16 %v155
  %v525 = vunpack.c.l.b16 %v156
  %v526 = vunpack.c.h.b16 %v156
  %v527 = vunpack.c.l.b16 %v157
  %v528 = vunpack.c.h.b16 %v157
  %v529 = vunpack.c.l.b16 %v158
  %v530 = vunpack.c.h.b16 %v158
  %v531 = vunpack.c.l.b16 %v159
  %v532 = vunpack.c.h.b16 %v159
  %v533 = vunpack.c.l.b16 %v160
  %v534 = vunpack.c.h.b16 %v160
  %v535 = vunpack.c.l.b16 %v161
  %v536 = vunpack.c.h.b16 %v161
  %v537 = vunpack.c.l.b16 %v162
  %v538 = vunpack.c.h.b16 %v162
  %v539 = vunpack.c.l.b16 %v163
  %v540 = vunpack.c.h.b16 %v163
  %v541 = vunpack.c.l.b16 %v164
  %v542 = vunpack.c.h.b16 %v164
  %v543 = vunpack.c.l.b16 %v165
  %v544 = vunpack.c.h.b16 %v165
  %v545 = vunpack.c.l.b16 %v166
  %v546 = vunpack.c.h.b16 %v166
  %v547 = vunpack.c.l.b16 %v167
  %v548 = vunpack.c.h.b16 %v167
  %v549 = vunpack.c.l.b16 %v168
  %v550 = vunpack.c.h.b16 %v168
  %v551 = vunpack.c.l.b16 %v169
  %v552 = vunpack.c.h.b16 %v169
  %v553 = vunpack.c.l.b16 %v170
  %v554 = vunpack.c.h.b16 %v170
  %v555 = vpack.c.b16 %v315, %v299
  %v556 = vpack.c.b16 %v316, %v300
  %v557 = vpack.c.b16 %v317, %v301
  %v558 = vpack.c.b16 %v318, %v302
  %v559 = vpack.c.b16 %v319, %v303
  %v560 = vpack.c.b16 %v320, %v304
  %v561 = vpack.c.b16 %v321, %v305
  %v562 = vpack.c.b16 %v322, %v306
  %v563 = vpack.c.b16 %v323, %v307
  %v564 = vpack.c.b16 %v324, %v308
  %v565 = vpack.c.b16 %v325, %v309
  %v566 = vpack.c.b16 %v326, %v310
  %v567 = vpack.c.b16 %v327, %v311
  %v568 = vpack.c.b16 %v328, %v312
  %v569 = vpack.c.b16 %v329, %v313
  %v570 = vpack.c.b16 %v330, %v314
  %v571 = vpack.c.b16 %v347, %v331
  %v572 = vpack.c.b16 %v348, %v332
  %v573 = vpack.c.b16 %v349, %v333
  %v574 = vpack.c.b16 %v350, %v334
  %v575 = vpack.c.b16 %v351, %v335
  %v576 = vpack.c.b16 %v352, %v336
  %v577 = vpack.c.b16 %v353, %v337
  %v578 = vpack.c.b16 %v354, %v338
  %v579 = vpack.c.b16 %v355, %v339
  %v580 = vpack.c.b16 %v356, %v340
  %v581 = vpack.c.b16 %v357, %v341
  %v582 = vpack.c.b16 %v358, %v342
  %v583 = vpack.c.b16 %v359, %v343
  %v584 = vpack.c.b16 %v360, %v344
  %v585 = vpack.c.b16 %v361, %v345
  %v586 = vpack.c.b16 %v362, %v346
  %v587 = vpack.c.b16 %v379, %v363
  %v588 = vpack.c.b16 %v380, %v364
  %v589 = vpack.c.b16 %v381, %v365
  %v590 = vpack.c.b16 %v382, %v366
  %v591 = vpack.c.b16 %v383, %v367
  %v592 = vpack.c.b16 %v384, %v368
  %v593 = vpack.c.b16 %v385, %v369
  %v594 = vpack.c.b16 %v386, %v370
  %v595 = vpack.c.b16 %v387, %v371
  %v596 = vpack.c.b16 %v388, %v372
  %v597 = vpack.c.b16 %v389, %v373
  %v598 = vpack.c.b16 %v390, %v374
  %v599 = vpack.c.b16 %v391, %v375
  %v600 = vpack.c.b16 %v392, %v376
  %v601 = vpack.c.b16 %v393, %v377
  %v602 = vpack.c.b16 %v394, %v378
  %v603 = vpack.c.b16 %v411, %v395
  %v604 = vpack.c.b16 %v412, %v396
  %v605 = vpack.c.b16 %v413, %v397
  %v606 = vpack.c.b16 %v414, %v398
  %v607 = vpack.c.b16 %v415, %v399
  %v608 = vpack.c.b16 %v416, %v400
  %v609 = vpack.c.b16 %v417, %v401
  %v610 = vpack.c.b16 %v418, %v402
  %v611 = vpack.c.b16 %v419, %v403
  %v612 = vpack.c.b16 %v420, %v404
  %v613 = vpack.c.b16 %v421, %v405
  %v614 = vpack.c.b16 %v422, %v406
  %v615 = vpack.c.b16 %v423, %v407
  %v616 = vpack.c.b16 %v424, %v408
  %v617 = vpack.c.b16 %v425, %v409
  %v618 = vpack.c.b16 %v426, %v410
  %v619 = vpack.c.b16 %v443, %v427
  %v620 = vpack.c.b16 %v444, %v428
  %v621 = vpack.c.b16 %v445, %v429
  %v622 = vpack.c.b16 %v446, %v430
  %v623 = vpack.c.b16 %v447, %v431
  %v624 = vpack.c.b16 %v448, %v432
  %v625 = vpack.c.b16 %v449, %v433
  %v626 = vpack.c.b16 %v450, %v434
  %v627 = vpack.c.b16 %v451, %v435
  %v628 = vpack.c.b16 %v452, %v436
  %v629 = vpack.c.b16 %v453, %v437
  %v630 = vpack.c.b16 %v454, %v438
  %v631 = vpack.c.b16 %v455, %v439
  %v632 = vpack.c.b16 %v456, %v440
  %v633 = vpack.c.b16 %v457, %v441
  %v634 = vpack.c.b16 %v458, %v442
  %v635 = vpack.c.b16 %v475, %v459
  %v636 = vpack.c.b16 %v476, %v460
  %v637 = vpack.c.b16 %v477, %v461
  %v638 = vpack.c.b16 %v478, %v462
  %v639 = vpack.c.b16 %v479, %v463
  %v640 = vpack.c.b16 %v480, %v464
  %v641 = vpack.c.b16 %v481, %v465
  %v642 = vpack.c.b16 %v482, %v466
  %v643 = vpack.c.b16 %v483, %v467
  %v644 = vpack.c.b16 %v484, %v468
  %v645 = vpack.c.b16 %v485, %v469
  %v646 = vpack.c.b16 %v486, %v470
  %v647 = vpack.c.b16 %v487, %v471
  %v648 = vpack.c.b16 %v488, %v472
  %v649 = vpack.c.b16 %v489, %v473
  %v650 = vpack.c.b16 %v490, %v474
  %v651 = vpack.c.b16 %v507, %v491
  %v652 = vpack.c.b16 %v508, %v492
  %v653 = vpack.c.b16 %v509, %v493
  %v654 = vpack.c.b16 %v510, %v494
  %v655 = vpack.c.b16 %v511, %v495
  %v656 = vpack.c.b16 %v512, %v496
  %v657 = vpack.c.b16 %v513, %v497
  %v658 = vpack.c.b16 %v514, %v498
  %v659 = vpack.c.b16 %v515, %v499
  %v660 = vpack.c.b16 %v516, %v500
  %v661 = vpack.c.b16 %v517, %v501
  %v662 = vpack.c.b16 %v518, %v502
  %v663 = vpack.c.b16 %v519, %v503
  %v664 = vpack.c.b16 %v520, %v504
  %v665 = vpack.c.b16 %v521, %v505
  %v666 = vpack.c.b16 %v522, %v506
  %v667 = vpack.c.b16 %v539, %v523
  %v668 = vpack.c.b16 %v540, %v524
  %v669 = vpack.c.b16 %v541, %v525
  %v670 = vpack.c.b16 %v542, %v526
  %v671 = vpack.c.b16 %v543, %v527
  %v672 = vpack.c.b16 %v544, %v528
  %v673 = vpack.c.b16 %v545, %v529
  %v674 = vpack.c.b16 %v546, %v530
  %v675 = vpack.c.b16 %v547, %v531
  %v676 = vpack.c.b16 %v548, %v532
  %v677 = vpack.c.b16 %v549, %v533
  %v678 = vpack.c.b16 %v550, %v534
  %v679 = vpack.c.b16 %v551, %v535
  %v680 = vpack.c.b16 %v552, %v536
  %v681 = vpack.c.b16 %v553, %v537
  %v682 = vpack.c.b16 %v554, %v538
  %811 = vmatprep.subr.bf16.mxu0 %v556
  %812 = vmatpush1.bf16.msra.mxu0 %v555
  %813 = vmatprep.subr.bf16.mxu0 %v572
  %814 = vmatpush1.bf16.msra.mxu0 %v571
  %815 = vmatprep.subr.bf16.mxu0 %v588
  %816 = vmatpush1.bf16.msra.mxu0 %v587
  %817 = vmatprep.subr.bf16.mxu0 %v604
  %818 = vmatpush1.bf16.msra.mxu0 %v603
  %819 = vmatprep.subr.bf16.mxu0 %v620
  %820 = vmatpush1.bf16.msra.mxu0 %v619
  %821 = vmatprep.subr.bf16.mxu0 %v636
  %822 = vmatpush1.bf16.msra.mxu0 %v635
  %823 = vmatprep.subr.bf16.mxu0 %v652
  %824 = vmatpush1.bf16.msra.mxu0 %v651
  %825 = vmatprep.subr.bf16.mxu0 %v668
  %826 = vmatpush1.bf16.msra.mxu0 %v667
  %827 = vmatprep.subr.bf16.mxu0 0
  %828 = vmatpush1.bf16.msra.mxu0 0
  %829 = vmatprep.subr.bf16.mxu0 0
  %830 = vmatpush1.bf16.msra.mxu0 0
  %831 = vmatprep.subr.bf16.mxu0 0
  %832 = vmatpush1.bf16.msra.mxu0 0
  %833 = vmatprep.subr.bf16.mxu0 0
  %834 = vmatpush1.bf16.msra.mxu0 0
  %835 = vmatprep.subr.bf16.mxu0 0
  %836 = vmatpush1.bf16.msra.mxu0 0
  %837 = vmatprep.subr.bf16.mxu0 0
  %838 = vmatpush1.bf16.msra.mxu0 0
  %839 = vmatprep.subr.bf16.mxu0 0
  %840 = vmatpush1.bf16.msra.mxu0 0
  %841 = vmatprep.subr.bf16.mxu0 0
  %842 = vmatpush1.bf16.msra.mxu0 0
  %843 = vmatprep.mubr.bf16.mxu0 0
  %844 = vmatmul.mubr.bf16.gmra.mrb[0].mxu0 %v42
  %v845 = vpop.f32.mrb[0].mxu0
  %v846 = vadd.f32 0.0, %v845
  %v847 = vpop.f32.mrb[0].mxu0
  %v848 = vadd.f32 0.0, %v847
  %v849 = vpop.f32.mrb[0].mxu0
  %v850 = vadd.f32 0.0, %v849
  %v851 = vpop.f32.mrb[0].mxu0
  %v852 = vadd.f32 0.0, %v851
  %853 = vdwg.mxu0
  %854 = vmatprep.subr.bf16.mxu0 %v558
  %855 = vmatpush1.bf16.msra.mxu0 %v557
  %856 = vmatprep.subr.bf16.mxu0 %v574
  %857 = vmatpush1.bf16.msra.mxu0 %v573
  %858 = vmatprep.subr.bf16.mxu0 %v590
  %859 = vmatpush1.bf16.msra.mxu0 %v589
  %860 = vmatprep.subr.bf16.mxu0 %v606
  %861 = vmatpush1.bf16.msra.mxu0 %v605
  %862 = vmatprep.subr.bf16.mxu0 %v622
  %863 = vmatpush1.bf16.msra.mxu0 %v621
  %864 = vmatprep.subr.bf16.mxu0 %v638
  %865 = vmatpush1.bf16.msra.mxu0 %v637
  %866 = vmatprep.subr.bf16.mxu0 %v654
  %867 = vmatpush1.bf16.msra.mxu0 %v653
  %868 = vmatprep.subr.bf16.mxu0 %v670
  %869 = vmatpush1.bf16.msra.mxu0 %v669
  %870 = vmatprep.subr.bf16.mxu0 0
  %871 = vmatpush1.bf16.msra.mxu0 0
  %872 = vmatprep.subr.bf16.mxu0 0
  %873 = vmatpush1.bf16.msra.mxu0 0
  %874 = vmatprep.subr.bf16.mxu0 0
  %875 = vmatpush1.bf16.msra.mxu0 0
  %876 = vmatprep.subr.bf16.mxu0 0
  %877 = vmatpush1.bf16.msra.mxu0 0
  %878 = vmatprep.subr.bf16.mxu0 0
  %879 = vmatpush1.bf16.msra.mxu0 0
  %880 = vmatprep.subr.bf16.mxu0 0
  %881 = vmatpush1.bf16.msra.mxu0 0
  %882 = vmatprep.subr.bf16.mxu0 0
  %883 = vmatpush1.bf16.msra.mxu0 0
  %884 = vmatprep.subr.bf16.mxu0 0
  %885 = vmatpush1.bf16.msra.mxu0 0
  %886 = vmatprep.mubr.bf16.mxu0 0
  %887 = vmatmul.mubr.bf16.gmra.mrb[0].mxu0 %v42
  %v888 = vpop.f32.mrb[0].mxu0
  %v889 = vadd.f32 0.0, %v888
  %v890 = vpop.f32.mrb[0].mxu0
  %v891 = vadd.f32 0.0, %v890
  %v892 = vpop.f32.mrb[0].mxu0
  %v893 = vadd.f32 0.0, %v892
  %v894 = vpop.f32.mrb[0].mxu0
  %v895 = vadd.f32 0.0, %v894
  %896 = vdwg.mxu0
  %897 = vmatprep.subr.bf16.mxu0 %v560
  %898 = vmatpush1.bf16.msra.mxu0 %v559
  %899 = vmatprep.subr.bf16.mxu0 %v576
  %900 = vmatpush1.bf16.msra.mxu0 %v575
  %901 = vmatprep.subr.bf16.mxu0 %v592
  %902 = vmatpush1.bf16.msra.mxu0 %v591
  %903 = vmatprep.subr.bf16.mxu0 %v608
  %904 = vmatpush1.bf16.msra.mxu0 %v607
  %905 = vmatprep.subr.bf16.mxu0 %v624
  %906 = vmatpush1.bf16.msra.mxu0 %v623
  %907 = vmatprep.subr.bf16.mxu0 %v640
  %908 = vmatpush1.bf16.msra.mxu0 %v639
  %909 = vmatprep.subr.bf16.mxu0 %v656
  %910 = vmatpush1.bf16.msra.mxu0 %v655
  %911 = vmatprep.subr.bf16.mxu0 %v672
  %912 = vmatpush1.bf16.msra.mxu0 %v671
  %913 = vmatprep.subr.bf16.mxu0 0
  %914 = vmatpush1.bf16.msra.mxu0 0
  %915 = vmatprep.subr.bf16.mxu0 0
  %916 = vmatpush1.bf16.msra.mxu0 0
  %917 = vmatprep.subr.bf16.mxu0 0
  %918 = vmatpush1.bf16.msra.mxu0 0
  %919 = vmatprep.subr.bf16.mxu0 0
  %920 = vmatpush1.bf16.msra.mxu0 0
  %921 = vmatprep.subr.bf16.mxu0 0
  %922 = vmatpush1.bf16.msra.mxu0 0
  %923 = vmatprep.subr.bf16.mxu0 0
  %924 = vmatpush1.bf16.msra.mxu0 0
  %925 = vmatprep.subr.bf16.mxu0 0
  %926 = vmatpush1.bf16.msra.mxu0 0
  %927 = vmatprep.subr.bf16.mxu0 0
  %928 = vmatpush1.bf16.msra.mxu0 0
  %929 = vmatprep.mubr.bf16.mxu0 0
  %930 = vmatmul.mubr.bf16.gmra.mrb[0].mxu0 %v42
  %v931 = vpop.f32.mrb[0].mxu0
  %v932 = vadd.f32 0.0, %v931
  %v933 = vpop.f32.mrb[0].mxu0
  %v934 = vadd.f32 0.0, %v933
  %v935 = vpop.f32.mrb[0].mxu0
  %v936 = vadd.f32 0.0, %v935
  %v937 = vpop.f32.mrb[0].mxu0
  %v938 = vadd.f32 0.0, %v937
  %939 = vdwg.mxu0
  %940 = vmatprep.subr.bf16.mxu0 %v562
  %941 = vmatpush1.bf16.msra.mxu0 %v561
  %942 = vmatprep.subr.bf16.mxu0 %v578
  %943 = vmatpush1.bf16.msra.mxu0 %v577
  %944 = vmatprep.subr.bf16.mxu0 %v594
  %945 = vmatpush1.bf16.msra.mxu0 %v593
  %946 = vmatprep.subr.bf16.mxu0 %v610
  %947 = vmatpush1.bf16.msra.mxu0 %v609
  %948 = vmatprep.subr.bf16.mxu0 %v626
  %949 = vmatpush1.bf16.msra.mxu0 %v625
  %950 = vmatprep.subr.bf16.mxu0 %v642
  %951 = vmatpush1.bf16.msra.mxu0 %v641
  %952 = vmatprep.subr.bf16.mxu0 %v658
  %953 = vmatpush1.bf16.msra.mxu0 %v657
  %954 = vmatprep.subr.bf16.mxu0 %v674
  %955 = vmatpush1.bf16.msra.mxu0 %v673
  %956 = vmatprep.subr.bf16.mxu0 0
  %957 = vmatpush1.bf16.msra.mxu0 0
  %958 = vmatprep.subr.bf16.mxu0 0
  %959 = vmatpush1.bf16.msra.mxu0 0
  %960 = vmatprep.subr.bf16.mxu0 0
  %961 = vmatpush1.bf16.msra.mxu0 0
  %962 = vmatprep.subr.bf16.mxu0 0
  %963 = vmatpush1.bf16.msra.mxu0 0
  %964 = vmatprep.subr.bf16.mxu0 0
  %965 = vmatpush1.bf16.msra.mxu0 0
  %966 = vmatprep.subr.bf16.mxu0 0
  %967 = vmatpush1.bf16.msra.mxu0 0
  %968 = vmatprep.subr.bf16.mxu0 0
  %969 = vmatpush1.bf16.msra.mxu0 0
  %970 = vmatprep.subr.bf16.mxu0 0
  %971 = vmatpush1.bf16.msra.mxu0 0
  %972 = vmatprep.mubr.bf16.mxu0 0
  %973 = vmatmul.mubr.bf16.gmra.mrb[0].mxu0 %v42
  %v974 = vpop.f32.mrb[0].mxu0
  %v975 = vadd.f32 0.0, %v974
  %v976 = vpop.f32.mrb[0].mxu0
  %v977 = vadd.f32 0.0, %v976
  %v978 = vpop.f32.mrb[0].mxu0
  %v979 = vadd.f32 0.0, %v978
  %v980 = vpop.f32.mrb[0].mxu0
  %v981 = vadd.f32 0.0, %v980
  %982 = vdwg.mxu0
  %983 = vmatprep.subr.bf16.mxu0 %v564
  %984 = vmatpush1.bf16.msra.mxu0 %v563
  %985 = vmatprep.subr.bf16.mxu0 %v580
  %986 = vmatpush1.bf16.msra.mxu0 %v579
  %987 = vmatprep.subr.bf16.mxu0 %v596
  %988 = vmatpush1.bf16.msra.mxu0 %v595
  %989 = vmatprep.subr.bf16.mxu0 %v612
  %990 = vmatpush1.bf16.msra.mxu0 %v611
  %991 = vmatprep.subr.bf16.mxu0 %v628
  %992 = vmatpush1.bf16.msra.mxu0 %v627
  %993 = vmatprep.subr.bf16.mxu0 %v644
  %994 = vmatpush1.bf16.msra.mxu0 %v643
  %995 = vmatprep.subr.bf16.mxu0 %v660
  %996 = vmatpush1.bf16.msra.mxu0 %v659
  %997 = vmatprep.subr.bf16.mxu0 %v676
  %998 = vmatpush1.bf16.msra.mxu0 %v675
  %999 = vmatprep.subr.bf16.mxu0 0
  %1000 = vmatpush1.bf16.msra.mxu0 0
  %1001 = vmatprep.subr.bf16.mxu0 0
  %1002 = vmatpush1.bf16.msra.mxu0 0
  %1003 = vmatprep.subr.bf16.mxu0 0
  %1004 = vmatpush1.bf16.msra.mxu0 0
  %1005 = vmatprep.subr.bf16.mxu0 0
  %1006 = vmatpush1.bf16.msra.mxu0 0
  %1007 = vmatprep.subr.bf16.mxu0 0
  %1008 = vmatpush1.bf16.msra.mxu0 0
  %1009 = vmatprep.subr.bf16.mxu0 0
  %1010 = vmatpush1.bf16.msra.mxu0 0
  %1011 = vmatprep.subr.bf16.mxu0 0
  %1012 = vmatpush1.bf16.msra.mxu0 0
  %1013 = vmatprep.subr.bf16.mxu0 0
  %1014 = vmatpush1.bf16.msra.mxu0 0
  %1015 = vmatprep.mubr.bf16.mxu0 0
  %1016 = vmatmul.mubr.bf16.gmra.mrb[0].mxu0 %v42
  %v1017 = vpop.f32.mrb[0].mxu0
  %v1018 = vadd.f32 0.0, %v1017
  %v1019 = vpop.f32.mrb[0].mxu0
  %v1020 = vadd.f32 0.0, %v1019
  %v1021 = vpop.f32.mrb[0].mxu0
  %v1022 = vadd.f32 0.0, %v1021
  %v1023 = vpop.f32.mrb[0].mxu0
  %v1024 = vadd.f32 0.0, %v1023
  %1025 = vdwg.mxu0
  %1026 = vmatprep.subr.bf16.mxu0 %v566
  %1027 = vmatpush1.bf16.msra.mxu0 %v565
  %1028 = vmatprep.subr.bf16.mxu0 %v582
  %1029 = vmatpush1.bf16.msra.mxu0 %v581
  %1030 = vmatprep.subr.bf16.mxu0 %v598
  %1031 = vmatpush1.bf16.msra.mxu0 %v597
  %1032 = vmatprep.subr.bf16.mxu0 %v614
  %1033 = vmatpush1.bf16.msra.mxu0 %v613
  %1034 = vmatprep.subr.bf16.mxu0 %v630
  %1035 = vmatpush1.bf16.msra.mxu0 %v629
  %1036 = vmatprep.subr.bf16.mxu0 %v646
  %1037 = vmatpush1.bf16.msra.mxu0 %v645
  %1038 = vmatprep.subr.bf16.mxu0 %v662
  %1039 = vmatpush1.bf16.msra.mxu0 %v661
  %1040 = vmatprep.subr.bf16.mxu0 %v678
  %1041 = vmatpush1.bf16.msra.mxu0 %v677
  %1042 = vmatprep.subr.bf16.mxu0 0
  %1043 = vmatpush1.bf16.msra.mxu0 0
  %1044 = vmatprep.subr.bf16.mxu0 0
  %1045 = vmatpush1.bf16.msra.mxu0 0
  %1046 = vmatprep.subr.bf16.mxu0 0
  %1047 = vmatpush1.bf16.msra.mxu0 0
  %1048 = vmatprep.subr.bf16.mxu0 0
  %1049 = vmatpush1.bf16.msra.mxu0 0
  %1050 = vmatprep.subr.bf16.mxu0 0
  %1051 = vmatpush1.bf16.msra.mxu0 0
  %1052 = vmatprep.subr.bf16.mxu0 0
  %1053 = vmatpush1.bf16.msra.mxu0 0
  %1054 = vmatprep.subr.bf16.mxu0 0
  %1055 = vmatpush1.bf16.msra.mxu0 0
  %1056 = vmatprep.subr.bf16.mxu0 0
  %1057 = vmatpush1.bf16.msra.mxu0 0
  %1058 = vmatprep.mubr.bf16.mxu0 0
  %1059 = vmatmul.mubr.bf16.gmra.mrb[0].mxu0 %v42
  %v1060 = vpop.f32.mrb[0].mxu0
  %v1061 = vadd.f32 0.0, %v1060
  %v1062 = vpop.f32.mrb[0].mxu0
  %v1063 = vadd.f32 0.0, %v1062
  %v1064 = vpop.f32.mrb[0].mxu0
  %v1065 = vadd.f32 0.0, %v1064
  %v1066 = vpop.f32.mrb[0].mxu0
  %v1067 = vadd.f32 0.0, %v1066
  %1068 = vdwg.mxu0
  %1069 = vmatprep.subr.bf16.mxu0 %v568
  %1070 = vmatpush1.bf16.msra.mxu0 %v567
  %1071 = vmatprep.subr.bf16.mxu0 %v584
  %1072 = vmatpush1.bf16.msra.mxu0 %v583
  %1073 = vmatprep.subr.bf16.mxu0 %v600
  %1074 = vmatpush1.bf16.msra.mxu0 %v599
  %1075 = vmatprep.subr.bf16.mxu0 %v616
  %1076 = vmatpush1.bf16.msra.mxu0 %v615
  %1077 = vmatprep.subr.bf16.mxu0 %v632
  %1078 = vmatpush1.bf16.msra.mxu0 %v631
  %1079 = vmatprep.subr.bf16.mxu0 %v648
  %1080 = vmatpush1.bf16.msra.mxu0 %v647
  %1081 = vmatprep.subr.bf16.mxu0 %v664
  %1082 = vmatpush1.bf16.msra.mxu0 %v663
  %1083 = vmatprep.subr.bf16.mxu0 %v680
  %1084 = vmatpush1.bf16.msra.mxu0 %v679
  %1085 = vmatprep.subr.bf16.mxu0 0
  %1086 = vmatpush1.bf16.msra.mxu0 0
  %1087 = vmatprep.subr.bf16.mxu0 0
  %1088 = vmatpush1.bf16.msra.mxu0 0
  %1089 = vmatprep.subr.bf16.mxu0 0
  %1090 = vmatpush1.bf16.msra.mxu0 0
  %1091 = vmatprep.subr.bf16.mxu0 0
  %1092 = vmatpush1.bf16.msra.mxu0 0
  %1093 = vmatprep.subr.bf16.mxu0 0
  %1094 = vmatpush1.bf16.msra.mxu0 0
  %1095 = vmatprep.subr.bf16.mxu0 0
  %1096 = vmatpush1.bf16.msra.mxu0 0
  %1097 = vmatprep.subr.bf16.mxu0 0
  %1098 = vmatpush1.bf16.msra.mxu0 0
  %1099 = vmatprep.subr.bf16.mxu0 0
  %1100 = vmatpush1.bf16.msra.mxu0 0
  %1101 = vmatprep.mubr.bf16.mxu0 0
  %1102 = vmatmul.mubr.bf16.gmra.mrb[0].mxu0 %v42
  %v1103 = vpop.f32.mrb[0].mxu0
  %v1104 = vadd.f32 0.0, %v1103
  %v1105 = vpop.f32.mrb[0].mxu0
  %v1106 = vadd.f32 0.0, %v1105
  %v1107 = vpop.f32.mrb[0].mxu0
  %v1108 = vadd.f32 0.0, %v1107
  %v1109 = vpop.f32.mrb[0].mxu0
  %v1110 = vadd.f32 0.0, %v1109
  %1111 = vdwg.mxu0
  %1112 = vmatprep.subr.bf16.mxu0 %v570
  %1113 = vmatpush1.bf16.msra.mxu0 %v569
  %1114 = vmatprep.subr.bf16.mxu0 %v586
  %1115 = vmatpush1.bf16.msra.mxu0 %v585
  %1116 = vmatprep.subr.bf16.mxu0 %v602
  %1117 = vmatpush1.bf16.msra.mxu0 %v601
  %1118 = vmatprep.subr.bf16.mxu0 %v618
  %1119 = vmatpush1.bf16.msra.mxu0 %v617
  %1120 = vmatprep.subr.bf16.mxu0 %v634
  %1121 = vmatpush1.bf16.msra.mxu0 %v633
  %1122 = vmatprep.subr.bf16.mxu0 %v650
  %1123 = vmatpush1.bf16.msra.mxu0 %v649
  %1124 = vmatprep.subr.bf16.mxu0 %v666
  %1125 = vmatpush1.bf16.msra.mxu0 %v665
  %1126 = vmatprep.subr.bf16.mxu0 %v682
  %1127 = vmatpush1.bf16.msra.mxu0 %v681
  %1128 = vmatprep.subr.bf16.mxu0 0
  %1129 = vmatpush1.bf16.msra.mxu0 0
  %1130 = vmatprep.subr.bf16.mxu0 0
  %1131 = vmatpush1.bf16.msra.mxu0 0
  %1132 = vmatprep.subr.bf16.mxu0 0
  %1133 = vmatpush1.bf16.msra.mxu0 0
  %1134 = vmatprep.subr.bf16.mxu0 0
  %1135 = vmatpush1.bf16.msra.mxu0 0
  %1136 = vmatprep.subr.bf16.mxu0 0
  %1137 = vmatpush1.bf16.msra.mxu0 0
  %1138 = vmatprep.subr.bf16.mxu0 0
  %1139 = vmatpush1.bf16.msra.mxu0 0
  %1140 = vmatprep.subr.bf16.mxu0 0
  %1141 = vmatpush1.bf16.msra.mxu0 0
  %1142 = vmatprep.subr.bf16.mxu0 0
  %1143 = vmatpush1.bf16.msra.mxu0 0
  %1144 = vmatprep.mubr.bf16.mxu0 0
  %1145 = vmatmul.mubr.bf16.gmra.mrb[0].mxu0 %v42
  %v1146 = vpop.f32.mrb[0].mxu0
  %v1147 = vadd.f32 0.0, %v1146
  %v1148 = vpop.f32.mrb[0].mxu0
  %v1149 = vadd.f32 0.0, %v1148
  %v1150 = vpop.f32.mrb[0].mxu0
  %v1151 = vadd.f32 0.0, %v1150
  %v1152 = vpop.f32.mrb[0].mxu0
  %v1153 = vadd.f32 0.0, %v1152
  %1154 = vdwg.mxu0
  %v1155 = vpack.c.bf16 %v850, %v846
  %v1156 = vpack.c.bf16 %v852, %v848
  %v1157 = vpack.c.bf16 %v893, %v889
  %v1158 = vpack.c.bf16 %v895, %v891
  %v1159 = vpack.c.bf16 %v936, %v932
  %v1160 = vpack.c.bf16 %v938, %v934
  %v1161 = vpack.c.bf16 %v979, %v975
  %v1162 = vpack.c.bf16 %v981, %v977
  %v1163 = vpack.c.bf16 %v1022, %v1018
  %v1164 = vpack.c.bf16 %v1024, %v1020
  %v1165 = vpack.c.bf16 %v1065, %v1061
  %v1166 = vpack.c.bf16 %v1067, %v1063
  %v1167 = vpack.c.bf16 %v1108, %v1104
  %v1168 = vpack.c.bf16 %v1110, %v1106
  %v1169 = vpack.c.bf16 %v1151, %v1147
  %v1170 = vpack.c.bf16 %v1153, %v1149
  %v1187 = vunpack.c.l.b16 %v1155
  %v1188 = vunpack.c.l.b16 %v1156
  %v1189 = vunpack.c.l.b16 %v1157
  %v1190 = vunpack.c.l.b16 %v1158
  %v1191 = vunpack.c.l.b16 %v1159
  %v1192 = vunpack.c.l.b16 %v1160
  %v1193 = vunpack.c.l.b16 %v1161
  %v1194 = vunpack.c.l.b16 %v1162
  %v1195 = vunpack.c.l.b16 %v1163
  %v1196 = vunpack.c.l.b16 %v1164
  %v1197 = vunpack.c.l.b16 %v1165
  %v1198 = vunpack.c.l.b16 %v1166
  %v1199 = vunpack.c.l.b16 %v1167
  %v1200 = vunpack.c.l.b16 %v1168
  %v1201 = vunpack.c.l.b16 %v1169
  %v1202 = vunpack.c.l.b16 %v1170
  %v1203 = vunpack.c.h.b16 %v1155
  %v1204 = vunpack.c.h.b16 %v1156
  %v1205 = vunpack.c.h.b16 %v1157
  %v1206 = vunpack.c.h.b16 %v1158
  %v1207 = vunpack.c.h.b16 %v1159
  %v1208 = vunpack.c.h.b16 %v1160
  %v1209 = vunpack.c.h.b16 %v1161
  %v1210 = vunpack.c.h.b16 %v1162
  %v1211 = vunpack.c.h.b16 %v1163
  %v1212 = vunpack.c.h.b16 %v1164
  %v1213 = vunpack.c.h.b16 %v1165
  %v1214 = vunpack.c.h.b16 %v1166
  %v1215 = vunpack.c.h.b16 %v1167
  %v1216 = vunpack.c.h.b16 %v1168
  %v1217 = vunpack.c.h.b16 %v1169
  %v1218 = vunpack.c.h.b16 %v1170
  %v1219 = vpack.c.b16 %v1188, %v1187
  %v1220 = vpack.c.b16 %v1190, %v1189
  %v1221 = vpack.c.b16 %v1192, %v1191
  %v1222 = vpack.c.b16 %v1194, %v1193
  %v1223 = vpack.c.b16 %v1196, %v1195
  %v1224 = vpack.c.b16 %v1198, %v1197
  %v1225 = vpack.c.b16 %v1200, %v1199
  %v1226 = vpack.c.b16 %v1202, %v1201
  %v1227 = vpack.c.b16 %v1204, %v1203
  %v1228 = vpack.c.b16 %v1206, %v1205
  %v1229 = vpack.c.b16 %v1208, %v1207
  %v1230 = vpack.c.b16 %v1210, %v1209
  %v1231 = vpack.c.b16 %v1212, %v1211
  %v1232 = vpack.c.b16 %v1214, %v1213
  %v1233 = vpack.c.b16 %v1216, %v1215
  %v1234 = vpack.c.b16 %v1218, %v1217
  %1251 = vst [vmem:[%s4] sm:$0xff] %v1219
  %1252 = vst [vmem:[%s4 + $0x8] sm:$0xff] %v1220
  %1253 = vst [vmem:[%s4 + $0x10] sm:$0xff] %v1221
  %1254 = vst [vmem:[%s4 + $0x18] sm:$0xff] %v1222
  %1255 = vst [vmem:[%s4 + $0x20] sm:$0xff] %v1223
  %1256 = vst [vmem:[%s4 + $0x28] sm:$0xff] %v1224
  %1257 = vst [vmem:[%s4 + $0x30] sm:$0xff] %v1225
  %1258 = vst [vmem:[%s4 + $0x38] sm:$0xff] %v1226
  %1259 = vst [vmem:[%s4 + $0x40] sm:$0xff] %v1227
  %1260 = vst [vmem:[%s4 + $0x48] sm:$0xff] %v1228
  %1261 = vst [vmem:[%s4 + $0x50] sm:$0xff] %v1229
  %1262 = vst [vmem:[%s4 + $0x58] sm:$0xff] %v1230
  %1263 = vst [vmem:[%s4 + $0x60] sm:$0xff] %v1231
  %1264 = vst [vmem:[%s4 + $0x68] sm:$0xff] %v1232
  %1265 = vst [vmem:[%s4 + $0x70] sm:$0xff] %v1233
  %1266 = vst [vmem:[%s4 + $0x78] sm:$0xff] %v1234
  // Predicated region
  $region18: #{unet_forward.15} parent=0 // pred_check
    _
  $region19: #{unet_forward.15} parent=0 // pred_check_branch
    %1268 = sbr.rel (0) target = $region21
  $region20: #{unet_forward.15} parent=0 // pred_region
    _
  $region21: #{unet_forward.15} parent=0 // pred_fallthru
    _
  // Predicated region
  $region22: #{unet_forward.15} parent=0 // pred_check
    _
  $region23: #{unet_forward.15} parent=0 // pred_check_branch
    %1270 = sbr.rel (0) target = $region25
  $region24: #{unet_forward.15} parent=0 // pred_region
    _
  $region25: #{unet_forward.15} parent=0 // pred_fallthru
    _

// kernel: unet_forward.14
$region0: #{unet_forward.14}
  #allocation0 [shape = 'u32[]', space=smem, size = 0x4, offset = 0x4, fixed_abs, tag = 'smem constant byte address 0x4 - core index']
  #allocation1 [shape = 'u32[144,128]{1,0:T(1,128)}', space=vmem, size = 0x12000, scoped, tag = 'internal scratch']
  %s0 = inlined_call_operand.vmem [shape: bf16[16,2048], index: 0, kind: input, shape index: {}]
  %s1 = inlined_call_operand.vmem [shape: f32[1,2048], index: 1, kind: input, shape index: {}]
  %s2 = inlined_call_operand.vmem [shape: f32[1,2048], index: 2, kind: input, shape index: {}]
  %s3 = inlined_call_operand.vmem [shape: bf16[2048,128], index: 3, kind: input, shape index: {}]
  %s4 = inlined_call_operand.vmem [shape: bf16[16,128], index: 4, kind: output, shape index: {0}]
  %s5 = inlined_call_operand.hbm [shape: f32[1,128], index: 5, kind: output, shape index: {1}]
  %s6 = inlined_call_operand.hbm [shape: f32[1,128], index: 6, kind: output, shape index: {2}]
  %7 = xla_tuple %s4, %s5, %s6
  %s8 = sld [smem:[#allocation0]]
  $region42: #{unet_forward.14} parent=0
    _
  %s10 = ssub.s32 1, %s8
  %s11 = scalar_select 0, %s10, %s8
  $region1: #{unet_forward.14} parent=0
    #allocation2 [shape = 'u8[512]{0}', space=vmem, size = 0x400, scoped, tag = 'output window, operand 1, single buffered']
    #allocation3 [shape = 's32[1]{0}', space=sflag, size = 0x4, scoped, tag = 'scoped memory for unet_forward.14']
    #allocation4 [shape = 'u8[512]{0}', space=vmem, size = 0x400, scoped, tag = 'output window, operand 2, single buffered']
    #allocation5 [shape = 's32[1]{0}', space=sflag, size = 0x4, scoped, tag = 'scoped memory for unet_forward.14']
    %12 = vsyncpa [#allocation3], 0
    %13 = vsyncpa [#allocation5], 0
    // Predicated region
    $region2: #{unet_forward.14} parent=1 // pred_check
      _
    $region3: #{unet_forward.14} parent=1 // pred_check_branch
      %15 = sbr.rel (0) target = $region5
    $region4: #{unet_forward.14} parent=1 // pred_region
      _
    $region5: #{unet_forward.14} parent=1 // pred_fallthru
      _
    // Predicated region
    $region6: #{unet_forward.14} parent=1 // pred_check
      _
    $region7: #{unet_forward.14} parent=1 // pred_check_branch
      %17 = sbr.rel (0) target = $region9
    $region8: #{unet_forward.14} parent=1 // pred_region
      _
    $region9: #{unet_forward.14} parent=1 // pred_fallthru
      _
    // Predicated region
    $region10: #{unet_forward.14} parent=1 // pred_check
      _
    $region11: #{unet_forward.14} parent=1 // pred_check_branch
      %19 = sbr.rel (0) target = $region13
    $region12: #{unet_forward.14} parent=1 // pred_region
      _
    $region13: #{unet_forward.14} parent=1 // pred_fallthru
      _
    // Predicated region
    $region14: #{unet_forward.14} parent=1 // pred_check
      _
    $region15: #{unet_forward.14} parent=1 // pred_check_branch
      %21 = sbr.rel (0) target = $region17
    $region16: #{unet_forward.14} parent=1 // pred_region
      _
    $region17: #{unet_forward.14} parent=1 // pred_fallthru
      _
    %v23 = vld [vmem:[%s0] sm:$0xff]
    %v24 = vld [vmem:[%s0 + $0x8] sm:$0xff]
    %v25 = vld [vmem:[%s0 + $0x10] sm:$0xff]
    %v26 = vld [vmem:[%s0 + $0x18] sm:$0xff]
    %v27 = vld [vmem:[%s0 + $0x20] sm:$0xff]
    %v28 = vld [vmem:[%s0 + $0x28] sm:$0xff]
    %v29 = vld [vmem:[%s0 + $0x30] sm:$0xff]
    %v30 = vld [vmem:[%s0 + $0x38] sm:$0xff]
    %v31 = vld [vmem:[%s0 + $0x40] sm:$0xff]
    %v32 = vld [vmem:[%s0 + $0x48] sm:$0xff]
    %v33 = vld [vmem:[%s0 + $0x50] sm:$0xff]
    %v34 = vld [vmem:[%s0 + $0x58] sm:$0xff]
    %v35 = vld [vmem:[%s0 + $0x60] sm:$0xff]
    %v36 = vld [vmem:[%s0 + $0x68] sm:$0xff]
    %v37 = vld [vmem:[%s0 + $0x70] sm:$0xff]
    %v38 = vld [vmem:[%s0 + $0x78] sm:$0xff]
    %v39 = vunpack.c.l.bf16 %v23
    %v40 = vunpack.c.h.bf16 %v23
    %v41 = vunpack.c.l.bf16 %v24
    %v42 = vunpack.c.h.bf16 %v24
    %v43 = vunpack.c.l.bf16 %v25
    %v44 = vunpack.c.h.bf16 %v25
    %v45 = vunpack.c.l.bf16 %v26
    %v46 = vunpack.c.h.bf16 %v26
    %v47 = vunpack.c.l.bf16 %v27
    %v48 = vunpack.c.h.bf16 %v27
    %v49 = vunpack.c.l.bf16 %v28
    %v50 = vunpack.c.h.bf16 %v28
    %v51 = vunpack.c.l.bf16 %v29
    %v52 = vunpack.c.h.bf16 %v29
    %v53 = vunpack.c.l.bf16 %v30
    %v54 = vunpack.c.h.bf16 %v30
    %v55 = vunpack.c.l.bf16 %v31
    %v56 = vunpack.c.h.bf16 %v31
    %v57 = vunpack.c.l.bf16 %v32
    %v58 = vunpack.c.h.bf16 %v32
    %v59 = vunpack.c.l.bf16 %v33
    %v60 = vunpack.c.h.bf16 %v33
    %v61 = vunpack.c.l.bf16 %v34
    %v62 = vunpack.c.h.bf16 %v34
    %v63 = vunpack.c.l.bf16 %v35
    %v64 = vunpack.c.h.bf16 %v35
    %v65 = vunpack.c.l.bf16 %v36
    %v66 = vunpack.c.h.bf16 %v36
    %v67 = vunpack.c.l.bf16 %v37
    %v68 = vunpack.c.h.bf16 %v37
    %v69 = vunpack.c.l.bf16 %v38
    %v70 = vunpack.c.h.bf16 %v38
    %v71 = vld [vmem:[%s1] sm:$0xff]
    %v72 = vld [vmem:[%s1 + $0x8] sm:$0xff]
    %v75 = vlaneseq
    %v76 = vshrl.u32 %v75, 7
    %v77 = vsub.s32 0, %v76
    %v78 = vrot.slane %v71, %v77
    %v79 = vlaneseq
    %v80 = vshrl.u32 %v79, 7
    %v81 = vsub.s32 1, %v80
    %v82 = vrot.slane %v71, %v81
    %v83 = vlaneseq
    %v84 = vshrl.u32 %v83, 7
    %v85 = vsub.s32 2, %v84
    %v86 = vrot.slane %v71, %v85
    %v87 = vlaneseq
    %v88 = vshrl.u32 %v87, 7
    %v89 = vsub.s32 3, %v88
    %v90 = vrot.slane %v71, %v89
    %v91 = vlaneseq
    %v92 = vshrl.u32 %v91, 7
    %v93 = vsub.s32 4, %v92
    %v94 = vrot.slane %v71, %v93
    %v95 = vlaneseq
    %v96 = vshrl.u32 %v95, 7
    %v97 = vsub.s32 5, %v96
    %v98 = vrot.slane %v71, %v97
    %v99 = vlaneseq
    %v100 = vshrl.u32 %v99, 7
    %v101 = vsub.s32 6, %v100
    %v102 = vrot.slane %v71, %v101
    %v103 = vlaneseq
    %v104 = vshrl.u32 %v103, 7
    %v105 = vsub.s32 7, %v104
    %v106 = vrot.slane %v71, %v105
    %v107 = vlaneseq
    %v108 = vshrl.u32 %v107, 7
    %v109 = vsub.s32 0, %v108
    %v110 = vrot.slane %v72, %v109
    %v111 = vlaneseq
    %v112 = vshrl.u32 %v111, 7
    %v113 = vsub.s32 1, %v112
    %v114 = vrot.slane %v72, %v113
    %v115 = vlaneseq
    %v116 = vshrl.u32 %v115, 7
    %v117 = vsub.s32 2, %v116
    %v118 = vrot.slane %v72, %v117
    %v119 = vlaneseq
    %v120 = vshrl.u32 %v119, 7
    %v121 = vsub.s32 3, %v120
    %v122 = vrot.slane %v72, %v121
    %v123 = vlaneseq
    %v124 = vshrl.u32 %v123, 7
    %v125 = vsub.s32 4, %v124
    %v126 = vrot.slane %v72, %v125
    %v127 = vlaneseq
    %v128 = vshrl.u32 %v127, 7
    %v129 = vsub.s32 5, %v128
    %v130 = vrot.slane %v72, %v129
    %v131 = vlaneseq
    %v132 = vshrl.u32 %v131, 7
    %v133 = vsub.s32 6, %v132
    %v134 = vrot.slane %v72, %v133
    %v135 = vlaneseq
    %v136 = vshrl.u32 %v135, 7
    %v137 = vsub.s32 7, %v136
    %v138 = vrot.slane %v72, %v137
    %v155 = vmul.f32 %v39, %v78
    %v156 = vmul.f32 %v40, %v82
    %v157 = vmul.f32 %v41, %v86
    %v158 = vmul.f32 %v42, %v90
    %v159 = vmul.f32 %v43, %v94
    %v160 = vmul.f32 %v44, %v98
    %v161 = vmul.f32 %v45, %v102
    %v162 = vmul.f32 %v46, %v106
    %v163 = vmul.f32 %v47, %v110
    %v164 = vmul.f32 %v48, %v114
    %v165 = vmul.f32 %v49, %v118
    %v166 = vmul.f32 %v50, %v122
    %v167 = vmul.f32 %v51, %v126
    %v168 = vmul.f32 %v52, %v130
    %v169 = vmul.f32 %v53, %v134
    %v170 = vmul.f32 %v54, %v138
    %v171 = vmul.f32 %v55, %v78
    %v172 = vmul.f32 %v56, %v82
    %v173 = vmul.f32 %v57, %v86
    %v174 = vmul.f32 %v58, %v90
    %v175 = vmul.f32 %v59, %v94
    %v176 = vmul.f32 %v60, %v98
    %v177 = vmul.f32 %v61, %v102
    %v178 = vmul.f32 %v62, %v106
    %v179 = vmul.f32 %v63, %v110
    %v180 = vmul.f32 %v64, %v114
    %v181 = vmul.f32 %v65, %v118
    %v182 = vmul.f32 %v66, %v122
    %v183 = vmul.f32 %v67, %v126
    %v184 = vmul.f32 %v68, %v130
    %v185 = vmul.f32 %v69, %v134
    %v186 = vmul.f32 %v70, %v138
    %v187 = vld [vmem:[%s2] sm:$0xff]
    %v188 = vld [vmem:[%s2 + $0x8] sm:$0xff]
    %v191 = vlaneseq
    %v192 = vshrl.u32 %v191, 7
    %v193 = vsub.s32 0, %v192
    %v194 = vrot.slane %v187, %v193
    %v195 = vlaneseq
    %v196 = vshrl.u32 %v195, 7
    %v197 = vsub.s32 1, %v196
    %v198 = vrot.slane %v187, %v197
    %v199 = vlaneseq
    %v200 = vshrl.u32 %v199, 7
    %v201 = vsub.s32 2, %v200
    %v202 = vrot.slane %v187, %v201
    %v203 = vlaneseq
    %v204 = vshrl.u32 %v203, 7
    %v205 = vsub.s32 3, %v204
    %v206 = vrot.slane %v187, %v205
    %v207 = vlaneseq
    %v208 = vshrl.u32 %v207, 7
    %v209 = vsub.s32 4, %v208
    %v210 = vrot.slane %v187, %v209
    %v211 = vlaneseq
    %v212 = vshrl.u32 %v211, 7
    %v213 = vsub.s32 5, %v212
    %v214 = vrot.slane %v187, %v213
    %v215 = vlaneseq
    %v216 = vshrl.u32 %v215, 7
    %v217 = vsub.s32 6, %v216
    %v218 = vrot.slane %v187, %v217
    %v219 = vlaneseq
    %v220 = vshrl.u32 %v219, 7
    %v221 = vsub.s32 7, %v220
    %v222 = vrot.slane %v187, %v221
    %v223 = vlaneseq
    %v224 = vshrl.u32 %v223, 7
    %v225 = vsub.s32 0, %v224
    %v226 = vrot.slane %v188, %v225
    %v227 = vlaneseq
    %v228 = vshrl.u32 %v227, 7
    %v229 = vsub.s32 1, %v228
    %v230 = vrot.slane %v188, %v229
    %v231 = vlaneseq
    %v232 = vshrl.u32 %v231, 7
    %v233 = vsub.s32 2, %v232
    %v234 = vrot.slane %v188, %v233
    %v235 = vlaneseq
    %v236 = vshrl.u32 %v235, 7
    %v237 = vsub.s32 3, %v236
    %v238 = vrot.slane %v188, %v237
    %v239 = vlaneseq
    %v240 = vshrl.u32 %v239, 7
    %v241 = vsub.s32 4, %v240
    %v242 = vrot.slane %v188, %v241
    %v243 = vlaneseq
    %v244 = vshrl.u32 %v243, 7
    %v245 = vsub.s32 5, %v244
    %v246 = vrot.slane %v188, %v245
    %v247 = vlaneseq
    %v248 = vshrl.u32 %v247, 7
    %v249 = vsub.s32 6, %v248
    %v250 = vrot.slane %v188, %v249
    %v251 = vlaneseq
    %v252 = vshrl.u32 %v251, 7
    %v253 = vsub.s32 7, %v252
    %v254 = vrot.slane %v188, %v253
    %v271 = vadd.f32 %v155, %v194
    %v272 = vadd.f32 %v156, %v198
    %v273 = vadd.f32 %v157, %v202
    %v274 = vadd.f32 %v158, %v206
    %v275 = vadd.f32 %v159, %v210
    %v276 = vadd.f32 %v160, %v214
    %v277 = vadd.f32 %v161, %v218
    %v278 = vadd.f32 %v162, %v222
    %v279 = vadd.f32 %v163, %v226
    %v280 = vadd.f32 %v164, %v230
    %v281 = vadd.f32 %v165, %v234
    %v282 = vadd.f32 %v166, %v238
    %v283 = vadd.f32 %v167, %v242
    %v284 = vadd.f32 %v168, %v246
    %v285 = vadd.f32 %v169, %v250
    %v286 = vadd.f32 %v170, %v254
    %v287 = vadd.f32 %v171, %v194
    %v288 = vadd.f32 %v172, %v198
    %v289 = vadd.f32 %v173, %v202
    %v290 = vadd.f32 %v174, %v206
    %v291 = vadd.f32 %v175, %v210
    %v292 = vadd.f32 %v176, %v214
    %v293 = vadd.f32 %v177, %v218
    %v294 = vadd.f32 %v178, %v222
    %v295 = vadd.f32 %v179, %v226
    %v296 = vadd.f32 %v180, %v230
    %v297 = vadd.f32 %v181, %v234
    %v298 = vadd.f32 %v182, %v238
    %v299 = vadd.f32 %v183, %v242
    %v300 = vadd.f32 %v184, %v246
    %v301 = vadd.f32 %v185, %v250
    %v302 = vadd.f32 %v186, %v254
    %v303 = vmul.f32 %v271, 0.2
    %v304 = vmul.f32 %v272, 0.2
    %v305 = vmul.f32 %v273, 0.2
    %v306 = vmul.f32 %v274, 0.2
    %v307 = vmul.f32 %v275, 0.2
    %v308 = vmul.f32 %v276, 0.2
    %v309 = vmul.f32 %v277, 0.2
    %v310 = vmul.f32 %v278, 0.2
    %v311 = vmul.f32 %v279, 0.2
    %v312 = vmul.f32 %v280, 0.2
    %v313 = vmul.f32 %v281, 0.2
    %v314 = vmul.f32 %v282, 0.2
    %v315 = vmul.f32 %v283, 0.2
    %v316 = vmul.f32 %v284, 0.2
    %v317 = vmul.f32 %v285, 0.2
    %v318 = vmul.f32 %v286, 0.2
    %v319 = vmul.f32 %v287, 0.2
    %v320 = vmul.f32 %v288, 0.2
    %v321 = vmul.f32 %v289, 0.2
    %v322 = vmul.f32 %v290, 0.2
    %v323 = vmul.f32 %v291, 0.2
    %v324 = vmul.f32 %v292, 0.2
    %v325 = vmul.f32 %v293, 0.2
    %v326 = vmul.f32 %v294, 0.2
    %v327 = vmul.f32 %v295, 0.2
    %v328 = vmul.f32 %v296, 0.2
    %v329 = vmul.f32 %v297, 0.2
    %v330 = vmul.f32 %v298, 0.2
    %v331 = vmul.f32 %v299, 0.2
    %v332 = vmul.f32 %v300, 0.2
    %v333 = vmul.f32 %v301, 0.2
    %v334 = vmul.f32 %v302, 0.2
    %v335 = vmax.f32 %v271, %v303
    %v336 = vmax.f32 %v272, %v304
    %v337 = vmax.f32 %v273, %v305
    %v338 = vmax.f32 %v274, %v306
    %v339 = vmax.f32 %v275, %v307
    %v340 = vmax.f32 %v276, %v308
    %v341 = vmax.f32 %v277, %v309
    %v342 = vmax.f32 %v278, %v310
    %v343 = vmax.f32 %v279, %v311
    %v344 = vmax.f32 %v280, %v312
    %v345 = vmax.f32 %v281, %v313
    %v346 = vmax.f32 %v282, %v314
    %v347 = vmax.f32 %v283, %v315
    %v348 = vmax.f32 %v284, %v316
    %v349 = vmax.f32 %v285, %v317
    %v350 = vmax.f32 %v286, %v318
    %v351 = vmax.f32 %v287, %v319
    %v352 = vmax.f32 %v288, %v320
    %v353 = vmax.f32 %v289, %v321
    %v354 = vmax.f32 %v290, %v322
    %v355 = vmax.f32 %v291, %v323
    %v356 = vmax.f32 %v292, %v324
    %v357 = vmax.f32 %v293, %v325
    %v358 = vmax.f32 %v294, %v326
    %v359 = vmax.f32 %v295, %v327
    %v360 = vmax.f32 %v296, %v328
    %v361 = vmax.f32 %v297, %v329
    %v362 = vmax.f32 %v298, %v330
    %v363 = vmax.f32 %v299, %v331
    %v364 = vmax.f32 %v300, %v332
    %v365 = vmax.f32 %v301, %v333
    %v366 = vmax.f32 %v302, %v334
    %v367 = vpack.c.bf16 %v351, %v335
    %v368 = vpack.c.bf16 %v352, %v336
    %v369 = vpack.c.bf16 %v353, %v337
    %v370 = vpack.c.bf16 %v354, %v338
    %v371 = vpack.c.bf16 %v355, %v339
    %v372 = vpack.c.bf16 %v356, %v340
    %v373 = vpack.c.bf16 %v357, %v341
    %v374 = vpack.c.bf16 %v358, %v342
    %v375 = vpack.c.bf16 %v359, %v343
    %v376 = vpack.c.bf16 %v360, %v344
    %v377 = vpack.c.bf16 %v361, %v345
    %v378 = vpack.c.bf16 %v362, %v346
    %v379 = vpack.c.bf16 %v363, %v347
    %v380 = vpack.c.bf16 %v364, %v348
    %v381 = vpack.c.bf16 %v365, %v349
    %v382 = vpack.c.bf16 %v366, %v350
    %v383 = vld [vmem:[%s3] sm:$0xf]
    %v384 = vld [vmem:[%s3 + $0x4] sm:$0xf]
    %v385 = vld [vmem:[%s3 + $0x8] sm:$0xf]
    %v386 = vld [vmem:[%s3 + $0xc] sm:$0xf]
    %v387 = vld [vmem:[%s3 + $0x10] sm:$0xf]
    %v388 = vld [vmem:[%s3 + $0x14] sm:$0xf]
    %v389 = vld [vmem:[%s3 + $0x18] sm:$0xf]
    %v390 = vld [vmem:[%s3 + $0x1c] sm:$0xf]
    %v391 = vld [vmem:[%s3 + $0x20] sm:$0xf]
    %v392 = vld [vmem:[%s3 + $0x24] sm:$0xf]
    %v393 = vld [vmem:[%s3 + $0x28] sm:$0xf]
    %v394 = vld [vmem:[%s3 + $0x2c] sm:$0xf]
    %v395 = vld [vmem:[%s3 + $0x30] sm:$0xf]
    %v396 = vld [vmem:[%s3 + $0x34] sm:$0xf]
    %v397 = vld [vmem:[%s3 + $0x38] sm:$0xf]
    %v398 = vld [vmem:[%s3 + $0x3c] sm:$0xf]
    %v399 = vld [vmem:[%s3 + $0x40] sm:$0xf]
    %v400 = vld [vmem:[%s3 + $0x44] sm:$0xf]
    %v401 = vld [vmem:[%s3 + $0x48] sm:$0xf]
    %v402 = vld [vmem:[%s3 + $0x4c] sm:$0xf]
    %v403 = vld [vmem:[%s3 + $0x50] sm:$0xf]
    %v404 = vld [vmem:[%s3 + $0x54] sm:$0xf]
    %v405 = vld [vmem:[%s3 + $0x58] sm:$0xf]
    %v406 = vld [vmem:[%s3 + $0x5c] sm:$0xf]
    %v407 = vld [vmem:[%s3 + $0x60] sm:$0xf]
    %v408 = vld [vmem:[%s3 + $0x64] sm:$0xf]
    %v409 = vld [vmem:[%s3 + $0x68] sm:$0xf]
    %v410 = vld [vmem:[%s3 + $0x6c] sm:$0xf]
    %v411 = vld [vmem:[%s3 + $0x70] sm:$0xf]
    %v412 = vld [vmem:[%s3 + $0x74] sm:$0xf]
    %v413 = vld [vmem:[%s3 + $0x78] sm:$0xf]
    %v414 = vld [vmem:[%s3 + $0x7c] sm:$0xf]
    %v415 = vld [vmem:[%s3 + $0x80] sm:$0xf]
    %v416 = vld [vmem:[%s3 + $0x84] sm:$0xf]
    %v417 = vld [vmem:[%s3 + $0x88] sm:$0xf]
    %v418 = vld [vmem:[%s3 + $0x8c] sm:$0xf]
    %v419 = vld [vmem:[%s3 + $0x90] sm:$0xf]
    %v420 = vld [vmem:[%s3 + $0x94] sm:$0xf]
    %v421 = vld [vmem:[%s3 + $0x98] sm:$0xf]
    %v422 = vld [vmem:[%s3 + $0x9c] sm:$0xf]
    %v423 = vld [vmem:[%s3 + $0xa0] sm:$0xf]
    %v424 = vld [vmem:[%s3 + $0xa4] sm:$0xf]
    %v425 = vld [vmem:[%s3 + $0xa8] sm:$0xf]
    %v426 = vld [vmem:[%s3 + $0xac] sm:$0xf]
    %v427 = vld [vmem:[%s3 + $0xb0] sm:$0xf]
    %v428 = vld [vmem:[%s3 + $0xb4] sm:$0xf]
    %v429 = vld [vmem:[%s3 + $0xb8] sm:$0xf]
    %v430 = vld [vmem:[%s3 + $0xbc] sm:$0xf]
    %v431 = vld [vmem:[%s3 + $0xc0] sm:$0xf]
    %v432 = vld [vmem:[%s3 + $0xc4] sm:$0xf]
    %v433 = vld [vmem:[%s3 + $0xc8] sm:$0xf]
    %v434 = vld [vmem:[%s3 + $0xcc] sm:$0xf]
    %v435 = vld [vmem:[%s3 + $0xd0] sm:$0xf]
    %v436 = vld [vmem:[%s3 + $0xd4] sm:$0xf]
    %v437 = vld [vmem:[%s3 + $0xd8] sm:$0xf]
    %v438 = vld [vmem:[%s3 + $0xdc] sm:$0xf]
    %v439 = vld [vmem:[%s3 + $0xe0] sm:$0xf]
    %v440 = vld [vmem:[%s3 + $0xe4] sm:$0xf]
    %v441 = vld [vmem:[%s3 + $0xe8] sm:$0xf]
    %v442 = vld [vmem:[%s3 + $0xec] sm:$0xf]
    %v443 = vld [vmem:[%s3 + $0xf0] sm:$0xf]
    %v444 = vld [vmem:[%s3 + $0xf4] sm:$0xf]
    %v445 = vld [vmem:[%s3 + $0xf8] sm:$0xf]
    %v446 = vld [vmem:[%s3 + $0xfc] sm:$0xf]
    %v447 = vld [vmem:[%s3 + $0x100] sm:$0xf]
    %v448 = vld [vmem:[%s3 + $0x104] sm:$0xf]
    %v449 = vld [vmem:[%s3 + $0x108] sm:$0xf]
    %v450 = vld [vmem:[%s3 + $0x10c] sm:$0xf]
    %v451 = vld [vmem:[%s3 + $0x110] sm:$0xf]
    %v452 = vld [vmem:[%s3 + $0x114] sm:$0xf]
    %v453 = vld [vmem:[%s3 + $0x118] sm:$0xf]
    %v454 = vld [vmem:[%s3 + $0x11c] sm:$0xf]
    %v455 = vld [vmem:[%s3 + $0x120] sm:$0xf]
    %v456 = vld [vmem:[%s3 + $0x124] sm:$0xf]
    %v457 = vld [vmem:[%s3 + $0x128] sm:$0xf]
    %v458 = vld [vmem:[%s3 + $0x12c] sm:$0xf]
    %v459 = vld [vmem:[%s3 + $0x130] sm:$0xf]
    %v460 = vld [vmem:[%s3 + $0x134] sm:$0xf]
    %v461 = vld [vmem:[%s3 + $0x138] sm:$0xf]
    %v462 = vld [vmem:[%s3 + $0x13c] sm:$0xf]
    %v463 = vld [vmem:[%s3 + $0x140] sm:$0xf]
    %v464 = vld [vmem:[%s3 + $0x144] sm:$0xf]
    %v465 = vld [vmem:[%s3 + $0x148] sm:$0xf]
    %v466 = vld [vmem:[%s3 + $0x14c] sm:$0xf]
    %v467 = vld [vmem:[%s3 + $0x150] sm:$0xf]
    %v468 = vld [vmem:[%s3 + $0x154] sm:$0xf]
    %v469 = vld [vmem:[%s3 + $0x158] sm:$0xf]
    %v470 = vld [vmem:[%s3 + $0x15c] sm:$0xf]
    %v471 = vld [vmem:[%s3 + $0x160] sm:$0xf]
    %v472 = vld [vmem:[%s3 + $0x164] sm:$0xf]
    %v473 = vld [vmem:[%s3 + $0x168] sm:$0xf]
    %v474 = vld [vmem:[%s3 + $0x16c] sm:$0xf]
    %v475 = vld [vmem:[%s3 + $0x170] sm:$0xf]
    %v476 = vld [vmem:[%s3 + $0x174] sm:$0xf]
    %v477 = vld [vmem:[%s3 + $0x178] sm:$0xf]
    %v478 = vld [vmem:[%s3 + $0x17c] sm:$0xf]
    %v479 = vld [vmem:[%s3 + $0x180] sm:$0xf]
    %v480 = vld [vmem:[%s3 + $0x184] sm:$0xf]
    %v481 = vld [vmem:[%s3 + $0x188] sm:$0xf]
    %v482 = vld [vmem:[%s3 + $0x18c] sm:$0xf]
    %v483 = vld [vmem:[%s3 + $0x190] sm:$0xf]
    %v484 = vld [vmem:[%s3 + $0x194] sm:$0xf]
    %v485 = vld [vmem:[%s3 + $0x198] sm:$0xf]
    %v486 = vld [vmem:[%s3 + $0x19c] sm:$0xf]
    %v487 = vld [vmem:[%s3 + $0x1a0] sm:$0xf]
    %v488 = vld [vmem:[%s3 + $0x1a4] sm:$0xf]
    %v489 = vld [vmem:[%s3 + $0x1a8] sm:$0xf]
    %v490 = vld [vmem:[%s3 + $0x1ac] sm:$0xf]
    %v491 = vld [vmem:[%s3 + $0x1b0] sm:$0xf]
    %v492 = vld [vmem:[%s3 + $0x1b4] sm:$0xf]
    %v493 = vld [vmem:[%s3 + $0x1b8] sm:$0xf]
    %v494 = vld [vmem:[%s3 + $0x1bc] sm:$0xf]
    %v495 = vld [vmem:[%s3 + $0x1c0] sm:$0xf]
    %v496 = vld [vmem:[%s3 + $0x1c4] sm:$0xf]
    %v497 = vld [vmem:[%s3 + $0x1c8] sm:$0xf]
    %v498 = vld [vmem:[%s3 + $0x1cc] sm:$0xf]
    %v499 = vld [vmem:[%s3 + $0x1d0] sm:$0xf]
    %v500 = vld [vmem:[%s3 + $0x1d4] sm:$0xf]
    %v501 = vld [vmem:[%s3 + $0x1d8] sm:$0xf]
    %v502 = vld [vmem:[%s3 + $0x1dc] sm:$0xf]
    %v503 = vld [vmem:[%s3 + $0x1e0] sm:$0xf]
    %v504 = vld [vmem:[%s3 + $0x1e4] sm:$0xf]
    %v505 = vld [vmem:[%s3 + $0x1e8] sm:$0xf]
    %v506 = vld [vmem:[%s3 + $0x1ec] sm:$0xf]
    %v507 = vld [vmem:[%s3 + $0x1f0] sm:$0xf]
    %v508 = vld [vmem:[%s3 + $0x1f4] sm:$0xf]
    %v509 = vld [vmem:[%s3 + $0x1f8] sm:$0xf]
    %v510 = vld [vmem:[%s3 + $0x1fc] sm:$0xf]
    %v511 = vld [vmem:[%s3 + $0x200] sm:$0xf]
    %v512 = vld [vmem:[%s3 + $0x204] sm:$0xf]
    %v513 = vld [vmem:[%s3 + $0x208] sm:$0xf]
    %v514 = vld [vmem:[%s3 + $0x20c] sm:$0xf]
    %v515 = vld [vmem:[%s3 + $0x210] sm:$0xf]
    %v516 = vld [vmem:[%s3 + $0x214] sm:$0xf]
    %v517 = vld [vmem:[%s3 + $0x218] sm:$0xf]
    %v518 = vld [vmem:[%s3 + $0x21c] sm:$0xf]
    %v519 = vld [vmem:[%s3 + $0x220] sm:$0xf]
    %v520 = vld [vmem:[%s3 + $0x224] sm:$0xf]
    %v521 = vld [vmem:[%s3 + $0x228] sm:$0xf]
    %v522 = vld [vmem:[%s3 + $0x22c] sm:$0xf]
    %v523 = vld [vmem:[%s3 + $0x230] sm:$0xf]
    %v524 = vld [vmem:[%s3 + $0x234] sm:$0xf]
    %v525 = vld [vmem:[%s3 + $0x238] sm:$0xf]
    %v526 = vld [vmem:[%s3 + $0x23c] sm:$0xf]
    %v527 = vld [vmem:[%s3 + $0x240] sm:$0xf]
    %v528 = vld [vmem:[%s3 + $0x244] sm:$0xf]
    %v529 = vld [vmem:[%s3 + $0x248] sm:$0xf]
    %v530 = vld [vmem:[%s3 + $0x24c] sm:$0xf]
    %v531 = vld [vmem:[%s3 + $0x250] sm:$0xf]
    %v532 = vld [vmem:[%s3 + $0x254] sm:$0xf]
    %v533 = vld [vmem:[%s3 + $0x258] sm:$0xf]
    %v534 = vld [vmem:[%s3 + $0x25c] sm:$0xf]
    %v535 = vld [vmem:[%s3 + $0x260] sm:$0xf]
    %v536 = vld [vmem:[%s3 + $0x264] sm:$0xf]
    %v537 = vld [vmem:[%s3 + $0x268] sm:$0xf]
    %v538 = vld [vmem:[%s3 + $0x26c] sm:$0xf]
    %v539 = vld [vmem:[%s3 + $0x270] sm:$0xf]
    %v540 = vld [vmem:[%s3 + $0x274] sm:$0xf]
    %v541 = vld [vmem:[%s3 + $0x278] sm:$0xf]
    %v542 = vld [vmem:[%s3 + $0x27c] sm:$0xf]
    %v543 = vld [vmem:[%s3 + $0x280] sm:$0xf]
    %v544 = vld [vmem:[%s3 + $0x284] sm:$0xf]
    %v545 = vld [vmem:[%s3 + $0x288] sm:$0xf]
    %v546 = vld [vmem:[%s3 + $0x28c] sm:$0xf]
    %v547 = vld [vmem:[%s3 + $0x290] sm:$0xf]
    %v548 = vld [vmem:[%s3 + $0x294] sm:$0xf]
    %v549 = vld [vmem:[%s3 + $0x298] sm:$0xf]
    %v550 = vld [vmem:[%s3 + $0x29c] sm:$0xf]
    %v551 = vld [vmem:[%s3 + $0x2a0] sm:$0xf]
    %v552 = vld [vmem:[%s3 + $0x2a4] sm:$0xf]
    %v553 = vld [vmem:[%s3 + $0x2a8] sm:$0xf]
    %v554 = vld [vmem:[%s3 + $0x2ac] sm:$0xf]
    %v555 = vld [vmem:[%s3 + $0x2b0] sm:$0xf]
    %v556 = vld [vmem:[%s3 + $0x2b4] sm:$0xf]
    %v557 = vld [vmem:[%s3 + $0x2b8] sm:$0xf]
    %v558 = vld [vmem:[%s3 + $0x2bc] sm:$0xf]
    %v559 = vld [vmem:[%s3 + $0x2c0] sm:$0xf]
    %v560 = vld [vmem:[%s3 + $0x2c4] sm:$0xf]
    %v561 = vld [vmem:[%s3 + $0x2c8] sm:$0xf]
    %v562 = vld [vmem:[%s3 + $0x2cc] sm:$0xf]
    %v563 = vld [vmem:[%s3 + $0x2d0] sm:$0xf]
    %v564 = vld [vmem:[%s3 + $0x2d4] sm:$0xf]
    %v565 = vld [vmem:[%s3 + $0x2d8] sm:$0xf]
    %v566 = vld [vmem:[%s3 + $0x2dc] sm:$0xf]
    %v567 = vld [vmem:[%s3 + $0x2e0] sm:$0xf]
    %v568 = vld [vmem:[%s3 + $0x2e4] sm:$0xf]
    %v569 = vld [vmem:[%s3 + $0x2e8] sm:$0xf]
    %v570 = vld [vmem:[%s3 + $0x2ec] sm:$0xf]
    %v571 = vld [vmem:[%s3 + $0x2f0] sm:$0xf]
    %v572 = vld [vmem:[%s3 + $0x2f4] sm:$0xf]
    %v573 = vld [vmem:[%s3 + $0x2f8] sm:$0xf]
    %v574 = vld [vmem:[%s3 + $0x2fc] sm:$0xf]
    %v575 = vld [vmem:[%s3 + $0x300] sm:$0xf]
    %v576 = vld [vmem:[%s3 + $0x304] sm:$0xf]
    %v577 = vld [vmem:[%s3 + $0x308] sm:$0xf]
    %v578 = vld [vmem:[%s3 + $0x30c] sm:$0xf]
    %v579 = vld [vmem:[%s3 + $0x310] sm:$0xf]
    %v580 = vld [vmem:[%s3 + $0x314] sm:$0xf]
    %v581 = vld [vmem:[%s3 + $0x318] sm:$0xf]
    %v582 = vld [vmem:[%s3 + $0x31c] sm:$0xf]
    %v583 = vld [vmem:[%s3 + $0x320] sm:$0xf]
    %v584 = vld [vmem:[%s3 + $0x324] sm:$0xf]
    %v585 = vld [vmem:[%s3 + $0x328] sm:$0xf]
    %v586 = vld [vmem:[%s3 + $0x32c] sm:$0xf]
    %v587 = vld [vmem:[%s3 + $0x330] sm:$0xf]
    %v588 = vld [vmem:[%s3 + $0x334] sm:$0xf]
    %v589 = vld [vmem:[%s3 + $0x338] sm:$0xf]
    %v590 = vld [vmem:[%s3 + $0x33c] sm:$0xf]
    %v591 = vld [vmem:[%s3 + $0x340] sm:$0xf]
    %v592 = vld [vmem:[%s3 + $0x344] sm:$0xf]
    %v593 = vld [vmem:[%s3 + $0x348] sm:$0xf]
    %v594 = vld [vmem:[%s3 + $0x34c] sm:$0xf]
    %v595 = vld [vmem:[%s3 + $0x350] sm:$0xf]
    %v596 = vld [vmem:[%s3 + $0x354] sm:$0xf]
    %v597 = vld [vmem:[%s3 + $0x358] sm:$0xf]
    %v598 = vld [vmem:[%s3 + $0x35c] sm:$0xf]
    %v599 = vld [vmem:[%s3 + $0x360] sm:$0xf]
    %v600 = vld [vmem:[%s3 + $0x364] sm:$0xf]
    %v601 = vld [vmem:[%s3 + $0x368] sm:$0xf]
    %v602 = vld [vmem:[%s3 + $0x36c] sm:$0xf]
    %v603 = vld [vmem:[%s3 + $0x370] sm:$0xf]
    %v604 = vld [vmem:[%s3 + $0x374] sm:$0xf]
    %v605 = vld [vmem:[%s3 + $0x378] sm:$0xf]
    %v606 = vld [vmem:[%s3 + $0x37c] sm:$0xf]
    %v607 = vld [vmem:[%s3 + $0x380] sm:$0xf]
    %v608 = vld [vmem:[%s3 + $0x384] sm:$0xf]
    %v609 = vld [vmem:[%s3 + $0x388] sm:$0xf]
    %v610 = vld [vmem:[%s3 + $0x38c] sm:$0xf]
    %v611 = vld [vmem:[%s3 + $0x390] sm:$0xf]
    %v612 = vld [vmem:[%s3 + $0x394] sm:$0xf]
    %v613 = vld [vmem:[%s3 + $0x398] sm:$0xf]
    %v614 = vld [vmem:[%s3 + $0x39c] sm:$0xf]
    %v615 = vld [vmem:[%s3 + $0x3a0] sm:$0xf]
    %v616 = vld [vmem:[%s3 + $0x3a4] sm:$0xf]
    %v617 = vld [vmem:[%s3 + $0x3a8] sm:$0xf]
    %v618 = vld [vmem:[%s3 + $0x3ac] sm:$0xf]
    %v619 = vld [vmem:[%s3 + $0x3b0] sm:$0xf]
    %v620 = vld [vmem:[%s3 + $0x3b4] sm:$0xf]
    %v621 = vld [vmem:[%s3 + $0x3b8] sm:$0xf]
    %v622 = vld [vmem:[%s3 + $0x3bc] sm:$0xf]
    %v623 = vld [vmem:[%s3 + $0x3c0] sm:$0xf]
    %v624 = vld [vmem:[%s3 + $0x3c4] sm:$0xf]
    %v625 = vld [vmem:[%s3 + $0x3c8] sm:$0xf]
    %v626 = vld [vmem:[%s3 + $0x3cc] sm:$0xf]
    %v627 = vld [vmem:[%s3 + $0x3d0] sm:$0xf]
    %v628 = vld [vmem:[%s3 + $0x3d4] sm:$0xf]
    %v629 = vld [vmem:[%s3 + $0x3d8] sm:$0xf]
    %v630 = vld [vmem:[%s3 + $0x3dc] sm:$0xf]
    %v631 = vld [vmem:[%s3 + $0x3e0] sm:$0xf]
    %v632 = vld [vmem:[%s3 + $0x3e4] sm:$0xf]
    %v633 = vld [vmem:[%s3 + $0x3e8] sm:$0xf]
    %v634 = vld [vmem:[%s3 + $0x3ec] sm:$0xf]
    %v635 = vld [vmem:[%s3 + $0x3f0] sm:$0xf]
    %v636 = vld [vmem:[%s3 + $0x3f4] sm:$0xf]
    %v637 = vld [vmem:[%s3 + $0x3f8] sm:$0xf]
    %v638 = vld [vmem:[%s3 + $0x3fc] sm:$0xf]
    %v895 = vunpack.c.l.b16 %v383
    %v896 = vunpack.c.l.b16 %v384
    %v897 = vunpack.c.l.b16 %v385
    %v898 = vunpack.c.l.b16 %v386
    %v899 = vunpack.c.l.b16 %v387
    %v900 = vunpack.c.l.b16 %v388
    %v901 = vunpack.c.l.b16 %v389
    %v902 = vunpack.c.l.b16 %v390
    %v903 = vunpack.c.l.b16 %v391
    %v904 = vunpack.c.l.b16 %v392
    %v905 = vunpack.c.l.b16 %v393
    %v906 = vunpack.c.l.b16 %v394
    %v907 = vunpack.c.l.b16 %v395
    %v908 = vunpack.c.l.b16 %v396
    %v909 = vunpack.c.l.b16 %v397
    %v910 = vunpack.c.l.b16 %v398
    %v911 = vunpack.c.l.b16 %v399
    %v912 = vunpack.c.l.b16 %v400
    %v913 = vunpack.c.l.b16 %v401
    %v914 = vunpack.c.l.b16 %v402
    %v915 = vunpack.c.l.b16 %v403
    %v916 = vunpack.c.l.b16 %v404
    %v917 = vunpack.c.l.b16 %v405
    %v918 = vunpack.c.l.b16 %v406
    %v919 = vunpack.c.l.b16 %v407
    %v920 = vunpack.c.l.b16 %v408
    %v921 = vunpack.c.l.b16 %v409
    %v922 = vunpack.c.l.b16 %v410
    %v923 = vunpack.c.l.b16 %v411
    %v924 = vunpack.c.l.b16 %v412
    %v925 = vunpack.c.l.b16 %v413
    %v926 = vunpack.c.l.b16 %v414
    %v927 = vunpack.c.l.b16 %v415
    %v928 = vunpack.c.l.b16 %v416
    %v929 = vunpack.c.l.b16 %v417
    %v930 = vunpack.c.l.b16 %v418
    %v931 = vunpack.c.l.b16 %v419
    %v932 = vunpack.c.l.b16 %v420
    %v933 = vunpack.c.l.b16 %v421
    %v934 = vunpack.c.l.b16 %v422
    %v935 = vunpack.c.l.b16 %v423
    %v936 = vunpack.c.l.b16 %v424
    %v937 = vunpack.c.l.b16 %v425
    %v938 = vunpack.c.l.b16 %v426
    %v939 = vunpack.c.l.b16 %v427
    %v940 = vunpack.c.l.b16 %v428
    %v941 = vunpack.c.l.b16 %v429
    %v942 = vunpack.c.l.b16 %v430
    %v943 = vunpack.c.l.b16 %v431
    %v944 = vunpack.c.l.b16 %v432
    %v945 = vunpack.c.l.b16 %v433
    %v946 = vunpack.c.l.b16 %v434
    %v947 = vunpack.c.l.b16 %v435
    %v948 = vunpack.c.l.b16 %v436
    %v949 = vunpack.c.l.b16 %v437
    %v950 = vunpack.c.l.b16 %v438
    %v951 = vunpack.c.l.b16 %v439
    %v952 = vunpack.c.l.b16 %v440
    %v953 = vunpack.c.l.b16 %v441
    %v954 = vunpack.c.l.b16 %v442
    %v955 = vunpack.c.l.b16 %v443
    %v956 = vunpack.c.l.b16 %v444
    %v957 = vunpack.c.l.b16 %v445
    %v958 = vunpack.c.l.b16 %v446
    %v959 = vunpack.c.l.b16 %v447
    %v960 = vunpack.c.l.b16 %v448
    %v961 = vunpack.c.l.b16 %v449
    %v962 = vunpack.c.l.b16 %v450
    %v963 = vunpack.c.l.b16 %v451
    %v964 = vunpack.c.l.b16 %v452
    %v965 = vunpack.c.l.b16 %v453
    %v966 = vunpack.c.l.b16 %v454
    %v967 = vunpack.c.l.b16 %v455
    %v968 = vunpack.c.l.b16 %v456
    %v969 = vunpack.c.l.b16 %v457
    %v970 = vunpack.c.l.b16 %v458
    %v971 = vunpack.c.l.b16 %v459
    %v972 = vunpack.c.l.b16 %v460
    %v973 = vunpack.c.l.b16 %v461
    %v974 = vunpack.c.l.b16 %v462
    %v975 = vunpack.c.l.b16 %v463
    %v976 = vunpack.c.l.b16 %v464
    %v977 = vunpack.c.l.b16 %v465
    %v978 = vunpack.c.l.b16 %v466
    %v979 = vunpack.c.l.b16 %v467
    %v980 = vunpack.c.l.b16 %v468
    %v981 = vunpack.c.l.b16 %v469
    %v982 = vunpack.c.l.b16 %v470
    %v983 = vunpack.c.l.b16 %v471
    %v984 = vunpack.c.l.b16 %v472
    %v985 = vunpack.c.l.b16 %v473
    %v986 = vunpack.c.l.b16 %v474
    %v987 = vunpack.c.l.b16 %v475
    %v988 = vunpack.c.l.b16 %v476
    %v989 = vunpack.c.l.b16 %v477
    %v990 = vunpack.c.l.b16 %v478
    %v991 = vunpack.c.l.b16 %v479
    %v992 = vunpack.c.l.b16 %v480
    %v993 = vunpack.c.l.b16 %v481
    %v994 = vunpack.c.l.b16 %v482
    %v995 = vunpack.c.l.b16 %v483
    %v996 = vunpack.c.l.b16 %v484
    %v997 = vunpack.c.l.b16 %v485
    %v998 = vunpack.c.l.b16 %v486
    %v999 = vunpack.c.l.b16 %v487
    %v1000 = vunpack.c.l.b16 %v488
    %v1001 = vunpack.c.l.b16 %v489
    %v1002 = vunpack.c.l.b16 %v490
    %v1003 = vunpack.c.l.b16 %v491
    %v1004 = vunpack.c.l.b16 %v492
    %v1005 = vunpack.c.l.b16 %v493
    %v1006 = vunpack.c.l.b16 %v494
    %v1007 = vunpack.c.l.b16 %v495
    %v1008 = vunpack.c.l.b16 %v496
    %v1009 = vunpack.c.l.b16 %v497
    %v1010 = vunpack.c.l.b16 %v498
    %v1011 = vunpack.c.l.b16 %v499
    %v1012 = vunpack.c.l.b16 %v500
    %v1013 = vunpack.c.l.b16 %v501
    %v1014 = vunpack.c.l.b16 %v502
    %v1015 = vunpack.c.l.b16 %v503
    %v1016 = vunpack.c.l.b16 %v504
    %v1017 = vunpack.c.l.b16 %v505
    %v1018 = vunpack.c.l.b16 %v506
    %v1019 = vunpack.c.l.b16 %v507
    %v1020 = vunpack.c.l.b16 %v508
    %v1021 = vunpack.c.l.b16 %v509
    %v1022 = vunpack.c.l.b16 %v510
    %v1023 = vunpack.c.l.b16 %v511
    %v1024 = vunpack.c.l.b16 %v512
    %v1025 = vunpack.c.l.b16 %v513
    %v1026 = vunpack.c.l.b16 %v514
    %v1027 = vunpack.c.l.b16 %v515
    %v1028 = vunpack.c.l.b16 %v516
    %v1029 = vunpack.c.l.b16 %v517
    %v1030 = vunpack.c.l.b16 %v518
    %v1031 = vunpack.c.l.b16 %v519
    %v1032 = vunpack.c.l.b16 %v520
    %v1033 = vunpack.c.l.b16 %v521
    %v1034 = vunpack.c.l.b16 %v522
    %v1035 = vunpack.c.l.b16 %v523
    %v1036 = vunpack.c.l.b16 %v524
    %v1037 = vunpack.c.l.b16 %v525
    %v1038 = vunpack.c.l.b16 %v526
    %v1039 = vunpack.c.l.b16 %v527
    %v1040 = vunpack.c.l.b16 %v528
    %v1041 = vunpack.c.l.b16 %v529
    %v1042 = vunpack.c.l.b16 %v530
    %v1043 = vunpack.c.l.b16 %v531
    %v1044 = vunpack.c.l.b16 %v532
    %v1045 = vunpack.c.l.b16 %v533
    %v1046 = vunpack.c.l.b16 %v534
    %v1047 = vunpack.c.l.b16 %v535
    %v1048 = vunpack.c.l.b16 %v536
    %v1049 = vunpack.c.l.b16 %v537
    %v1050 = vunpack.c.l.b16 %v538
    %v1051 = vunpack.c.l.b16 %v539
    %v1052 = vunpack.c.l.b16 %v540
    %v1053 = vunpack.c.l.b16 %v541
    %v1054 = vunpack.c.l.b16 %v542
    %v1055 = vunpack.c.l.b16 %v543
    %v1056 = vunpack.c.l.b16 %v544
    %v1057 = vunpack.c.l.b16 %v545
    %v1058 = vunpack.c.l.b16 %v546
    %v1059 = vunpack.c.l.b16 %v547
    %v1060 = vunpack.c.l.b16 %v548
    %v1061 = vunpack.c.l.b16 %v549
    %v1062 = vunpack.c.l.b16 %v550
    %v1063 = vunpack.c.l.b16 %v551
    %v1064 = vunpack.c.l.b16 %v552
    %v1065 = vunpack.c.l.b16 %v553
    %v1066 = vunpack.c.l.b16 %v554
    %v1067 = vunpack.c.l.b16 %v555
    %v1068 = vunpack.c.l.b16 %v556
    %v1069 = vunpack.c.l.b16 %v557
    %v1070 = vunpack.c.l.b16 %v558
    %v1071 = vunpack.c.l.b16 %v559
    %v1072 = vunpack.c.l.b16 %v560
    %v1073 = vunpack.c.l.b16 %v561
    %v1074 = vunpack.c.l.b16 %v562
    %v1075 = vunpack.c.l.b16 %v563
    %v1076 = vunpack.c.l.b16 %v564
    %v1077 = vunpack.c.l.b16 %v565
    %v1078 = vunpack.c.l.b16 %v566
    %v1079 = vunpack.c.l.b16 %v567
    %v1080 = vunpack.c.l.b16 %v568
    %v1081 = vunpack.c.l.b16 %v569
    %v1082 = vunpack.c.l.b16 %v570
    %v1083 = vunpack.c.l.b16 %v571
    %v1084 = vunpack.c.l.b16 %v572
    %v1085 = vunpack.c.l.b16 %v573
    %v1086 = vunpack.c.l.b16 %v574
    %v1087 = vunpack.c.l.b16 %v575
    %v1088 = vunpack.c.l.b16 %v576
    %v1089 = vunpack.c.l.b16 %v577
    %v1090 = vunpack.c.l.b16 %v578
    %v1091 = vunpack.c.l.b16 %v579
    %v1092 = vunpack.c.l.b16 %v580
    %v1093 = vunpack.c.l.b16 %v581
    %v1094 = vunpack.c.l.b16 %v582
    %v1095 = vunpack.c.l.b16 %v583
    %v1096 = vunpack.c.l.b16 %v584
    %v1097 = vunpack.c.l.b16 %v585
    %v1098 = vunpack.c.l.b16 %v586
    %v1099 = vunpack.c.l.b16 %v587
    %v1100 = vunpack.c.l.b16 %v588
    %v1101 = vunpack.c.l.b16 %v589
    %v1102 = vunpack.c.l.b16 %v590
    %v1103 = vunpack.c.l.b16 %v591
    %v1104 = vunpack.c.l.b16 %v592
    %v1105 = vunpack.c.l.b16 %v593
    %v1106 = vunpack.c.l.b16 %v594
    %v1107 = vunpack.c.l.b16 %v595
    %v1108 = vunpack.c.l.b16 %v596
    %v1109 = vunpack.c.l.b16 %v597
    %v1110 = vunpack.c.l.b16 %v598
    %v1111 = vunpack.c.l.b16 %v599
    %v1112 = vunpack.c.l.b16 %v600
    %v1113 = vunpack.c.l.b16 %v601
    %v1114 = vunpack.c.l.b16 %v602
    %v1115 = vunpack.c.l.b16 %v603
    %v1116 = vunpack.c.l.b16 %v604
    %v1117 = vunpack.c.l.b16 %v605
    %v1118 = vunpack.c.l.b16 %v606
    %v1119 = vunpack.c.l.b16 %v607
    %v1120 = vunpack.c.l.b16 %v608
    %v1121 = vunpack.c.l.b16 %v609
    %v1122 = vunpack.c.l.b16 %v610
    %v1123 = vunpack.c.l.b16 %v611
    %v1124 = vunpack.c.l.b16 %v612
    %v1125 = vunpack.c.l.b16 %v613
    %v1126 = vunpack.c.l.b16 %v614
    %v1127 = vunpack.c.l.b16 %v615
    %v1128 = vunpack.c.l.b16 %v616
    %v1129 = vunpack.c.l.b16 %v617
    %v1130 = vunpack.c.l.b16 %v618
    %v1131 = vunpack.c.l.b16 %v619
    %v1132 = vunpack.c.l.b16 %v620
    %v1133 = vunpack.c.l.b16 %v621
    %v1134 = vunpack.c.l.b16 %v622
    %v1135 = vunpack.c.l.b16 %v623
    %v1136 = vunpack.c.l.b16 %v624
    %v1137 = vunpack.c.l.b16 %v625
    %v1138 = vunpack.c.l.b16 %v626
    %v1139 = vunpack.c.l.b16 %v627
    %v1140 = vunpack.c.l.b16 %v628
    %v1141 = vunpack.c.l.b16 %v629
    %v1142 = vunpack.c.l.b16 %v630
    %v1143 = vunpack.c.l.b16 %v631
    %v1144 = vunpack.c.l.b16 %v632
    %v1145 = vunpack.c.l.b16 %v633
    %v1146 = vunpack.c.l.b16 %v634
    %v1147 = vunpack.c.l.b16 %v635
    %v1148 = vunpack.c.l.b16 %v636
    %v1149 = vunpack.c.l.b16 %v637
    %v1150 = vunpack.c.l.b16 %v638
    %v1151 = vpack.c.b16 %v896, %v895
    %v1152 = vpack.c.b16 %v898, %v897
    %v1153 = vpack.c.b16 %v900, %v899
    %v1154 = vpack.c.b16 %v902, %v901
    %v1155 = vpack.c.b16 %v904, %v903
    %v1156 = vpack.c.b16 %v906, %v905
    %v1157 = vpack.c.b16 %v908, %v907
    %v1158 = vpack.c.b16 %v910, %v909
    %v1159 = vpack.c.b16 %v912, %v911
    %v1160 = vpack.c.b16 %v914, %v913
    %v1161 = vpack.c.b16 %v916, %v915
    %v1162 = vpack.c.b16 %v918, %v917
    %v1163 = vpack.c.b16 %v920, %v919
    %v1164 = vpack.c.b16 %v922, %v921
    %v1165 = vpack.c.b16 %v924, %v923
    %v1166 = vpack.c.b16 %v926, %v925
    %v1167 = vpack.c.b16 %v928, %v927
    %v1168 = vpack.c.b16 %v930, %v929
    %v1169 = vpack.c.b16 %v932, %v931
    %v1170 = vpack.c.b16 %v934, %v933
    %v1171 = vpack.c.b16 %v936, %v935
    %v1172 = vpack.c.b16 %v938, %v937
    %v1173 = vpack.c.b16 %v940, %v939
    %v1174 = vpack.c.b16 %v942, %v941
    %v1175 = vpack.c.b16 %v944, %v943
    %v1176 = vpack.c.b16 %v946, %v945
    %v1177 = vpack.c.b16 %v948, %v947
    %v1178 = vpack.c.b16 %v950, %v949
    %v1179 = vpack.c.b16 %v952, %v951
    %v1180 = vpack.c.b16 %v954, %v953
    %v1181 = vpack.c.b16 %v956, %v955
    %v1182 = vpack.c.b16 %v958, %v957
    %v1183 = vpack.c.b16 %v960, %v959
    %v1184 = vpack.c.b16 %v962, %v961
    %v1185 = vpack.c.b16 %v964, %v963
    %v1186 = vpack.c.b16 %v966, %v965
    %v1187 = vpack.c.b16 %v968, %v967
    %v1188 = vpack.c.b16 %v970, %v969
    %v1189 = vpack.c.b16 %v972, %v971
    %v1190 = vpack.c.b16 %v974, %v973
    %v1191 = vpack.c.b16 %v976, %v975
    %v1192 = vpack.c.b16 %v978, %v977
    %v1193 = vpack.c.b16 %v980, %v979
    %v1194 = vpack.c.b16 %v982, %v981
    %v1195 = vpack.c.b16 %v984, %v983
    %v1196 = vpack.c.b16 %v986, %v985
    %v1197 = vpack.c.b16 %v988, %v987
    %v1198 = vpack.c.b16 %v990, %v989
    %v1199 = vpack.c.b16 %v992, %v991
    %v1200 = vpack.c.b16 %v994, %v993
    %v1201 = vpack.c.b16 %v996, %v995
    %v1202 = vpack.c.b16 %v998, %v997
    %v1203 = vpack.c.b16 %v1000, %v999
    %v1204 = vpack.c.b16 %v1002, %v1001
    %v1205 = vpack.c.b16 %v1004, %v1003
    %v1206 = vpack.c.b16 %v1006, %v1005
    %v1207 = vpack.c.b16 %v1008, %v1007
    %v1208 = vpack.c.b16 %v1010, %v1009
    %v1209 = vpack.c.b16 %v1012, %v1011
    %v1210 = vpack.c.b16 %v1014, %v1013
    %v1211 = vpack.c.b16 %v1016, %v1015
    %v1212 = vpack.c.b16 %v1018, %v1017
    %v1213 = vpack.c.b16 %v1020, %v1019
    %v1214 = vpack.c.b16 %v1022, %v1021
    %v1215 = vpack.c.b16 %v1024, %v1023
    %v1216 = vpack.c.b16 %v1026, %v1025
    %v1217 = vpack.c.b16 %v1028, %v1027
    %v1218 = vpack.c.b16 %v1030, %v1029
    %v1219 = vpack.c.b16 %v1032, %v1031
    %v1220 = vpack.c.b16 %v1034, %v1033
    %v1221 = vpack.c.b16 %v1036, %v1035
    %v1222 = vpack.c.b16 %v1038, %v1037
    %v1223 = vpack.c.b16 %v1040, %v1039
    %v1224 = vpack.c.b16 %v1042, %v1041
    %v1225 = vpack.c.b16 %v1044, %v1043
    %v1226 = vpack.c.b16 %v1046, %v1045
    %v1227 = vpack.c.b16 %v1048, %v1047
    %v1228 = vpack.c.b16 %v1050, %v1049
    %v1229 = vpack.c.b16 %v1052, %v1051
    %v1230 = vpack.c.b16 %v1054, %v1053
    %v1231 = vpack.c.b16 %v1056, %v1055
    %v1232 = vpack.c.b16 %v1058, %v1057
    %v1233 = vpack.c.b16 %v1060, %v1059
    %v1234 = vpack.c.b16 %v1062, %v1061
    %v1235 = vpack.c.b16 %v1064, %v1063
    %v1236 = vpack.c.b16 %v1066, %v1065
    %v1237 = vpack.c.b16 %v1068, %v1067
    %v1238 = vpack.c.b16 %v1070, %v1069
    %v1239 = vpack.c.b16 %v1072, %v1071
    %v1240 = vpack.c.b16 %v1074, %v1073
    %v1241 = vpack.c.b16 %v1076, %v1075
    %v1242 = vpack.c.b16 %v1078, %v1077
    %v1243 = vpack.c.b16 %v1080, %v1079
    %v1244 = vpack.c.b16 %v1082, %v1081
    %v1245 = vpack.c.b16 %v1084, %v1083
    %v1246 = vpack.c.b16 %v1086, %v1085
    %v1247 = vpack.c.b16 %v1088, %v1087
    %v1248 = vpack.c.b16 %v1090, %v1089
    %v1249 = vpack.c.b16 %v1092, %v1091
    %v1250 = vpack.c.b16 %v1094, %v1093
    %v1251 = vpack.c.b16 %v1096, %v1095
    %v1252 = vpack.c.b16 %v1098, %v1097
    %v1253 = vpack.c.b16 %v1100, %v1099
    %v1254 = vpack.c.b16 %v1102, %v1101
    %v1255 = vpack.c.b16 %v1104, %v1103
    %v1256 = vpack.c.b16 %v1106, %v1105
    %v1257 = vpack.c.b16 %v1108, %v1107
    %v1258 = vpack.c.b16 %v1110, %v1109
    %v1259 = vpack.c.b16 %v1112, %v1111
    %v1260 = vpack.c.b16 %v1114, %v1113
    %v1261 = vpack.c.b16 %v1116, %v1115
    %v1262 = vpack.c.b16 %v1118, %v1117
    %v1263 = vpack.c.b16 %v1120, %v1119
    %v1264 = vpack.c.b16 %v1122, %v1121
    %v1265 = vpack.c.b16 %v1124, %v1123
    %v1266 = vpack.c.b16 %v1126, %v1125
    %v1267 = vpack.c.b16 %v1128, %v1127
    %v1268 = vpack.c.b16 %v1130, %v1129
    %v1269 = vpack.c.b16 %v1132, %v1131
    %v1270 = vpack.c.b16 %v1134, %v1133
    %v1271 = vpack.c.b16 %v1136, %v1135
    %v1272 = vpack.c.b16 %v1138, %v1137
    %v1273 = vpack.c.b16 %v1140, %v1139
    %v1274 = vpack.c.b16 %v1142, %v1141
    %v1275 = vpack.c.b16 %v1144, %v1143
    %v1276 = vpack.c.b16 %v1146, %v1145
    %v1277 = vpack.c.b16 %v1148, %v1147
    %v1278 = vpack.c.b16 %v1150, %v1149
    %1407 = vmatprep.subr.bf16.mxu0 0
    %1408 = vmatpush1.bf16.msra.mxu0 %v1151
    %1409 = vmatprep.subr.bf16.mxu0 0
    %1410 = vmatpush1.bf16.msra.mxu0 %v1152
    %1411 = vmatprep.subr.bf16.mxu0 0
    %1412 = vmatpush1.bf16.msra.mxu0 %v1153
    %1413 = vmatprep.subr.bf16.mxu0 0
    %1414 = vmatpush1.bf16.msra.mxu0 %v1154
    %1415 = vmatprep.subr.bf16.mxu0 0
    %1416 = vmatpush1.bf16.msra.mxu0 %v1155
    %1417 = vmatprep.subr.bf16.mxu0 0
    %1418 = vmatpush1.bf16.msra.mxu0 %v1156
    %1419 = vmatprep.subr.bf16.mxu0 0
    %1420 = vmatpush1.bf16.msra.mxu0 %v1157
    %1421 = vmatprep.subr.bf16.mxu0 0
    %1422 = vmatpush1.bf16.msra.mxu0 %v1158
    %1423 = vmatprep.subr.bf16.mxu0 0
    %1424 = vmatpush1.bf16.msra.mxu0 %v1159
    %1425 = vmatprep.subr.bf16.mxu0 0
    %1426 = vmatpush1.bf16.msra.mxu0 %v1160
    %1427 = vmatprep.subr.bf16.mxu0 0
    %1428 = vmatpush1.bf16.msra.mxu0 %v1161
    %1429 = vmatprep.subr.bf16.mxu0 0
    %1430 = vmatpush1.bf16.msra.mxu0 %v1162
    %1431 = vmatprep.subr.bf16.mxu0 0
    %1432 = vmatpush1.bf16.msra.mxu0 %v1163
    %1433 = vmatprep.subr.bf16.mxu0 0
    %1434 = vmatpush1.bf16.msra.mxu0 %v1164
    %1435 = vmatprep.subr.bf16.mxu0 0
    %1436 = vmatpush1.bf16.msra.mxu0 %v1165
    %1437 = vmatprep.subr.bf16.mxu0 0
    %1438 = vmatpush1.bf16.msra.mxu0 %v1166
    %1439 = vmatprep.mubr.bf16.mxu0 %v368
    %1440 = vmatmul.mubr.bf16.gmra.mrb[0].mxu0 %v367
    %v1441 = vpop.f32.mrb[0].mxu0
    %v1442 = vadd.f32 0.0, %v1441
    %v1443 = vpop.f32.mrb[0].mxu0
    %v1444 = vpop.f32.mrb[0].mxu0
    %v1445 = vadd.f32 0.0, %v1444
    %v1446 = vpop.f32.mrb[0].mxu0
    %1447 = vdwg.mxu0
    %1448 = vmatprep.subr.bf16.mxu0 0
    %1449 = vmatpush1.bf16.msra.mxu0 %v1167
    %1450 = vmatprep.subr.bf16.mxu0 0
    %1451 = vmatpush1.bf16.msra.mxu0 %v1168
    %1452 = vmatprep.subr.bf16.mxu0 0
    %1453 = vmatpush1.bf16.msra.mxu0 %v1169
    %1454 = vmatprep.subr.bf16.mxu0 0
    %1455 = vmatpush1.bf16.msra.mxu0 %v1170
    %1456 = vmatprep.subr.bf16.mxu0 0
    %1457 = vmatpush1.bf16.msra.mxu0 %v1171
    %1458 = vmatprep.subr.bf16.mxu0 0
    %1459 = vmatpush1.bf16.msra.mxu0 %v1172
    %1460 = vmatprep.subr.bf16.mxu0 0
    %1461 = vmatpush1.bf16.msra.mxu0 %v1173
    %1462 = vmatprep.subr.bf16.mxu0 0
    %1463 = vmatpush1.bf16.msra.mxu0 %v1174
    %1464 = vmatprep.subr.bf16.mxu0 0
    %1465 = vmatpush1.bf16.msra.mxu0 %v1175
    %1466 = vmatprep.subr.bf16.mxu0 0
    %1467 = vmatpush1.bf16.msra.mxu0 %v1176
    %1468 = vmatprep.subr.bf16.mxu0 0
    %1469 = vmatpush1.bf16.msra.mxu0 %v1177
    %1470 = vmatprep.subr.bf16.mxu0 0
    %1471 = vmatpush1.bf16.msra.mxu0 %v1178
    %1472 = vmatprep.subr.bf16.mxu0 0
    %1473 = vmatpush1.bf16.msra.mxu0 %v1179
    %1474 = vmatprep.subr.bf16.mxu0 0
    %1475 = vmatpush1.bf16.msra.mxu0 %v1180
    %1476 = vmatprep.subr.bf16.mxu0 0
    %1477 = vmatpush1.bf16.msra.mxu0 %v1181
    %1478 = vmatprep.subr.bf16.mxu0 0
    %1479 = vmatpush1.bf16.msra.mxu0 %v1182
    %1480 = vmatprep.mubr.bf16.mxu0 %v370
    %1481 = vmatmul.mubr.bf16.gmra.mrb[0].mxu0 %v369
    %v1482 = vpop.f32.mrb[0].mxu0
    %v1483 = vadd.f32 %v1442, %v1482
    %v1484 = vpop.f32.mrb[0].mxu0
    %v1485 = vpop.f32.mrb[0].mxu0
    %v1486 = vadd.f32 %v1445, %v1485
    %v1487 = vpop.f32.mrb[0].mxu0
    %1488 = vdwg.mxu0
    %1489 = vmatprep.subr.bf16.mxu0 0
    %1490 = vmatpush1.bf16.msra.mxu0 %v1183
    %1491 = vmatprep.subr.bf16.mxu0 0
    %1492 = vmatpush1.bf16.msra.mxu0 %v1184
    %1493 = vmatprep.subr.bf16.mxu0 0
    %1494 = vmatpush1.bf16.msra.mxu0 %v1185
    %1495 = vmatprep.subr.bf16.mxu0 0
    %1496 = vmatpush1.bf16.msra.mxu0 %v1186
    %1497 = vmatprep.subr.bf16.mxu0 0
    %1498 = vmatpush1.bf16.msra.mxu0 %v1187
    %1499 = vmatprep.subr.bf16.mxu0 0
    %1500 = vmatpush1.bf16.msra.mxu0 %v1188
    %1501 = vmatprep.subr.bf16.mxu0 0
    %1502 = vmatpush1.bf16.msra.mxu0 %v1189
    %1503 = vmatprep.subr.bf16.mxu0 0
    %1504 = vmatpush1.bf16.msra.mxu0 %v1190
    %1505 = vmatprep.subr.bf16.mxu0 0
    %1506 = vmatpush1.bf16.msra.mxu0 %v1191
    %1507 = vmatprep.subr.bf16.mxu0 0
    %1508 = vmatpush1.bf16.msra.mxu0 %v1192
    %1509 = vmatprep.subr.bf16.mxu0 0
    %1510 = vmatpush1.bf16.msra.mxu0 %v1193
    %1511 = vmatprep.subr.bf16.mxu0 0
    %1512 = vmatpush1.bf16.msra.mxu0 %v1194
    %1513 = vmatprep.subr.bf16.mxu0 0
    %1514 = vmatpush1.bf16.msra.mxu0 %v1195
    %1515 = vmatprep.subr.bf16.mxu0 0
    %1516 = vmatpush1.bf16.msra.mxu0 %v1196
    %1517 = vmatprep.subr.bf16.mxu0 0
    %1518 = vmatpush1.bf16.msra.mxu0 %v1197
    %1519 = vmatprep.subr.bf16.mxu0 0
    %1520 = vmatpush1.bf16.msra.mxu0 %v1198
    %1521 = vmatprep.mubr.bf16.mxu0 %v372
    %1522 = vmatmul.mubr.bf16.gmra.mrb[0].mxu0 %v371
    %v1523 = vpop.f32.mrb[0].mxu0
    %v1524 = vadd.f32 %v1483, %v1523
    %v1525 = vpop.f32.mrb[0].mxu0
    %v1526 = vpop.f32.mrb[0].mxu0
    %v1527 = vadd.f32 %v1486, %v1526
    %v1528 = vpop.f32.mrb[0].mxu0
    %1529 = vdwg.mxu0
    %1530 = vmatprep.subr.bf16.mxu0 0
    %1531 = vmatpush1.bf16.msra.mxu0 %v1199
    %1532 = vmatprep.subr.bf16.mxu0 0
    %1533 = vmatpush1.bf16.msra.mxu0 %v1200
    %1534 = vmatprep.subr.bf16.mxu0 0
    %1535 = vmatpush1.bf16.msra.mxu0 %v1201
    %1536 = vmatprep.subr.bf16.mxu0 0
    %1537 = vmatpush1.bf16.msra.mxu0 %v1202
    %1538 = vmatprep.subr.bf16.mxu0 0
    %1539 = vmatpush1.bf16.msra.mxu0 %v1203
    %1540 = vmatprep.subr.bf16.mxu0 0
    %1541 = vmatpush1.bf16.msra.mxu0 %v1204
    %1542 = vmatprep.subr.bf16.mxu0 0
    %1543 = vmatpush1.bf16.msra.mxu0 %v1205
    %1544 = vmatprep.subr.bf16.mxu0 0
    %1545 = vmatpush1.bf16.msra.mxu0 %v1206
    %1546 = vmatprep.subr.bf16.mxu0 0
    %1547 = vmatpush1.bf16.msra.mxu0 %v1207
    %1548 = vmatprep.subr.bf16.mxu0 0
    %1549 = vmatpush1.bf16.msra.mxu0 %v1208
    %1550 = vmatprep.subr.bf16.mxu0 0
    %1551 = vmatpush1.bf16.msra.mxu0 %v1209
    %1552 = vmatprep.subr.bf16.mxu0 0
    %1553 = vmatpush1.bf16.msra.mxu0 %v1210
    %1554 = vmatprep.subr.bf16.mxu0 0
    %1555 = vmatpush1.bf16.msra.mxu0 %v1211
    %1556 = vmatprep.subr.bf16.mxu0 0
    %1557 = vmatpush1.bf16.msra.mxu0 %v1212
    %1558 = vmatprep.subr.bf16.mxu0 0
    %1559 = vmatpush1.bf16.msra.mxu0 %v1213
    %1560 = vmatprep.subr.bf16.mxu0 0
    %1561 = vmatpush1.bf16.msra.mxu0 %v1214
    %1562 = vmatprep.mubr.bf16.mxu0 %v374
    %1563 = vmatmul.mubr.bf16.gmra.mrb[0].mxu0 %v373
    %v1564 = vpop.f32.mrb[0].mxu0
    %v1565 = vadd.f32 %v1524, %v1564
    %v1566 = vpop.f32.mrb[0].mxu0
    %v1567 = vpop.f32.mrb[0].mxu0
    %v1568 = vadd.f32 %v1527, %v1567
    %v1569 = vpop.f32.mrb[0].mxu0
    %1570 = vdwg.mxu0
    %1571 = vmatprep.subr.bf16.mxu0 0
    %1572 = vmatpush1.bf16.msra.mxu0 %v1215
    %1573 = vmatprep.subr.bf16.mxu0 0
    %1574 = vmatpush1.bf16.msra.mxu0 %v1216
    %1575 = vmatprep.subr.bf16.mxu0 0
    %1576 = vmatpush1.bf16.msra.mxu0 %v1217
    %1577 = vmatprep.subr.bf16.mxu0 0
    %1578 = vmatpush1.bf16.msra.mxu0 %v1218
    %1579 = vmatprep.subr.bf16.mxu0 0
    %1580 = vmatpush1.bf16.msra.mxu0 %v1219
    %1581 = vmatprep.subr.bf16.mxu0 0
    %1582 = vmatpush1.bf16.msra.mxu0 %v1220
    %1583 = vmatprep.subr.bf16.mxu0 0
    %1584 = vmatpush1.bf16.msra.mxu0 %v1221
    %1585 = vmatprep.subr.bf16.mxu0 0
    %1586 = vmatpush1.bf16.msra.mxu0 %v1222
    %1587 = vmatprep.subr.bf16.mxu0 0
    %1588 = vmatpush1.bf16.msra.mxu0 %v1223
    %1589 = vmatprep.subr.bf16.mxu0 0
    %1590 = vmatpush1.bf16.msra.mxu0 %v1224
    %1591 = vmatprep.subr.bf16.mxu0 0
    %1592 = vmatpush1.bf16.msra.mxu0 %v1225
    %1593 = vmatprep.subr.bf16.mxu0 0
    %1594 = vmatpush1.bf16.msra.mxu0 %v1226
    %1595 = vmatprep.subr.bf16.mxu0 0
    %1596 = vmatpush1.bf16.msra.mxu0 %v1227
    %1597 = vmatprep.subr.bf16.mxu0 0
    %1598 = vmatpush1.bf16.msra.mxu0 %v1228
    %1599 = vmatprep.subr.bf16.mxu0 0
    %1600 = vmatpush1.bf16.msra.mxu0 %v1229
    %1601 = vmatprep.subr.bf16.mxu0 0
    %1602 = vmatpush1.bf16.msra.mxu0 %v1230
    %1603 = vmatprep.mubr.bf16.mxu0 %v376
    %1604 = vmatmul.mubr.bf16.gmra.mrb[0].mxu0 %v375
    %v1605 = vpop.f32.mrb[0].mxu0
    %v1606 = vadd.f32 %v1565, %v1605
    %v1607 = vpop.f32.mrb[0].mxu0
    %v1608 = vpop.f32.mrb[0].mxu0
    %v1609 = vadd.f32 %v1568, %v1608
    %v1610 = vpop.f32.mrb[0].mxu0
    %1611 = vdwg.mxu0
    %1612 = vmatprep.subr.bf16.mxu0 0
    %1613 = vmatpush1.bf16.msra.mxu0 %v1231
    %1614 = vmatprep.subr.bf16.mxu0 0
    %1615 = vmatpush1.bf16.msra.mxu0 %v1232
    %1616 = vmatprep.subr.bf16.mxu0 0
    %1617 = vmatpush1.bf16.msra.mxu0 %v1233
    %1618 = vmatprep.subr.bf16.mxu0 0
    %1619 = vmatpush1.bf16.msra.mxu0 %v1234
    %1620 = vmatprep.subr.bf16.mxu0 0
    %1621 = vmatpush1.bf16.msra.mxu0 %v1235
    %1622 = vmatprep.subr.bf16.mxu0 0
    %1623 = vmatpush1.bf16.msra.mxu0 %v1236
    %1624 = vmatprep.subr.bf16.mxu0 0
    %1625 = vmatpush1.bf16.msra.mxu0 %v1237
    %1626 = vmatprep.subr.bf16.mxu0 0
    %1627 = vmatpush1.bf16.msra.mxu0 %v1238
    %1628 = vmatprep.subr.bf16.mxu0 0
    %1629 = vmatpush1.bf16.msra.mxu0 %v1239
    %1630 = vmatprep.subr.bf16.mxu0 0
    %1631 = vmatpush1.bf16.msra.mxu0 %v1240
    %1632 = vmatprep.subr.bf16.mxu0 0
    %1633 = vmatpush1.bf16.msra.mxu0 %v1241
    %1634 = vmatprep.subr.bf16.mxu0 0
    %1635 = vmatpush1.bf16.msra.mxu0 %v1242
    %1636 = vmatprep.subr.bf16.mxu0 0
    %1637 = vmatpush1.bf16.msra.mxu0 %v1243
    %1638 = vmatprep.subr.bf16.mxu0 0
    %1639 = vmatpush1.bf16.msra.mxu0 %v1244
    %1640 = vmatprep.subr.bf16.mxu0 0
    %1641 = vmatpush1.bf16.msra.mxu0 %v1245
    %1642 = vmatprep.subr.bf16.mxu0 0
    %1643 = vmatpush1.bf16.msra.mxu0 %v1246
    %1644 = vmatprep.mubr.bf16.mxu0 %v378
    %1645 = vmatmul.mubr.bf16.gmra.mrb[0].mxu0 %v377
    %v1646 = vpop.f32.mrb[0].mxu0
    %v1647 = vadd.f32 %v1606, %v1646
    %v1648 = vpop.f32.mrb[0].mxu0
    %v1649 = vpop.f32.mrb[0].mxu0
    %v1650 = vadd.f32 %v1609, %v1649
    %v1651 = vpop.f32.mrb[0].mxu0
    %1652 = vdwg.mxu0
    %1653 = vmatprep.subr.bf16.mxu0 0
    %1654 = vmatpush1.bf16.msra.mxu0 %v1247
    %1655 = vmatprep.subr.bf16.mxu0 0
    %1656 = vmatpush1.bf16.msra.mxu0 %v1248
    %1657 = vmatprep.subr.bf16.mxu0 0
    %1658 = vmatpush1.bf16.msra.mxu0 %v1249
    %1659 = vmatprep.subr.bf16.mxu0 0
    %1660 = vmatpush1.bf16.msra.mxu0 %v1250
    %1661 = vmatprep.subr.bf16.mxu0 0
    %1662 = vmatpush1.bf16.msra.mxu0 %v1251
    %1663 = vmatprep.subr.bf16.mxu0 0
    %1664 = vmatpush1.bf16.msra.mxu0 %v1252
    %1665 = vmatprep.subr.bf16.mxu0 0
    %1666 = vmatpush1.bf16.msra.mxu0 %v1253
    %1667 = vmatprep.subr.bf16.mxu0 0
    %1668 = vmatpush1.bf16.msra.mxu0 %v1254
    %1669 = vmatprep.subr.bf16.mxu0 0
    %1670 = vmatpush1.bf16.msra.mxu0 %v1255
    %1671 = vmatprep.subr.bf16.mxu0 0
    %1672 = vmatpush1.bf16.msra.mxu0 %v1256
    %1673 = vmatprep.subr.bf16.mxu0 0
    %1674 = vmatpush1.bf16.msra.mxu0 %v1257
    %1675 = vmatprep.subr.bf16.mxu0 0
    %1676 = vmatpush1.bf16.msra.mxu0 %v1258
    %1677 = vmatprep.subr.bf16.mxu0 0
    %1678 = vmatpush1.bf16.msra.mxu0 %v1259
    %1679 = vmatprep.subr.bf16.mxu0 0
    %1680 = vmatpush1.bf16.msra.mxu0 %v1260
    %1681 = vmatprep.subr.bf16.mxu0 0
    %1682 = vmatpush1.bf16.msra.mxu0 %v1261
    %1683 = vmatprep.subr.bf16.mxu0 0
    %1684 = vmatpush1.bf16.msra.mxu0 %v1262
    %1685 = vmatprep.mubr.bf16.mxu0 %v380
    %1686 = vmatmul.mubr.bf16.gmra.mrb[0].mxu0 %v379
    %v1687 = vpop.f32.mrb[0].mxu0
    %v1688 = vadd.f32 %v1647, %v1687
    %v1689 = vpop.f32.mrb[0].mxu0
    %v1690 = vpop.f32.mrb[0].mxu0
    %v1691 = vadd.f32 %v1650, %v1690
    %v1692 = vpop.f32.mrb[0].mxu0
    %1693 = vdwg.mxu0
    %1694 = vmatprep.subr.bf16.mxu0 0
    %1695 = vmatpush1.bf16.msra.mxu0 %v1263
    %1696 = vmatprep.subr.bf16.mxu0 0
    %1697 = vmatpush1.bf16.msra.mxu0 %v1264
    %1698 = vmatprep.subr.bf16.mxu0 0
    %1699 = vmatpush1.bf16.msra.mxu0 %v1265
    %1700 = vmatprep.subr.bf16.mxu0 0
    %1701 = vmatpush1.bf16.msra.mxu0 %v1266
    %1702 = vmatprep.subr.bf16.mxu0 0
    %1703 = vmatpush1.bf16.msra.mxu0 %v1267
    %1704 = vmatprep.subr.bf16.mxu0 0
    %1705 = vmatpush1.bf16.msra.mxu0 %v1268
    %1706 = vmatprep.subr.bf16.mxu0 0
    %1707 = vmatpush1.bf16.msra.mxu0 %v1269
    %1708 = vmatprep.subr.bf16.mxu0 0
    %1709 = vmatpush1.bf16.msra.mxu0 %v1270
    %1710 = vmatprep.subr.bf16.mxu0 0
    %1711 = vmatpush1.bf16.msra.mxu0 %v1271
    %1712 = vmatprep.subr.bf16.mxu0 0
    %1713 = vmatpush1.bf16.msra.mxu0 %v1272
    %1714 = vmatprep.subr.bf16.mxu0 0
    %1715 = vmatpush1.bf16.msra.mxu0 %v1273
    %1716 = vmatprep.subr.bf16.mxu0 0
    %1717 = vmatpush1.bf16.msra.mxu0 %v1274
    %1718 = vmatprep.subr.bf16.mxu0 0
    %1719 = vmatpush1.bf16.msra.mxu0 %v1275
    %1720 = vmatprep.subr.bf16.mxu0 0
    %1721 = vmatpush1.bf16.msra.mxu0 %v1276
    %1722 = vmatprep.subr.bf16.mxu0 0
    %1723 = vmatpush1.bf16.msra.mxu0 %v1277
    %1724 = vmatprep.subr.bf16.mxu0 0
    %1725 = vmatpush1.bf16.msra.mxu0 %v1278
    %1726 = vmatprep.mubr.bf16.mxu0 %v382
    %1727 = vmatmul.mubr.bf16.gmra.mrb[0].mxu0 %v381
    %v1728 = vpop.f32.mrb[0].mxu0
    %v1729 = vadd.f32 %v1688, %v1728
    %v1730 = vpop.f32.mrb[0].mxu0
    %v1731 = vpop.f32.mrb[0].mxu0
    %v1732 = vadd.f32 %v1691, %v1731
    %v1733 = vpop.f32.mrb[0].mxu0
    %1734 = vdwg.mxu0
    %v1735 = vpack.c.bf16 %v1732, %v1729
    %v1737 = vunpack.c.l.b16 %v1735
    %v1738 = vunpack.c.h.b16 %v1735
    %v1739 = vpack.c.b16 %v1737, %v1737
    %v1740 = vpack.c.b16 %v1738, %v1738
    %1743 = vst [vmem:[%s4] sm:$0xf] %v1739
    %1744 = vst [vmem:[%s4 + $0x4] sm:$0xf] %v1740
    %s1745 = smul.u32 0, 16
    %v1746 = vlaneseq
    %v1747 = vshrl.u32 %v1746, 7
    %v1748 = vadd.s32 %v1747, 8
    %v1749 = vstv %s1745
    %v1750 = vadd.s32 %v1749, %v1747
    %v1751 = vadd.s32 %v1749, %v1748
    %vm1752 = vcmp.lt.s32.totalorder %v1750, 2
    %vm1753 = vcmp.lt.s32.totalorder %v1751, 2
    %v1754 = vsel %vm1752, 1, 0
    %v1755 = vsel %vm1753, 1, 0
    %vm1756 = vcmp.eq.s32.totalorder %v1754, 1
    %vm1757 = vcmp.eq.s32.totalorder %v1755, 1
    %v1758 = vsel %vm1756, %v1729, 0.0
    %v1759 = vsel %vm1757, %v1732, 0.0
    %v1760 = vadd.f32 %v1758, %v1759
    %v1761 = vrot.slane %v1760, 4
    %v1762 = vadd.f32 %v1760, %v1761
    %v1763 = vrot.slane %v1762, 2
    %v1764 = vadd.f32 %v1762, %v1763
    %v1765 = vrot.slane %v1764, 1
    %v1766 = vadd.f32 %v1764, %v1765
    %1767 = vst [vmem:[#allocation2] sm:$0x1] %v1766
    %v1768 = vmul.f32 %v1758, %v1758
    %v1769 = vmul.f32 %v1759, %v1759
    %v1770 = vadd.f32 %v1768, %v1769
    %v1771 = vrot.slane %v1770, 4
    %v1772 = vadd.f32 %v1770, %v1771
    %v1773 = vrot.slane %v1772, 2
    %v1774 = vadd.f32 %v1772, %v1773
    %v1775 = vrot.slane %v1774, 1
    %v1776 = vadd.f32 %v1774, %v1775
    %1777 = vst [vmem:[#allocation4] sm:$0x1] %v1776
    // Predicated region
    $region18: #{unet_forward.14} parent=1 // pred_check
      _
    $region19: #{unet_forward.14} parent=1 // pred_check_branch
      %1779 = sbr.rel (0) target = $region21
    $region20: #{unet_forward.14} parent=1 // pred_region
      _
    $region21: #{unet_forward.14} parent=1 // pred_fallthru
      _
    // Predicated region
    $region22: #{unet_forward.14} parent=1 // pred_check
      _
    $region23: #{unet_forward.14} parent=1 // pred_check_branch
      %1781 = sbr.rel (0) target = $region25
    $region24: #{unet_forward.14} parent=1 // pred_region
      %s1783 = ssub.s32 16, 16
      %1784 = vsyncadd [#allocation3], %s1783
      %s1786 = sshll.u32 [#allocation2], 4
      %s1787 = int_to_ptr.vmem [resolvable:$true] %s1786
      %1789 = dma.vmem_to_hbm [thread:$0]  %s1787, 16, %s5, [#allocation3]
    $region25: #{unet_forward.14} parent=1 // pred_fallthru
      _
    // Predicated region
    $region26: #{unet_forward.14} parent=1 // pred_check
      _
    $region27: #{unet_forward.14} parent=1 // pred_check_branch
      %1791 = sbr.rel (0) target = $region29
    $region28: #{unet_forward.14} parent=1 // pred_region
      %s1793 = ssub.s32 16, 16
      %1794 = vsyncadd [#allocation5], %s1793
      %s1796 = sshll.u32 [#allocation4], 4
      %s1797 = int_to_ptr.vmem [resolvable:$true] %s1796
      %1799 = dma.vmem_to_hbm [thread:$0]  %s1797, 16, %s6, [#allocation5]
    $region29: #{unet_forward.14} parent=1 // pred_fallthru
      _
    // Predicated region
    $region30: #{unet_forward.14} parent=1 // pred_check
      _
    $region31: #{unet_forward.14} parent=1 // pred_check_branch
      %1801 = sbr.rel (0) target = $region33
    $region32: #{unet_forward.14} parent=1 // pred_region
      _
    $region33: #{unet_forward.14} parent=1 // pred_fallthru
      _
    // Predicated region
    $region34: #{unet_forward.14} parent=1 // pred_check
      _
    $region35: #{unet_forward.14} parent=1 // pred_check_branch
      %1803 = sbr.rel (0) target = $region37
    $region36: #{unet_forward.14} parent=1 // pred_region
      %1804 = dma.done [#allocation3], 16
    $region37: #{unet_forward.14} parent=1 // pred_fallthru
      _
    // Predicated region
    $region38: #{unet_forward.14} parent=1 // pred_check
      _
    $region39: #{unet_forward.14} parent=1 // pred_check_branch
      %1806 = sbr.rel (0) target = $region41
    $region40: #{unet_forward.14} parent=1 // pred_region
      %1807 = dma.done [#allocation5], 16
    $region41: #{unet_forward.14} parent=1 // pred_fallthru
      _
    %1808 = vsyncpa [#allocation3], 1
    %1809 = vsyncpa [#allocation5], 1

// kernel: unet_forward.16
$region0: #{unet_forward.16}
  #allocation0 [shape = 'u32[]', space=smem, size = 0x4, offset = 0x4, fixed_abs, tag = 'smem constant byte address 0x4 - core index']
  #allocation1 [shape = 'u32[144,128]{1,0:T(1,128)}', space=vmem, size = 0x12000, scoped, tag = 'internal scratch']
  %s0 = inlined_call_operand.vmem [shape: bf16[16,256], index: 0, kind: input, shape index: {}]
  %s1 = inlined_call_operand.vmem [shape: f32[1,256], index: 1, kind: input, shape index: {}]
  %s2 = inlined_call_operand.vmem [shape: f32[1,256], index: 2, kind: input, shape index: {}]
  %s3 = inlined_call_operand.vmem [shape: bf16[256,1024], index: 3, kind: input, shape index: {}]
  %s4 = inlined_call_operand.vmem [shape: bf16[16,1024], index: 4, kind: output, shape index: {}]
  %s5 = sld [smem:[#allocation0]]
  $region26: #{unet_forward.16} parent=0
    _
  %s7 = ssub.s32 1, %s5
  %s8 = scalar_select 0, %s7, %s5
  // Predicated region
  $region2: #{unet_forward.16} parent=0 // pred_check
    _
  $region3: #{unet_forward.16} parent=0 // pred_check_branch
    %10 = sbr.rel (0) target = $region5
  $region4: #{unet_forward.16} parent=0 // pred_region
    _
  $region5: #{unet_forward.16} parent=0 // pred_fallthru
    _
  // Predicated region
  $region6: #{unet_forward.16} parent=0 // pred_check
    _
  $region7: #{unet_forward.16} parent=0 // pred_check_branch
    %12 = sbr.rel (0) target = $region9
  $region8: #{unet_forward.16} parent=0 // pred_region
    _
  $region9: #{unet_forward.16} parent=0 // pred_fallthru
    _
  // Predicated region
  $region10: #{unet_forward.16} parent=0 // pred_check
    _
  $region11: #{unet_forward.16} parent=0 // pred_check_branch
    %14 = sbr.rel (0) target = $region13
  $region12: #{unet_forward.16} parent=0 // pred_region
    _
  $region13: #{unet_forward.16} parent=0 // pred_fallthru
    _
  // Predicated region
  $region14: #{unet_forward.16} parent=0 // pred_check
    _
  $region15: #{unet_forward.16} parent=0 // pred_check_branch
    %16 = sbr.rel (0) target = $region17
  $region16: #{unet_forward.16} parent=0 // pred_region
    _
  $region17: #{unet_forward.16} parent=0 // pred_fallthru
    _
  %v17 = vld [vmem:[%s0] sm:$0xff]
  %v18 = vld [vmem:[%s0 + $0x8] sm:$0xff]
  %v19 = vunpack.c.l.bf16 %v17
  %v20 = vunpack.c.h.bf16 %v17
  %v21 = vunpack.c.l.bf16 %v18
  %v22 = vunpack.c.h.bf16 %v18
  %v23 = vld [vmem:[%s1] sm:$0x3]
  %v25 = vlaneseq
  %v26 = vshrl.u32 %v25, 7
  %v27 = vsub.s32 0, %v26
  %v28 = vrot.slane %v23, %v27
  %v29 = vlaneseq
  %v30 = vshrl.u32 %v29, 7
  %v31 = vsub.s32 1, %v30
  %v32 = vrot.slane %v23, %v31
  %v35 = vmul.f32 %v19, %v28
  %v36 = vmul.f32 %v20, %v32
  %v37 = vmul.f32 %v21, %v28
  %v38 = vmul.f32 %v22, %v32
  %v39 = vld [vmem:[%s2] sm:$0x3]
  %v41 = vlaneseq
  %v42 = vshrl.u32 %v41, 7
  %v43 = vsub.s32 0, %v42
  %v44 = vrot.slane %v39, %v43
  %v45 = vlaneseq
  %v46 = vshrl.u32 %v45, 7
  %v47 = vsub.s32 1, %v46
  %v48 = vrot.slane %v39, %v47
  %v51 = vadd.f32 %v35, %v44
  %v52 = vadd.f32 %v36, %v48
  %v53 = vadd.f32 %v37, %v44
  %v54 = vadd.f32 %v38, %v48
  %v55 = vmax.f32 %v51, 0.0
  %v56 = vmax.f32 %v52, 0.0
  %v57 = vmax.f32 %v53, 0.0
  %v58 = vmax.f32 %v54, 0.0
  %v59 = vpack.c.bf16 %v57, %v55
  %v60 = vpack.c.bf16 %v58, %v56
  %v61 = vld [vmem:[%s3] sm:$0xff]
  %v62 = vld [vmem:[%s3 + $0x8] sm:$0xff]
  %v63 = vld [vmem:[%s3 + $0x10] sm:$0xff]
  %v64 = vld [vmem:[%s3 + $0x18] sm:$0xff]
  %v65 = vld [vmem:[%s3 + $0x20] sm:$0xff]
  %v66 = vld [vmem:[%s3 + $0x28] sm:$0xff]
  %v67 = vld [vmem:[%s3 + $0x30] sm:$0xff]
  %v68 = vld [vmem:[%s3 + $0x38] sm:$0xff]
  %v69 = vld [vmem:[%s3 + $0x40] sm:$0xff]
  %v70 = vld [vmem:[%s3 + $0x48] sm:$0xff]
  %v71 = vld [vmem:[%s3 + $0x50] sm:$0xff]
  %v72 = vld [vmem:[%s3 + $0x58] sm:$0xff]
  %v73 = vld [vmem:[%s3 + $0x60] sm:$0xff]
  %v74 = vld [vmem:[%s3 + $0x68] sm:$0xff]
  %v75 = vld [vmem:[%s3 + $0x70] sm:$0xff]
  %v76 = vld [vmem:[%s3 + $0x78] sm:$0xff]
  %v77 = vld [vmem:[%s3 + $0x80] sm:$0xff]
  %v78 = vld [vmem:[%s3 + $0x88] sm:$0xff]
  %v79 = vld [vmem:[%s3 + $0x90] sm:$0xff]
  %v80 = vld [vmem:[%s3 + $0x98] sm:$0xff]
  %v81 = vld [vmem:[%s3 + $0xa0] sm:$0xff]
  %v82 = vld [vmem:[%s3 + $0xa8] sm:$0xff]
  %v83 = vld [vmem:[%s3 + $0xb0] sm:$0xff]
  %v84 = vld [vmem:[%s3 + $0xb8] sm:$0xff]
  %v85 = vld [vmem:[%s3 + $0xc0] sm:$0xff]
  %v86 = vld [vmem:[%s3 + $0xc8] sm:$0xff]
  %v87 = vld [vmem:[%s3 + $0xd0] sm:$0xff]
  %v88 = vld [vmem:[%s3 + $0xd8] sm:$0xff]
  %v89 = vld [vmem:[%s3 + $0xe0] sm:$0xff]
  %v90 = vld [vmem:[%s3 + $0xe8] sm:$0xff]
  %v91 = vld [vmem:[%s3 + $0xf0] sm:$0xff]
  %v92 = vld [vmem:[%s3 + $0xf8] sm:$0xff]
  %v93 = vld [vmem:[%s3 + $0x100] sm:$0xff]
  %v94 = vld [vmem:[%s3 + $0x108] sm:$0xff]
  %v95 = vld [vmem:[%s3 + $0x110] sm:$0xff]
  %v96 = vld [vmem:[%s3 + $0x118] sm:$0xff]
  %v97 = vld [vmem:[%s3 + $0x120] sm:$0xff]
  %v98 = vld [vmem:[%s3 + $0x128] sm:$0xff]
  %v99 = vld [vmem:[%s3 + $0x130] sm:$0xff]
  %v100 = vld [vmem:[%s3 + $0x138] sm:$0xff]
  %v101 = vld [vmem:[%s3 + $0x140] sm:$0xff]
  %v102 = vld [vmem:[%s3 + $0x148] sm:$0xff]
  %v103 = vld [vmem:[%s3 + $0x150] sm:$0xff]
  %v104 = vld [vmem:[%s3 + $0x158] sm:$0xff]
  %v105 = vld [vmem:[%s3 + $0x160] sm:$0xff]
  %v106 = vld [vmem:[%s3 + $0x168] sm:$0xff]
  %v107 = vld [vmem:[%s3 + $0x170] sm:$0xff]
  %v108 = vld [vmem:[%s3 + $0x178] sm:$0xff]
  %v109 = vld [vmem:[%s3 + $0x180] sm:$0xff]
  %v110 = vld [vmem:[%s3 + $0x188] sm:$0xff]
  %v111 = vld [vmem:[%s3 + $0x190] sm:$0xff]
  %v112 = vld [vmem:[%s3 + $0x198] sm:$0xff]
  %v113 = vld [vmem:[%s3 + $0x1a0] sm:$0xff]
  %v114 = vld [vmem:[%s3 + $0x1a8] sm:$0xff]
  %v115 = vld [vmem:[%s3 + $0x1b0] sm:$0xff]
  %v116 = vld [vmem:[%s3 + $0x1b8] sm:$0xff]
  %v117 = vld [vmem:[%s3 + $0x1c0] sm:$0xff]
  %v118 = vld [vmem:[%s3 + $0x1c8] sm:$0xff]
  %v119 = vld [vmem:[%s3 + $0x1d0] sm:$0xff]
  %v120 = vld [vmem:[%s3 + $0x1d8] sm:$0xff]
  %v121 = vld [vmem:[%s3 + $0x1e0] sm:$0xff]
  %v122 = vld [vmem:[%s3 + $0x1e8] sm:$0xff]
  %v123 = vld [vmem:[%s3 + $0x1f0] sm:$0xff]
  %v124 = vld [vmem:[%s3 + $0x1f8] sm:$0xff]
  %v125 = vld [vmem:[%s3 + $0x200] sm:$0xff]
  %v126 = vld [vmem:[%s3 + $0x208] sm:$0xff]
  %v127 = vld [vmem:[%s3 + $0x210] sm:$0xff]
  %v128 = vld [vmem:[%s3 + $0x218] sm:$0xff]
  %v129 = vld [vmem:[%s3 + $0x220] sm:$0xff]
  %v130 = vld [vmem:[%s3 + $0x228] sm:$0xff]
  %v131 = vld [vmem:[%s3 + $0x230] sm:$0xff]
  %v132 = vld [vmem:[%s3 + $0x238] sm:$0xff]
  %v133 = vld [vmem:[%s3 + $0x240] sm:$0xff]
  %v134 = vld [vmem:[%s3 + $0x248] sm:$0xff]
  %v135 = vld [vmem:[%s3 + $0x250] sm:$0xff]
  %v136 = vld [vmem:[%s3 + $0x258] sm:$0xff]
  %v137 = vld [vmem:[%s3 + $0x260] sm:$0xff]
  %v138 = vld [vmem:[%s3 + $0x268] sm:$0xff]
  %v139 = vld [vmem:[%s3 + $0x270] sm:$0xff]
  %v140 = vld [vmem:[%s3 + $0x278] sm:$0xff]
  %v141 = vld [vmem:[%s3 + $0x280] sm:$0xff]
  %v142 = vld [vmem:[%s3 + $0x288] sm:$0xff]
  %v143 = vld [vmem:[%s3 + $0x290] sm:$0xff]
  %v144 = vld [vmem:[%s3 + $0x298] sm:$0xff]
  %v145 = vld [vmem:[%s3 + $0x2a0] sm:$0xff]
  %v146 = vld [vmem:[%s3 + $0x2a8] sm:$0xff]
  %v147 = vld [vmem:[%s3 + $0x2b0] sm:$0xff]
  %v148 = vld [vmem:[%s3 + $0x2b8] sm:$0xff]
  %v149 = vld [vmem:[%s3 + $0x2c0] sm:$0xff]
  %v150 = vld [vmem:[%s3 + $0x2c8] sm:$0xff]
  %v151 = vld [vmem:[%s3 + $0x2d0] sm:$0xff]
  %v152 = vld [vmem:[%s3 + $0x2d8] sm:$0xff]
  %v153 = vld [vmem:[%s3 + $0x2e0] sm:$0xff]
  %v154 = vld [vmem:[%s3 + $0x2e8] sm:$0xff]
  %v155 = vld [vmem:[%s3 + $0x2f0] sm:$0xff]
  %v156 = vld [vmem:[%s3 + $0x2f8] sm:$0xff]
  %v157 = vld [vmem:[%s3 + $0x300] sm:$0xff]
  %v158 = vld [vmem:[%s3 + $0x308] sm:$0xff]
  %v159 = vld [vmem:[%s3 + $0x310] sm:$0xff]
  %v160 = vld [vmem:[%s3 + $0x318] sm:$0xff]
  %v161 = vld [vmem:[%s3 + $0x320] sm:$0xff]
  %v162 = vld [vmem:[%s3 + $0x328] sm:$0xff]
  %v163 = vld [vmem:[%s3 + $0x330] sm:$0xff]
  %v164 = vld [vmem:[%s3 + $0x338] sm:$0xff]
  %v165 = vld [vmem:[%s3 + $0x340] sm:$0xff]
  %v166 = vld [vmem:[%s3 + $0x348] sm:$0xff]
  %v167 = vld [vmem:[%s3 + $0x350] sm:$0xff]
  %v168 = vld [vmem:[%s3 + $0x358] sm:$0xff]
  %v169 = vld [vmem:[%s3 + $0x360] sm:$0xff]
  %v170 = vld [vmem:[%s3 + $0x368] sm:$0xff]
  %v171 = vld [vmem:[%s3 + $0x370] sm:$0xff]
  %v172 = vld [vmem:[%s3 + $0x378] sm:$0xff]
  %v173 = vld [vmem:[%s3 + $0x380] sm:$0xff]
  %v174 = vld [vmem:[%s3 + $0x388] sm:$0xff]
  %v175 = vld [vmem:[%s3 + $0x390] sm:$0xff]
  %v176 = vld [vmem:[%s3 + $0x398] sm:$0xff]
  %v177 = vld [vmem:[%s3 + $0x3a0] sm:$0xff]
  %v178 = vld [vmem:[%s3 + $0x3a8] sm:$0xff]
  %v179 = vld [vmem:[%s3 + $0x3b0] sm:$0xff]
  %v180 = vld [vmem:[%s3 + $0x3b8] sm:$0xff]
  %v181 = vld [vmem:[%s3 + $0x3c0] sm:$0xff]
  %v182 = vld [vmem:[%s3 + $0x3c8] sm:$0xff]
  %v183 = vld [vmem:[%s3 + $0x3d0] sm:$0xff]
  %v184 = vld [vmem:[%s3 + $0x3d8] sm:$0xff]
  %v185 = vld [vmem:[%s3 + $0x3e0] sm:$0xff]
  %v186 = vld [vmem:[%s3 + $0x3e8] sm:$0xff]
  %v187 = vld [vmem:[%s3 + $0x3f0] sm:$0xff]
  %v188 = vld [vmem:[%s3 + $0x3f8] sm:$0xff]
  %v317 = vunpack.c.l.b16 %v61
  %v318 = vunpack.c.h.b16 %v61
  %v319 = vunpack.c.l.b16 %v62
  %v320 = vunpack.c.h.b16 %v62
  %v321 = vunpack.c.l.b16 %v63
  %v322 = vunpack.c.h.b16 %v63
  %v323 = vunpack.c.l.b16 %v64
  %v324 = vunpack.c.h.b16 %v64
  %v325 = vunpack.c.l.b16 %v65
  %v326 = vunpack.c.h.b16 %v65
  %v327 = vunpack.c.l.b16 %v66
  %v328 = vunpack.c.h.b16 %v66
  %v329 = vunpack.c.l.b16 %v67
  %v330 = vunpack.c.h.b16 %v67
  %v331 = vunpack.c.l.b16 %v68
  %v332 = vunpack.c.h.b16 %v68
  %v333 = vunpack.c.l.b16 %v69
  %v334 = vunpack.c.h.b16 %v69
  %v335 = vunpack.c.l.b16 %v70
  %v336 = vunpack.c.h.b16 %v70
  %v337 = vunpack.c.l.b16 %v71
  %v338 = vunpack.c.h.b16 %v71
  %v339 = vunpack.c.l.b16 %v72
  %v340 = vunpack.c.h.b16 %v72
  %v341 = vunpack.c.l.b16 %v73
  %v342 = vunpack.c.h.b16 %v73
  %v343 = vunpack.c.l.b16 %v74
  %v344 = vunpack.c.h.b16 %v74
  %v345 = vunpack.c.l.b16 %v75
  %v346 = vunpack.c.h.b16 %v75
  %v347 = vunpack.c.l.b16 %v76
  %v348 = vunpack.c.h.b16 %v76
  %v349 = vunpack.c.l.b16 %v77
  %v350 = vunpack.c.h.b16 %v77
  %v351 = vunpack.c.l.b16 %v78
  %v352 = vunpack.c.h.b16 %v78
  %v353 = vunpack.c.l.b16 %v79
  %v354 = vunpack.c.h.b16 %v79
  %v355 = vunpack.c.l.b16 %v80
  %v356 = vunpack.c.h.b16 %v80
  %v357 = vunpack.c.l.b16 %v81
  %v358 = vunpack.c.h.b16 %v81
  %v359 = vunpack.c.l.b16 %v82
  %v360 = vunpack.c.h.b16 %v82
  %v361 = vunpack.c.l.b16 %v83
  %v362 = vunpack.c.h.b16 %v83
  %v363 = vunpack.c.l.b16 %v84
  %v364 = vunpack.c.h.b16 %v84
  %v365 = vunpack.c.l.b16 %v85
  %v366 = vunpack.c.h.b16 %v85
  %v367 = vunpack.c.l.b16 %v86
  %v368 = vunpack.c.h.b16 %v86
  %v369 = vunpack.c.l.b16 %v87
  %v370 = vunpack.c.h.b16 %v87
  %v371 = vunpack.c.l.b16 %v88
  %v372 = vunpack.c.h.b16 %v88
  %v373 = vunpack.c.l.b16 %v89
  %v374 = vunpack.c.h.b16 %v89
  %v375 = vunpack.c.l.b16 %v90
  %v376 = vunpack.c.h.b16 %v90
  %v377 = vunpack.c.l.b16 %v91
  %v378 = vunpack.c.h.b16 %v91
  %v379 = vunpack.c.l.b16 %v92
  %v380 = vunpack.c.h.b16 %v92
  %v381 = vunpack.c.l.b16 %v93
  %v382 = vunpack.c.h.b16 %v93
  %v383 = vunpack.c.l.b16 %v94
  %v384 = vunpack.c.h.b16 %v94
  %v385 = vunpack.c.l.b16 %v95
  %v386 = vunpack.c.h.b16 %v95
  %v387 = vunpack.c.l.b16 %v96
  %v388 = vunpack.c.h.b16 %v96
  %v389 = vunpack.c.l.b16 %v97
  %v390 = vunpack.c.h.b16 %v97
  %v391 = vunpack.c.l.b16 %v98
  %v392 = vunpack.c.h.b16 %v98
  %v393 = vunpack.c.l.b16 %v99
  %v394 = vunpack.c.h.b16 %v99
  %v395 = vunpack.c.l.b16 %v100
  %v396 = vunpack.c.h.b16 %v100
  %v397 = vunpack.c.l.b16 %v101
  %v398 = vunpack.c.h.b16 %v101
  %v399 = vunpack.c.l.b16 %v102
  %v400 = vunpack.c.h.b16 %v102
  %v401 = vunpack.c.l.b16 %v103
  %v402 = vunpack.c.h.b16 %v103
  %v403 = vunpack.c.l.b16 %v104
  %v404 = vunpack.c.h.b16 %v104
  %v405 = vunpack.c.l.b16 %v105
  %v406 = vunpack.c.h.b16 %v105
  %v407 = vunpack.c.l.b16 %v106
  %v408 = vunpack.c.h.b16 %v106
  %v409 = vunpack.c.l.b16 %v107
  %v410 = vunpack.c.h.b16 %v107
  %v411 = vunpack.c.l.b16 %v108
  %v412 = vunpack.c.h.b16 %v108
  %v413 = vunpack.c.l.b16 %v109
  %v414 = vunpack.c.h.b16 %v109
  %v415 = vunpack.c.l.b16 %v110
  %v416 = vunpack.c.h.b16 %v110
  %v417 = vunpack.c.l.b16 %v111
  %v418 = vunpack.c.h.b16 %v111
  %v419 = vunpack.c.l.b16 %v112
  %v420 = vunpack.c.h.b16 %v112
  %v421 = vunpack.c.l.b16 %v113
  %v422 = vunpack.c.h.b16 %v113
  %v423 = vunpack.c.l.b16 %v114
  %v424 = vunpack.c.h.b16 %v114
  %v425 = vunpack.c.l.b16 %v115
  %v426 = vunpack.c.h.b16 %v115
  %v427 = vunpack.c.l.b16 %v116
  %v428 = vunpack.c.h.b16 %v116
  %v429 = vunpack.c.l.b16 %v117
  %v430 = vunpack.c.h.b16 %v117
  %v431 = vunpack.c.l.b16 %v118
  %v432 = vunpack.c.h.b16 %v118
  %v433 = vunpack.c.l.b16 %v119
  %v434 = vunpack.c.h.b16 %v119
  %v435 = vunpack.c.l.b16 %v120
  %v436 = vunpack.c.h.b16 %v120
  %v437 = vunpack.c.l.b16 %v121
  %v438 = vunpack.c.h.b16 %v121
  %v439 = vunpack.c.l.b16 %v122
  %v440 = vunpack.c.h.b16 %v122
  %v441 = vunpack.c.l.b16 %v123
  %v442 = vunpack.c.h.b16 %v123
  %v443 = vunpack.c.l.b16 %v124
  %v444 = vunpack.c.h.b16 %v124
  %v445 = vunpack.c.l.b16 %v125
  %v446 = vunpack.c.h.b16 %v125
  %v447 = vunpack.c.l.b16 %v126
  %v448 = vunpack.c.h.b16 %v126
  %v449 = vunpack.c.l.b16 %v127
  %v450 = vunpack.c.h.b16 %v127
  %v451 = vunpack.c.l.b16 %v128
  %v452 = vunpack.c.h.b16 %v128
  %v453 = vunpack.c.l.b16 %v129
  %v454 = vunpack.c.h.b16 %v129
  %v455 = vunpack.c.l.b16 %v130
  %v456 = vunpack.c.h.b16 %v130
  %v457 = vunpack.c.l.b16 %v131
  %v458 = vunpack.c.h.b16 %v131
  %v459 = vunpack.c.l.b16 %v132
  %v460 = vunpack.c.h.b16 %v132
  %v461 = vunpack.c.l.b16 %v133
  %v462 = vunpack.c.h.b16 %v133
  %v463 = vunpack.c.l.b16 %v134
  %v464 = vunpack.c.h.b16 %v134
  %v465 = vunpack.c.l.b16 %v135
  %v466 = vunpack.c.h.b16 %v135
  %v467 = vunpack.c.l.b16 %v136
  %v468 = vunpack.c.h.b16 %v136
  %v469 = vunpack.c.l.b16 %v137
  %v470 = vunpack.c.h.b16 %v137
  %v471 = vunpack.c.l.b16 %v138
  %v472 = vunpack.c.h.b16 %v138
  %v473 = vunpack.c.l.b16 %v139
  %v474 = vunpack.c.h.b16 %v139
  %v475 = vunpack.c.l.b16 %v140
  %v476 = vunpack.c.h.b16 %v140
  %v477 = vunpack.c.l.b16 %v141
  %v478 = vunpack.c.h.b16 %v141
  %v479 = vunpack.c.l.b16 %v142
  %v480 = vunpack.c.h.b16 %v142
  %v481 = vunpack.c.l.b16 %v143
  %v482 = vunpack.c.h.b16 %v143
  %v483 = vunpack.c.l.b16 %v144
  %v484 = vunpack.c.h.b16 %v144
  %v485 = vunpack.c.l.b16 %v145
  %v486 = vunpack.c.h.b16 %v145
  %v487 = vunpack.c.l.b16 %v146
  %v488 = vunpack.c.h.b16 %v146
  %v489 = vunpack.c.l.b16 %v147
  %v490 = vunpack.c.h.b16 %v147
  %v491 = vunpack.c.l.b16 %v148
  %v492 = vunpack.c.h.b16 %v148
  %v493 = vunpack.c.l.b16 %v149
  %v494 = vunpack.c.h.b16 %v149
  %v495 = vunpack.c.l.b16 %v150
  %v496 = vunpack.c.h.b16 %v150
  %v497 = vunpack.c.l.b16 %v151
  %v498 = vunpack.c.h.b16 %v151
  %v499 = vunpack.c.l.b16 %v152
  %v500 = vunpack.c.h.b16 %v152
  %v501 = vunpack.c.l.b16 %v153
  %v502 = vunpack.c.h.b16 %v153
  %v503 = vunpack.c.l.b16 %v154
  %v504 = vunpack.c.h.b16 %v154
  %v505 = vunpack.c.l.b16 %v155
  %v506 = vunpack.c.h.b16 %v155
  %v507 = vunpack.c.l.b16 %v156
  %v508 = vunpack.c.h.b16 %v156
  %v509 = vunpack.c.l.b16 %v157
  %v510 = vunpack.c.h.b16 %v157
  %v511 = vunpack.c.l.b16 %v158
  %v512 = vunpack.c.h.b16 %v158
  %v513 = vunpack.c.l.b16 %v159
  %v514 = vunpack.c.h.b16 %v159
  %v515 = vunpack.c.l.b16 %v160
  %v516 = vunpack.c.h.b16 %v160
  %v517 = vunpack.c.l.b16 %v161
  %v518 = vunpack.c.h.b16 %v161
  %v519 = vunpack.c.l.b16 %v162
  %v520 = vunpack.c.h.b16 %v162
  %v521 = vunpack.c.l.b16 %v163
  %v522 = vunpack.c.h.b16 %v163
  %v523 = vunpack.c.l.b16 %v164
  %v524 = vunpack.c.h.b16 %v164
  %v525 = vunpack.c.l.b16 %v165
  %v526 = vunpack.c.h.b16 %v165
  %v527 = vunpack.c.l.b16 %v166
  %v528 = vunpack.c.h.b16 %v166
  %v529 = vunpack.c.l.b16 %v167
  %v530 = vunpack.c.h.b16 %v167
  %v531 = vunpack.c.l.b16 %v168
  %v532 = vunpack.c.h.b16 %v168
  %v533 = vunpack.c.l.b16 %v169
  %v534 = vunpack.c.h.b16 %v169
  %v535 = vunpack.c.l.b16 %v170
  %v536 = vunpack.c.h.b16 %v170
  %v537 = vunpack.c.l.b16 %v171
  %v538 = vunpack.c.h.b16 %v171
  %v539 = vunpack.c.l.b16 %v172
  %v540 = vunpack.c.h.b16 %v172
  %v541 = vunpack.c.l.b16 %v173
  %v542 = vunpack.c.h.b16 %v173
  %v543 = vunpack.c.l.b16 %v174
  %v544 = vunpack.c.h.b16 %v174
  %v545 = vunpack.c.l.b16 %v175
  %v546 = vunpack.c.h.b16 %v175
  %v547 = vunpack.c.l.b16 %v176
  %v548 = vunpack.c.h.b16 %v176
  %v549 = vunpack.c.l.b16 %v177
  %v550 = vunpack.c.h.b16 %v177
  %v551 = vunpack.c.l.b16 %v178
  %v552 = vunpack.c.h.b16 %v178
  %v553 = vunpack.c.l.b16 %v179
  %v554 = vunpack.c.h.b16 %v179
  %v555 = vunpack.c.l.b16 %v180
  %v556 = vunpack.c.h.b16 %v180
  %v557 = vunpack.c.l.b16 %v181
  %v558 = vunpack.c.h.b16 %v181
  %v559 = vunpack.c.l.b16 %v182
  %v560 = vunpack.c.h.b16 %v182
  %v561 = vunpack.c.l.b16 %v183
  %v562 = vunpack.c.h.b16 %v183
  %v563 = vunpack.c.l.b16 %v184
  %v564 = vunpack.c.h.b16 %v184
  %v565 = vunpack.c.l.b16 %v185
  %v566 = vunpack.c.h.b16 %v185
  %v567 = vunpack.c.l.b16 %v186
  %v568 = vunpack.c.h.b16 %v186
  %v569 = vunpack.c.l.b16 %v187
  %v570 = vunpack.c.h.b16 %v187
  %v571 = vunpack.c.l.b16 %v188
  %v572 = vunpack.c.h.b16 %v188
  %v573 = vpack.c.b16 %v325, %v317
  %v574 = vpack.c.b16 %v326, %v318
  %v575 = vpack.c.b16 %v327, %v319
  %v576 = vpack.c.b16 %v328, %v320
  %v577 = vpack.c.b16 %v329, %v321
  %v578 = vpack.c.b16 %v330, %v322
  %v579 = vpack.c.b16 %v331, %v323
  %v580 = vpack.c.b16 %v332, %v324
  %v581 = vpack.c.b16 %v341, %v333
  %v582 = vpack.c.b16 %v342, %v334
  %v583 = vpack.c.b16 %v343, %v335
  %v584 = vpack.c.b16 %v344, %v336
  %v585 = vpack.c.b16 %v345, %v337
  %v586 = vpack.c.b16 %v346, %v338
  %v587 = vpack.c.b16 %v347, %v339
  %v588 = vpack.c.b16 %v348, %v340
  %v589 = vpack.c.b16 %v357, %v349
  %v590 = vpack.c.b16 %v358, %v350
  %v591 = vpack.c.b16 %v359, %v351
  %v592 = vpack.c.b16 %v360, %v352
  %v593 = vpack.c.b16 %v361, %v353
  %v594 = vpack.c.b16 %v362, %v354
  %v595 = vpack.c.b16 %v363, %v355
  %v596 = vpack.c.b16 %v364, %v356
  %v597 = vpack.c.b16 %v373, %v365
  %v598 = vpack.c.b16 %v374, %v366
  %v599 = vpack.c.b16 %v375, %v367
  %v600 = vpack.c.b16 %v376, %v368
  %v601 = vpack.c.b16 %v377, %v369
  %v602 = vpack.c.b16 %v378, %v370
  %v603 = vpack.c.b16 %v379, %v371
  %v604 = vpack.c.b16 %v380, %v372
  %v605 = vpack.c.b16 %v389, %v381
  %v606 = vpack.c.b16 %v390, %v382
  %v607 = vpack.c.b16 %v391, %v383
  %v608 = vpack.c.b16 %v392, %v384
  %v609 = vpack.c.b16 %v393, %v385
  %v610 = vpack.c.b16 %v394, %v386
  %v611 = vpack.c.b16 %v395, %v387
  %v612 = vpack.c.b16 %v396, %v388
  %v613 = vpack.c.b16 %v405, %v397
  %v614 = vpack.c.b16 %v406, %v398
  %v615 = vpack.c.b16 %v407, %v399
  %v616 = vpack.c.b16 %v408, %v400
  %v617 = vpack.c.b16 %v409, %v401
  %v618 = vpack.c.b16 %v410, %v402
  %v619 = vpack.c.b16 %v411, %v403
  %v620 = vpack.c.b16 %v412, %v404
  %v621 = vpack.c.b16 %v421, %v413
  %v622 = vpack.c.b16 %v422, %v414
  %v623 = vpack.c.b16 %v423, %v415
  %v624 = vpack.c.b16 %v424, %v416
  %v625 = vpack.c.b16 %v425, %v417
  %v626 = vpack.c.b16 %v426, %v418
  %v627 = vpack.c.b16 %v427, %v419
  %v628 = vpack.c.b16 %v428, %v420
  %v629 = vpack.c.b16 %v437, %v429
  %v630 = vpack.c.b16 %v438, %v430
  %v631 = vpack.c.b16 %v439, %v431
  %v632 = vpack.c.b16 %v440, %v432
  %v633 = vpack.c.b16 %v441, %v433
  %v634 = vpack.c.b16 %v442, %v434
  %v635 = vpack.c.b16 %v443, %v435
  %v636 = vpack.c.b16 %v444, %v436
  %v637 = vpack.c.b16 %v453, %v445
  %v638 = vpack.c.b16 %v454, %v446
  %v639 = vpack.c.b16 %v455, %v447
  %v640 = vpack.c.b16 %v456, %v448
  %v641 = vpack.c.b16 %v457, %v449
  %v642 = vpack.c.b16 %v458, %v450
  %v643 = vpack.c.b16 %v459, %v451
  %v644 = vpack.c.b16 %v460, %v452
  %v645 = vpack.c.b16 %v469, %v461
  %v646 = vpack.c.b16 %v470, %v462
  %v647 = vpack.c.b16 %v471, %v463
  %v648 = vpack.c.b16 %v472, %v464
  %v649 = vpack.c.b16 %v473, %v465
  %v650 = vpack.c.b16 %v474, %v466
  %v651 = vpack.c.b16 %v475, %v467
  %v652 = vpack.c.b16 %v476, %v468
  %v653 = vpack.c.b16 %v485, %v477
  %v654 = vpack.c.b16 %v486, %v478
  %v655 = vpack.c.b16 %v487, %v479
  %v656 = vpack.c.b16 %v488, %v480
  %v657 = vpack.c.b16 %v489, %v481
  %v658 = vpack.c.b16 %v490, %v482
  %v659 = vpack.c.b16 %v491, %v483
  %v660 = vpack.c.b16 %v492, %v484
  %v661 = vpack.c.b16 %v501, %v493
  %v662 = vpack.c.b16 %v502, %v494
  %v663 = vpack.c.b16 %v503, %v495
  %v664 = vpack.c.b16 %v504, %v496
  %v665 = vpack.c.b16 %v505, %v497
  %v666 = vpack.c.b16 %v506, %v498
  %v667 = vpack.c.b16 %v507, %v499
  %v668 = vpack.c.b16 %v508, %v500
  %v669 = vpack.c.b16 %v517, %v509
  %v670 = vpack.c.b16 %v518, %v510
  %v671 = vpack.c.b16 %v519, %v511
  %v672 = vpack.c.b16 %v520, %v512
  %v673 = vpack.c.b16 %v521, %v513
  %v674 = vpack.c.b16 %v522, %v514
  %v675 = vpack.c.b16 %v523, %v515
  %v676 = vpack.c.b16 %v524, %v516
  %v677 = vpack.c.b16 %v533, %v525
  %v678 = vpack.c.b16 %v534, %v526
  %v679 = vpack.c.b16 %v535, %v527
  %v680 = vpack.c.b16 %v536, %v528
  %v681 = vpack.c.b16 %v537, %v529
  %v682 = vpack.c.b16 %v538, %v530
  %v683 = vpack.c.b16 %v539, %v531
  %v684 = vpack.c.b16 %v540, %v532
  %v685 = vpack.c.b16 %v549, %v541
  %v686 = vpack.c.b16 %v550, %v542
  %v687 = vpack.c.b16 %v551, %v543
  %v688 = vpack.c.b16 %v552, %v544
  %v689 = vpack.c.b16 %v553, %v545
  %v690 = vpack.c.b16 %v554, %v546
  %v691 = vpack.c.b16 %v555, %v547
  %v692 = vpack.c.b16 %v556, %v548
  %v693 = vpack.c.b16 %v565, %v557
  %v694 = vpack.c.b16 %v566, %v558
  %v695 = vpack.c.b16 %v567, %v559
  %v696 = vpack.c.b16 %v568, %v560
  %v697 = vpack.c.b16 %v569, %v561
  %v698 = vpack.c.b16 %v570, %v562
  %v699 = vpack.c.b16 %v571, %v563
  %v700 = vpack.c.b16 %v572, %v564
  %829 = vmatprep.subr.bf16.mxu0 %v574
  %830 = vmatpush1.bf16.msra.mxu0 %v573
  %831 = vmatprep.subr.bf16.mxu0 %v582
  %832 = vmatpush1.bf16.msra.mxu0 %v581
  %833 = vmatprep.subr.bf16.mxu0 %v590
  %834 = vmatpush1.bf16.msra.mxu0 %v589
  %835 = vmatprep.subr.bf16.mxu0 %v598
  %836 = vmatpush1.bf16.msra.mxu0 %v597
  %837 = vmatprep.subr.bf16.mxu0 %v606
  %838 = vmatpush1.bf16.msra.mxu0 %v605
  %839 = vmatprep.subr.bf16.mxu0 %v614
  %840 = vmatpush1.bf16.msra.mxu0 %v613
  %841 = vmatprep.subr.bf16.mxu0 %v622
  %842 = vmatpush1.bf16.msra.mxu0 %v621
  %843 = vmatprep.subr.bf16.mxu0 %v630
  %844 = vmatpush1.bf16.msra.mxu0 %v629
  %845 = vmatprep.subr.bf16.mxu0 %v638
  %846 = vmatpush1.bf16.msra.mxu0 %v637
  %847 = vmatprep.subr.bf16.mxu0 %v646
  %848 = vmatpush1.bf16.msra.mxu0 %v645
  %849 = vmatprep.subr.bf16.mxu0 %v654
  %850 = vmatpush1.bf16.msra.mxu0 %v653
  %851 = vmatprep.subr.bf16.mxu0 %v662
  %852 = vmatpush1.bf16.msra.mxu0 %v661
  %853 = vmatprep.subr.bf16.mxu0 %v670
  %854 = vmatpush1.bf16.msra.mxu0 %v669
  %855 = vmatprep.subr.bf16.mxu0 %v678
  %856 = vmatpush1.bf16.msra.mxu0 %v677
  %857 = vmatprep.subr.bf16.mxu0 %v686
  %858 = vmatpush1.bf16.msra.mxu0 %v685
  %859 = vmatprep.subr.bf16.mxu0 %v694
  %860 = vmatpush1.bf16.msra.mxu0 %v693
  %861 = vmatprep.mubr.bf16.mxu0 %v60
  %862 = vmatmul.mubr.bf16.gmra.mrb[0].mxu0 %v59
  %v863 = vpop.f32.mrb[0].mxu0
  %v864 = vadd.f32 0.0, %v863
  %v865 = vpop.f32.mrb[0].mxu0
  %v866 = vadd.f32 0.0, %v865
  %v867 = vpop.f32.mrb[0].mxu0
  %v868 = vadd.f32 0.0, %v867
  %v869 = vpop.f32.mrb[0].mxu0
  %v870 = vadd.f32 0.0, %v869
  %871 = vdwg.mxu0
  %872 = vmatprep.subr.bf16.mxu0 %v576
  %873 = vmatpush1.bf16.msra.mxu0 %v575
  %874 = vmatprep.subr.bf16.mxu0 %v584
  %875 = vmatpush1.bf16.msra.mxu0 %v583
  %876 = vmatprep.subr.bf16.mxu0 %v592
  %877 = vmatpush1.bf16.msra.mxu0 %v591
  %878 = vmatprep.subr.bf16.mxu0 %v600
  %879 = vmatpush1.bf16.msra.mxu0 %v599
  %880 = vmatprep.subr.bf16.mxu0 %v608
  %881 = vmatpush1.bf16.msra.mxu0 %v607
  %882 = vmatprep.subr.bf16.mxu0 %v616
  %883 = vmatpush1.bf16.msra.mxu0 %v615
  %884 = vmatprep.subr.bf16.mxu0 %v624
  %885 = vmatpush1.bf16.msra.mxu0 %v623
  %886 = vmatprep.subr.bf16.mxu0 %v632
  %887 = vmatpush1.bf16.msra.mxu0 %v631
  %888 = vmatprep.subr.bf16.mxu0 %v640
  %889 = vmatpush1.bf16.msra.mxu0 %v639
  %890 = vmatprep.subr.bf16.mxu0 %v648
  %891 = vmatpush1.bf16.msra.mxu0 %v647
  %892 = vmatprep.subr.bf16.mxu0 %v656
  %893 = vmatpush1.bf16.msra.mxu0 %v655
  %894 = vmatprep.subr.bf16.mxu0 %v664
  %895 = vmatpush1.bf16.msra.mxu0 %v663
  %896 = vmatprep.subr.bf16.mxu0 %v672
  %897 = vmatpush1.bf16.msra.mxu0 %v671
  %898 = vmatprep.subr.bf16.mxu0 %v680
  %899 = vmatpush1.bf16.msra.mxu0 %v679
  %900 = vmatprep.subr.bf16.mxu0 %v688
  %901 = vmatpush1.bf16.msra.mxu0 %v687
  %902 = vmatprep.subr.bf16.mxu0 %v696
  %903 = vmatpush1.bf16.msra.mxu0 %v695
  %904 = vmatprep.mubr.bf16.mxu0 %v60
  %905 = vmatmul.mubr.bf16.gmra.mrb[0].mxu0 %v59
  %v906 = vpop.f32.mrb[0].mxu0
  %v907 = vadd.f32 0.0, %v906
  %v908 = vpop.f32.mrb[0].mxu0
  %v909 = vadd.f32 0.0, %v908
  %v910 = vpop.f32.mrb[0].mxu0
  %v911 = vadd.f32 0.0, %v910
  %v912 = vpop.f32.mrb[0].mxu0
  %v913 = vadd.f32 0.0, %v912
  %914 = vdwg.mxu0
  %915 = vmatprep.subr.bf16.mxu0 %v578
  %916 = vmatpush1.bf16.msra.mxu0 %v577
  %917 = vmatprep.subr.bf16.mxu0 %v586
  %918 = vmatpush1.bf16.msra.mxu0 %v585
  %919 = vmatprep.subr.bf16.mxu0 %v594
  %920 = vmatpush1.bf16.msra.mxu0 %v593
  %921 = vmatprep.subr.bf16.mxu0 %v602
  %922 = vmatpush1.bf16.msra.mxu0 %v601
  %923 = vmatprep.subr.bf16.mxu0 %v610
  %924 = vmatpush1.bf16.msra.mxu0 %v609
  %925 = vmatprep.subr.bf16.mxu0 %v618
  %926 = vmatpush1.bf16.msra.mxu0 %v617
  %927 = vmatprep.subr.bf16.mxu0 %v626
  %928 = vmatpush1.bf16.msra.mxu0 %v625
  %929 = vmatprep.subr.bf16.mxu0 %v634
  %930 = vmatpush1.bf16.msra.mxu0 %v633
  %931 = vmatprep.subr.bf16.mxu0 %v642
  %932 = vmatpush1.bf16.msra.mxu0 %v641
  %933 = vmatprep.subr.bf16.mxu0 %v650
  %934 = vmatpush1.bf16.msra.mxu0 %v649
  %935 = vmatprep.subr.bf16.mxu0 %v658
  %936 = vmatpush1.bf16.msra.mxu0 %v657
  %937 = vmatprep.subr.bf16.mxu0 %v666
  %938 = vmatpush1.bf16.msra.mxu0 %v665
  %939 = vmatprep.subr.bf16.mxu0 %v674
  %940 = vmatpush1.bf16.msra.mxu0 %v673
  %941 = vmatprep.subr.bf16.mxu0 %v682
  %942 = vmatpush1.bf16.msra.mxu0 %v681
  %943 = vmatprep.subr.bf16.mxu0 %v690
  %944 = vmatpush1.bf16.msra.mxu0 %v689
  %945 = vmatprep.subr.bf16.mxu0 %v698
  %946 = vmatpush1.bf16.msra.mxu0 %v697
  %947 = vmatprep.mubr.bf16.mxu0 %v60
  %948 = vmatmul.mubr.bf16.gmra.mrb[0].mxu0 %v59
  %v949 = vpop.f32.mrb[0].mxu0
  %v950 = vadd.f32 0.0, %v949
  %v951 = vpop.f32.mrb[0].mxu0
  %v952 = vadd.f32 0.0, %v951
  %v953 = vpop.f32.mrb[0].mxu0
  %v954 = vadd.f32 0.0, %v953
  %v955 = vpop.f32.mrb[0].mxu0
  %v956 = vadd.f32 0.0, %v955
  %957 = vdwg.mxu0
  %958 = vmatprep.subr.bf16.mxu0 %v580
  %959 = vmatpush1.bf16.msra.mxu0 %v579
  %960 = vmatprep.subr.bf16.mxu0 %v588
  %961 = vmatpush1.bf16.msra.mxu0 %v587
  %962 = vmatprep.subr.bf16.mxu0 %v596
  %963 = vmatpush1.bf16.msra.mxu0 %v595
  %964 = vmatprep.subr.bf16.mxu0 %v604
  %965 = vmatpush1.bf16.msra.mxu0 %v603
  %966 = vmatprep.subr.bf16.mxu0 %v612
  %967 = vmatpush1.bf16.msra.mxu0 %v611
  %968 = vmatprep.subr.bf16.mxu0 %v620
  %969 = vmatpush1.bf16.msra.mxu0 %v619
  %970 = vmatprep.subr.bf16.mxu0 %v628
  %971 = vmatpush1.bf16.msra.mxu0 %v627
  %972 = vmatprep.subr.bf16.mxu0 %v636
  %973 = vmatpush1.bf16.msra.mxu0 %v635
  %974 = vmatprep.subr.bf16.mxu0 %v644
  %975 = vmatpush1.bf16.msra.mxu0 %v643
  %976 = vmatprep.subr.bf16.mxu0 %v652
  %977 = vmatpush1.bf16.msra.mxu0 %v651
  %978 = vmatprep.subr.bf16.mxu0 %v660
  %979 = vmatpush1.bf16.msra.mxu0 %v659
  %980 = vmatprep.subr.bf16.mxu0 %v668
  %981 = vmatpush1.bf16.msra.mxu0 %v667
  %982 = vmatprep.subr.bf16.mxu0 %v676
  %983 = vmatpush1.bf16.msra.mxu0 %v675
  %984 = vmatprep.subr.bf16.mxu0 %v684
  %985 = vmatpush1.bf16.msra.mxu0 %v683
  %986 = vmatprep.subr.bf16.mxu0 %v692
  %987 = vmatpush1.bf16.msra.mxu0 %v691
  %988 = vmatprep.subr.bf16.mxu0 %v700
  %989 = vmatpush1.bf16.msra.mxu0 %v699
  %990 = vmatprep.mubr.bf16.mxu0 %v60
  %991 = vmatmul.mubr.bf16.gmra.mrb[0].mxu0 %v59
  %v992 = vpop.f32.mrb[0].mxu0
  %v993 = vadd.f32 0.0, %v992
  %v994 = vpop.f32.mrb[0].mxu0
  %v995 = vadd.f32 0.0, %v994
  %v996 = vpop.f32.mrb[0].mxu0
  %v997 = vadd.f32 0.0, %v996
  %v998 = vpop.f32.mrb[0].mxu0
  %v999 = vadd.f32 0.0, %v998
  %1000 = vdwg.mxu0
  %v1001 = vpack.c.bf16 %v868, %v864
  %v1002 = vpack.c.bf16 %v870, %v866
  %v1003 = vpack.c.bf16 %v911, %v907
  %v1004 = vpack.c.bf16 %v913, %v909
  %v1005 = vpack.c.bf16 %v954, %v950
  %v1006 = vpack.c.bf16 %v956, %v952
  %v1007 = vpack.c.bf16 %v997, %v993
  %v1008 = vpack.c.bf16 %v999, %v995
  %v1017 = vunpack.c.l.b16 %v1001
  %v1018 = vunpack.c.l.b16 %v1002
  %v1019 = vunpack.c.l.b16 %v1003
  %v1020 = vunpack.c.l.b16 %v1004
  %v1021 = vunpack.c.l.b16 %v1005
  %v1022 = vunpack.c.l.b16 %v1006
  %v1023 = vunpack.c.l.b16 %v1007
  %v1024 = vunpack.c.l.b16 %v1008
  %v1025 = vunpack.c.h.b16 %v1001
  %v1026 = vunpack.c.h.b16 %v1002
  %v1027 = vunpack.c.h.b16 %v1003
  %v1028 = vunpack.c.h.b16 %v1004
  %v1029 = vunpack.c.h.b16 %v1005
  %v1030 = vunpack.c.h.b16 %v1006
  %v1031 = vunpack.c.h.b16 %v1007
  %v1032 = vunpack.c.h.b16 %v1008
  %v1033 = vpack.c.b16 %v1018, %v1017
  %v1034 = vpack.c.b16 %v1020, %v1019
  %v1035 = vpack.c.b16 %v1022, %v1021
  %v1036 = vpack.c.b16 %v1024, %v1023
  %v1037 = vpack.c.b16 %v1026, %v1025
  %v1038 = vpack.c.b16 %v1028, %v1027
  %v1039 = vpack.c.b16 %v1030, %v1029
  %v1040 = vpack.c.b16 %v1032, %v1031
  %1049 = vst [vmem:[%s4] sm:$0xff] %v1033
  %1050 = vst [vmem:[%s4 + $0x8] sm:$0xff] %v1034
  %1051 = vst [vmem:[%s4 + $0x10] sm:$0xff] %v1035
  %1052 = vst [vmem:[%s4 + $0x18] sm:$0xff] %v1036
  %1053 = vst [vmem:[%s4 + $0x20] sm:$0xff] %v1037
  %1054 = vst [vmem:[%s4 + $0x28] sm:$0xff] %v1038
  %1055 = vst [vmem:[%s4 + $0x30] sm:$0xff] %v1039
  %1056 = vst [vmem:[%s4 + $0x38] sm:$0xff] %v1040
  // Predicated region
  $region18: #{unet_forward.16} parent=0 // pred_check
    _
  $region19: #{unet_forward.16} parent=0 // pred_check_branch
    %1058 = sbr.rel (0) target = $region21
  $region20: #{unet_forward.16} parent=0 // pred_region
    _
  $region21: #{unet_forward.16} parent=0 // pred_fallthru
    _
  // Predicated region
  $region22: #{unet_forward.16} parent=0 // pred_check
    _
  $region23: #{unet_forward.16} parent=0 // pred_check_branch
    %1060 = sbr.rel (0) target = $region25
  $region24: #{unet_forward.16} parent=0 // pred_region
    _
  $region25: #{unet_forward.16} parent=0 // pred_fallthru
    _

// kernel: unet_forward.17
$region0: #{unet_forward.17}
  #allocation0 [shape = 'u32[]', space=smem, size = 0x4, offset = 0x4, fixed_abs, tag = 'smem constant byte address 0x4 - core index']
  #allocation1 [shape = 'u32[144,128]{1,0:T(1,128)}', space=vmem, size = 0x12000, scoped, tag = 'internal scratch']
  %s0 = inlined_call_operand.vmem [shape: bf16[32,128], index: 0, kind: input, shape index: {}]
  %s1 = inlined_call_operand.vmem [shape: f32[1,128], index: 1, kind: input, shape index: {}]
  %s2 = inlined_call_operand.vmem [shape: f32[1,128], index: 2, kind: input, shape index: {}]
  %s3 = inlined_call_operand.vmem [shape: bf16[128,512], index: 3, kind: input, shape index: {}]
  %s4 = inlined_call_operand.vmem [shape: bf16[32,512], index: 4, kind: output, shape index: {}]
  %s5 = sld [smem:[#allocation0]]
  $region26: #{unet_forward.17} parent=0
    _
  %s7 = ssub.s32 1, %s5
  %s8 = scalar_select 0, %s7, %s5
  // Predicated region
  $region2: #{unet_forward.17} parent=0 // pred_check
    _
  $region3: #{unet_forward.17} parent=0 // pred_check_branch
    %10 = sbr.rel (0) target = $region5
  $region4: #{unet_forward.17} parent=0 // pred_region
    _
  $region5: #{unet_forward.17} parent=0 // pred_fallthru
    _
  // Predicated region
  $region6: #{unet_forward.17} parent=0 // pred_check
    _
  $region7: #{unet_forward.17} parent=0 // pred_check_branch
    %12 = sbr.rel (0) target = $region9
  $region8: #{unet_forward.17} parent=0 // pred_region
    _
  $region9: #{unet_forward.17} parent=0 // pred_fallthru
    _
  // Predicated region
  $region10: #{unet_forward.17} parent=0 // pred_check
    _
  $region11: #{unet_forward.17} parent=0 // pred_check_branch
    %14 = sbr.rel (0) target = $region13
  $region12: #{unet_forward.17} parent=0 // pred_region
    _
  $region13: #{unet_forward.17} parent=0 // pred_fallthru
    _
  // Predicated region
  $region14: #{unet_forward.17} parent=0 // pred_check
    _
  $region15: #{unet_forward.17} parent=0 // pred_check_branch
    %16 = sbr.rel (0) target = $region17
  $region16: #{unet_forward.17} parent=0 // pred_region
    _
  $region17: #{unet_forward.17} parent=0 // pred_fallthru
    _
  %v18 = vld [vmem:[%s0] sm:$0xf]
  %v19 = vld [vmem:[%s0 + $0x4] sm:$0xf]
  %v20 = vld [vmem:[%s0 + $0x8] sm:$0xf]
  %v21 = vld [vmem:[%s0 + $0xc] sm:$0xf]
  %v22 = vunpack.c.l.bf16 %v18
  %v23 = vunpack.c.l.bf16 %v19
  %v24 = vunpack.c.l.bf16 %v20
  %v25 = vunpack.c.l.bf16 %v21
  %v26 = vld [vmem:[%s1] sm:$0x1]
  %v28 = vlaneseq
  %v29 = vshrl.u32 %v28, 7
  %v30 = vsub.s32 0, %v29
  %v31 = vrot.slane %v26, %v30
  %v33 = vmul.f32 %v22, %v31
  %v34 = vmul.f32 %v23, %v31
  %v35 = vmul.f32 %v24, %v31
  %v36 = vmul.f32 %v25, %v31
  %v37 = vld [vmem:[%s2] sm:$0x1]
  %v39 = vlaneseq
  %v40 = vshrl.u32 %v39, 7
  %v41 = vsub.s32 0, %v40
  %v42 = vrot.slane %v37, %v41
  %v44 = vadd.f32 %v33, %v42
  %v45 = vadd.f32 %v34, %v42
  %v46 = vadd.f32 %v35, %v42
  %v47 = vadd.f32 %v36, %v42
  %v48 = vmax.f32 %v44, 0.0
  %v49 = vmax.f32 %v45, 0.0
  %v50 = vmax.f32 %v46, 0.0
  %v51 = vmax.f32 %v47, 0.0
  %v52 = vpack.c.bf16 %v49, %v48
  %v53 = vpack.c.bf16 %v51, %v50
  %v54 = vld [vmem:[%s3] sm:$0xff]
  %v55 = vld [vmem:[%s3 + $0x8] sm:$0xff]
  %v56 = vld [vmem:[%s3 + $0x10] sm:$0xff]
  %v57 = vld [vmem:[%s3 + $0x18] sm:$0xff]
  %v58 = vld [vmem:[%s3 + $0x20] sm:$0xff]
  %v59 = vld [vmem:[%s3 + $0x28] sm:$0xff]
  %v60 = vld [vmem:[%s3 + $0x30] sm:$0xff]
  %v61 = vld [vmem:[%s3 + $0x38] sm:$0xff]
  %v62 = vld [vmem:[%s3 + $0x40] sm:$0xff]
  %v63 = vld [vmem:[%s3 + $0x48] sm:$0xff]
  %v64 = vld [vmem:[%s3 + $0x50] sm:$0xff]
  %v65 = vld [vmem:[%s3 + $0x58] sm:$0xff]
  %v66 = vld [vmem:[%s3 + $0x60] sm:$0xff]
  %v67 = vld [vmem:[%s3 + $0x68] sm:$0xff]
  %v68 = vld [vmem:[%s3 + $0x70] sm:$0xff]
  %v69 = vld [vmem:[%s3 + $0x78] sm:$0xff]
  %v70 = vld [vmem:[%s3 + $0x80] sm:$0xff]
  %v71 = vld [vmem:[%s3 + $0x88] sm:$0xff]
  %v72 = vld [vmem:[%s3 + $0x90] sm:$0xff]
  %v73 = vld [vmem:[%s3 + $0x98] sm:$0xff]
  %v74 = vld [vmem:[%s3 + $0xa0] sm:$0xff]
  %v75 = vld [vmem:[%s3 + $0xa8] sm:$0xff]
  %v76 = vld [vmem:[%s3 + $0xb0] sm:$0xff]
  %v77 = vld [vmem:[%s3 + $0xb8] sm:$0xff]
  %v78 = vld [vmem:[%s3 + $0xc0] sm:$0xff]
  %v79 = vld [vmem:[%s3 + $0xc8] sm:$0xff]
  %v80 = vld [vmem:[%s3 + $0xd0] sm:$0xff]
  %v81 = vld [vmem:[%s3 + $0xd8] sm:$0xff]
  %v82 = vld [vmem:[%s3 + $0xe0] sm:$0xff]
  %v83 = vld [vmem:[%s3 + $0xe8] sm:$0xff]
  %v84 = vld [vmem:[%s3 + $0xf0] sm:$0xff]
  %v85 = vld [vmem:[%s3 + $0xf8] sm:$0xff]
  %v118 = vunpack.c.l.b16 %v54
  %v119 = vunpack.c.h.b16 %v54
  %v120 = vunpack.c.l.b16 %v55
  %v121 = vunpack.c.h.b16 %v55
  %v122 = vunpack.c.l.b16 %v56
  %v123 = vunpack.c.h.b16 %v56
  %v124 = vunpack.c.l.b16 %v57
  %v125 = vunpack.c.h.b16 %v57
  %v126 = vunpack.c.l.b16 %v58
  %v127 = vunpack.c.h.b16 %v58
  %v128 = vunpack.c.l.b16 %v59
  %v129 = vunpack.c.h.b16 %v59
  %v130 = vunpack.c.l.b16 %v60
  %v131 = vunpack.c.h.b16 %v60
  %v132 = vunpack.c.l.b16 %v61
  %v133 = vunpack.c.h.b16 %v61
  %v134 = vunpack.c.l.b16 %v62
  %v135 = vunpack.c.h.b16 %v62
  %v136 = vunpack.c.l.b16 %v63
  %v137 = vunpack.c.h.b16 %v63
  %v138 = vunpack.c.l.b16 %v64
  %v139 = vunpack.c.h.b16 %v64
  %v140 = vunpack.c.l.b16 %v65
  %v141 = vunpack.c.h.b16 %v65
  %v142 = vunpack.c.l.b16 %v66
  %v143 = vunpack.c.h.b16 %v66
  %v144 = vunpack.c.l.b16 %v67
  %v145 = vunpack.c.h.b16 %v67
  %v146 = vunpack.c.l.b16 %v68
  %v147 = vunpack.c.h.b16 %v68
  %v148 = vunpack.c.l.b16 %v69
  %v149 = vunpack.c.h.b16 %v69
  %v150 = vunpack.c.l.b16 %v70
  %v151 = vunpack.c.h.b16 %v70
  %v152 = vunpack.c.l.b16 %v71
  %v153 = vunpack.c.h.b16 %v71
  %v154 = vunpack.c.l.b16 %v72
  %v155 = vunpack.c.h.b16 %v72
  %v156 = vunpack.c.l.b16 %v73
  %v157 = vunpack.c.h.b16 %v73
  %v158 = vunpack.c.l.b16 %v74
  %v159 = vunpack.c.h.b16 %v74
  %v160 = vunpack.c.l.b16 %v75
  %v161 = vunpack.c.h.b16 %v75
  %v162 = vunpack.c.l.b16 %v76
  %v163 = vunpack.c.h.b16 %v76
  %v164 = vunpack.c.l.b16 %v77
  %v165 = vunpack.c.h.b16 %v77
  %v166 = vunpack.c.l.b16 %v78
  %v167 = vunpack.c.h.b16 %v78
  %v168 = vunpack.c.l.b16 %v79
  %v169 = vunpack.c.h.b16 %v79
  %v170 = vunpack.c.l.b16 %v80
  %v171 = vunpack.c.h.b16 %v80
  %v172 = vunpack.c.l.b16 %v81
  %v173 = vunpack.c.h.b16 %v81
  %v174 = vunpack.c.l.b16 %v82
  %v175 = vunpack.c.h.b16 %v82
  %v176 = vunpack.c.l.b16 %v83
  %v177 = vunpack.c.h.b16 %v83
  %v178 = vunpack.c.l.b16 %v84
  %v179 = vunpack.c.h.b16 %v84
  %v180 = vunpack.c.l.b16 %v85
  %v181 = vunpack.c.h.b16 %v85
  %v182 = vpack.c.b16 %v122, %v118
  %v183 = vpack.c.b16 %v123, %v119
  %v184 = vpack.c.b16 %v124, %v120
  %v185 = vpack.c.b16 %v125, %v121
  %v186 = vpack.c.b16 %v130, %v126
  %v187 = vpack.c.b16 %v131, %v127
  %v188 = vpack.c.b16 %v132, %v128
  %v189 = vpack.c.b16 %v133, %v129
  %v190 = vpack.c.b16 %v138, %v134
  %v191 = vpack.c.b16 %v139, %v135
  %v192 = vpack.c.b16 %v140, %v136
  %v193 = vpack.c.b16 %v141, %v137
  %v194 = vpack.c.b16 %v146, %v142
  %v195 = vpack.c.b16 %v147, %v143
  %v196 = vpack.c.b16 %v148, %v144
  %v197 = vpack.c.b16 %v149, %v145
  %v198 = vpack.c.b16 %v154, %v150
  %v199 = vpack.c.b16 %v155, %v151
  %v200 = vpack.c.b16 %v156, %v152
  %v201 = vpack.c.b16 %v157, %v153
  %v202 = vpack.c.b16 %v162, %v158
  %v203 = vpack.c.b16 %v163, %v159
  %v204 = vpack.c.b16 %v164, %v160
  %v205 = vpack.c.b16 %v165, %v161
  %v206 = vpack.c.b16 %v170, %v166
  %v207 = vpack.c.b16 %v171, %v167
  %v208 = vpack.c.b16 %v172, %v168
  %v209 = vpack.c.b16 %v173, %v169
  %v210 = vpack.c.b16 %v178, %v174
  %v211 = vpack.c.b16 %v179, %v175
  %v212 = vpack.c.b16 %v180, %v176
  %v213 = vpack.c.b16 %v181, %v177
  %246 = vmatprep.subr.bf16.mxu0 %v183
  %247 = vmatpush1.bf16.msra.mxu0 %v182
  %248 = vmatprep.subr.bf16.mxu0 %v187
  %249 = vmatpush1.bf16.msra.mxu0 %v186
  %250 = vmatprep.subr.bf16.mxu0 %v191
  %251 = vmatpush1.bf16.msra.mxu0 %v190
  %252 = vmatprep.subr.bf16.mxu0 %v195
  %253 = vmatpush1.bf16.msra.mxu0 %v194
  %254 = vmatprep.subr.bf16.mxu0 %v199
  %255 = vmatpush1.bf16.msra.mxu0 %v198
  %256 = vmatprep.subr.bf16.mxu0 %v203
  %257 = vmatpush1.bf16.msra.mxu0 %v202
  %258 = vmatprep.subr.bf16.mxu0 %v207
  %259 = vmatpush1.bf16.msra.mxu0 %v206
  %260 = vmatprep.subr.bf16.mxu0 %v211
  %261 = vmatpush1.bf16.msra.mxu0 %v210
  %262 = vmatprep.subr.bf16.mxu0 0
  %263 = vmatpush1.bf16.msra.mxu0 0
  %264 = vmatprep.subr.bf16.mxu0 0
  %265 = vmatpush1.bf16.msra.mxu0 0
  %266 = vmatprep.subr.bf16.mxu0 0
  %267 = vmatpush1.bf16.msra.mxu0 0
  %268 = vmatprep.subr.bf16.mxu0 0
  %269 = vmatpush1.bf16.msra.mxu0 0
  %270 = vmatprep.subr.bf16.mxu0 0
  %271 = vmatpush1.bf16.msra.mxu0 0
  %272 = vmatprep.subr.bf16.mxu0 0
  %273 = vmatpush1.bf16.msra.mxu0 0
  %274 = vmatprep.subr.bf16.mxu0 0
  %275 = vmatpush1.bf16.msra.mxu0 0
  %276 = vmatprep.subr.bf16.mxu0 0
  %277 = vmatpush1.bf16.msra.mxu0 0
  %278 = vmatprep.mubr.bf16.mxu0 0
  %279 = vmatmul.mubr.bf16.gmra.mrb[0].mxu0 %v52
  %v280 = vpop.f32.mrb[0].mxu0
  %v281 = vadd.f32 0.0, %v280
  %v282 = vpop.f32.mrb[0].mxu0
  %v283 = vadd.f32 0.0, %v282
  %v284 = vpop.f32.mrb[0].mxu0
  %v285 = vadd.f32 0.0, %v284
  %v286 = vpop.f32.mrb[0].mxu0
  %v287 = vadd.f32 0.0, %v286
  %288 = vmatprep.mubr.bf16.mxu0 0
  %289 = vmatmul.mubr.bf16.gmra.mrb[0].mxu0 %v53
  %v290 = vpop.f32.mrb[0].mxu0
  %v291 = vadd.f32 0.0, %v290
  %v292 = vpop.f32.mrb[0].mxu0
  %v293 = vadd.f32 0.0, %v292
  %v294 = vpop.f32.mrb[0].mxu0
  %v295 = vadd.f32 0.0, %v294
  %v296 = vpop.f32.mrb[0].mxu0
  %v297 = vadd.f32 0.0, %v296
  %298 = vdwg.mxu0
  %299 = vmatprep.subr.bf16.mxu0 %v185
  %300 = vmatpush1.bf16.msra.mxu0 %v184
  %301 = vmatprep.subr.bf16.mxu0 %v189
  %302 = vmatpush1.bf16.msra.mxu0 %v188
  %303 = vmatprep.subr.bf16.mxu0 %v193
  %304 = vmatpush1.bf16.msra.mxu0 %v192
  %305 = vmatprep.subr.bf16.mxu0 %v197
  %306 = vmatpush1.bf16.msra.mxu0 %v196
  %307 = vmatprep.subr.bf16.mxu0 %v201
  %308 = vmatpush1.bf16.msra.mxu0 %v200
  %309 = vmatprep.subr.bf16.mxu0 %v205
  %310 = vmatpush1.bf16.msra.mxu0 %v204
  %311 = vmatprep.subr.bf16.mxu0 %v209
  %312 = vmatpush1.bf16.msra.mxu0 %v208
  %313 = vmatprep.subr.bf16.mxu0 %v213
  %314 = vmatpush1.bf16.msra.mxu0 %v212
  %315 = vmatprep.subr.bf16.mxu0 0
  %316 = vmatpush1.bf16.msra.mxu0 0
  %317 = vmatprep.subr.bf16.mxu0 0
  %318 = vmatpush1.bf16.msra.mxu0 0
  %319 = vmatprep.subr.bf16.mxu0 0
  %320 = vmatpush1.bf16.msra.mxu0 0
  %321 = vmatprep.subr.bf16.mxu0 0
  %322 = vmatpush1.bf16.msra.mxu0 0
  %323 = vmatprep.subr.bf16.mxu0 0
  %324 = vmatpush1.bf16.msra.mxu0 0
  %325 = vmatprep.subr.bf16.mxu0 0
  %326 = vmatpush1.bf16.msra.mxu0 0
  %327 = vmatprep.subr.bf16.mxu0 0
  %328 = vmatpush1.bf16.msra.mxu0 0
  %329 = vmatprep.subr.bf16.mxu0 0
  %330 = vmatpush1.bf16.msra.mxu0 0
  %331 = vmatprep.mubr.bf16.mxu0 0
  %332 = vmatmul.mubr.bf16.gmra.mrb[0].mxu0 %v52
  %v333 = vpop.f32.mrb[0].mxu0
  %v334 = vadd.f32 0.0, %v333
  %v335 = vpop.f32.mrb[0].mxu0
  %v336 = vadd.f32 0.0, %v335
  %v337 = vpop.f32.mrb[0].mxu0
  %v338 = vadd.f32 0.0, %v337
  %v339 = vpop.f32.mrb[0].mxu0
  %v340 = vadd.f32 0.0, %v339
  %341 = vmatprep.mubr.bf16.mxu0 0
  %342 = vmatmul.mubr.bf16.gmra.mrb[0].mxu0 %v53
  %v343 = vpop.f32.mrb[0].mxu0
  %v344 = vadd.f32 0.0, %v343
  %v345 = vpop.f32.mrb[0].mxu0
  %v346 = vadd.f32 0.0, %v345
  %v347 = vpop.f32.mrb[0].mxu0
  %v348 = vadd.f32 0.0, %v347
  %v349 = vpop.f32.mrb[0].mxu0
  %v350 = vadd.f32 0.0, %v349
  %351 = vdwg.mxu0
  %v352 = vpack.c.bf16 %v285, %v281
  %v353 = vpack.c.bf16 %v287, %v283
  %v354 = vpack.c.bf16 %v338, %v334
  %v355 = vpack.c.bf16 %v340, %v336
  %v356 = vpack.c.bf16 %v295, %v291
  %v357 = vpack.c.bf16 %v297, %v293
  %v358 = vpack.c.bf16 %v348, %v344
  %v359 = vpack.c.bf16 %v350, %v346
  %v368 = vunpack.c.l.b16 %v352
  %v369 = vunpack.c.l.b16 %v353
  %v370 = vunpack.c.l.b16 %v354
  %v371 = vunpack.c.l.b16 %v355
  %v372 = vunpack.c.h.b16 %v352
  %v373 = vunpack.c.h.b16 %v353
  %v374 = vunpack.c.h.b16 %v354
  %v375 = vunpack.c.h.b16 %v355
  %v376 = vunpack.c.l.b16 %v356
  %v377 = vunpack.c.l.b16 %v357
  %v378 = vunpack.c.l.b16 %v358
  %v379 = vunpack.c.l.b16 %v359
  %v380 = vunpack.c.h.b16 %v356
  %v381 = vunpack.c.h.b16 %v357
  %v382 = vunpack.c.h.b16 %v358
  %v383 = vunpack.c.h.b16 %v359
  %v384 = vpack.c.b16 %v369, %v368
  %v385 = vpack.c.b16 %v371, %v370
  %v386 = vpack.c.b16 %v373, %v372
  %v387 = vpack.c.b16 %v375, %v374
  %v388 = vpack.c.b16 %v377, %v376
  %v389 = vpack.c.b16 %v379, %v378
  %v390 = vpack.c.b16 %v381, %v380
  %v391 = vpack.c.b16 %v383, %v382
  %400 = vst [vmem:[%s4] sm:$0xff] %v384
  %401 = vst [vmem:[%s4 + $0x8] sm:$0xff] %v385
  %402 = vst [vmem:[%s4 + $0x10] sm:$0xff] %v386
  %403 = vst [vmem:[%s4 + $0x18] sm:$0xff] %v387
  %404 = vst [vmem:[%s4 + $0x20] sm:$0xff] %v388
  %405 = vst [vmem:[%s4 + $0x28] sm:$0xff] %v389
  %406 = vst [vmem:[%s4 + $0x30] sm:$0xff] %v390
  %407 = vst [vmem:[%s4 + $0x38] sm:$0xff] %v391
  // Predicated region
  $region18: #{unet_forward.17} parent=0 // pred_check
    _
  $region19: #{unet_forward.17} parent=0 // pred_check_branch
    %409 = sbr.rel (0) target = $region21
  $region20: #{unet_forward.17} parent=0 // pred_region
    _
  $region21: #{unet_forward.17} parent=0 // pred_fallthru
    _
  // Predicated region
  $region22: #{unet_forward.17} parent=0 // pred_check
    _
  $region23: #{unet_forward.17} parent=0 // pred_check_branch
    %411 = sbr.rel (0) target = $region25
  $region24: #{unet_forward.17} parent=0 // pred_region
    _
  $region25: #{unet_forward.17} parent=0 // pred_fallthru
    _

// kernel: unet_forward.18
$region0: #{unet_forward.18}
  #allocation0 [shape = 'u32[]', space=smem, size = 0x4, offset = 0x4, fixed_abs, tag = 'smem constant byte address 0x4 - core index']
  #allocation1 [shape = 'u32[144,128]{1,0:T(1,128)}', space=vmem, size = 0x12000, scoped, tag = 'internal scratch']
  %s0 = inlined_call_operand.vmem [shape: bf16[128,128], index: 0, kind: input, shape index: {}]
  %s1 = inlined_call_operand.vmem [shape: f32[1,128], index: 1, kind: input, shape index: {}]
  %s2 = inlined_call_operand.vmem [shape: f32[1,128], index: 2, kind: input, shape index: {}]
  %s3 = inlined_call_operand.vmem [shape: bf16[128,256], index: 3, kind: input, shape index: {}]
  %s4 = inlined_call_operand.vmem [shape: bf16[128,256], index: 4, kind: output, shape index: {}]
  %s5 = sld [smem:[#allocation0]]
  $region26: #{unet_forward.18} parent=0
    _
  %s7 = ssub.s32 1, %s5
  %s8 = scalar_select 0, %s7, %s5
  // Predicated region
  $region2: #{unet_forward.18} parent=0 // pred_check
    _
  $region3: #{unet_forward.18} parent=0 // pred_check_branch
    %10 = sbr.rel (0) target = $region5
  $region4: #{unet_forward.18} parent=0 // pred_region
    _
  $region5: #{unet_forward.18} parent=0 // pred_fallthru
    _
  // Predicated region
  $region6: #{unet_forward.18} parent=0 // pred_check
    _
  $region7: #{unet_forward.18} parent=0 // pred_check_branch
    %12 = sbr.rel (0) target = $region9
  $region8: #{unet_forward.18} parent=0 // pred_region
    _
  $region9: #{unet_forward.18} parent=0 // pred_fallthru
    _
  // Predicated region
  $region10: #{unet_forward.18} parent=0 // pred_check
    _
  $region11: #{unet_forward.18} parent=0 // pred_check_branch
    %14 = sbr.rel (0) target = $region13
  $region12: #{unet_forward.18} parent=0 // pred_region
    _
  $region13: #{unet_forward.18} parent=0 // pred_fallthru
    _
  // Predicated region
  $region14: #{unet_forward.18} parent=0 // pred_check
    _
  $region15: #{unet_forward.18} parent=0 // pred_check_branch
    %16 = sbr.rel (0) target = $region17
  $region16: #{unet_forward.18} parent=0 // pred_region
    _
  $region17: #{unet_forward.18} parent=0 // pred_fallthru
    _
  %v18 = vld [vmem:[%s0] sm:$0xf]
  %v19 = vld [vmem:[%s0 + $0x4] sm:$0xf]
  %v20 = vld [vmem:[%s0 + $0x8] sm:$0xf]
  %v21 = vld [vmem:[%s0 + $0xc] sm:$0xf]
  %v22 = vld [vmem:[%s0 + $0x10] sm:$0xf]
  %v23 = vld [vmem:[%s0 + $0x14] sm:$0xf]
  %v24 = vld [vmem:[%s0 + $0x18] sm:$0xf]
  %v25 = vld [vmem:[%s0 + $0x1c] sm:$0xf]
  %v26 = vld [vmem:[%s0 + $0x20] sm:$0xf]
  %v27 = vld [vmem:[%s0 + $0x24] sm:$0xf]
  %v28 = vld [vmem:[%s0 + $0x28] sm:$0xf]
  %v29 = vld [vmem:[%s0 + $0x2c] sm:$0xf]
  %v30 = vld [vmem:[%s0 + $0x30] sm:$0xf]
  %v31 = vld [vmem:[%s0 + $0x34] sm:$0xf]
  %v32 = vld [vmem:[%s0 + $0x38] sm:$0xf]
  %v33 = vld [vmem:[%s0 + $0x3c] sm:$0xf]
  %v34 = vunpack.c.l.bf16 %v18
  %v35 = vunpack.c.l.bf16 %v19
  %v36 = vunpack.c.l.bf16 %v20
  %v37 = vunpack.c.l.bf16 %v21
  %v38 = vunpack.c.l.bf16 %v22
  %v39 = vunpack.c.l.bf16 %v23
  %v40 = vunpack.c.l.bf16 %v24
  %v41 = vunpack.c.l.bf16 %v25
  %v42 = vunpack.c.l.bf16 %v26
  %v43 = vunpack.c.l.bf16 %v27
  %v44 = vunpack.c.l.bf16 %v28
  %v45 = vunpack.c.l.bf16 %v29
  %v46 = vunpack.c.l.bf16 %v30
  %v47 = vunpack.c.l.bf16 %v31
  %v48 = vunpack.c.l.bf16 %v32
  %v49 = vunpack.c.l.bf16 %v33
  %v50 = vld [vmem:[%s1] sm:$0x1]
  %v52 = vlaneseq
  %v53 = vshrl.u32 %v52, 7
  %v54 = vsub.s32 0, %v53
  %v55 = vrot.slane %v50, %v54
  %v57 = vmul.f32 %v34, %v55
  %v58 = vmul.f32 %v35, %v55
  %v59 = vmul.f32 %v36, %v55
  %v60 = vmul.f32 %v37, %v55
  %v61 = vmul.f32 %v38, %v55
  %v62 = vmul.f32 %v39, %v55
  %v63 = vmul.f32 %v40, %v55
  %v64 = vmul.f32 %v41, %v55
  %v65 = vmul.f32 %v42, %v55
  %v66 = vmul.f32 %v43, %v55
  %v67 = vmul.f32 %v44, %v55
  %v68 = vmul.f32 %v45, %v55
  %v69 = vmul.f32 %v46, %v55
  %v70 = vmul.f32 %v47, %v55
  %v71 = vmul.f32 %v48, %v55
  %v72 = vmul.f32 %v49, %v55
  %v73 = vld [vmem:[%s2] sm:$0x1]
  %v75 = vlaneseq
  %v76 = vshrl.u32 %v75, 7
  %v77 = vsub.s32 0, %v76
  %v78 = vrot.slane %v73, %v77
  %v80 = vadd.f32 %v57, %v78
  %v81 = vadd.f32 %v58, %v78
  %v82 = vadd.f32 %v59, %v78
  %v83 = vadd.f32 %v60, %v78
  %v84 = vadd.f32 %v61, %v78
  %v85 = vadd.f32 %v62, %v78
  %v86 = vadd.f32 %v63, %v78
  %v87 = vadd.f32 %v64, %v78
  %v88 = vadd.f32 %v65, %v78
  %v89 = vadd.f32 %v66, %v78
  %v90 = vadd.f32 %v67, %v78
  %v91 = vadd.f32 %v68, %v78
  %v92 = vadd.f32 %v69, %v78
  %v93 = vadd.f32 %v70, %v78
  %v94 = vadd.f32 %v71, %v78
  %v95 = vadd.f32 %v72, %v78
  %v96 = vmax.f32 %v80, 0.0
  %v97 = vmax.f32 %v81, 0.0
  %v98 = vmax.f32 %v82, 0.0
  %v99 = vmax.f32 %v83, 0.0
  %v100 = vmax.f32 %v84, 0.0
  %v101 = vmax.f32 %v85, 0.0
  %v102 = vmax.f32 %v86, 0.0
  %v103 = vmax.f32 %v87, 0.0
  %v104 = vmax.f32 %v88, 0.0
  %v105 = vmax.f32 %v89, 0.0
  %v106 = vmax.f32 %v90, 0.0
  %v107 = vmax.f32 %v91, 0.0
  %v108 = vmax.f32 %v92, 0.0
  %v109 = vmax.f32 %v93, 0.0
  %v110 = vmax.f32 %v94, 0.0
  %v111 = vmax.f32 %v95, 0.0
  %v112 = vpack.c.bf16 %v97, %v96
  %v113 = vpack.c.bf16 %v99, %v98
  %v114 = vpack.c.bf16 %v101, %v100
  %v115 = vpack.c.bf16 %v103, %v102
  %v116 = vpack.c.bf16 %v105, %v104
  %v117 = vpack.c.bf16 %v107, %v106
  %v118 = vpack.c.bf16 %v109, %v108
  %v119 = vpack.c.bf16 %v111, %v110
  %v120 = vld [vmem:[%s3] sm:$0xff]
  %v121 = vld [vmem:[%s3 + $0x8] sm:$0xff]
  %v122 = vld [vmem:[%s3 + $0x10] sm:$0xff]
  %v123 = vld [vmem:[%s3 + $0x18] sm:$0xff]
  %v124 = vld [vmem:[%s3 + $0x20] sm:$0xff]
  %v125 = vld [vmem:[%s3 + $0x28] sm:$0xff]
  %v126 = vld [vmem:[%s3 + $0x30] sm:$0xff]
  %v127 = vld [vmem:[%s3 + $0x38] sm:$0xff]
  %v128 = vld [vmem:[%s3 + $0x40] sm:$0xff]
  %v129 = vld [vmem:[%s3 + $0x48] sm:$0xff]
  %v130 = vld [vmem:[%s3 + $0x50] sm:$0xff]
  %v131 = vld [vmem:[%s3 + $0x58] sm:$0xff]
  %v132 = vld [vmem:[%s3 + $0x60] sm:$0xff]
  %v133 = vld [vmem:[%s3 + $0x68] sm:$0xff]
  %v134 = vld [vmem:[%s3 + $0x70] sm:$0xff]
  %v135 = vld [vmem:[%s3 + $0x78] sm:$0xff]
  %v152 = vunpack.c.l.b16 %v120
  %v153 = vunpack.c.h.b16 %v120
  %v154 = vunpack.c.l.b16 %v121
  %v155 = vunpack.c.h.b16 %v121
  %v156 = vunpack.c.l.b16 %v122
  %v157 = vunpack.c.h.b16 %v122
  %v158 = vunpack.c.l.b16 %v123
  %v159 = vunpack.c.h.b16 %v123
  %v160 = vunpack.c.l.b16 %v124
  %v161 = vunpack.c.h.b16 %v124
  %v162 = vunpack.c.l.b16 %v125
  %v163 = vunpack.c.h.b16 %v125
  %v164 = vunpack.c.l.b16 %v126
  %v165 = vunpack.c.h.b16 %v126
  %v166 = vunpack.c.l.b16 %v127
  %v167 = vunpack.c.h.b16 %v127
  %v168 = vunpack.c.l.b16 %v128
  %v169 = vunpack.c.h.b16 %v128
  %v170 = vunpack.c.l.b16 %v129
  %v171 = vunpack.c.h.b16 %v129
  %v172 = vunpack.c.l.b16 %v130
  %v173 = vunpack.c.h.b16 %v130
  %v174 = vunpack.c.l.b16 %v131
  %v175 = vunpack.c.h.b16 %v131
  %v176 = vunpack.c.l.b16 %v132
  %v177 = vunpack.c.h.b16 %v132
  %v178 = vunpack.c.l.b16 %v133
  %v179 = vunpack.c.h.b16 %v133
  %v180 = vunpack.c.l.b16 %v134
  %v181 = vunpack.c.h.b16 %v134
  %v182 = vunpack.c.l.b16 %v135
  %v183 = vunpack.c.h.b16 %v135
  %v184 = vpack.c.b16 %v154, %v152
  %v185 = vpack.c.b16 %v155, %v153
  %v186 = vpack.c.b16 %v158, %v156
  %v187 = vpack.c.b16 %v159, %v157
  %v188 = vpack.c.b16 %v162, %v160
  %v189 = vpack.c.b16 %v163, %v161
  %v190 = vpack.c.b16 %v166, %v164
  %v191 = vpack.c.b16 %v167, %v165
  %v192 = vpack.c.b16 %v170, %v168
  %v193 = vpack.c.b16 %v171, %v169
  %v194 = vpack.c.b16 %v174, %v172
  %v195 = vpack.c.b16 %v175, %v173
  %v196 = vpack.c.b16 %v178, %v176
  %v197 = vpack.c.b16 %v179, %v177
  %v198 = vpack.c.b16 %v182, %v180
  %v199 = vpack.c.b16 %v183, %v181
  %216 = vmatprep.subr.bf16.mxu0 %v185
  %217 = vmatpush1.bf16.msra.mxu0 %v184
  %218 = vmatprep.subr.bf16.mxu0 %v187
  %219 = vmatpush1.bf16.msra.mxu0 %v186
  %220 = vmatprep.subr.bf16.mxu0 %v189
  %221 = vmatpush1.bf16.msra.mxu0 %v188
  %222 = vmatprep.subr.bf16.mxu0 %v191
  %223 = vmatpush1.bf16.msra.mxu0 %v190
  %224 = vmatprep.subr.bf16.mxu0 %v193
  %225 = vmatpush1.bf16.msra.mxu0 %v192
  %226 = vmatprep.subr.bf16.mxu0 %v195
  %227 = vmatpush1.bf16.msra.mxu0 %v194
  %228 = vmatprep.subr.bf16.mxu0 %v197
  %229 = vmatpush1.bf16.msra.mxu0 %v196
  %230 = vmatprep.subr.bf16.mxu0 %v199
  %231 = vmatpush1.bf16.msra.mxu0 %v198
  %232 = vmatprep.subr.bf16.mxu0 0
  %233 = vmatpush1.bf16.msra.mxu0 0
  %234 = vmatprep.subr.bf16.mxu0 0
  %235 = vmatpush1.bf16.msra.mxu0 0
  %236 = vmatprep.subr.bf16.mxu0 0
  %237 = vmatpush1.bf16.msra.mxu0 0
  %238 = vmatprep.subr.bf16.mxu0 0
  %239 = vmatpush1.bf16.msra.mxu0 0
  %240 = vmatprep.subr.bf16.mxu0 0
  %241 = vmatpush1.bf16.msra.mxu0 0
  %242 = vmatprep.subr.bf16.mxu0 0
  %243 = vmatpush1.bf16.msra.mxu0 0
  %244 = vmatprep.subr.bf16.mxu0 0
  %245 = vmatpush1.bf16.msra.mxu0 0
  %246 = vmatprep.subr.bf16.mxu0 0
  %247 = vmatpush1.bf16.msra.mxu0 0
  %248 = vmatprep.mubr.bf16.mxu0 0
  %249 = vmatmul.mubr.bf16.gmra.mrb[0].mxu0 %v112
  %v250 = vpop.f32.mrb[0].mxu0
  %v251 = vadd.f32 0.0, %v250
  %v252 = vpop.f32.mrb[0].mxu0
  %v253 = vadd.f32 0.0, %v252
  %v254 = vpop.f32.mrb[0].mxu0
  %v255 = vadd.f32 0.0, %v254
  %v256 = vpop.f32.mrb[0].mxu0
  %v257 = vadd.f32 0.0, %v256
  %258 = vmatprep.mubr.bf16.mxu0 0
  %259 = vmatmul.mubr.bf16.gmra.mrb[0].mxu0 %v113
  %v260 = vpop.f32.mrb[0].mxu0
  %v261 = vadd.f32 0.0, %v260
  %v262 = vpop.f32.mrb[0].mxu0
  %v263 = vadd.f32 0.0, %v262
  %v264 = vpop.f32.mrb[0].mxu0
  %v265 = vadd.f32 0.0, %v264
  %v266 = vpop.f32.mrb[0].mxu0
  %v267 = vadd.f32 0.0, %v266
  %268 = vmatprep.mubr.bf16.mxu0 0
  %269 = vmatmul.mubr.bf16.gmra.mrb[0].mxu0 %v114
  %v270 = vpop.f32.mrb[0].mxu0
  %v271 = vadd.f32 0.0, %v270
  %v272 = vpop.f32.mrb[0].mxu0
  %v273 = vadd.f32 0.0, %v272
  %v274 = vpop.f32.mrb[0].mxu0
  %v275 = vadd.f32 0.0, %v274
  %v276 = vpop.f32.mrb[0].mxu0
  %v277 = vadd.f32 0.0, %v276
  %278 = vmatprep.mubr.bf16.mxu0 0
  %279 = vmatmul.mubr.bf16.gmra.mrb[0].mxu0 %v115
  %v280 = vpop.f32.mrb[0].mxu0
  %v281 = vadd.f32 0.0, %v280
  %v282 = vpop.f32.mrb[0].mxu0
  %v283 = vadd.f32 0.0, %v282
  %v284 = vpop.f32.mrb[0].mxu0
  %v285 = vadd.f32 0.0, %v284
  %v286 = vpop.f32.mrb[0].mxu0
  %v287 = vadd.f32 0.0, %v286
  %288 = vmatprep.mubr.bf16.mxu0 0
  %289 = vmatmul.mubr.bf16.gmra.mrb[0].mxu0 %v116
  %v290 = vpop.f32.mrb[0].mxu0
  %v291 = vadd.f32 0.0, %v290
  %v292 = vpop.f32.mrb[0].mxu0
  %v293 = vadd.f32 0.0, %v292
  %v294 = vpop.f32.mrb[0].mxu0
  %v295 = vadd.f32 0.0, %v294
  %v296 = vpop.f32.mrb[0].mxu0
  %v297 = vadd.f32 0.0, %v296
  %298 = vmatprep.mubr.bf16.mxu0 0
  %299 = vmatmul.mubr.bf16.gmra.mrb[0].mxu0 %v117
  %v300 = vpop.f32.mrb[0].mxu0
  %v301 = vadd.f32 0.0, %v300
  %v302 = vpop.f32.mrb[0].mxu0
  %v303 = vadd.f32 0.0, %v302
  %v304 = vpop.f32.mrb[0].mxu0
  %v305 = vadd.f32 0.0, %v304
  %v306 = vpop.f32.mrb[0].mxu0
  %v307 = vadd.f32 0.0, %v306
  %308 = vmatprep.mubr.bf16.mxu0 0
  %309 = vmatmul.mubr.bf16.gmra.mrb[0].mxu0 %v118
  %v310 = vpop.f32.mrb[0].mxu0
  %v311 = vadd.f32 0.0, %v310
  %v312 = vpop.f32.mrb[0].mxu0
  %v313 = vadd.f32 0.0, %v312
  %v314 = vpop.f32.mrb[0].mxu0
  %v315 = vadd.f32 0.0, %v314
  %v316 = vpop.f32.mrb[0].mxu0
  %v317 = vadd.f32 0.0, %v316
  %318 = vmatprep.mubr.bf16.mxu0 0
  %319 = vmatmul.mubr.bf16.gmra.mrb[0].mxu0 %v119
  %v320 = vpop.f32.mrb[0].mxu0
  %v321 = vadd.f32 0.0, %v320
  %v322 = vpop.f32.mrb[0].mxu0
  %v323 = vadd.f32 0.0, %v322
  %v324 = vpop.f32.mrb[0].mxu0
  %v325 = vadd.f32 0.0, %v324
  %v326 = vpop.f32.mrb[0].mxu0
  %v327 = vadd.f32 0.0, %v326
  %328 = vdwg.mxu0
  %v329 = vpack.c.bf16 %v255, %v251
  %v330 = vpack.c.bf16 %v257, %v253
  %v331 = vpack.c.bf16 %v265, %v261
  %v332 = vpack.c.bf16 %v267, %v263
  %v333 = vpack.c.bf16 %v275, %v271
  %v334 = vpack.c.bf16 %v277, %v273
  %v335 = vpack.c.bf16 %v285, %v281
  %v336 = vpack.c.bf16 %v287, %v283
  %v337 = vpack.c.bf16 %v295, %v291
  %v338 = vpack.c.bf16 %v297, %v293
  %v339 = vpack.c.bf16 %v305, %v301
  %v340 = vpack.c.bf16 %v307, %v303
  %v341 = vpack.c.bf16 %v315, %v311
  %v342 = vpack.c.bf16 %v317, %v313
  %v343 = vpack.c.bf16 %v325, %v321
  %v344 = vpack.c.bf16 %v327, %v323
  %v361 = vunpack.c.l.b16 %v329
  %v362 = vunpack.c.l.b16 %v330
  %v363 = vunpack.c.h.b16 %v329
  %v364 = vunpack.c.h.b16 %v330
  %v365 = vunpack.c.l.b16 %v331
  %v366 = vunpack.c.l.b16 %v332
  %v367 = vunpack.c.h.b16 %v331
  %v368 = vunpack.c.h.b16 %v332
  %v369 = vunpack.c.l.b16 %v333
  %v370 = vunpack.c.l.b16 %v334
  %v371 = vunpack.c.h.b16 %v333
  %v372 = vunpack.c.h.b16 %v334
  %v373 = vunpack.c.l.b16 %v335
  %v374 = vunpack.c.l.b16 %v336
  %v375 = vunpack.c.h.b16 %v335
  %v376 = vunpack.c.h.b16 %v336
  %v377 = vunpack.c.l.b16 %v337
  %v378 = vunpack.c.l.b16 %v338
  %v379 = vunpack.c.h.b16 %v337
  %v380 = vunpack.c.h.b16 %v338
  %v381 = vunpack.c.l.b16 %v339
  %v382 = vunpack.c.l.b16 %v340
  %v383 = vunpack.c.h.b16 %v339
  %v384 = vunpack.c.h.b16 %v340
  %v385 = vunpack.c.l.b16 %v341
  %v386 = vunpack.c.l.b16 %v342
  %v387 = vunpack.c.h.b16 %v341
  %v388 = vunpack.c.h.b16 %v342
  %v389 = vunpack.c.l.b16 %v343
  %v390 = vunpack.c.l.b16 %v344
  %v391 = vunpack.c.h.b16 %v343
  %v392 = vunpack.c.h.b16 %v344
  %v393 = vpack.c.b16 %v362, %v361
  %v394 = vpack.c.b16 %v364, %v363
  %v395 = vpack.c.b16 %v366, %v365
  %v396 = vpack.c.b16 %v368, %v367
  %v397 = vpack.c.b16 %v370, %v369
  %v398 = vpack.c.b16 %v372, %v371
  %v399 = vpack.c.b16 %v374, %v373
  %v400 = vpack.c.b16 %v376, %v375
  %v401 = vpack.c.b16 %v378, %v377
  %v402 = vpack.c.b16 %v380, %v379
  %v403 = vpack.c.b16 %v382, %v381
  %v404 = vpack.c.b16 %v384, %v383
  %v405 = vpack.c.b16 %v386, %v385
  %v406 = vpack.c.b16 %v388, %v387
  %v407 = vpack.c.b16 %v390, %v389
  %v408 = vpack.c.b16 %v392, %v391
  %425 = vst [vmem:[%s4] sm:$0xff] %v393
  %426 = vst [vmem:[%s4 + $0x8] sm:$0xff] %v394
  %427 = vst [vmem:[%s4 + $0x10] sm:$0xff] %v395
  %428 = vst [vmem:[%s4 + $0x18] sm:$0xff] %v396
  %429 = vst [vmem:[%s4 + $0x20] sm:$0xff] %v397
  %430 = vst [vmem:[%s4 + $0x28] sm:$0xff] %v398
  %431 = vst [vmem:[%s4 + $0x30] sm:$0xff] %v399
  %432 = vst [vmem:[%s4 + $0x38] sm:$0xff] %v400
  %433 = vst [vmem:[%s4 + $0x40] sm:$0xff] %v401
  %434 = vst [vmem:[%s4 + $0x48] sm:$0xff] %v402
  %435 = vst [vmem:[%s4 + $0x50] sm:$0xff] %v403
  %436 = vst [vmem:[%s4 + $0x58] sm:$0xff] %v404
  %437 = vst [vmem:[%s4 + $0x60] sm:$0xff] %v405
  %438 = vst [vmem:[%s4 + $0x68] sm:$0xff] %v406
  %439 = vst [vmem:[%s4 + $0x70] sm:$0xff] %v407
  %440 = vst [vmem:[%s4 + $0x78] sm:$0xff] %v408
  // Predicated region
  $region18: #{unet_forward.18} parent=0 // pred_check
    _
  $region19: #{unet_forward.18} parent=0 // pred_check_branch
    %442 = sbr.rel (0) target = $region21
  $region20: #{unet_forward.18} parent=0 // pred_region
    _
  $region21: #{unet_forward.18} parent=0 // pred_fallthru
    _
  // Predicated region
  $region22: #{unet_forward.18} parent=0 // pred_check
    _
  $region23: #{unet_forward.18} parent=0 // pred_check_branch
    %444 = sbr.rel (0) target = $region25
  $region24: #{unet_forward.18} parent=0 // pred_region
    _
  $region25: #{unet_forward.18} parent=0 // pred_fallthru
    _

// kernel: unet_forward.19
$region0: #{unet_forward.19}
  #allocation0 [shape = 'u32[]', space=smem, size = 0x4, offset = 0x4, fixed_abs, tag = 'smem constant byte address 0x4 - core index']
  #allocation1 [shape = 'u32[144,128]{1,0:T(1,128)}', space=vmem, size = 0x12000, scoped, tag = 'internal scratch']
  %s0 = inlined_call_operand.vmem [shape: bf16[512,128], index: 0, kind: input, shape index: {}]
  %s1 = inlined_call_operand.vmem [shape: f32[1,128], index: 1, kind: input, shape index: {}]
  %s2 = inlined_call_operand.vmem [shape: f32[1,128], index: 2, kind: input, shape index: {}]
  %s3 = inlined_call_operand.vmem [shape: bf16[128,128], index: 3, kind: input, shape index: {}]
  %s4 = inlined_call_operand.vmem [shape: bf16[512,128], index: 4, kind: output, shape index: {}]
  %s5 = sld [smem:[#allocation0]]
  $region26: #{unet_forward.19} parent=0
    _
  %s7 = ssub.s32 1, %s5
  %s8 = scalar_select 0, %s7, %s5
  // Predicated region
  $region2: #{unet_forward.19} parent=0 // pred_check
    _
  $region3: #{unet_forward.19} parent=0 // pred_check_branch
    %10 = sbr.rel (0) target = $region5
  $region4: #{unet_forward.19} parent=0 // pred_region
    _
  $region5: #{unet_forward.19} parent=0 // pred_fallthru
    _
  // Predicated region
  $region6: #{unet_forward.19} parent=0 // pred_check
    _
  $region7: #{unet_forward.19} parent=0 // pred_check_branch
    %12 = sbr.rel (0) target = $region9
  $region8: #{unet_forward.19} parent=0 // pred_region
    _
  $region9: #{unet_forward.19} parent=0 // pred_fallthru
    _
  // Predicated region
  $region10: #{unet_forward.19} parent=0 // pred_check
    _
  $region11: #{unet_forward.19} parent=0 // pred_check_branch
    %14 = sbr.rel (0) target = $region13
  $region12: #{unet_forward.19} parent=0 // pred_region
    _
  $region13: #{unet_forward.19} parent=0 // pred_fallthru
    _
  // Predicated region
  $region14: #{unet_forward.19} parent=0 // pred_check
    _
  $region15: #{unet_forward.19} parent=0 // pred_check_branch
    %16 = sbr.rel (0) target = $region17
  $region16: #{unet_forward.19} parent=0 // pred_region
    _
  $region17: #{unet_forward.19} parent=0 // pred_fallthru
    _
  %v18 = vld [vmem:[%s0] sm:$0xf]
  %v19 = vld [vmem:[%s0 + $0x4] sm:$0xf]
  %v20 = vld [vmem:[%s0 + $0x8] sm:$0xf]
  %v21 = vld [vmem:[%s0 + $0xc] sm:$0xf]
  %v22 = vld [vmem:[%s0 + $0x10] sm:$0xf]
  %v23 = vld [vmem:[%s0 + $0x14] sm:$0xf]
  %v24 = vld [vmem:[%s0 + $0x18] sm:$0xf]
  %v25 = vld [vmem:[%s0 + $0x1c] sm:$0xf]
  %v26 = vld [vmem:[%s0 + $0x20] sm:$0xf]
  %v27 = vld [vmem:[%s0 + $0x24] sm:$0xf]
  %v28 = vld [vmem:[%s0 + $0x28] sm:$0xf]
  %v29 = vld [vmem:[%s0 + $0x2c] sm:$0xf]
  %v30 = vld [vmem:[%s0 + $0x30] sm:$0xf]
  %v31 = vld [vmem:[%s0 + $0x34] sm:$0xf]
  %v32 = vld [vmem:[%s0 + $0x38] sm:$0xf]
  %v33 = vld [vmem:[%s0 + $0x3c] sm:$0xf]
  %v34 = vld [vmem:[%s0 + $0x40] sm:$0xf]
  %v35 = vld [vmem:[%s0 + $0x44] sm:$0xf]
  %v36 = vld [vmem:[%s0 + $0x48] sm:$0xf]
  %v37 = vld [vmem:[%s0 + $0x4c] sm:$0xf]
  %v38 = vld [vmem:[%s0 + $0x50] sm:$0xf]
  %v39 = vld [vmem:[%s0 + $0x54] sm:$0xf]
  %v40 = vld [vmem:[%s0 + $0x58] sm:$0xf]
  %v41 = vld [vmem:[%s0 + $0x5c] sm:$0xf]
  %v42 = vld [vmem:[%s0 + $0x60] sm:$0xf]
  %v43 = vld [vmem:[%s0 + $0x64] sm:$0xf]
  %v44 = vld [vmem:[%s0 + $0x68] sm:$0xf]
  %v45 = vld [vmem:[%s0 + $0x6c] sm:$0xf]
  %v46 = vld [vmem:[%s0 + $0x70] sm:$0xf]
  %v47 = vld [vmem:[%s0 + $0x74] sm:$0xf]
  %v48 = vld [vmem:[%s0 + $0x78] sm:$0xf]
  %v49 = vld [vmem:[%s0 + $0x7c] sm:$0xf]
  %v50 = vld [vmem:[%s0 + $0x80] sm:$0xf]
  %v51 = vld [vmem:[%s0 + $0x84] sm:$0xf]
  %v52 = vld [vmem:[%s0 + $0x88] sm:$0xf]
  %v53 = vld [vmem:[%s0 + $0x8c] sm:$0xf]
  %v54 = vld [vmem:[%s0 + $0x90] sm:$0xf]
  %v55 = vld [vmem:[%s0 + $0x94] sm:$0xf]
  %v56 = vld [vmem:[%s0 + $0x98] sm:$0xf]
  %v57 = vld [vmem:[%s0 + $0x9c] sm:$0xf]
  %v58 = vld [vmem:[%s0 + $0xa0] sm:$0xf]
  %v59 = vld [vmem:[%s0 + $0xa4] sm:$0xf]
  %v60 = vld [vmem:[%s0 + $0xa8] sm:$0xf]
  %v61 = vld [vmem:[%s0 + $0xac] sm:$0xf]
  %v62 = vld [vmem:[%s0 + $0xb0] sm:$0xf]
  %v63 = vld [vmem:[%s0 + $0xb4] sm:$0xf]
  %v64 = vld [vmem:[%s0 + $0xb8] sm:$0xf]
  %v65 = vld [vmem:[%s0 + $0xbc] sm:$0xf]
  %v66 = vld [vmem:[%s0 + $0xc0] sm:$0xf]
  %v67 = vld [vmem:[%s0 + $0xc4] sm:$0xf]
  %v68 = vld [vmem:[%s0 + $0xc8] sm:$0xf]
  %v69 = vld [vmem:[%s0 + $0xcc] sm:$0xf]
  %v70 = vld [vmem:[%s0 + $0xd0] sm:$0xf]
  %v71 = vld [vmem:[%s0 + $0xd4] sm:$0xf]
  %v72 = vld [vmem:[%s0 + $0xd8] sm:$0xf]
  %v73 = vld [vmem:[%s0 + $0xdc] sm:$0xf]
  %v74 = vld [vmem:[%s0 + $0xe0] sm:$0xf]
  %v75 = vld [vmem:[%s0 + $0xe4] sm:$0xf]
  %v76 = vld [vmem:[%s0 + $0xe8] sm:$0xf]
  %v77 = vld [vmem:[%s0 + $0xec] sm:$0xf]
  %v78 = vld [vmem:[%s0 + $0xf0] sm:$0xf]
  %v79 = vld [vmem:[%s0 + $0xf4] sm:$0xf]
  %v80 = vld [vmem:[%s0 + $0xf8] sm:$0xf]
  %v81 = vld [vmem:[%s0 + $0xfc] sm:$0xf]
  %v82 = vunpack.c.l.bf16 %v18
  %v83 = vunpack.c.l.bf16 %v19
  %v84 = vunpack.c.l.bf16 %v20
  %v85 = vunpack.c.l.bf16 %v21
  %v86 = vunpack.c.l.bf16 %v22
  %v87 = vunpack.c.l.bf16 %v23
  %v88 = vunpack.c.l.bf16 %v24
  %v89 = vunpack.c.l.bf16 %v25
  %v90 = vunpack.c.l.bf16 %v26
  %v91 = vunpack.c.l.bf16 %v27
  %v92 = vunpack.c.l.bf16 %v28
  %v93 = vunpack.c.l.bf16 %v29
  %v94 = vunpack.c.l.bf16 %v30
  %v95 = vunpack.c.l.bf16 %v31
  %v96 = vunpack.c.l.bf16 %v32
  %v97 = vunpack.c.l.bf16 %v33
  %v98 = vunpack.c.l.bf16 %v34
  %v99 = vunpack.c.l.bf16 %v35
  %v100 = vunpack.c.l.bf16 %v36
  %v101 = vunpack.c.l.bf16 %v37
  %v102 = vunpack.c.l.bf16 %v38
  %v103 = vunpack.c.l.bf16 %v39
  %v104 = vunpack.c.l.bf16 %v40
  %v105 = vunpack.c.l.bf16 %v41
  %v106 = vunpack.c.l.bf16 %v42
  %v107 = vunpack.c.l.bf16 %v43
  %v108 = vunpack.c.l.bf16 %v44
  %v109 = vunpack.c.l.bf16 %v45
  %v110 = vunpack.c.l.bf16 %v46
  %v111 = vunpack.c.l.bf16 %v47
  %v112 = vunpack.c.l.bf16 %v48
  %v113 = vunpack.c.l.bf16 %v49
  %v114 = vunpack.c.l.bf16 %v50
  %v115 = vunpack.c.l.bf16 %v51
  %v116 = vunpack.c.l.bf16 %v52
  %v117 = vunpack.c.l.bf16 %v53
  %v118 = vunpack.c.l.bf16 %v54
  %v119 = vunpack.c.l.bf16 %v55
  %v120 = vunpack.c.l.bf16 %v56
  %v121 = vunpack.c.l.bf16 %v57
  %v122 = vunpack.c.l.bf16 %v58
  %v123 = vunpack.c.l.bf16 %v59
  %v124 = vunpack.c.l.bf16 %v60
  %v125 = vunpack.c.l.bf16 %v61
  %v126 = vunpack.c.l.bf16 %v62
  %v127 = vunpack.c.l.bf16 %v63
  %v128 = vunpack.c.l.bf16 %v64
  %v129 = vunpack.c.l.bf16 %v65
  %v130 = vunpack.c.l.bf16 %v66
  %v131 = vunpack.c.l.bf16 %v67
  %v132 = vunpack.c.l.bf16 %v68
  %v133 = vunpack.c.l.bf16 %v69
  %v134 = vunpack.c.l.bf16 %v70
  %v135 = vunpack.c.l.bf16 %v71
  %v136 = vunpack.c.l.bf16 %v72
  %v137 = vunpack.c.l.bf16 %v73
  %v138 = vunpack.c.l.bf16 %v74
  %v139 = vunpack.c.l.bf16 %v75
  %v140 = vunpack.c.l.bf16 %v76
  %v141 = vunpack.c.l.bf16 %v77
  %v142 = vunpack.c.l.bf16 %v78
  %v143 = vunpack.c.l.bf16 %v79
  %v144 = vunpack.c.l.bf16 %v80
  %v145 = vunpack.c.l.bf16 %v81
  %v146 = vld [vmem:[%s1] sm:$0x1]
  %v148 = vlaneseq
  %v149 = vshrl.u32 %v148, 7
  %v150 = vsub.s32 0, %v149
  %v151 = vrot.slane %v146, %v150
  %v153 = vmul.f32 %v82, %v151
  %v154 = vmul.f32 %v83, %v151
  %v155 = vmul.f32 %v84, %v151
  %v156 = vmul.f32 %v85, %v151
  %v157 = vmul.f32 %v86, %v151
  %v158 = vmul.f32 %v87, %v151
  %v159 = vmul.f32 %v88, %v151
  %v160 = vmul.f32 %v89, %v151
  %v161 = vmul.f32 %v90, %v151
  %v162 = vmul.f32 %v91, %v151
  %v163 = vmul.f32 %v92, %v151
  %v164 = vmul.f32 %v93, %v151
  %v165 = vmul.f32 %v94, %v151
  %v166 = vmul.f32 %v95, %v151
  %v167 = vmul.f32 %v96, %v151
  %v168 = vmul.f32 %v97, %v151
  %v169 = vmul.f32 %v98, %v151
  %v170 = vmul.f32 %v99, %v151
  %v171 = vmul.f32 %v100, %v151
  %v172 = vmul.f32 %v101, %v151
  %v173 = vmul.f32 %v102, %v151
  %v174 = vmul.f32 %v103, %v151
  %v175 = vmul.f32 %v104, %v151
  %v176 = vmul.f32 %v105, %v151
  %v177 = vmul.f32 %v106, %v151
  %v178 = vmul.f32 %v107, %v151
  %v179 = vmul.f32 %v108, %v151
  %v180 = vmul.f32 %v109, %v151
  %v181 = vmul.f32 %v110, %v151
  %v182 = vmul.f32 %v111, %v151
  %v183 = vmul.f32 %v112, %v151
  %v184 = vmul.f32 %v113, %v151
  %v185 = vmul.f32 %v114, %v151
  %v186 = vmul.f32 %v115, %v151
  %v187 = vmul.f32 %v116, %v151
  %v188 = vmul.f32 %v117, %v151
  %v189 = vmul.f32 %v118, %v151
  %v190 = vmul.f32 %v119, %v151
  %v191 = vmul.f32 %v120, %v151
  %v192 = vmul.f32 %v121, %v151
  %v193 = vmul.f32 %v122, %v151
  %v194 = vmul.f32 %v123, %v151
  %v195 = vmul.f32 %v124, %v151
  %v196 = vmul.f32 %v125, %v151
  %v197 = vmul.f32 %v126, %v151
  %v198 = vmul.f32 %v127, %v151
  %v199 = vmul.f32 %v128, %v151
  %v200 = vmul.f32 %v129, %v151
  %v201 = vmul.f32 %v130, %v151
  %v202 = vmul.f32 %v131, %v151
  %v203 = vmul.f32 %v132, %v151
  %v204 = vmul.f32 %v133, %v151
  %v205 = vmul.f32 %v134, %v151
  %v206 = vmul.f32 %v135, %v151
  %v207 = vmul.f32 %v136, %v151
  %v208 = vmul.f32 %v137, %v151
  %v209 = vmul.f32 %v138, %v151
  %v210 = vmul.f32 %v139, %v151
  %v211 = vmul.f32 %v140, %v151
  %v212 = vmul.f32 %v141, %v151
  %v213 = vmul.f32 %v142, %v151
  %v214 = vmul.f32 %v143, %v151
  %v215 = vmul.f32 %v144, %v151
  %v216 = vmul.f32 %v145, %v151
  %v217 = vld [vmem:[%s2] sm:$0x1]
  %v219 = vlaneseq
  %v220 = vshrl.u32 %v219, 7
  %v221 = vsub.s32 0, %v220
  %v222 = vrot.slane %v217, %v221
  %v224 = vadd.f32 %v153, %v222
  %v225 = vadd.f32 %v154, %v222
  %v226 = vadd.f32 %v155, %v222
  %v227 = vadd.f32 %v156, %v222
  %v228 = vadd.f32 %v157, %v222
  %v229 = vadd.f32 %v158, %v222
  %v230 = vadd.f32 %v159, %v222
  %v231 = vadd.f32 %v160, %v222
  %v232 = vadd.f32 %v161, %v222
  %v233 = vadd.f32 %v162, %v222
  %v234 = vadd.f32 %v163, %v222
  %v235 = vadd.f32 %v164, %v222
  %v236 = vadd.f32 %v165, %v222
  %v237 = vadd.f32 %v166, %v222
  %v238 = vadd.f32 %v167, %v222
  %v239 = vadd.f32 %v168, %v222
  %v240 = vadd.f32 %v169, %v222
  %v241 = vadd.f32 %v170, %v222
  %v242 = vadd.f32 %v171, %v222
  %v243 = vadd.f32 %v172, %v222
  %v244 = vadd.f32 %v173, %v222
  %v245 = vadd.f32 %v174, %v222
  %v246 = vadd.f32 %v175, %v222
  %v247 = vadd.f32 %v176, %v222
  %v248 = vadd.f32 %v177, %v222
  %v249 = vadd.f32 %v178, %v222
  %v250 = vadd.f32 %v179, %v222
  %v251 = vadd.f32 %v180, %v222
  %v252 = vadd.f32 %v181, %v222
  %v253 = vadd.f32 %v182, %v222
  %v254 = vadd.f32 %v183, %v222
  %v255 = vadd.f32 %v184, %v222
  %v256 = vadd.f32 %v185, %v222
  %v257 = vadd.f32 %v186, %v222
  %v258 = vadd.f32 %v187, %v222
  %v259 = vadd.f32 %v188, %v222
  %v260 = vadd.f32 %v189, %v222
  %v261 = vadd.f32 %v190, %v222
  %v262 = vadd.f32 %v191, %v222
  %v263 = vadd.f32 %v192, %v222
  %v264 = vadd.f32 %v193, %v222
  %v265 = vadd.f32 %v194, %v222
  %v266 = vadd.f32 %v195, %v222
  %v267 = vadd.f32 %v196, %v222
  %v268 = vadd.f32 %v197, %v222
  %v269 = vadd.f32 %v198, %v222
  %v270 = vadd.f32 %v199, %v222
  %v271 = vadd.f32 %v200, %v222
  %v272 = vadd.f32 %v201, %v222
  %v273 = vadd.f32 %v202, %v222
  %v274 = vadd.f32 %v203, %v222
  %v275 = vadd.f32 %v204, %v222
  %v276 = vadd.f32 %v205, %v222
  %v277 = vadd.f32 %v206, %v222
  %v278 = vadd.f32 %v207, %v222
  %v279 = vadd.f32 %v208, %v222
  %v280 = vadd.f32 %v209, %v222
  %v281 = vadd.f32 %v210, %v222
  %v282 = vadd.f32 %v211, %v222
  %v283 = vadd.f32 %v212, %v222
  %v284 = vadd.f32 %v213, %v222
  %v285 = vadd.f32 %v214, %v222
  %v286 = vadd.f32 %v215, %v222
  %v287 = vadd.f32 %v216, %v222
  %v288 = vmax.f32 %v224, 0.0
  %v289 = vmax.f32 %v225, 0.0
  %v290 = vmax.f32 %v226, 0.0
  %v291 = vmax.f32 %v227, 0.0
  %v292 = vmax.f32 %v228, 0.0
  %v293 = vmax.f32 %v229, 0.0
  %v294 = vmax.f32 %v230, 0.0
  %v295 = vmax.f32 %v231, 0.0
  %v296 = vmax.f32 %v232, 0.0
  %v297 = vmax.f32 %v233, 0.0
  %v298 = vmax.f32 %v234, 0.0
  %v299 = vmax.f32 %v235, 0.0
  %v300 = vmax.f32 %v236, 0.0
  %v301 = vmax.f32 %v237, 0.0
  %v302 = vmax.f32 %v238, 0.0
  %v303 = vmax.f32 %v239, 0.0
  %v304 = vmax.f32 %v240, 0.0
  %v305 = vmax.f32 %v241, 0.0
  %v306 = vmax.f32 %v242, 0.0
  %v307 = vmax.f32 %v243, 0.0
  %v308 = vmax.f32 %v244, 0.0
  %v309 = vmax.f32 %v245, 0.0
  %v310 = vmax.f32 %v246, 0.0
  %v311 = vmax.f32 %v247, 0.0
  %v312 = vmax.f32 %v248, 0.0
  %v313 = vmax.f32 %v249, 0.0
  %v314 = vmax.f32 %v250, 0.0
  %v315 = vmax.f32 %v251, 0.0
  %v316 = vmax.f32 %v252, 0.0
  %v317 = vmax.f32 %v253, 0.0
  %v318 = vmax.f32 %v254, 0.0
  %v319 = vmax.f32 %v255, 0.0
  %v320 = vmax.f32 %v256, 0.0
  %v321 = vmax.f32 %v257, 0.0
  %v322 = vmax.f32 %v258, 0.0
  %v323 = vmax.f32 %v259, 0.0
  %v324 = vmax.f32 %v260, 0.0
  %v325 = vmax.f32 %v261, 0.0
  %v326 = vmax.f32 %v262, 0.0
  %v327 = vmax.f32 %v263, 0.0
  %v328 = vmax.f32 %v264, 0.0
  %v329 = vmax.f32 %v265, 0.0
  %v330 = vmax.f32 %v266, 0.0
  %v331 = vmax.f32 %v267, 0.0
  %v332 = vmax.f32 %v268, 0.0
  %v333 = vmax.f32 %v269, 0.0
  %v334 = vmax.f32 %v270, 0.0
  %v335 = vmax.f32 %v271, 0.0
  %v336 = vmax.f32 %v272, 0.0
  %v337 = vmax.f32 %v273, 0.0
  %v338 = vmax.f32 %v274, 0.0
  %v339 = vmax.f32 %v275, 0.0
  %v340 = vmax.f32 %v276, 0.0
  %v341 = vmax.f32 %v277, 0.0
  %v342 = vmax.f32 %v278, 0.0
  %v343 = vmax.f32 %v279, 0.0
  %v344 = vmax.f32 %v280, 0.0
  %v345 = vmax.f32 %v281, 0.0
  %v346 = vmax.f32 %v282, 0.0
  %v347 = vmax.f32 %v283, 0.0
  %v348 = vmax.f32 %v284, 0.0
  %v349 = vmax.f32 %v285, 0.0
  %v350 = vmax.f32 %v286, 0.0
  %v351 = vmax.f32 %v287, 0.0
  %v352 = vpack.c.bf16 %v289, %v288
  %v353 = vpack.c.bf16 %v291, %v290
  %v354 = vpack.c.bf16 %v293, %v292
  %v355 = vpack.c.bf16 %v295, %v294
  %v356 = vpack.c.bf16 %v297, %v296
  %v357 = vpack.c.bf16 %v299, %v298
  %v358 = vpack.c.bf16 %v301, %v300
  %v359 = vpack.c.bf16 %v303, %v302
  %v360 = vpack.c.bf16 %v305, %v304
  %v361 = vpack.c.bf16 %v307, %v306
  %v362 = vpack.c.bf16 %v309, %v308
  %v363 = vpack.c.bf16 %v311, %v310
  %v364 = vpack.c.bf16 %v313, %v312
  %v365 = vpack.c.bf16 %v315, %v314
  %v366 = vpack.c.bf16 %v317, %v316
  %v367 = vpack.c.bf16 %v319, %v318
  %v368 = vpack.c.bf16 %v321, %v320
  %v369 = vpack.c.bf16 %v323, %v322
  %v370 = vpack.c.bf16 %v325, %v324
  %v371 = vpack.c.bf16 %v327, %v326
  %v372 = vpack.c.bf16 %v329, %v328
  %v373 = vpack.c.bf16 %v331, %v330
  %v374 = vpack.c.bf16 %v333, %v332
  %v375 = vpack.c.bf16 %v335, %v334
  %v376 = vpack.c.bf16 %v337, %v336
  %v377 = vpack.c.bf16 %v339, %v338
  %v378 = vpack.c.bf16 %v341, %v340
  %v379 = vpack.c.bf16 %v343, %v342
  %v380 = vpack.c.bf16 %v345, %v344
  %v381 = vpack.c.bf16 %v347, %v346
  %v382 = vpack.c.bf16 %v349, %v348
  %v383 = vpack.c.bf16 %v351, %v350
  %v384 = vld [vmem:[%s3] sm:$0xf]
  %v385 = vld [vmem:[%s3 + $0x4] sm:$0xf]
  %v386 = vld [vmem:[%s3 + $0x8] sm:$0xf]
  %v387 = vld [vmem:[%s3 + $0xc] sm:$0xf]
  %v388 = vld [vmem:[%s3 + $0x10] sm:$0xf]
  %v389 = vld [vmem:[%s3 + $0x14] sm:$0xf]
  %v390 = vld [vmem:[%s3 + $0x18] sm:$0xf]
  %v391 = vld [vmem:[%s3 + $0x1c] sm:$0xf]
  %v392 = vld [vmem:[%s3 + $0x20] sm:$0xf]
  %v393 = vld [vmem:[%s3 + $0x24] sm:$0xf]
  %v394 = vld [vmem:[%s3 + $0x28] sm:$0xf]
  %v395 = vld [vmem:[%s3 + $0x2c] sm:$0xf]
  %v396 = vld [vmem:[%s3 + $0x30] sm:$0xf]
  %v397 = vld [vmem:[%s3 + $0x34] sm:$0xf]
  %v398 = vld [vmem:[%s3 + $0x38] sm:$0xf]
  %v399 = vld [vmem:[%s3 + $0x3c] sm:$0xf]
  %v416 = vunpack.c.l.b16 %v384
  %v417 = vunpack.c.l.b16 %v385
  %v418 = vunpack.c.l.b16 %v386
  %v419 = vunpack.c.l.b16 %v387
  %v420 = vunpack.c.l.b16 %v388
  %v421 = vunpack.c.l.b16 %v389
  %v422 = vunpack.c.l.b16 %v390
  %v423 = vunpack.c.l.b16 %v391
  %v424 = vunpack.c.l.b16 %v392
  %v425 = vunpack.c.l.b16 %v393
  %v426 = vunpack.c.l.b16 %v394
  %v427 = vunpack.c.l.b16 %v395
  %v428 = vunpack.c.l.b16 %v396
  %v429 = vunpack.c.l.b16 %v397
  %v430 = vunpack.c.l.b16 %v398
  %v431 = vunpack.c.l.b16 %v399
  %v432 = vpack.c.b16 %v417, %v416
  %v433 = vpack.c.b16 %v419, %v418
  %v434 = vpack.c.b16 %v421, %v420
  %v435 = vpack.c.b16 %v423, %v422
  %v436 = vpack.c.b16 %v425, %v424
  %v437 = vpack.c.b16 %v427, %v426
  %v438 = vpack.c.b16 %v429, %v428
  %v439 = vpack.c.b16 %v431, %v430
  %448 = vmatprep.subr.bf16.mxu0 0
  %449 = vmatpush1.bf16.msra.mxu0 %v432
  %450 = vmatprep.subr.bf16.mxu0 0
  %451 = vmatpush1.bf16.msra.mxu0 %v433
  %452 = vmatprep.subr.bf16.mxu0 0
  %453 = vmatpush1.bf16.msra.mxu0 %v434
  %454 = vmatprep.subr.bf16.mxu0 0
  %455 = vmatpush1.bf16.msra.mxu0 %v435
  %456 = vmatprep.subr.bf16.mxu0 0
  %457 = vmatpush1.bf16.msra.mxu0 %v436
  %458 = vmatprep.subr.bf16.mxu0 0
  %459 = vmatpush1.bf16.msra.mxu0 %v437
  %460 = vmatprep.subr.bf16.mxu0 0
  %461 = vmatpush1.bf16.msra.mxu0 %v438
  %462 = vmatprep.subr.bf16.mxu0 0
  %463 = vmatpush1.bf16.msra.mxu0 %v439
  %464 = vmatprep.subr.bf16.mxu0 0
  %465 = vmatpush1.bf16.msra.mxu0 0
  %466 = vmatprep.subr.bf16.mxu0 0
  %467 = vmatpush1.bf16.msra.mxu0 0
  %468 = vmatprep.subr.bf16.mxu0 0
  %469 = vmatpush1.bf16.msra.mxu0 0
  %470 = vmatprep.subr.bf16.mxu0 0
  %471 = vmatpush1.bf16.msra.mxu0 0
  %472 = vmatprep.subr.bf16.mxu0 0
  %473 = vmatpush1.bf16.msra.mxu0 0
  %474 = vmatprep.subr.bf16.mxu0 0
  %475 = vmatpush1.bf16.msra.mxu0 0
  %476 = vmatprep.subr.bf16.mxu0 0
  %477 = vmatpush1.bf16.msra.mxu0 0
  %478 = vmatprep.subr.bf16.mxu0 0
  %479 = vmatpush1.bf16.msra.mxu0 0
  %480 = vmatprep.mubr.bf16.mxu0 0
  %481 = vmatmul.mubr.bf16.gmra.mrb[0].mxu0 %v352
  %v482 = vpop.f32.mrb[0].mxu0
  %v483 = vadd.f32 0.0, %v482
  %v484 = vpop.f32.mrb[0].mxu0
  %v485 = vpop.f32.mrb[0].mxu0
  %v486 = vadd.f32 0.0, %v485
  %v487 = vpop.f32.mrb[0].mxu0
  %488 = vmatprep.mubr.bf16.mxu0 0
  %489 = vmatmul.mubr.bf16.gmra.mrb[0].mxu0 %v353
  %v490 = vpop.f32.mrb[0].mxu0
  %v491 = vadd.f32 0.0, %v490
  %v492 = vpop.f32.mrb[0].mxu0
  %v493 = vpop.f32.mrb[0].mxu0
  %v494 = vadd.f32 0.0, %v493
  %v495 = vpop.f32.mrb[0].mxu0
  %496 = vmatprep.mubr.bf16.mxu0 0
  %497 = vmatmul.mubr.bf16.gmra.mrb[0].mxu0 %v354
  %v498 = vpop.f32.mrb[0].mxu0
  %v499 = vadd.f32 0.0, %v498
  %v500 = vpop.f32.mrb[0].mxu0
  %v501 = vpop.f32.mrb[0].mxu0
  %v502 = vadd.f32 0.0, %v501
  %v503 = vpop.f32.mrb[0].mxu0
  %504 = vmatprep.mubr.bf16.mxu0 0
  %505 = vmatmul.mubr.bf16.gmra.mrb[0].mxu0 %v355
  %v506 = vpop.f32.mrb[0].mxu0
  %v507 = vadd.f32 0.0, %v506
  %v508 = vpop.f32.mrb[0].mxu0
  %v509 = vpop.f32.mrb[0].mxu0
  %v510 = vadd.f32 0.0, %v509
  %v511 = vpop.f32.mrb[0].mxu0
  %512 = vmatprep.mubr.bf16.mxu0 0
  %513 = vmatmul.mubr.bf16.gmra.mrb[0].mxu0 %v356
  %v514 = vpop.f32.mrb[0].mxu0
  %v515 = vadd.f32 0.0, %v514
  %v516 = vpop.f32.mrb[0].mxu0
  %v517 = vpop.f32.mrb[0].mxu0
  %v518 = vadd.f32 0.0, %v517
  %v519 = vpop.f32.mrb[0].mxu0
  %520 = vmatprep.mubr.bf16.mxu0 0
  %521 = vmatmul.mubr.bf16.gmra.mrb[0].mxu0 %v357
  %v522 = vpop.f32.mrb[0].mxu0
  %v523 = vadd.f32 0.0, %v522
  %v524 = vpop.f32.mrb[0].mxu0
  %v525 = vpop.f32.mrb[0].mxu0
  %v526 = vadd.f32 0.0, %v525
  %v527 = vpop.f32.mrb[0].mxu0
  %528 = vmatprep.mubr.bf16.mxu0 0
  %529 = vmatmul.mubr.bf16.gmra.mrb[0].mxu0 %v358
  %v530 = vpop.f32.mrb[0].mxu0
  %v531 = vadd.f32 0.0, %v530
  %v532 = vpop.f32.mrb[0].mxu0
  %v533 = vpop.f32.mrb[0].mxu0
  %v534 = vadd.f32 0.0, %v533
  %v535 = vpop.f32.mrb[0].mxu0
  %536 = vmatprep.mubr.bf16.mxu0 0
  %537 = vmatmul.mubr.bf16.gmra.mrb[0].mxu0 %v359
  %v538 = vpop.f32.mrb[0].mxu0
  %v539 = vadd.f32 0.0, %v538
  %v540 = vpop.f32.mrb[0].mxu0
  %v541 = vpop.f32.mrb[0].mxu0
  %v542 = vadd.f32 0.0, %v541
  %v543 = vpop.f32.mrb[0].mxu0
  %544 = vmatprep.mubr.bf16.mxu0 0
  %545 = vmatmul.mubr.bf16.gmra.mrb[0].mxu0 %v360
  %v546 = vpop.f32.mrb[0].mxu0
  %v547 = vadd.f32 0.0, %v546
  %v548 = vpop.f32.mrb[0].mxu0
  %v549 = vpop.f32.mrb[0].mxu0
  %v550 = vadd.f32 0.0, %v549
  %v551 = vpop.f32.mrb[0].mxu0
  %552 = vmatprep.mubr.bf16.mxu0 0
  %553 = vmatmul.mubr.bf16.gmra.mrb[0].mxu0 %v361
  %v554 = vpop.f32.mrb[0].mxu0
  %v555 = vadd.f32 0.0, %v554
  %v556 = vpop.f32.mrb[0].mxu0
  %v557 = vpop.f32.mrb[0].mxu0
  %v558 = vadd.f32 0.0, %v557
  %v559 = vpop.f32.mrb[0].mxu0
  %560 = vmatprep.mubr.bf16.mxu0 0
  %561 = vmatmul.mubr.bf16.gmra.mrb[0].mxu0 %v362
  %v562 = vpop.f32.mrb[0].mxu0
  %v563 = vadd.f32 0.0, %v562
  %v564 = vpop.f32.mrb[0].mxu0
  %v565 = vpop.f32.mrb[0].mxu0
  %v566 = vadd.f32 0.0, %v565
  %v567 = vpop.f32.mrb[0].mxu0
  %568 = vmatprep.mubr.bf16.mxu0 0
  %569 = vmatmul.mubr.bf16.gmra.mrb[0].mxu0 %v363
  %v570 = vpop.f32.mrb[0].mxu0
  %v571 = vadd.f32 0.0, %v570
  %v572 = vpop.f32.mrb[0].mxu0
  %v573 = vpop.f32.mrb[0].mxu0
  %v574 = vadd.f32 0.0, %v573
  %v575 = vpop.f32.mrb[0].mxu0
  %576 = vmatprep.mubr.bf16.mxu0 0
  %577 = vmatmul.mubr.bf16.gmra.mrb[0].mxu0 %v364
  %v578 = vpop.f32.mrb[0].mxu0
  %v579 = vadd.f32 0.0, %v578
  %v580 = vpop.f32.mrb[0].mxu0
  %v581 = vpop.f32.mrb[0].mxu0
  %v582 = vadd.f32 0.0, %v581
  %v583 = vpop.f32.mrb[0].mxu0
  %584 = vmatprep.mubr.bf16.mxu0 0
  %585 = vmatmul.mubr.bf16.gmra.mrb[0].mxu0 %v365
  %v586 = vpop.f32.mrb[0].mxu0
  %v587 = vadd.f32 0.0, %v586
  %v588 = vpop.f32.mrb[0].mxu0
  %v589 = vpop.f32.mrb[0].mxu0
  %v590 = vadd.f32 0.0, %v589
  %v591 = vpop.f32.mrb[0].mxu0
  %592 = vmatprep.mubr.bf16.mxu0 0
  %593 = vmatmul.mubr.bf16.gmra.mrb[0].mxu0 %v366
  %v594 = vpop.f32.mrb[0].mxu0
  %v595 = vadd.f32 0.0, %v594
  %v596 = vpop.f32.mrb[0].mxu0
  %v597 = vpop.f32.mrb[0].mxu0
  %v598 = vadd.f32 0.0, %v597
  %v599 = vpop.f32.mrb[0].mxu0
  %600 = vmatprep.mubr.bf16.mxu0 0
  %601 = vmatmul.mubr.bf16.gmra.mrb[0].mxu0 %v367
  %v602 = vpop.f32.mrb[0].mxu0
  %v603 = vadd.f32 0.0, %v602
  %v604 = vpop.f32.mrb[0].mxu0
  %v605 = vpop.f32.mrb[0].mxu0
  %v606 = vadd.f32 0.0, %v605
  %v607 = vpop.f32.mrb[0].mxu0
  %608 = vmatprep.mubr.bf16.mxu0 0
  %609 = vmatmul.mubr.bf16.gmra.mrb[0].mxu0 %v368
  %v610 = vpop.f32.mrb[0].mxu0
  %v611 = vadd.f32 0.0, %v610
  %v612 = vpop.f32.mrb[0].mxu0
  %v613 = vpop.f32.mrb[0].mxu0
  %v614 = vadd.f32 0.0, %v613
  %v615 = vpop.f32.mrb[0].mxu0
  %616 = vmatprep.mubr.bf16.mxu0 0
  %617 = vmatmul.mubr.bf16.gmra.mrb[0].mxu0 %v369
  %v618 = vpop.f32.mrb[0].mxu0
  %v619 = vadd.f32 0.0, %v618
  %v620 = vpop.f32.mrb[0].mxu0
  %v621 = vpop.f32.mrb[0].mxu0
  %v622 = vadd.f32 0.0, %v621
  %v623 = vpop.f32.mrb[0].mxu0
  %624 = vmatprep.mubr.bf16.mxu0 0
  %625 = vmatmul.mubr.bf16.gmra.mrb[0].mxu0 %v370
  %v626 = vpop.f32.mrb[0].mxu0
  %v627 = vadd.f32 0.0, %v626
  %v628 = vpop.f32.mrb[0].mxu0
  %v629 = vpop.f32.mrb[0].mxu0
  %v630 = vadd.f32 0.0, %v629
  %v631 = vpop.f32.mrb[0].mxu0
  %632 = vmatprep.mubr.bf16.mxu0 0
  %633 = vmatmul.mubr.bf16.gmra.mrb[0].mxu0 %v371
  %v634 = vpop.f32.mrb[0].mxu0
  %v635 = vadd.f32 0.0, %v634
  %v636 = vpop.f32.mrb[0].mxu0
  %v637 = vpop.f32.mrb[0].mxu0
  %v638 = vadd.f32 0.0, %v637
  %v639 = vpop.f32.mrb[0].mxu0
  %640 = vmatprep.mubr.bf16.mxu0 0
  %641 = vmatmul.mubr.bf16.gmra.mrb[0].mxu0 %v372
  %v642 = vpop.f32.mrb[0].mxu0
  %v643 = vadd.f32 0.0, %v642
  %v644 = vpop.f32.mrb[0].mxu0
  %v645 = vpop.f32.mrb[0].mxu0
  %v646 = vadd.f32 0.0, %v645
  %v647 = vpop.f32.mrb[0].mxu0
  %648 = vmatprep.mubr.bf16.mxu0 0
  %649 = vmatmul.mubr.bf16.gmra.mrb[0].mxu0 %v373
  %v650 = vpop.f32.mrb[0].mxu0
  %v651 = vadd.f32 0.0, %v650
  %v652 = vpop.f32.mrb[0].mxu0
  %v653 = vpop.f32.mrb[0].mxu0
  %v654 = vadd.f32 0.0, %v653
  %v655 = vpop.f32.mrb[0].mxu0
  %656 = vmatprep.mubr.bf16.mxu0 0
  %657 = vmatmul.mubr.bf16.gmra.mrb[0].mxu0 %v374
  %v658 = vpop.f32.mrb[0].mxu0
  %v659 = vadd.f32 0.0, %v658
  %v660 = vpop.f32.mrb[0].mxu0
  %v661 = vpop.f32.mrb[0].mxu0
  %v662 = vadd.f32 0.0, %v661
  %v663 = vpop.f32.mrb[0].mxu0
  %664 = vmatprep.mubr.bf16.mxu0 0
  %665 = vmatmul.mubr.bf16.gmra.mrb[0].mxu0 %v375
  %v666 = vpop.f32.mrb[0].mxu0
  %v667 = vadd.f32 0.0, %v666
  %v668 = vpop.f32.mrb[0].mxu0
  %v669 = vpop.f32.mrb[0].mxu0
  %v670 = vadd.f32 0.0, %v669
  %v671 = vpop.f32.mrb[0].mxu0
  %672 = vmatprep.mubr.bf16.mxu0 0
  %673 = vmatmul.mubr.bf16.gmra.mrb[0].mxu0 %v376
  %v674 = vpop.f32.mrb[0].mxu0
  %v675 = vadd.f32 0.0, %v674
  %v676 = vpop.f32.mrb[0].mxu0
  %v677 = vpop.f32.mrb[0].mxu0
  %v678 = vadd.f32 0.0, %v677
  %v679 = vpop.f32.mrb[0].mxu0
  %680 = vmatprep.mubr.bf16.mxu0 0
  %681 = vmatmul.mubr.bf16.gmra.mrb[0].mxu0 %v377
  %v682 = vpop.f32.mrb[0].mxu0
  %v683 = vadd.f32 0.0, %v682
  %v684 = vpop.f32.mrb[0].mxu0
  %v685 = vpop.f32.mrb[0].mxu0
  %v686 = vadd.f32 0.0, %v685
  %v687 = vpop.f32.mrb[0].mxu0
  %688 = vmatprep.mubr.bf16.mxu0 0
  %689 = vmatmul.mubr.bf16.gmra.mrb[0].mxu0 %v378
  %v690 = vpop.f32.mrb[0].mxu0
  %v691 = vadd.f32 0.0, %v690
  %v692 = vpop.f32.mrb[0].mxu0
  %v693 = vpop.f32.mrb[0].mxu0
  %v694 = vadd.f32 0.0, %v693
  %v695 = vpop.f32.mrb[0].mxu0
  %696 = vmatprep.mubr.bf16.mxu0 0
  %697 = vmatmul.mubr.bf16.gmra.mrb[0].mxu0 %v379
  %v698 = vpop.f32.mrb[0].mxu0
  %v699 = vadd.f32 0.0, %v698
  %v700 = vpop.f32.mrb[0].mxu0
  %v701 = vpop.f32.mrb[0].mxu0
  %v702 = vadd.f32 0.0, %v701
  %v703 = vpop.f32.mrb[0].mxu0
  %704 = vmatprep.mubr.bf16.mxu0 0
  %705 = vmatmul.mubr.bf16.gmra.mrb[0].mxu0 %v380
  %v706 = vpop.f32.mrb[0].mxu0
  %v707 = vadd.f32 0.0, %v706
  %v708 = vpop.f32.mrb[0].mxu0
  %v709 = vpop.f32.mrb[0].mxu0
  %v710 = vadd.f32 0.0, %v709
  %v711 = vpop.f32.mrb[0].mxu0
  %712 = vmatprep.mubr.bf16.mxu0 0
  %713 = vmatmul.mubr.bf16.gmra.mrb[0].mxu0 %v381
  %v714 = vpop.f32.mrb[0].mxu0
  %v715 = vadd.f32 0.0, %v714
  %v716 = vpop.f32.mrb[0].mxu0
  %v717 = vpop.f32.mrb[0].mxu0
  %v718 = vadd.f32 0.0, %v717
  %v719 = vpop.f32.mrb[0].mxu0
  %720 = vmatprep.mubr.bf16.mxu0 0
  %721 = vmatmul.mubr.bf16.gmra.mrb[0].mxu0 %v382
  %v722 = vpop.f32.mrb[0].mxu0
  %v723 = vadd.f32 0.0, %v722
  %v724 = vpop.f32.mrb[0].mxu0
  %v725 = vpop.f32.mrb[0].mxu0
  %v726 = vadd.f32 0.0, %v725
  %v727 = vpop.f32.mrb[0].mxu0
  %728 = vmatprep.mubr.bf16.mxu0 0
  %729 = vmatmul.mubr.bf16.gmra.mrb[0].mxu0 %v383
  %v730 = vpop.f32.mrb[0].mxu0
  %v731 = vadd.f32 0.0, %v730
  %v732 = vpop.f32.mrb[0].mxu0
  %v733 = vpop.f32.mrb[0].mxu0
  %v734 = vadd.f32 0.0, %v733
  %v735 = vpop.f32.mrb[0].mxu0
  %736 = vdwg.mxu0
  %v737 = vpack.c.bf16 %v486, %v483
  %v738 = vpack.c.bf16 %v494, %v491
  %v739 = vpack.c.bf16 %v502, %v499
  %v740 = vpack.c.bf16 %v510, %v507
  %v741 = vpack.c.bf16 %v518, %v515
  %v742 = vpack.c.bf16 %v526, %v523
  %v743 = vpack.c.bf16 %v534, %v531
  %v744 = vpack.c.bf16 %v542, %v539
  %v745 = vpack.c.bf16 %v550, %v547
  %v746 = vpack.c.bf16 %v558, %v555
  %v747 = vpack.c.bf16 %v566, %v563
  %v748 = vpack.c.bf16 %v574, %v571
  %v749 = vpack.c.bf16 %v582, %v579
  %v750 = vpack.c.bf16 %v590, %v587
  %v751 = vpack.c.bf16 %v598, %v595
  %v752 = vpack.c.bf16 %v606, %v603
  %v753 = vpack.c.bf16 %v614, %v611
  %v754 = vpack.c.bf16 %v622, %v619
  %v755 = vpack.c.bf16 %v630, %v627
  %v756 = vpack.c.bf16 %v638, %v635
  %v757 = vpack.c.bf16 %v646, %v643
  %v758 = vpack.c.bf16 %v654, %v651
  %v759 = vpack.c.bf16 %v662, %v659
  %v760 = vpack.c.bf16 %v670, %v667
  %v761 = vpack.c.bf16 %v678, %v675
  %v762 = vpack.c.bf16 %v686, %v683
  %v763 = vpack.c.bf16 %v694, %v691
  %v764 = vpack.c.bf16 %v702, %v699
  %v765 = vpack.c.bf16 %v710, %v707
  %v766 = vpack.c.bf16 %v718, %v715
  %v767 = vpack.c.bf16 %v726, %v723
  %v768 = vpack.c.bf16 %v734, %v731
  %v801 = vunpack.c.l.b16 %v737
  %v802 = vunpack.c.h.b16 %v737
  %v803 = vunpack.c.l.b16 %v738
  %v804 = vunpack.c.h.b16 %v738
  %v805 = vunpack.c.l.b16 %v739
  %v806 = vunpack.c.h.b16 %v739
  %v807 = vunpack.c.l.b16 %v740
  %v808 = vunpack.c.h.b16 %v740
  %v809 = vunpack.c.l.b16 %v741
  %v810 = vunpack.c.h.b16 %v741
  %v811 = vunpack.c.l.b16 %v742
  %v812 = vunpack.c.h.b16 %v742
  %v813 = vunpack.c.l.b16 %v743
  %v814 = vunpack.c.h.b16 %v743
  %v815 = vunpack.c.l.b16 %v744
  %v816 = vunpack.c.h.b16 %v744
  %v817 = vunpack.c.l.b16 %v745
  %v818 = vunpack.c.h.b16 %v745
  %v819 = vunpack.c.l.b16 %v746
  %v820 = vunpack.c.h.b16 %v746
  %v821 = vunpack.c.l.b16 %v747
  %v822 = vunpack.c.h.b16 %v747
  %v823 = vunpack.c.l.b16 %v748
  %v824 = vunpack.c.h.b16 %v748
  %v825 = vunpack.c.l.b16 %v749
  %v826 = vunpack.c.h.b16 %v749
  %v827 = vunpack.c.l.b16 %v750
  %v828 = vunpack.c.h.b16 %v750
  %v829 = vunpack.c.l.b16 %v751
  %v830 = vunpack.c.h.b16 %v751
  %v831 = vunpack.c.l.b16 %v752
  %v832 = vunpack.c.h.b16 %v752
  %v833 = vunpack.c.l.b16 %v753
  %v834 = vunpack.c.h.b16 %v753
  %v835 = vunpack.c.l.b16 %v754
  %v836 = vunpack.c.h.b16 %v754
  %v837 = vunpack.c.l.b16 %v755
  %v838 = vunpack.c.h.b16 %v755
  %v839 = vunpack.c.l.b16 %v756
  %v840 = vunpack.c.h.b16 %v756
  %v841 = vunpack.c.l.b16 %v757
  %v842 = vunpack.c.h.b16 %v757
  %v843 = vunpack.c.l.b16 %v758
  %v844 = vunpack.c.h.b16 %v758
  %v845 = vunpack.c.l.b16 %v759
  %v846 = vunpack.c.h.b16 %v759
  %v847 = vunpack.c.l.b16 %v760
  %v848 = vunpack.c.h.b16 %v760
  %v849 = vunpack.c.l.b16 %v761
  %v850 = vunpack.c.h.b16 %v761
  %v851 = vunpack.c.l.b16 %v762
  %v852 = vunpack.c.h.b16 %v762
  %v853 = vunpack.c.l.b16 %v763
  %v854 = vunpack.c.h.b16 %v763
  %v855 = vunpack.c.l.b16 %v764
  %v856 = vunpack.c.h.b16 %v764
  %v857 = vunpack.c.l.b16 %v765
  %v858 = vunpack.c.h.b16 %v765
  %v859 = vunpack.c.l.b16 %v766
  %v860 = vunpack.c.h.b16 %v766
  %v861 = vunpack.c.l.b16 %v767
  %v862 = vunpack.c.h.b16 %v767
  %v863 = vunpack.c.l.b16 %v768
  %v864 = vunpack.c.h.b16 %v768
  %v865 = vpack.c.b16 %v801, %v801
  %v866 = vpack.c.b16 %v802, %v802
  %v867 = vpack.c.b16 %v803, %v803
  %v868 = vpack.c.b16 %v804, %v804
  %v869 = vpack.c.b16 %v805, %v805
  %v870 = vpack.c.b16 %v806, %v806
  %v871 = vpack.c.b16 %v807, %v807
  %v872 = vpack.c.b16 %v808, %v808
  %v873 = vpack.c.b16 %v809, %v809
  %v874 = vpack.c.b16 %v810, %v810
  %v875 = vpack.c.b16 %v811, %v811
  %v876 = vpack.c.b16 %v812, %v812
  %v877 = vpack.c.b16 %v813, %v813
  %v878 = vpack.c.b16 %v814, %v814
  %v879 = vpack.c.b16 %v815, %v815
  %v880 = vpack.c.b16 %v816, %v816
  %v881 = vpack.c.b16 %v817, %v817
  %v882 = vpack.c.b16 %v818, %v818
  %v883 = vpack.c.b16 %v819, %v819
  %v884 = vpack.c.b16 %v820, %v820
  %v885 = vpack.c.b16 %v821, %v821
  %v886 = vpack.c.b16 %v822, %v822
  %v887 = vpack.c.b16 %v823, %v823
  %v888 = vpack.c.b16 %v824, %v824
  %v889 = vpack.c.b16 %v825, %v825
  %v890 = vpack.c.b16 %v826, %v826
  %v891 = vpack.c.b16 %v827, %v827
  %v892 = vpack.c.b16 %v828, %v828
  %v893 = vpack.c.b16 %v829, %v829
  %v894 = vpack.c.b16 %v830, %v830
  %v895 = vpack.c.b16 %v831, %v831
  %v896 = vpack.c.b16 %v832, %v832
  %v897 = vpack.c.b16 %v833, %v833
  %v898 = vpack.c.b16 %v834, %v834
  %v899 = vpack.c.b16 %v835, %v835
  %v900 = vpack.c.b16 %v836, %v836
  %v901 = vpack.c.b16 %v837, %v837
  %v902 = vpack.c.b16 %v838, %v838
  %v903 = vpack.c.b16 %v839, %v839
  %v904 = vpack.c.b16 %v840, %v840
  %v905 = vpack.c.b16 %v841, %v841
  %v906 = vpack.c.b16 %v842, %v842
  %v907 = vpack.c.b16 %v843, %v843
  %v908 = vpack.c.b16 %v844, %v844
  %v909 = vpack.c.b16 %v845, %v845
  %v910 = vpack.c.b16 %v846, %v846
  %v911 = vpack.c.b16 %v847, %v847
  %v912 = vpack.c.b16 %v848, %v848
  %v913 = vpack.c.b16 %v849, %v849
  %v914 = vpack.c.b16 %v850, %v850
  %v915 = vpack.c.b16 %v851, %v851
  %v916 = vpack.c.b16 %v852, %v852
  %v917 = vpack.c.b16 %v853, %v853
  %v918 = vpack.c.b16 %v854, %v854
  %v919 = vpack.c.b16 %v855, %v855
  %v920 = vpack.c.b16 %v856, %v856
  %v921 = vpack.c.b16 %v857, %v857
  %v922 = vpack.c.b16 %v858, %v858
  %v923 = vpack.c.b16 %v859, %v859
  %v924 = vpack.c.b16 %v860, %v860
  %v925 = vpack.c.b16 %v861, %v861
  %v926 = vpack.c.b16 %v862, %v862
  %v927 = vpack.c.b16 %v863, %v863
  %v928 = vpack.c.b16 %v864, %v864
  %993 = vst [vmem:[%s4] sm:$0xf] %v865
  %994 = vst [vmem:[%s4 + $0x4] sm:$0xf] %v866
  %995 = vst [vmem:[%s4 + $0x8] sm:$0xf] %v867
  %996 = vst [vmem:[%s4 + $0xc] sm:$0xf] %v868
  %997 = vst [vmem:[%s4 + $0x10] sm:$0xf] %v869
  %998 = vst [vmem:[%s4 + $0x14] sm:$0xf] %v870
  %999 = vst [vmem:[%s4 + $0x18] sm:$0xf] %v871
  %1000 = vst [vmem:[%s4 + $0x1c] sm:$0xf] %v872
  %1001 = vst [vmem:[%s4 + $0x20] sm:$0xf] %v873
  %1002 = vst [vmem:[%s4 + $0x24] sm:$0xf] %v874
  %1003 = vst [vmem:[%s4 + $0x28] sm:$0xf] %v875
  %1004 = vst [vmem:[%s4 + $0x2c] sm:$0xf] %v876
  %1005 = vst [vmem:[%s4 + $0x30] sm:$0xf] %v877
  %1006 = vst [vmem:[%s4 + $0x34] sm:$0xf] %v878
  %1007 = vst [vmem:[%s4 + $0x38] sm:$0xf] %v879
  %1008 = vst [vmem:[%s4 + $0x3c] sm:$0xf] %v880
  %1009 = vst [vmem:[%s4 + $0x40] sm:$0xf] %v881
  %1010 = vst [vmem:[%s4 + $0x44] sm:$0xf] %v882
  %1011 = vst [vmem:[%s4 + $0x48] sm:$0xf] %v883
  %1012 = vst [vmem:[%s4 + $0x4c] sm:$0xf] %v884
  %1013 = vst [vmem:[%s4 + $0x50] sm:$0xf] %v885
  %1014 = vst [vmem:[%s4 + $0x54] sm:$0xf] %v886
  %1015 = vst [vmem:[%s4 + $0x58] sm:$0xf] %v887
  %1016 = vst [vmem:[%s4 + $0x5c] sm:$0xf] %v888
  %1017 = vst [vmem:[%s4 + $0x60] sm:$0xf] %v889
  %1018 = vst [vmem:[%s4 + $0x64] sm:$0xf] %v890
  %1019 = vst [vmem:[%s4 + $0x68] sm:$0xf] %v891
  %1020 = vst [vmem:[%s4 + $0x6c] sm:$0xf] %v892
  %1021 = vst [vmem:[%s4 + $0x70] sm:$0xf] %v893
  %1022 = vst [vmem:[%s4 + $0x74] sm:$0xf] %v894
  %1023 = vst [vmem:[%s4 + $0x78] sm:$0xf] %v895
  %1024 = vst [vmem:[%s4 + $0x7c] sm:$0xf] %v896
  %1025 = vst [vmem:[%s4 + $0x80] sm:$0xf] %v897
  %1026 = vst [vmem:[%s4 + $0x84] sm:$0xf] %v898
  %1027 = vst [vmem:[%s4 + $0x88] sm:$0xf] %v899
  %1028 = vst [vmem:[%s4 + $0x8c] sm:$0xf] %v900
  %1029 = vst [vmem:[%s4 + $0x90] sm:$0xf] %v901
  %1030 = vst [vmem:[%s4 + $0x94] sm:$0xf] %v902
  %1031 = vst [vmem:[%s4 + $0x98] sm:$0xf] %v903
  %1032 = vst [vmem:[%s4 + $0x9c] sm:$0xf] %v904
  %1033 = vst [vmem:[%s4 + $0xa0] sm:$0xf] %v905
  %1034 = vst [vmem:[%s4 + $0xa4] sm:$0xf] %v906
  %1035 = vst [vmem:[%s4 + $0xa8] sm:$0xf] %v907
  %1036 = vst [vmem:[%s4 + $0xac] sm:$0xf] %v908
  %1037 = vst [vmem:[%s4 + $0xb0] sm:$0xf] %v909
  %1038 = vst [vmem:[%s4 + $0xb4] sm:$0xf] %v910
  %1039 = vst [vmem:[%s4 + $0xb8] sm:$0xf] %v911
  %1040 = vst [vmem:[%s4 + $0xbc] sm:$0xf] %v912
  %1041 = vst [vmem:[%s4 + $0xc0] sm:$0xf] %v913
  %1042 = vst [vmem:[%s4 + $0xc4] sm:$0xf] %v914
  %1043 = vst [vmem:[%s4 + $0xc8] sm:$0xf] %v915
  %1044 = vst [vmem:[%s4 + $0xcc] sm:$0xf] %v916
  %1045 = vst [vmem:[%s4 + $0xd0] sm:$0xf] %v917
  %1046 = vst [vmem:[%s4 + $0xd4] sm:$0xf] %v918
  %1047 = vst [vmem:[%s4 + $0xd8] sm:$0xf] %v919
  %1048 = vst [vmem:[%s4 + $0xdc] sm:$0xf] %v920
  %1049 = vst [vmem:[%s4 + $0xe0] sm:$0xf] %v921
  %1050 = vst [vmem:[%s4 + $0xe4] sm:$0xf] %v922
  %1051 = vst [vmem:[%s4 + $0xe8] sm:$0xf] %v923
  %1052 = vst [vmem:[%s4 + $0xec] sm:$0xf] %v924
  %1053 = vst [vmem:[%s4 + $0xf0] sm:$0xf] %v925
  %1054 = vst [vmem:[%s4 + $0xf4] sm:$0xf] %v926
  %1055 = vst [vmem:[%s4 + $0xf8] sm:$0xf] %v927
  %1056 = vst [vmem:[%s4 + $0xfc] sm:$0xf] %v928
  // Predicated region
  $region18: #{unet_forward.19} parent=0 // pred_check
    _
  $region19: #{unet_forward.19} parent=0 // pred_check_branch
    %1058 = sbr.rel (0) target = $region21
  $region20: #{unet_forward.19} parent=0 // pred_region
    _
  $region21: #{unet_forward.19} parent=0 // pred_fallthru
    _
  // Predicated region
  $region22: #{unet_forward.19} parent=0 // pred_check
    _
  $region23: #{unet_forward.19} parent=0 // pred_check_branch
    %1060 = sbr.rel (0) target = $region25
  $region24: #{unet_forward.19} parent=0 // pred_region
    _
  $region25: #{unet_forward.19} parent=0 // pred_fallthru
    _

</llo_original>
